<compile_context>
chip_gen: v7x
topology: tpu7x:2x2x1
jax: 0.10.0
libtpu: 0.0.40
codegen_flags: <defaults>
</compile_context>

<pallas_src>
import jax
import jax.numpy as jnp
from jax.experimental import pallas as pl
from jax.experimental.pallas import tpu as pltpu

n_embd = 64
n_head = 4
head_size = n_embd // n_head   # 16
block_size = 32
dropout = 0.0                  # TODO(synk): dropout p=0.0 everywhere -> identity (no-op)


def block_kernel(x_ref, mask_ref, ln1_g_ref, ln1_b_ref, wattn_ref, bproj_ref,
                 ln2_g_ref, ln2_b_ref, w1_ref, b1_ref, w2_ref, b2_ref, o_ref):
    # x_ref: (Bb, T, C) f32.  mask_ref: (T, T) additive causal mask (0 / -1e30).
    # wattn_ref: (C, 2*H*C) bf16, columns [0, H*C) hold A_h = scale*Wq_h@Wk_h^T
    # per head, columns [H*C, 2*H*C) hold Wvp_h = Wv_h@Wproj_h per head.
    # w1: (C, 4C) bf16; w2: (4C, C) bf16; biases / LN params: (1, dim) f32.
    Bb, T, C = x_ref.shape
    H = n_head
    N = Bb * T

    x3 = x_ref[...]                       # (Bb, T, C) f32
    x = x3.reshape(N, C)                  # 2D slab for the dense matmuls

    def layer_norm(v, g, b):              # f32 statistics (eps matches nn.LayerNorm)
        mu = jnp.mean(v, axis=-1, keepdims=True)
        var = jnp.mean(jnp.square(v - mu), axis=-1, keepdims=True)
        return (v - mu) * jax.lax.rsqrt(var + 1e-5) * g + b

    # ---- self-attention branch: x + sum_h attn_h @ (h1 @ Wvp_h) + bproj ----
    h1 = layer_norm(x, ln1_g_ref[...], ln1_b_ref[...])                    # (N, C) f32
    h1b = h1.astype(jnp.bfloat16)

    big = jnp.dot(h1b, wattn_ref[...], preferred_element_type=jnp.float32)  # (N, 2HC)
    big = big.astype(jnp.bfloat16).reshape(Bb, T, 2 * H * C)
    h1b3 = h1b.reshape(Bb, T, C)

    # stack heads along the (cheap) leading axis -> one softmax / one einsum
    g_all = jnp.concatenate([big[..., h * C:(h + 1) * C] for h in range(H)],
                            axis=0)                                        # (H*Bb, T, C)
    vp_all = jnp.concatenate([big[..., (H + h) * C:(H + h + 1) * C] for h in range(H)],
                             axis=0)                                       # (H*Bb, T, C)
    k_all = jnp.concatenate([h1b3] * H, axis=0)                            # (H*Bb, T, C)

    s = jnp.einsum('bqc,bkc->bqk', g_all, k_all,
                   preferred_element_type=jnp.float32)                     # (H*Bb, T, T)
    s = s + mask_ref[...]                  # additive causal mask, one VPU add
    m = jnp.max(s, axis=-1, keepdims=True)
    e = jnp.exp(s - m)
    attn = e * pl.reciprocal(jnp.sum(e, axis=-1, keepdims=True), approx=True)

    ctx = jnp.einsum('bqk,bkc->bqc', attn.astype(jnp.bfloat16), vp_all,
                     preferred_element_type=jnp.float32)                   # (H*Bb, T, C)
    sa3 = ctx[0:Bb]
    for h in range(1, H):                  # head sum (projection already folded in)
        sa3 = sa3 + ctx[h * Bb:(h + 1) * Bb]
    sa = sa3.reshape(N, C) + bproj_ref[...]
    x1 = x + sa                                                            # residual 1

    # ---- feed-forward branch: x1 + W2(relu(W1(ln2(x1)))) ----
    h2 = layer_norm(x1, ln2_g_ref[...], ln2_b_ref[...])
    f = jnp.dot(h2.astype(jnp.bfloat16), w1_ref[...],
                preferred_element_type=jnp.float32) + b1_ref[...]
    f = jnp.maximum(f, 0.0)
    f = jnp.dot(f.astype(jnp.bfloat16), w2_ref[...],
                preferred_element_type=jnp.float32) + b2_ref[...]
    out = x1 + f                                                           # residual 2

    o_ref[...] = out.reshape(Bb, T, C).astype(o_ref.dtype)
    # TODO(synk): output last dim is 64 lanes (masked stores); a lane-dense
    # (B, T*C) output layout is a possible further win but needs an in-kernel
    # sublane->lane relayout that must be measured first.


def _num_tensorcores():
    """Best-effort TensorCore-per-chip count (v5e/v6e: 1, v7x/v4/v5p: 2)."""
    try:
        kind = jax.devices()[0].device_kind.lower()
    except Exception:
        return 1
    if "lite" in kind or "v5e" in kind or "v6e" in kind:
        return 1
    if "7" in kind or "v4" in kind or "v5p" in kind or "v3" in kind or "v2" in kind:
        return 2
    return 1


def _largest_divisor_le(n, cap):
    cap = max(1, min(n, cap))
    for d in range(cap, 0, -1):
        if n % d == 0:
            return d
    return 1


def block_forward(x, params, *, batch_block=None, rows_per_step=512):
    """x: (B, T, C) float32. params: dict of pre-transposed (in, out) weights."""
    B, T, C = x.shape
    assert C == n_embd, f"expected C == n_embd ({n_embd}), got {C}"
    assert T <= block_size, f"T={T} exceeds block_size={block_size}"
    F = 4 * C
    H = n_head
    hd = C // H

    # ---- grid / batch-block selection (device-aware) ----
    if batch_block is not None:
        if B % batch_block != 0:
            raise ValueError(f"batch_block={batch_block} must divide B={B}")
        Bb = batch_block
    else:
        Bb = _largest_divisor_le(B, max(1, rows_per_step // T))   # >= 512 rows/step
        if _num_tensorcores() >= 2 and B >= 2:
            # keep >= 2 grid steps so both TensorCores get work (v7x / megacore)
            Bb = min(Bb, _largest_divisor_le(B, B // 2))
    grid = (B // Bb,)

    # rough per-step working set (f32 + bf16 intermediates, all heads) -> VMEM limit
    vmem_est = Bb * T * 12 * 1024 + (4 << 20)
    vmem_limit = int(min(max(32 << 20, vmem_est), 64 << 20))

    # ---- host-side weight fusion (exact associativity rewrites) ----
    for nm, shp in (("wq_heads", (C, hd)), ("wk_heads", (C, hd)), ("wv_heads", (C, hd))):
        assert all(w.shape == shp for w in params[nm]), f"{nm} must be (C, head_size)"
    assert params["wproj"].shape == (C, C) and params["w1"].shape == (C, F)
    assert params["w2"].shape == (F, C)

    scale = float(C) ** -0.5               # Head.forward scales by C**-0.5
    a_heads = [(params["wq_heads"][h] * scale) @ params["wk_heads"][h].T   # (C, C)
               for h in range(H)]
    wvp_heads = [params["wv_heads"][h] @ params["wproj"][h * hd:(h + 1) * hd, :]  # (C, C)
                 for h in range(H)]
    w_attn = jnp.concatenate(a_heads + wvp_heads, axis=1).astype(jnp.bfloat16)  # (C, 2HC)

    mask = jnp.where(jnp.tril(jnp.ones((T, T), dtype=bool)),
                     0.0, -1e30).astype(jnp.float32)                        # additive mask

    r = lambda v: v.reshape(1, -1).astype(jnp.float32)
    args = (x, mask,
            r(params["ln1_g"]), r(params["ln1_b"]),
            w_attn, r(params["bproj"]),
            r(params["ln2_g"]), r(params["ln2_b"]),
            params["w1"].astype(jnp.bfloat16), r(params["b1"]),
            params["w2"].astype(jnp.bfloat16), r(params["b2"]))

    in_specs = [
        pl.BlockSpec((Bb, T, C), lambda b: (b, 0, 0)),       # x
        pl.BlockSpec((T, T), lambda b: (0, 0)),              # additive causal mask
        pl.BlockSpec((1, C), lambda b: (0, 0)),              # ln1 gamma
        pl.BlockSpec((1, C), lambda b: (0, 0)),              # ln1 beta
        pl.BlockSpec((C, 2 * H * C), lambda b: (0, 0)),      # fused attention weights
        pl.BlockSpec((1, C), lambda b: (0, 0)),              # proj bias
        pl.BlockSpec((1, C), lambda b: (0, 0)),              # ln2 gamma
        pl.BlockSpec((1, C), lambda b: (0, 0)),              # ln2 beta
        pl.BlockSpec((C, F), lambda b: (0, 0)),              # ffwd W1
        pl.BlockSpec((1, F), lambda b: (0, 0)),              # ffwd b1
        pl.BlockSpec((F, C), lambda b: (0, 0)),              # ffwd W2
        pl.BlockSpec((1, C), lambda b: (0, 0)),              # ffwd b2
    ]

    return pl.pallas_call(
        block_kernel,
        out_shape=jax.ShapeDtypeStruct((B, T, C), x.dtype),
        grid_spec=pl.GridSpec(
            grid=grid,
            in_specs=in_specs,
            out_specs=pl.BlockSpec((Bb, T, C), lambda b: (b, 0, 0)),
        ),
        compiler_params=pltpu.CompilerParams(
            dimension_semantics=("parallel",),
            vmem_limit_bytes=vmem_limit),
    )(*args)


def block_reference(x, params):
    """Pure-JAX f32 reference matching the PyTorch Block forward."""
    B, T, C = x.shape

    def ln(v, g, b):
        mu = v.mean(-1, keepdims=True)
        var = ((v - mu) ** 2).mean(-1, keepdims=True)
        return (v - mu) / jnp.sqrt(var + 1e-5) * g + b

    h = ln(x, params["ln1_g"], params["ln1_b"])
    mask = jnp.tril(jnp.ones((T, T), dtype=bool))
    heads = []
    for wq, wk, wv in zip(params["wq_heads"], params["wk_heads"], params["wv_heads"]):
        q = h @ wq
        k = h @ wk
        v = h @ wv
        w = (q @ jnp.swapaxes(k, -2, -1)) * C ** (-0.5)   # note: C, as in Head.forward
        w = jnp.where(mask, w, -jnp.inf)
        w = jax.nn.softmax(w, axis=-1)
        heads.append(w @ v)
    sa = jnp.concatenate(heads, axis=-1) @ params["wproj"] + params["bproj"]
    x = x + sa
    h2 = ln(x, params["ln2_g"], params["ln2_b"])
    f = jnp.maximum(h2 @ params["w1"] + params["b1"], 0.0) @ params["w2"] + params["b2"]
    return x + f


def init_params(key):
    C, H = n_embd, n_head
    hd = C // H
    F = 4 * C
    keys = iter(jax.random.split(key, 3 * H + 10))

    def lin(k, fan_in, shape):
        bound = 1.0 / (fan_in ** 0.5)
        return jax.random.uniform(k, shape, jnp.float32, -bound, bound)

    return dict(
        wq_heads=[lin(next(keys), C, (C, hd)) for _ in range(H)],
        wk_heads=[lin(next(keys), C, (C, hd)) for _ in range(H)],
        wv_heads=[lin(next(keys), C, (C, hd)) for _ in range(H)],
        wproj=lin(next(keys), C, (C, C)),
        bproj=lin(next(keys), C, (C,)),
        w1=lin(next(keys), C, (C, F)),
        b1=lin(next(keys), C, (F,)),
        w2=lin(next(keys), F, (F, C)),
        b2=lin(next(keys), F, (C,)),
        ln1_g=1.0 + 0.1 * jax.random.normal(next(keys), (C,), jnp.float32),
        ln1_b=0.1 * jax.random.normal(next(keys), (C,), jnp.float32),
        ln2_g=1.0 + 0.1 * jax.random.normal(next(keys), (C,), jnp.float32),
        ln2_b=0.1 * jax.random.normal(next(keys), (C,), jnp.float32),
    )


if __name__ == "__main__":
    key = jax.random.PRNGKey(0)
    k_x, k_p = jax.random.split(key)

    B, T, C = 8, block_size, n_embd        # 8 x 32 x 64
    x = jax.random.normal(k_x, (B, T, C), dtype=jnp.float32)
    params = init_params(k_p)

    out = jax.block_until_ready(block_forward(x, params))
    ref = block_reference(x, params)

    assert out.shape == (B, T, C)
    max_err = float(jnp.max(jnp.abs(out - ref)))
    # bf16 MXU operands + approx softmax reciprocal -> small, documented deviation
    # from the f32 reference; well inside 2e-2.
    assert jnp.allclose(out, ref, atol=2e-2, rtol=2e-2), (
        f"mismatch vs reference, max abs err {max_err}")

    print("KERNEL_OK")
</pallas_src>

<mosaic_0001>
module attributes {stable_mosaic.version = 11 : i64} {
  func.func @block_kernel(%arg0: i32, %arg1: memref<8x32x64xf32, #tpu.memory_space<vmem>>, %arg2: memref<32x32xf32, #tpu.memory_space<vmem>>, %arg3: memref<1x64xf32, #tpu.memory_space<vmem>>, %arg4: memref<1x64xf32, #tpu.memory_space<vmem>>, %arg5: memref<64x512xbf16, #tpu.memory_space<vmem>>, %arg6: memref<1x64xf32, #tpu.memory_space<vmem>>, %arg7: memref<1x64xf32, #tpu.memory_space<vmem>>, %arg8: memref<1x64xf32, #tpu.memory_space<vmem>>, %arg9: memref<64x256xbf16, #tpu.memory_space<vmem>>, %arg10: memref<1x256xf32, #tpu.memory_space<vmem>>, %arg11: memref<256x64xbf16, #tpu.memory_space<vmem>>, %arg12: memref<1x64xf32, #tpu.memory_space<vmem>>, %arg13: memref<8x32x64xf32, #tpu.memory_space<vmem>>) attributes {dimension_semantics = [#tpu.dimension_semantics<parallel>], iteration_bounds = array<i64: 1>, scalar_prefetch = 0 : i64, scratch_operands = 0 : i64, tpu.core_type = #tpu.core_type<tc>, window_params = [{transform_indices = @transform_0, window_bounds = array<i64: 8, 32, 64>}, {pipeline_mode = #tpu.pipeline_mode<synchronous>, transform_indices = @transform_1, window_bounds = array<i64: 32, 32>}, {pipeline_mode = #tpu.pipeline_mode<synchronous>, transform_indices = @transform_2, window_bounds = array<i64: 1, 64>}, {pipeline_mode = #tpu.pipeline_mode<synchronous>, transform_indices = @transform_3, window_bounds = array<i64: 1, 64>}, {pipeline_mode = #tpu.pipeline_mode<synchronous>, transform_indices = @transform_4, window_bounds = array<i64: 64, 512>}, {pipeline_mode = #tpu.pipeline_mode<synchronous>, transform_indices = @transform_5, window_bounds = array<i64: 1, 64>}, {pipeline_mode = #tpu.pipeline_mode<synchronous>, transform_indices = @transform_6, window_bounds = array<i64: 1, 64>}, {pipeline_mode = #tpu.pipeline_mode<synchronous>, transform_indices = @transform_7, window_bounds = array<i64: 1, 64>}, {pipeline_mode = #tpu.pipeline_mode<synchronous>, transform_indices = @transform_8, window_bounds = array<i64: 64, 256>}, {pipeline_mode = #tpu.pipeline_mode<synchronous>, transform_indices = @transform_9, window_bounds = array<i64: 1, 256>}, {pipeline_mode = #tpu.pipeline_mode<synchronous>, transform_indices = @transform_10, window_bounds = array<i64: 256, 64>}, {pipeline_mode = #tpu.pipeline_mode<synchronous>, transform_indices = @transform_11, window_bounds = array<i64: 1, 64>}, {transform_indices = @transform_12, window_bounds = array<i64: 8, 32, 64>}]} {
    %c0 = arith.constant 0 : index
    %c0_0 = arith.constant 0 : index
    %c0_1 = arith.constant 0 : index
    %0 = vector.load %arg1[%c0, %c0_0, %c0_1] : memref<8x32x64xf32, #tpu.memory_space<vmem>>, vector<8x32x64xf32>
    %1 = vector.shape_cast %0 : vector<8x32x64xf32> to vector<256x64xf32>
    %c0_2 = arith.constant 0 : index
    %c0_3 = arith.constant 0 : index
    %2 = vector.load %arg3[%c0_2, %c0_3] : memref<1x64xf32, #tpu.memory_space<vmem>>, vector<1x64xf32>
    %c0_4 = arith.constant 0 : index
    %c0_5 = arith.constant 0 : index
    %3 = vector.load %arg4[%c0_4, %c0_5] : memref<1x64xf32, #tpu.memory_space<vmem>>, vector<1x64xf32>
    %cst = arith.constant dense<0.000000e+00> : vector<256xf32>
    %4 = vector.multi_reduction <add>, %1, %cst [1] : vector<256x64xf32> to vector<256xf32>
    %5 = vector.shape_cast %4 : vector<256xf32> to vector<256x1xf32>
    %cst_6 = arith.constant 6.400000e+01 : f32
    %6 = vector.broadcast %cst_6 : f32 to vector<256x1xf32>
    %7 = arith.divf %5, %6 : vector<256x1xf32>
    %8 = vector.broadcast %7 : vector<256x1xf32> to vector<256x64xf32>
    %9 = arith.subf %1, %8 : vector<256x64xf32>
    %10 = arith.mulf %9, %9 : vector<256x64xf32>
    %cst_7 = arith.constant dense<0.000000e+00> : vector<256xf32>
    %11 = vector.multi_reduction <add>, %10, %cst_7 [1] : vector<256x64xf32> to vector<256xf32>
    %12 = vector.shape_cast %11 : vector<256xf32> to vector<256x1xf32>
    %cst_8 = arith.constant 6.400000e+01 : f32
    %13 = vector.broadcast %cst_8 : f32 to vector<256x1xf32>
    %14 = arith.divf %12, %13 : vector<256x1xf32>
    %15 = vector.broadcast %7 : vector<256x1xf32> to vector<256x64xf32>
    %16 = arith.subf %1, %15 : vector<256x64xf32>
    %cst_9 = arith.constant 9.99999974E-6 : f32
    %17 = vector.broadcast %cst_9 : f32 to vector<256x1xf32>
    %18 = arith.addf %14, %17 : vector<256x1xf32>
    %19 = math.rsqrt %18 : vector<256x1xf32>
    %20 = vector.broadcast %19 : vector<256x1xf32> to vector<256x64xf32>
    %21 = arith.mulf %16, %20 : vector<256x64xf32>
    %22 = vector.broadcast %2 : vector<1x64xf32> to vector<256x64xf32>
    %23 = arith.mulf %21, %22 : vector<256x64xf32>
    %24 = vector.broadcast %3 : vector<1x64xf32> to vector<256x64xf32>
    %25 = arith.addf %23, %24 : vector<256x64xf32>
    %26 = arith.truncf %25 : vector<256x64xf32> to vector<256x64xbf16>
    %c0_10 = arith.constant 0 : index
    %c0_11 = arith.constant 0 : index
    %27 = vector.load %arg5[%c0_10, %c0_11] : memref<64x512xbf16, #tpu.memory_space<vmem>>, vector<64x512xbf16>
    %cst_12 = arith.constant dense<0.000000e+00> : vector<256x512xf32>
    %28 = tpu.matmul %26, %27, %cst_12 {dimension_numbers = #tpu.dot_dimension_numbers<[1], [0], [0], [1], [0, 0, 1, 1], [], []>} : vector<256x64xbf16>, vector<64x512xbf16>, vector<256x512xf32> -> vector<256x512xf32>
    %29 = arith.truncf %28 : vector<256x512xf32> to vector<256x512xbf16>
    %30 = vector.shape_cast %29 : vector<256x512xbf16> to vector<8x32x512xbf16>
    %31 = vector.shape_cast %26 : vector<256x64xbf16> to vector<8x32x64xbf16>
    %32 = vector.extract_strided_slice %30 {offsets = [0, 0, 0], sizes = [8, 32, 64], strides = [1, 1, 1]} : vector<8x32x512xbf16> to vector<8x32x64xbf16>
    %33 = vector.extract_strided_slice %30 {offsets = [0, 0, 64], sizes = [8, 32, 64], strides = [1, 1, 1]} : vector<8x32x512xbf16> to vector<8x32x64xbf16>
    %34 = vector.extract_strided_slice %30 {offsets = [0, 0, 128], sizes = [8, 32, 64], strides = [1, 1, 1]} : vector<8x32x512xbf16> to vector<8x32x64xbf16>
    %35 = vector.extract_strided_slice %30 {offsets = [0, 0, 192], sizes = [8, 32, 64], strides = [1, 1, 1]} : vector<8x32x512xbf16> to vector<8x32x64xbf16>
    %36 = tpu.concatenate %32, %33, %34, %35 in 0 : vector<8x32x64xbf16>, vector<8x32x64xbf16>, vector<8x32x64xbf16>, vector<8x32x64xbf16> -> vector<32x32x64xbf16>
    %37 = vector.extract_strided_slice %30 {offsets = [0, 0, 256], sizes = [8, 32, 64], strides = [1, 1, 1]} : vector<8x32x512xbf16> to vector<8x32x64xbf16>
    %38 = vector.extract_strided_slice %30 {offsets = [0, 0, 320], sizes = [8, 32, 64], strides = [1, 1, 1]} : vector<8x32x512xbf16> to vector<8x32x64xbf16>
    %39 = vector.extract_strided_slice %30 {offsets = [0, 0, 384], sizes = [8, 32, 64], strides = [1, 1, 1]} : vector<8x32x512xbf16> to vector<8x32x64xbf16>
    %40 = vector.extract_strided_slice %30 {offsets = [0, 0, 448], sizes = [8, 32, 64], strides = [1, 1, 1]} : vector<8x32x512xbf16> to vector<8x32x64xbf16>
    %41 = tpu.concatenate %37, %38, %39, %40 in 0 : vector<8x32x64xbf16>, vector<8x32x64xbf16>, vector<8x32x64xbf16>, vector<8x32x64xbf16> -> vector<32x32x64xbf16>
    %42 = tpu.concatenate %31, %31, %31, %31 in 0 : vector<8x32x64xbf16>, vector<8x32x64xbf16>, vector<8x32x64xbf16>, vector<8x32x64xbf16> -> vector<32x32x64xbf16>
    "tpu.trace_start"() <{level = 10 : i32, message = "bqc,bkc->bqk"}> : () -> ()
    %cst_13 = arith.constant dense<0.000000e+00> : vector<32x32x32xf32>
    %43 = tpu.matmul %36, %42, %cst_13 {dimension_numbers = #tpu.dot_dimension_numbers<[2], [2], [1], [1], [0, 0, 0, 1, 1, 1], [0], [0]>} : vector<32x32x64xbf16>, vector<32x32x64xbf16>, vector<32x32x32xf32> -> vector<32x32x32xf32>
    "tpu.trace_stop"() : () -> ()
    %c0_14 = arith.constant 0 : index
    %c0_15 = arith.constant 0 : index
    %44 = vector.load %arg2[%c0_14, %c0_15] : memref<32x32xf32, #tpu.memory_space<vmem>>, vector<32x32xf32>
    %45 = vector.shape_cast %44 : vector<32x32xf32> to vector<1x32x32xf32>
    %46 = vector.broadcast %45 : vector<1x32x32xf32> to vector<32x32x32xf32>
    %47 = arith.addf %43, %46 : vector<32x32x32xf32>
    %cst_16 = arith.constant dense<0xFF800000> : vector<32x32xf32>
    %48 = vector.multi_reduction <maximumf>, %47, %cst_16 [2] : vector<32x32x32xf32> to vector<32x32xf32>
    %49 = vector.shape_cast %48 : vector<32x32xf32> to vector<32x32x1xf32>
    %50 = vector.broadcast %49 : vector<32x32x1xf32> to vector<32x32x32xf32>
    %51 = arith.subf %47, %50 : vector<32x32x32xf32>
    %52 = math.exp %51 : vector<32x32x32xf32>
    %cst_17 = arith.constant dense<0.000000e+00> : vector<32x32xf32>
    %53 = vector.multi_reduction <add>, %52, %cst_17 [2] : vector<32x32x32xf32> to vector<32x32xf32>
    %54 = vector.shape_cast %53 : vector<32x32xf32> to vector<32x32x1xf32>
    %55 = tpu.reciprocal %54 {approx = true} : vector<32x32x1xf32> -> vector<32x32x1xf32>
    %56 = vector.broadcast %55 : vector<32x32x1xf32> to vector<32x32x32xf32>
    %57 = arith.mulf %52, %56 : vector<32x32x32xf32>
    %58 = arith.truncf %57 : vector<32x32x32xf32> to vector<32x32x32xbf16>
    "tpu.trace_start"() <{level = 10 : i32, message = "bqk,bkc->bqc"}> : () -> ()
    %cst_18 = arith.constant dense<0.000000e+00> : vector<32x32x64xf32>
    %59 = tpu.matmul %58, %41, %cst_18 {dimension_numbers = #tpu.dot_dimension_numbers<[2], [1], [1], [2], [0, 0, 0, 1, 1, 2], [0], [0]>} : vector<32x32x32xbf16>, vector<32x32x64xbf16>, vector<32x32x64xf32> -> vector<32x32x64xf32>
    "tpu.trace_stop"() : () -> ()
    %60 = vector.extract_strided_slice %59 {offsets = [0, 0, 0], sizes = [8, 32, 64], strides = [1, 1, 1]} : vector<32x32x64xf32> to vector<8x32x64xf32>
    %61 = vector.extract_strided_slice %59 {offsets = [8, 0, 0], sizes = [8, 32, 64], strides = [1, 1, 1]} : vector<32x32x64xf32> to vector<8x32x64xf32>
    %62 = arith.addf %60, %61 : vector<8x32x64xf32>
    %63 = vector.extract_strided_slice %59 {offsets = [16, 0, 0], sizes = [8, 32, 64], strides = [1, 1, 1]} : vector<32x32x64xf32> to vector<8x32x64xf32>
    %64 = arith.addf %62, %63 : vector<8x32x64xf32>
    %65 = vector.extract_strided_slice %59 {offsets = [24, 0, 0], sizes = [8, 32, 64], strides = [1, 1, 1]} : vector<32x32x64xf32> to vector<8x32x64xf32>
    %66 = arith.addf %64, %65 : vector<8x32x64xf32>
    %67 = vector.shape_cast %66 : vector<8x32x64xf32> to vector<256x64xf32>
    %c0_19 = arith.constant 0 : index
    %c0_20 = arith.constant 0 : index
    %68 = vector.load %arg6[%c0_19, %c0_20] : memref<1x64xf32, #tpu.memory_space<vmem>>, vector<1x64xf32>
    %69 = vector.broadcast %68 : vector<1x64xf32> to vector<256x64xf32>
    %70 = arith.addf %67, %69 : vector<256x64xf32>
    %71 = arith.addf %1, %70 : vector<256x64xf32>
    %c0_21 = arith.constant 0 : index
    %c0_22 = arith.constant 0 : index
    %72 = vector.load %arg7[%c0_21, %c0_22] : memref<1x64xf32, #tpu.memory_space<vmem>>, vector<1x64xf32>
    %c0_23 = arith.constant 0 : index
    %c0_24 = arith.constant 0 : index
    %73 = vector.load %arg8[%c0_23, %c0_24] : memref<1x64xf32, #tpu.memory_space<vmem>>, vector<1x64xf32>
    %cst_25 = arith.constant dense<0.000000e+00> : vector<256xf32>
    %74 = vector.multi_reduction <add>, %71, %cst_25 [1] : vector<256x64xf32> to vector<256xf32>
    %75 = vector.shape_cast %74 : vector<256xf32> to vector<256x1xf32>
    %cst_26 = arith.constant 6.400000e+01 : f32
    %76 = vector.broadcast %cst_26 : f32 to vector<256x1xf32>
    %77 = arith.divf %75, %76 : vector<256x1xf32>
    %78 = vector.broadcast %77 : vector<256x1xf32> to vector<256x64xf32>
    %79 = arith.subf %71, %78 : vector<256x64xf32>
    %80 = arith.mulf %79, %79 : vector<256x64xf32>
    %cst_27 = arith.constant dense<0.000000e+00> : vector<256xf32>
    %81 = vector.multi_reduction <add>, %80, %cst_27 [1] : vector<256x64xf32> to vector<256xf32>
    %82 = vector.shape_cast %81 : vector<256xf32> to vector<256x1xf32>
    %cst_28 = arith.constant 6.400000e+01 : f32
    %83 = vector.broadcast %cst_28 : f32 to vector<256x1xf32>
    %84 = arith.divf %82, %83 : vector<256x1xf32>
    %85 = vector.broadcast %77 : vector<256x1xf32> to vector<256x64xf32>
    %86 = arith.subf %71, %85 : vector<256x64xf32>
    %cst_29 = arith.constant 9.99999974E-6 : f32
    %87 = vector.broadcast %cst_29 : f32 to vector<256x1xf32>
    %88 = arith.addf %84, %87 : vector<256x1xf32>
    %89 = math.rsqrt %88 : vector<256x1xf32>
    %90 = vector.broadcast %89 : vector<256x1xf32> to vector<256x64xf32>
    %91 = arith.mulf %86, %90 : vector<256x64xf32>
    %92 = vector.broadcast %72 : vector<1x64xf32> to vector<256x64xf32>
    %93 = arith.mulf %91, %92 : vector<256x64xf32>
    %94 = vector.broadcast %73 : vector<1x64xf32> to vector<256x64xf32>
    %95 = arith.addf %93, %94 : vector<256x64xf32>
    %96 = arith.truncf %95 : vector<256x64xf32> to vector<256x64xbf16>
    %c0_30 = arith.constant 0 : index
    %c0_31 = arith.constant 0 : index
    %97 = vector.load %arg9[%c0_30, %c0_31] : memref<64x256xbf16, #tpu.memory_space<vmem>>, vector<64x256xbf16>
    %cst_32 = arith.constant dense<0.000000e+00> : vector<256x256xf32>
    %98 = tpu.matmul %96, %97, %cst_32 {dimension_numbers = #tpu.dot_dimension_numbers<[1], [0], [0], [1], [0, 0, 1, 1], [], []>} : vector<256x64xbf16>, vector<64x256xbf16>, vector<256x256xf32> -> vector<256x256xf32>
    %c0_33 = arith.constant 0 : index
    %c0_34 = arith.constant 0 : index
    %99 = vector.load %arg10[%c0_33, %c0_34] : memref<1x256xf32, #tpu.memory_space<vmem>>, vector<1x256xf32>
    %100 = vector.broadcast %99 : vector<1x256xf32> to vector<256x256xf32>
    %101 = arith.addf %98, %100 : vector<256x256xf32>
    %cst_35 = arith.constant 0.000000e+00 : f32
    %102 = vector.broadcast %cst_35 : f32 to vector<256x256xf32>
    %103 = arith.maximumf %101, %102 : vector<256x256xf32>
    %104 = arith.truncf %103 : vector<256x256xf32> to vector<256x256xbf16>
    %c0_36 = arith.constant 0 : index
    %c0_37 = arith.constant 0 : index
    %105 = vector.load %arg11[%c0_36, %c0_37] : memref<256x64xbf16, #tpu.memory_space<vmem>>, vector<256x64xbf16>
    %cst_38 = arith.constant dense<0.000000e+00> : vector<256x64xf32>
    %106 = tpu.matmul %104, %105, %cst_38 {dimension_numbers = #tpu.dot_dimension_numbers<[1], [0], [0], [1], [0, 0, 1, 1], [], []>} : vector<256x256xbf16>, vector<256x64xbf16>, vector<256x64xf32> -> vector<256x64xf32>
    %c0_39 = arith.constant 0 : index
    %c0_40 = arith.constant 0 : index
    %107 = vector.load %arg12[%c0_39, %c0_40] : memref<1x64xf32, #tpu.memory_space<vmem>>, vector<1x64xf32>
    %108 = vector.broadcast %107 : vector<1x64xf32> to vector<256x64xf32>
    %109 = arith.addf %106, %108 : vector<256x64xf32>
    %110 = arith.addf %71, %109 : vector<256x64xf32>
    %111 = vector.shape_cast %110 : vector<256x64xf32> to vector<8x32x64xf32>
    %c0_41 = arith.constant 0 : index
    %c0_42 = arith.constant 0 : index
    %c0_43 = arith.constant 0 : index
    %112 = vector.load %arg13[%c0_41, %c0_42, %c0_43] : memref<8x32x64xf32, #tpu.memory_space<vmem>>, vector<8x32x64xf32>
    tpu.vector_store %arg13[%c0_41, %c0_42, %c0_43], %111 {strides = array<i32>} : memref<8x32x64xf32, #tpu.memory_space<vmem>>, vector<8x32x64xf32>,
    return
  }
  func.func @transform_0(%arg0: i32) -> (i32, i32, i32) {
    %c0_i32 = arith.constant 0 : i32
    %c0_i32_0 = arith.constant 0 : i32
    %c0_i32_1 = arith.constant 0 : i32
    return %arg0, %c0_i32, %c0_i32_0 : i32, i32, i32
  }
  func.func @transform_1(%arg0: i32) -> (i32, i32) {
    %c0_i32 = arith.constant 0 : i32
    %c0_i32_0 = arith.constant 0 : i32
    %c0_i32_1 = arith.constant 0 : i32
    return %c0_i32, %c0_i32_0 : i32, i32
  }
  func.func @transform_2(%arg0: i32) -> (i32, i32) {
    %c0_i32 = arith.constant 0 : i32
    %c0_i32_0 = arith.constant 0 : i32
    %c0_i32_1 = arith.constant 0 : i32
    return %c0_i32, %c0_i32_0 : i32, i32
  }
  func.func @transform_3(%arg0: i32) -> (i32, i32) {
    %c0_i32 = arith.constant 0 : i32
    %c0_i32_0 = arith.constant 0 : i32
    %c0_i32_1 = arith.constant 0 : i32
    return %c0_i32, %c0_i32_0 : i32, i32
  }
  func.func @transform_4(%arg0: i32) -> (i32, i32) {
    %c0_i32 = arith.constant 0 : i32
    %c0_i32_0 = arith.constant 0 : i32
    %c0_i32_1 = arith.constant 0 : i32
    return %c0_i32, %c0_i32_0 : i32, i32
  }
  func.func @transform_5(%arg0: i32) -> (i32, i32) {
    %c0_i32 = arith.constant 0 : i32
    %c0_i32_0 = arith.constant 0 : i32
    %c0_i32_1 = arith.constant 0 : i32
    return %c0_i32, %c0_i32_0 : i32, i32
  }
  func.func @transform_6(%arg0: i32) -> (i32, i32) {
    %c0_i32 = arith.constant 0 : i32
    %c0_i32_0 = arith.constant 0 : i32
    %c0_i32_1 = arith.constant 0 : i32
    return %c0_i32, %c0_i32_0 : i32, i32
  }
  func.func @transform_7(%arg0: i32) -> (i32, i32) {
    %c0_i32 = arith.constant 0 : i32
    %c0_i32_0 = arith.constant 0 : i32
    %c0_i32_1 = arith.constant 0 : i32
    return %c0_i32, %c0_i32_0 : i32, i32
  }
  func.func @transform_8(%arg0: i32) -> (i32, i32) {
    %c0_i32 = arith.constant 0 : i32
    %c0_i32_0 = arith.constant 0 : i32
    %c0_i32_1 = arith.constant 0 : i32
    return %c0_i32, %c0_i32_0 : i32, i32
  }
  func.func @transform_9(%arg0: i32) -> (i32, i32) {
    %c0_i32 = arith.constant 0 : i32
    %c0_i32_0 = arith.constant 0 : i32
    %c0_i32_1 = arith.constant 0 : i32
    return %c0_i32, %c0_i32_0 : i32, i32
  }
  func.func @transform_10(%arg0: i32) -> (i32, i32) {
    %c0_i32 = arith.constant 0 : i32
    %c0_i32_0 = arith.constant 0 : i32
    %c0_i32_1 = arith.constant 0 : i32
    return %c0_i32, %c0_i32_0 : i32, i32
  }
  func.func @transform_11(%arg0: i32) -> (i32, i32) {
    %c0_i32 = arith.constant 0 : i32
    %c0_i32_0 = arith.constant 0 : i32
    %c0_i32_1 = arith.constant 0 : i32
    return %c0_i32, %c0_i32_0 : i32, i32
  }
  func.func @transform_12(%arg0: i32) -> (i32, i32, i32) {
    %c0_i32 = arith.constant 0 : i32
    %c0_i32_0 = arith.constant 0 : i32
    %c0_i32_1 = arith.constant 0 : i32
    return %arg0, %c0_i32, %c0_i32_0 : i32, i32, i32
  }
}

</mosaic_0001>

<llo_original>
// kernel: tpu_custom_call.1
$region0: #{tpu_custom_call.1}
  #allocation0 [shape = 'u32[]', space=smem, size = 0x4, offset = 0x4, fixed_abs, tag = 'smem constant byte address 0x4 - core index']
  #allocation1 [shape = 'u32[144,128]{1,0:T(1,128)}', space=vmem, size = 0x12000, scoped, tag = 'internal scratch']
  %s0 = inlined_call_operand.hbm [shape: f32[8,32,64], index: 0, kind: input, shape index: {}]
  %s1 = inlined_call_operand.hbm [shape: f32[32,32], index: 1, kind: input, shape index: {}]
  %s2 = inlined_call_operand.vmem [shape: f32[1,64], index: 2, kind: input, shape index: {}]
  %s3 = inlined_call_operand.vmem [shape: f32[1,64], index: 3, kind: input, shape index: {}]
  %s4 = inlined_call_operand.vmem [shape: bf16[64,512], index: 4, kind: input, shape index: {}]
  %s5 = inlined_call_operand.vmem [shape: f32[1,64], index: 5, kind: input, shape index: {}]
  %s6 = inlined_call_operand.vmem [shape: f32[1,64], index: 6, kind: input, shape index: {}]
  %s7 = inlined_call_operand.vmem [shape: f32[1,64], index: 7, kind: input, shape index: {}]
  %s8 = inlined_call_operand.vmem [shape: bf16[64,256], index: 8, kind: input, shape index: {}]
  %s9 = inlined_call_operand.vmem [shape: f32[1,256], index: 9, kind: input, shape index: {}]
  %s10 = inlined_call_operand.vmem [shape: bf16[256,64], index: 10, kind: input, shape index: {}]
  %s11 = inlined_call_operand.vmem [shape: f32[1,64], index: 11, kind: input, shape index: {}]
  %s12 = inlined_call_operand.hbm [shape: f32[8,32,64], index: 12, kind: output, shape index: {}]
  %s13 = sld [smem:[#allocation0]]
  $region66: #{tpu_custom_call.1} parent=0
    _
  %s15 = ssub.s32 1, %s13
  %s16 = scalar_select 0, %s15, %s13
  $region1: #{tpu_custom_call.1} parent=0
    #allocation2 [shape = 'u8[131072]{0}', space=vmem, size = 0x20000, scoped, tag = 'input window, operand 0, single buffered']
    #allocation3 [shape = 's32[1]{0}', space=sflag, size = 0x4, scoped, tag = 'scoped memory for tpu_custom_call.1']
    #allocation4 [shape = 's32[1]{0}', space=sflag, size = 0x4, scoped, tag = 'scoped memory for tpu_custom_call.1']
    #allocation5 [shape = 'u8[16384]{0}', space=vmem, size = 0x4000, scoped, tag = 'input window, operand 1, single buffered']
    #allocation6 [shape = 's32[1]{0}', space=sflag, size = 0x4, scoped, tag = 'scoped memory for tpu_custom_call.1']
    #allocation7 [shape = 'u8[131072]{0}', space=vmem, size = 0x20000, scoped, tag = 'output window, operand 0, single buffered']
    %17 = vsyncpa [#allocation3], 0
    %18 = vsyncpa [#allocation6], 0
    %19 = vsyncpa [#allocation4], 0
    // Predicated region
    $region2: #{tpu_custom_call.1} parent=1 // pred_check
      _
    $region3: #{tpu_custom_call.1} parent=1 // pred_check_branch
      %21 = sbr.rel (0) target = $region5
    $region4: #{tpu_custom_call.1} parent=1 // pred_region
      %s23 = ssub.s32 4096, 4096
      %24 = vsyncadd [#allocation3], %s23
      %s25 = sshll.u32 [#allocation2], 4
      %s26 = int_to_ptr.vmem [resolvable:$true] %s25
      %31 = dma.hbm_to_vmem [thread:$0]  %s0, 4096, %s26, [#allocation3], 128, 128, 8
    $region5: #{tpu_custom_call.1} parent=1 // pred_fallthru
      _
    // Predicated region
    $region6: #{tpu_custom_call.1} parent=1 // pred_check
      _
    $region7: #{tpu_custom_call.1} parent=1 // pred_check_branch
      %33 = sbr.rel (0) target = $region9
    $region8: #{tpu_custom_call.1} parent=1 // pred_region
      %s35 = ssub.s32 512, 512
      %36 = vsyncadd [#allocation6], %s35
      %s37 = sshll.u32 [#allocation5], 4
      %s38 = int_to_ptr.vmem [resolvable:$true] %s37
      %43 = dma.hbm_to_vmem [thread:$0]  %s1, 512, %s38, [#allocation6], 128, 128, 8
    $region9: #{tpu_custom_call.1} parent=1 // pred_fallthru
      _
    // Predicated region
    $region10: #{tpu_custom_call.1} parent=1 // pred_check
      _
    $region11: #{tpu_custom_call.1} parent=1 // pred_check_branch
      %45 = sbr.rel (0) target = $region13
    $region12: #{tpu_custom_call.1} parent=1 // pred_region
      _
    $region13: #{tpu_custom_call.1} parent=1 // pred_fallthru
      _
    // Predicated region
    $region14: #{tpu_custom_call.1} parent=1 // pred_check
      _
    $region15: #{tpu_custom_call.1} parent=1 // pred_check_branch
      %47 = sbr.rel (0) target = $region17
    $region16: #{tpu_custom_call.1} parent=1 // pred_region
      _
    $region17: #{tpu_custom_call.1} parent=1 // pred_fallthru
      _
    // Predicated region
    $region18: #{tpu_custom_call.1} parent=1 // pred_check
      _
    $region19: #{tpu_custom_call.1} parent=1 // pred_check_branch
      %49 = sbr.rel (0) target = $region21
    $region20: #{tpu_custom_call.1} parent=1 // pred_region
      _
    $region21: #{tpu_custom_call.1} parent=1 // pred_fallthru
      _
    // Predicated region
    $region22: #{tpu_custom_call.1} parent=1 // pred_check
      _
    $region23: #{tpu_custom_call.1} parent=1 // pred_check_branch
      %51 = sbr.rel (0) target = $region25
    $region24: #{tpu_custom_call.1} parent=1 // pred_region
      _
    $region25: #{tpu_custom_call.1} parent=1 // pred_fallthru
      _
    // Predicated region
    $region26: #{tpu_custom_call.1} parent=1 // pred_check
      _
    $region27: #{tpu_custom_call.1} parent=1 // pred_check_branch
      %53 = sbr.rel (0) target = $region29
    $region28: #{tpu_custom_call.1} parent=1 // pred_region
      _
    $region29: #{tpu_custom_call.1} parent=1 // pred_fallthru
      _
    // Predicated region
    $region30: #{tpu_custom_call.1} parent=1 // pred_check
      _
    $region31: #{tpu_custom_call.1} parent=1 // pred_check_branch
      %55 = sbr.rel (0) target = $region33
    $region32: #{tpu_custom_call.1} parent=1 // pred_region
      _
    $region33: #{tpu_custom_call.1} parent=1 // pred_fallthru
      _
    // Predicated region
    $region34: #{tpu_custom_call.1} parent=1 // pred_check
      _
    $region35: #{tpu_custom_call.1} parent=1 // pred_check_branch
      %57 = sbr.rel (0) target = $region37
    $region36: #{tpu_custom_call.1} parent=1 // pred_region
      _
    $region37: #{tpu_custom_call.1} parent=1 // pred_fallthru
      _
    // Predicated region
    $region38: #{tpu_custom_call.1} parent=1 // pred_check
      _
    $region39: #{tpu_custom_call.1} parent=1 // pred_check_branch
      %59 = sbr.rel (0) target = $region41
    $region40: #{tpu_custom_call.1} parent=1 // pred_region
      _
    $region41: #{tpu_custom_call.1} parent=1 // pred_fallthru
      _
    // Predicated region
    $region42: #{tpu_custom_call.1} parent=1 // pred_check
      _
    $region43: #{tpu_custom_call.1} parent=1 // pred_check_branch
      %61 = sbr.rel (0) target = $region45
    $region44: #{tpu_custom_call.1} parent=1 // pred_region
      _
    $region45: #{tpu_custom_call.1} parent=1 // pred_fallthru
      _
    // Predicated region
    $region46: #{tpu_custom_call.1} parent=1 // pred_check
      _
    $region47: #{tpu_custom_call.1} parent=1 // pred_check_branch
      %63 = sbr.rel (0) target = $region49
    $region48: #{tpu_custom_call.1} parent=1 // pred_region
      _
    $region49: #{tpu_custom_call.1} parent=1 // pred_fallthru
      _
    // Predicated region
    $region50: #{tpu_custom_call.1} parent=1 // pred_check
      _
    $region51: #{tpu_custom_call.1} parent=1 // pred_check_branch
      %65 = sbr.rel (0) target = $region53
    $region52: #{tpu_custom_call.1} parent=1 // pred_region
      %66 = dma.done [#allocation3], 4096
    $region53: #{tpu_custom_call.1} parent=1 // pred_fallthru
      _
    // Predicated region
    $region54: #{tpu_custom_call.1} parent=1 // pred_check
      _
    $region55: #{tpu_custom_call.1} parent=1 // pred_check_branch
      %68 = sbr.rel (0) target = $region57
    $region56: #{tpu_custom_call.1} parent=1 // pred_region
      %69 = dma.done [#allocation6], 512
    $region57: #{tpu_custom_call.1} parent=1 // pred_fallthru
      _
    %v71 = vld [vmem:[#allocation2] sm:$0xff]
    %v72 = vld [vmem:[#allocation2 + $0x8] sm:$0xff]
    %v73 = vld [vmem:[#allocation2 + $0x10] sm:$0xff]
    %v74 = vld [vmem:[#allocation2 + $0x18] sm:$0xff]
    %v75 = vld [vmem:[#allocation2 + $0x20] sm:$0xff]
    %v76 = vld [vmem:[#allocation2 + $0x28] sm:$0xff]
    %v77 = vld [vmem:[#allocation2 + $0x30] sm:$0xff]
    %v78 = vld [vmem:[#allocation2 + $0x38] sm:$0xff]
    %v79 = vld [vmem:[#allocation2 + $0x40] sm:$0xff]
    %v80 = vld [vmem:[#allocation2 + $0x48] sm:$0xff]
    %v81 = vld [vmem:[#allocation2 + $0x50] sm:$0xff]
    %v82 = vld [vmem:[#allocation2 + $0x58] sm:$0xff]
    %v83 = vld [vmem:[#allocation2 + $0x60] sm:$0xff]
    %v84 = vld [vmem:[#allocation2 + $0x68] sm:$0xff]
    %v85 = vld [vmem:[#allocation2 + $0x70] sm:$0xff]
    %v86 = vld [vmem:[#allocation2 + $0x78] sm:$0xff]
    %v87 = vld [vmem:[#allocation2 + $0x80] sm:$0xff]
    %v88 = vld [vmem:[#allocation2 + $0x88] sm:$0xff]
    %v89 = vld [vmem:[#allocation2 + $0x90] sm:$0xff]
    %v90 = vld [vmem:[#allocation2 + $0x98] sm:$0xff]
    %v91 = vld [vmem:[#allocation2 + $0xa0] sm:$0xff]
    %v92 = vld [vmem:[#allocation2 + $0xa8] sm:$0xff]
    %v93 = vld [vmem:[#allocation2 + $0xb0] sm:$0xff]
    %v94 = vld [vmem:[#allocation2 + $0xb8] sm:$0xff]
    %v95 = vld [vmem:[#allocation2 + $0xc0] sm:$0xff]
    %v96 = vld [vmem:[#allocation2 + $0xc8] sm:$0xff]
    %v97 = vld [vmem:[#allocation2 + $0xd0] sm:$0xff]
    %v98 = vld [vmem:[#allocation2 + $0xd8] sm:$0xff]
    %v99 = vld [vmem:[#allocation2 + $0xe0] sm:$0xff]
    %v100 = vld [vmem:[#allocation2 + $0xe8] sm:$0xff]
    %v101 = vld [vmem:[#allocation2 + $0xf0] sm:$0xff]
    %v102 = vld [vmem:[#allocation2 + $0xf8] sm:$0xff]
    %v103 = vld [vmem:[%s2] sm:$0x1]
    %v104 = vld [vmem:[%s3] sm:$0x1]
    %vm105 = vcmask 523264
    %v106 = vsel %vm105, %v71, 0.0
    %107 = vadd.xlane.f32.xlu0 %v106
    %v108 = vpop.xlane.xlu0 %107
    %v109 = vsel %vm105, %v72, 0.0
    %110 = vadd.xlane.f32.xlu0 %v109
    %v111 = vpop.xlane.xlu0 %110
    %v112 = vsel %vm105, %v73, 0.0
    %113 = vadd.xlane.f32.xlu0 %v112
    %v114 = vpop.xlane.xlu0 %113
    %v115 = vsel %vm105, %v74, 0.0
    %116 = vadd.xlane.f32.xlu0 %v115
    %v117 = vpop.xlane.xlu0 %116
    %v118 = vsel %vm105, %v75, 0.0
    %119 = vadd.xlane.f32.xlu0 %v118
    %v120 = vpop.xlane.xlu0 %119
    %v121 = vsel %vm105, %v76, 0.0
    %122 = vadd.xlane.f32.xlu0 %v121
    %v123 = vpop.xlane.xlu0 %122
    %v124 = vsel %vm105, %v77, 0.0
    %125 = vadd.xlane.f32.xlu0 %v124
    %v126 = vpop.xlane.xlu0 %125
    %v127 = vsel %vm105, %v78, 0.0
    %128 = vadd.xlane.f32.xlu0 %v127
    %v129 = vpop.xlane.xlu0 %128
    %v130 = vsel %vm105, %v79, 0.0
    %131 = vadd.xlane.f32.xlu0 %v130
    %v132 = vpop.xlane.xlu0 %131
    %v133 = vsel %vm105, %v80, 0.0
    %134 = vadd.xlane.f32.xlu0 %v133
    %v135 = vpop.xlane.xlu0 %134
    %v136 = vsel %vm105, %v81, 0.0
    %137 = vadd.xlane.f32.xlu0 %v136
    %v138 = vpop.xlane.xlu0 %137
    %v139 = vsel %vm105, %v82, 0.0
    %140 = vadd.xlane.f32.xlu0 %v139
    %v141 = vpop.xlane.xlu0 %140
    %v142 = vsel %vm105, %v83, 0.0
    %143 = vadd.xlane.f32.xlu0 %v142
    %v144 = vpop.xlane.xlu0 %143
    %v145 = vsel %vm105, %v84, 0.0
    %146 = vadd.xlane.f32.xlu0 %v145
    %v147 = vpop.xlane.xlu0 %146
    %v148 = vsel %vm105, %v85, 0.0
    %149 = vadd.xlane.f32.xlu0 %v148
    %v150 = vpop.xlane.xlu0 %149
    %v151 = vsel %vm105, %v86, 0.0
    %152 = vadd.xlane.f32.xlu0 %v151
    %v153 = vpop.xlane.xlu0 %152
    %v154 = vsel %vm105, %v87, 0.0
    %155 = vadd.xlane.f32.xlu0 %v154
    %v156 = vpop.xlane.xlu0 %155
    %v157 = vsel %vm105, %v88, 0.0
    %158 = vadd.xlane.f32.xlu0 %v157
    %v159 = vpop.xlane.xlu0 %158
    %v160 = vsel %vm105, %v89, 0.0
    %161 = vadd.xlane.f32.xlu0 %v160
    %v162 = vpop.xlane.xlu0 %161
    %v163 = vsel %vm105, %v90, 0.0
    %164 = vadd.xlane.f32.xlu0 %v163
    %v165 = vpop.xlane.xlu0 %164
    %v166 = vsel %vm105, %v91, 0.0
    %167 = vadd.xlane.f32.xlu0 %v166
    %v168 = vpop.xlane.xlu0 %167
    %v169 = vsel %vm105, %v92, 0.0
    %170 = vadd.xlane.f32.xlu0 %v169
    %v171 = vpop.xlane.xlu0 %170
    %v172 = vsel %vm105, %v93, 0.0
    %173 = vadd.xlane.f32.xlu0 %v172
    %v174 = vpop.xlane.xlu0 %173
    %v175 = vsel %vm105, %v94, 0.0
    %176 = vadd.xlane.f32.xlu0 %v175
    %v177 = vpop.xlane.xlu0 %176
    %v178 = vsel %vm105, %v95, 0.0
    %179 = vadd.xlane.f32.xlu0 %v178
    %v180 = vpop.xlane.xlu0 %179
    %v181 = vsel %vm105, %v96, 0.0
    %182 = vadd.xlane.f32.xlu0 %v181
    %v183 = vpop.xlane.xlu0 %182
    %v184 = vsel %vm105, %v97, 0.0
    %185 = vadd.xlane.f32.xlu0 %v184
    %v186 = vpop.xlane.xlu0 %185
    %v187 = vsel %vm105, %v98, 0.0
    %188 = vadd.xlane.f32.xlu0 %v187
    %v189 = vpop.xlane.xlu0 %188
    %v190 = vsel %vm105, %v99, 0.0
    %191 = vadd.xlane.f32.xlu0 %v190
    %v192 = vpop.xlane.xlu0 %191
    %v193 = vsel %vm105, %v100, 0.0
    %194 = vadd.xlane.f32.xlu0 %v193
    %v195 = vpop.xlane.xlu0 %194
    %v196 = vsel %vm105, %v101, 0.0
    %197 = vadd.xlane.f32.xlu0 %v196
    %v198 = vpop.xlane.xlu0 %197
    %v199 = vsel %vm105, %v102, 0.0
    %200 = vadd.xlane.f32.xlu0 %v199
    %v201 = vpop.xlane.xlu0 %200
    %v202 = vrcp.pop 64.0
    %v203 = vmul.f32 %v108, %v202
    %v204 = vmul.f32 %v111, %v202
    %v205 = vmul.f32 %v114, %v202
    %v206 = vmul.f32 %v117, %v202
    %v207 = vmul.f32 %v120, %v202
    %v208 = vmul.f32 %v123, %v202
    %v209 = vmul.f32 %v126, %v202
    %v210 = vmul.f32 %v129, %v202
    %v211 = vmul.f32 %v132, %v202
    %v212 = vmul.f32 %v135, %v202
    %v213 = vmul.f32 %v138, %v202
    %v214 = vmul.f32 %v141, %v202
    %v215 = vmul.f32 %v144, %v202
    %v216 = vmul.f32 %v147, %v202
    %v217 = vmul.f32 %v150, %v202
    %v218 = vmul.f32 %v153, %v202
    %v219 = vmul.f32 %v156, %v202
    %v220 = vmul.f32 %v159, %v202
    %v221 = vmul.f32 %v162, %v202
    %v222 = vmul.f32 %v165, %v202
    %v223 = vmul.f32 %v168, %v202
    %v224 = vmul.f32 %v171, %v202
    %v225 = vmul.f32 %v174, %v202
    %v226 = vmul.f32 %v177, %v202
    %v227 = vmul.f32 %v180, %v202
    %v228 = vmul.f32 %v183, %v202
    %v229 = vmul.f32 %v186, %v202
    %v230 = vmul.f32 %v189, %v202
    %v231 = vmul.f32 %v192, %v202
    %v232 = vmul.f32 %v195, %v202
    %v233 = vmul.f32 %v198, %v202
    %v234 = vmul.f32 %v201, %v202
    %v235 = vsub.f32 %v71, %v203
    %v236 = vsub.f32 %v72, %v204
    %v237 = vsub.f32 %v73, %v205
    %v238 = vsub.f32 %v74, %v206
    %v239 = vsub.f32 %v75, %v207
    %v240 = vsub.f32 %v76, %v208
    %v241 = vsub.f32 %v77, %v209
    %v242 = vsub.f32 %v78, %v210
    %v243 = vsub.f32 %v79, %v211
    %v244 = vsub.f32 %v80, %v212
    %v245 = vsub.f32 %v81, %v213
    %v246 = vsub.f32 %v82, %v214
    %v247 = vsub.f32 %v83, %v215
    %v248 = vsub.f32 %v84, %v216
    %v249 = vsub.f32 %v85, %v217
    %v250 = vsub.f32 %v86, %v218
    %v251 = vsub.f32 %v87, %v219
    %v252 = vsub.f32 %v88, %v220
    %v253 = vsub.f32 %v89, %v221
    %v254 = vsub.f32 %v90, %v222
    %v255 = vsub.f32 %v91, %v223
    %v256 = vsub.f32 %v92, %v224
    %v257 = vsub.f32 %v93, %v225
    %v258 = vsub.f32 %v94, %v226
    %v259 = vsub.f32 %v95, %v227
    %v260 = vsub.f32 %v96, %v228
    %v261 = vsub.f32 %v97, %v229
    %v262 = vsub.f32 %v98, %v230
    %v263 = vsub.f32 %v99, %v231
    %v264 = vsub.f32 %v100, %v232
    %v265 = vsub.f32 %v101, %v233
    %v266 = vsub.f32 %v102, %v234
    %v267 = vmul.f32 %v235, %v235
    %v268 = vmul.f32 %v236, %v236
    %v269 = vmul.f32 %v237, %v237
    %v270 = vmul.f32 %v238, %v238
    %v271 = vmul.f32 %v239, %v239
    %v272 = vmul.f32 %v240, %v240
    %v273 = vmul.f32 %v241, %v241
    %v274 = vmul.f32 %v242, %v242
    %v275 = vmul.f32 %v243, %v243
    %v276 = vmul.f32 %v244, %v244
    %v277 = vmul.f32 %v245, %v245
    %v278 = vmul.f32 %v246, %v246
    %v279 = vmul.f32 %v247, %v247
    %v280 = vmul.f32 %v248, %v248
    %v281 = vmul.f32 %v249, %v249
    %v282 = vmul.f32 %v250, %v250
    %v283 = vmul.f32 %v251, %v251
    %v284 = vmul.f32 %v252, %v252
    %v285 = vmul.f32 %v253, %v253
    %v286 = vmul.f32 %v254, %v254
    %v287 = vmul.f32 %v255, %v255
    %v288 = vmul.f32 %v256, %v256
    %v289 = vmul.f32 %v257, %v257
    %v290 = vmul.f32 %v258, %v258
    %v291 = vmul.f32 %v259, %v259
    %v292 = vmul.f32 %v260, %v260
    %v293 = vmul.f32 %v261, %v261
    %v294 = vmul.f32 %v262, %v262
    %v295 = vmul.f32 %v263, %v263
    %v296 = vmul.f32 %v264, %v264
    %v297 = vmul.f32 %v265, %v265
    %v298 = vmul.f32 %v266, %v266
    %v299 = vsel %vm105, %v267, 0.0
    %300 = vadd.xlane.f32.xlu0 %v299
    %v301 = vpop.xlane.xlu0 %300
    %v302 = vsel %vm105, %v268, 0.0
    %303 = vadd.xlane.f32.xlu0 %v302
    %v304 = vpop.xlane.xlu0 %303
    %v305 = vsel %vm105, %v269, 0.0
    %306 = vadd.xlane.f32.xlu0 %v305
    %v307 = vpop.xlane.xlu0 %306
    %v308 = vsel %vm105, %v270, 0.0
    %309 = vadd.xlane.f32.xlu0 %v308
    %v310 = vpop.xlane.xlu0 %309
    %v311 = vsel %vm105, %v271, 0.0
    %312 = vadd.xlane.f32.xlu0 %v311
    %v313 = vpop.xlane.xlu0 %312
    %v314 = vsel %vm105, %v272, 0.0
    %315 = vadd.xlane.f32.xlu0 %v314
    %v316 = vpop.xlane.xlu0 %315
    %v317 = vsel %vm105, %v273, 0.0
    %318 = vadd.xlane.f32.xlu0 %v317
    %v319 = vpop.xlane.xlu0 %318
    %v320 = vsel %vm105, %v274, 0.0
    %321 = vadd.xlane.f32.xlu0 %v320
    %v322 = vpop.xlane.xlu0 %321
    %v323 = vsel %vm105, %v275, 0.0
    %324 = vadd.xlane.f32.xlu0 %v323
    %v325 = vpop.xlane.xlu0 %324
    %v326 = vsel %vm105, %v276, 0.0
    %327 = vadd.xlane.f32.xlu0 %v326
    %v328 = vpop.xlane.xlu0 %327
    %v329 = vsel %vm105, %v277, 0.0
    %330 = vadd.xlane.f32.xlu0 %v329
    %v331 = vpop.xlane.xlu0 %330
    %v332 = vsel %vm105, %v278, 0.0
    %333 = vadd.xlane.f32.xlu0 %v332
    %v334 = vpop.xlane.xlu0 %333
    %v335 = vsel %vm105, %v279, 0.0
    %336 = vadd.xlane.f32.xlu0 %v335
    %v337 = vpop.xlane.xlu0 %336
    %v338 = vsel %vm105, %v280, 0.0
    %339 = vadd.xlane.f32.xlu0 %v338
    %v340 = vpop.xlane.xlu0 %339
    %v341 = vsel %vm105, %v281, 0.0
    %342 = vadd.xlane.f32.xlu0 %v341
    %v343 = vpop.xlane.xlu0 %342
    %v344 = vsel %vm105, %v282, 0.0
    %345 = vadd.xlane.f32.xlu0 %v344
    %v346 = vpop.xlane.xlu0 %345
    %v347 = vsel %vm105, %v283, 0.0
    %348 = vadd.xlane.f32.xlu0 %v347
    %v349 = vpop.xlane.xlu0 %348
    %v350 = vsel %vm105, %v284, 0.0
    %351 = vadd.xlane.f32.xlu0 %v350
    %v352 = vpop.xlane.xlu0 %351
    %v353 = vsel %vm105, %v285, 0.0
    %354 = vadd.xlane.f32.xlu0 %v353
    %v355 = vpop.xlane.xlu0 %354
    %v356 = vsel %vm105, %v286, 0.0
    %357 = vadd.xlane.f32.xlu0 %v356
    %v358 = vpop.xlane.xlu0 %357
    %v359 = vsel %vm105, %v287, 0.0
    %360 = vadd.xlane.f32.xlu0 %v359
    %v361 = vpop.xlane.xlu0 %360
    %v362 = vsel %vm105, %v288, 0.0
    %363 = vadd.xlane.f32.xlu0 %v362
    %v364 = vpop.xlane.xlu0 %363
    %v365 = vsel %vm105, %v289, 0.0
    %366 = vadd.xlane.f32.xlu0 %v365
    %v367 = vpop.xlane.xlu0 %366
    %v368 = vsel %vm105, %v290, 0.0
    %369 = vadd.xlane.f32.xlu0 %v368
    %v370 = vpop.xlane.xlu0 %369
    %v371 = vsel %vm105, %v291, 0.0
    %372 = vadd.xlane.f32.xlu0 %v371
    %v373 = vpop.xlane.xlu0 %372
    %v374 = vsel %vm105, %v292, 0.0
    %375 = vadd.xlane.f32.xlu0 %v374
    %v376 = vpop.xlane.xlu0 %375
    %v377 = vsel %vm105, %v293, 0.0
    %378 = vadd.xlane.f32.xlu0 %v377
    %v379 = vpop.xlane.xlu0 %378
    %v380 = vsel %vm105, %v294, 0.0
    %381 = vadd.xlane.f32.xlu0 %v380
    %v382 = vpop.xlane.xlu0 %381
    %v383 = vsel %vm105, %v295, 0.0
    %384 = vadd.xlane.f32.xlu0 %v383
    %v385 = vpop.xlane.xlu0 %384
    %v386 = vsel %vm105, %v296, 0.0
    %387 = vadd.xlane.f32.xlu0 %v386
    %v388 = vpop.xlane.xlu0 %387
    %v389 = vsel %vm105, %v297, 0.0
    %390 = vadd.xlane.f32.xlu0 %v389
    %v391 = vpop.xlane.xlu0 %390
    %v392 = vsel %vm105, %v298, 0.0
    %393 = vadd.xlane.f32.xlu0 %v392
    %v394 = vpop.xlane.xlu0 %393
    %v395 = vmul.f32 %v301, %v202
    %v396 = vmul.f32 %v304, %v202
    %v397 = vmul.f32 %v307, %v202
    %v398 = vmul.f32 %v310, %v202
    %v399 = vmul.f32 %v313, %v202
    %v400 = vmul.f32 %v316, %v202
    %v401 = vmul.f32 %v319, %v202
    %v402 = vmul.f32 %v322, %v202
    %v403 = vmul.f32 %v325, %v202
    %v404 = vmul.f32 %v328, %v202
    %v405 = vmul.f32 %v331, %v202
    %v406 = vmul.f32 %v334, %v202
    %v407 = vmul.f32 %v337, %v202
    %v408 = vmul.f32 %v340, %v202
    %v409 = vmul.f32 %v343, %v202
    %v410 = vmul.f32 %v346, %v202
    %v411 = vmul.f32 %v349, %v202
    %v412 = vmul.f32 %v352, %v202
    %v413 = vmul.f32 %v355, %v202
    %v414 = vmul.f32 %v358, %v202
    %v415 = vmul.f32 %v361, %v202
    %v416 = vmul.f32 %v364, %v202
    %v417 = vmul.f32 %v367, %v202
    %v418 = vmul.f32 %v370, %v202
    %v419 = vmul.f32 %v373, %v202
    %v420 = vmul.f32 %v376, %v202
    %v421 = vmul.f32 %v379, %v202
    %v422 = vmul.f32 %v382, %v202
    %v423 = vmul.f32 %v385, %v202
    %v424 = vmul.f32 %v388, %v202
    %v425 = vmul.f32 %v391, %v202
    %v426 = vmul.f32 %v394, %v202
    %v427 = vadd.f32 %v395, 1e-05
    %v428 = vadd.f32 %v396, 1e-05
    %v429 = vadd.f32 %v397, 1e-05
    %v430 = vadd.f32 %v398, 1e-05
    %v431 = vadd.f32 %v399, 1e-05
    %v432 = vadd.f32 %v400, 1e-05
    %v433 = vadd.f32 %v401, 1e-05
    %v434 = vadd.f32 %v402, 1e-05
    %v435 = vadd.f32 %v403, 1e-05
    %v436 = vadd.f32 %v404, 1e-05
    %v437 = vadd.f32 %v405, 1e-05
    %v438 = vadd.f32 %v406, 1e-05
    %v439 = vadd.f32 %v407, 1e-05
    %v440 = vadd.f32 %v408, 1e-05
    %v441 = vadd.f32 %v409, 1e-05
    %v442 = vadd.f32 %v410, 1e-05
    %v443 = vadd.f32 %v411, 1e-05
    %v444 = vadd.f32 %v412, 1e-05
    %v445 = vadd.f32 %v413, 1e-05
    %v446 = vadd.f32 %v414, 1e-05
    %v447 = vadd.f32 %v415, 1e-05
    %v448 = vadd.f32 %v416, 1e-05
    %v449 = vadd.f32 %v417, 1e-05
    %v450 = vadd.f32 %v418, 1e-05
    %v451 = vadd.f32 %v419, 1e-05
    %v452 = vadd.f32 %v420, 1e-05
    %v453 = vadd.f32 %v421, 1e-05
    %v454 = vadd.f32 %v422, 1e-05
    %v455 = vadd.f32 %v423, 1e-05
    %v456 = vadd.f32 %v424, 1e-05
    %v457 = vadd.f32 %v425, 1e-05
    %v458 = vadd.f32 %v426, 1e-05
    %v459 = vrsqrt.pop %v427
    %v460 = vrsqrt.pop %v428
    %v461 = vrsqrt.pop %v429
    %v462 = vrsqrt.pop %v430
    %v463 = vrsqrt.pop %v431
    %v464 = vrsqrt.pop %v432
    %v465 = vrsqrt.pop %v433
    %v466 = vrsqrt.pop %v434
    %v467 = vrsqrt.pop %v435
    %v468 = vrsqrt.pop %v436
    %v469 = vrsqrt.pop %v437
    %v470 = vrsqrt.pop %v438
    %v471 = vrsqrt.pop %v439
    %v472 = vrsqrt.pop %v440
    %v473 = vrsqrt.pop %v441
    %v474 = vrsqrt.pop %v442
    %v475 = vrsqrt.pop %v443
    %v476 = vrsqrt.pop %v444
    %v477 = vrsqrt.pop %v445
    %v478 = vrsqrt.pop %v446
    %v479 = vrsqrt.pop %v447
    %v480 = vrsqrt.pop %v448
    %v481 = vrsqrt.pop %v449
    %v482 = vrsqrt.pop %v450
    %v483 = vrsqrt.pop %v451
    %v484 = vrsqrt.pop %v452
    %v485 = vrsqrt.pop %v453
    %v486 = vrsqrt.pop %v454
    %v487 = vrsqrt.pop %v455
    %v488 = vrsqrt.pop %v456
    %v489 = vrsqrt.pop %v457
    %v490 = vrsqrt.pop %v458
    %v491 = vmul.f32 %v235, %v459
    %v492 = vmul.f32 %v236, %v460
    %v493 = vmul.f32 %v237, %v461
    %v494 = vmul.f32 %v238, %v462
    %v495 = vmul.f32 %v239, %v463
    %v496 = vmul.f32 %v240, %v464
    %v497 = vmul.f32 %v241, %v465
    %v498 = vmul.f32 %v242, %v466
    %v499 = vmul.f32 %v243, %v467
    %v500 = vmul.f32 %v244, %v468
    %v501 = vmul.f32 %v245, %v469
    %v502 = vmul.f32 %v246, %v470
    %v503 = vmul.f32 %v247, %v471
    %v504 = vmul.f32 %v248, %v472
    %v505 = vmul.f32 %v249, %v473
    %v506 = vmul.f32 %v250, %v474
    %v507 = vmul.f32 %v251, %v475
    %v508 = vmul.f32 %v252, %v476
    %v509 = vmul.f32 %v253, %v477
    %v510 = vmul.f32 %v254, %v478
    %v511 = vmul.f32 %v255, %v479
    %v512 = vmul.f32 %v256, %v480
    %v513 = vmul.f32 %v257, %v481
    %v514 = vmul.f32 %v258, %v482
    %v515 = vmul.f32 %v259, %v483
    %v516 = vmul.f32 %v260, %v484
    %v517 = vmul.f32 %v261, %v485
    %v518 = vmul.f32 %v262, %v486
    %v519 = vmul.f32 %v263, %v487
    %v520 = vmul.f32 %v264, %v488
    %v521 = vmul.f32 %v265, %v489
    %v522 = vmul.f32 %v266, %v490
    %v524 = vlaneseq
    %v525 = vshrl.u32 %v524, 7
    %v526 = vsub.s32 0, %v525
    %v527 = vrot.slane %v103, %v526
    %v529 = vmul.f32 %v491, %v527
    %v530 = vmul.f32 %v492, %v527
    %v531 = vmul.f32 %v493, %v527
    %v532 = vmul.f32 %v494, %v527
    %v533 = vmul.f32 %v495, %v527
    %v534 = vmul.f32 %v496, %v527
    %v535 = vmul.f32 %v497, %v527
    %v536 = vmul.f32 %v498, %v527
    %v537 = vmul.f32 %v499, %v527
    %v538 = vmul.f32 %v500, %v527
    %v539 = vmul.f32 %v501, %v527
    %v540 = vmul.f32 %v502, %v527
    %v541 = vmul.f32 %v503, %v527
    %v542 = vmul.f32 %v504, %v527
    %v543 = vmul.f32 %v505, %v527
    %v544 = vmul.f32 %v506, %v527
    %v545 = vmul.f32 %v507, %v527
    %v546 = vmul.f32 %v508, %v527
    %v547 = vmul.f32 %v509, %v527
    %v548 = vmul.f32 %v510, %v527
    %v549 = vmul.f32 %v511, %v527
    %v550 = vmul.f32 %v512, %v527
    %v551 = vmul.f32 %v513, %v527
    %v552 = vmul.f32 %v514, %v527
    %v553 = vmul.f32 %v515, %v527
    %v554 = vmul.f32 %v516, %v527
    %v555 = vmul.f32 %v517, %v527
    %v556 = vmul.f32 %v518, %v527
    %v557 = vmul.f32 %v519, %v527
    %v558 = vmul.f32 %v520, %v527
    %v559 = vmul.f32 %v521, %v527
    %v560 = vmul.f32 %v522, %v527
    %v562 = vlaneseq
    %v563 = vshrl.u32 %v562, 7
    %v564 = vsub.s32 0, %v563
    %v565 = vrot.slane %v104, %v564
    %v567 = vadd.f32 %v529, %v565
    %v568 = vadd.f32 %v530, %v565
    %v569 = vadd.f32 %v531, %v565
    %v570 = vadd.f32 %v532, %v565
    %v571 = vadd.f32 %v533, %v565
    %v572 = vadd.f32 %v534, %v565
    %v573 = vadd.f32 %v535, %v565
    %v574 = vadd.f32 %v536, %v565
    %v575 = vadd.f32 %v537, %v565
    %v576 = vadd.f32 %v538, %v565
    %v577 = vadd.f32 %v539, %v565
    %v578 = vadd.f32 %v540, %v565
    %v579 = vadd.f32 %v541, %v565
    %v580 = vadd.f32 %v542, %v565
    %v581 = vadd.f32 %v543, %v565
    %v582 = vadd.f32 %v544, %v565
    %v583 = vadd.f32 %v545, %v565
    %v584 = vadd.f32 %v546, %v565
    %v585 = vadd.f32 %v547, %v565
    %v586 = vadd.f32 %v548, %v565
    %v587 = vadd.f32 %v549, %v565
    %v588 = vadd.f32 %v550, %v565
    %v589 = vadd.f32 %v551, %v565
    %v590 = vadd.f32 %v552, %v565
    %v591 = vadd.f32 %v553, %v565
    %v592 = vadd.f32 %v554, %v565
    %v593 = vadd.f32 %v555, %v565
    %v594 = vadd.f32 %v556, %v565
    %v595 = vadd.f32 %v557, %v565
    %v596 = vadd.f32 %v558, %v565
    %v597 = vadd.f32 %v559, %v565
    %v598 = vadd.f32 %v560, %v565
    %v599 = vpack.c.bf16 %v568, %v567
    %v600 = vpack.c.bf16 %v570, %v569
    %v601 = vpack.c.bf16 %v572, %v571
    %v602 = vpack.c.bf16 %v574, %v573
    %v603 = vpack.c.bf16 %v576, %v575
    %v604 = vpack.c.bf16 %v578, %v577
    %v605 = vpack.c.bf16 %v580, %v579
    %v606 = vpack.c.bf16 %v582, %v581
    %v607 = vpack.c.bf16 %v584, %v583
    %v608 = vpack.c.bf16 %v586, %v585
    %v609 = vpack.c.bf16 %v588, %v587
    %v610 = vpack.c.bf16 %v590, %v589
    %v611 = vpack.c.bf16 %v592, %v591
    %v612 = vpack.c.bf16 %v594, %v593
    %v613 = vpack.c.bf16 %v596, %v595
    %v614 = vpack.c.bf16 %v598, %v597
    %v615 = vld [vmem:[%s4] sm:$0xff]
    %v616 = vld [vmem:[%s4 + $0x8] sm:$0xff]
    %v617 = vld [vmem:[%s4 + $0x10] sm:$0xff]
    %v618 = vld [vmem:[%s4 + $0x18] sm:$0xff]
    %v619 = vld [vmem:[%s4 + $0x20] sm:$0xff]
    %v620 = vld [vmem:[%s4 + $0x28] sm:$0xff]
    %v621 = vld [vmem:[%s4 + $0x30] sm:$0xff]
    %v622 = vld [vmem:[%s4 + $0x38] sm:$0xff]
    %v623 = vld [vmem:[%s4 + $0x40] sm:$0xff]
    %v624 = vld [vmem:[%s4 + $0x48] sm:$0xff]
    %v625 = vld [vmem:[%s4 + $0x50] sm:$0xff]
    %v626 = vld [vmem:[%s4 + $0x58] sm:$0xff]
    %v627 = vld [vmem:[%s4 + $0x60] sm:$0xff]
    %v628 = vld [vmem:[%s4 + $0x68] sm:$0xff]
    %v629 = vld [vmem:[%s4 + $0x70] sm:$0xff]
    %v630 = vld [vmem:[%s4 + $0x78] sm:$0xff]
    %v647 = vunpack.c.l.b16 %v615
    %v648 = vunpack.c.h.b16 %v615
    %v649 = vunpack.c.l.b16 %v616
    %v650 = vunpack.c.h.b16 %v616
    %v651 = vunpack.c.l.b16 %v617
    %v652 = vunpack.c.h.b16 %v617
    %v653 = vunpack.c.l.b16 %v618
    %v654 = vunpack.c.h.b16 %v618
    %v655 = vunpack.c.l.b16 %v619
    %v656 = vunpack.c.h.b16 %v619
    %v657 = vunpack.c.l.b16 %v620
    %v658 = vunpack.c.h.b16 %v620
    %v659 = vunpack.c.l.b16 %v621
    %v660 = vunpack.c.h.b16 %v621
    %v661 = vunpack.c.l.b16 %v622
    %v662 = vunpack.c.h.b16 %v622
    %v663 = vunpack.c.l.b16 %v623
    %v664 = vunpack.c.h.b16 %v623
    %v665 = vunpack.c.l.b16 %v624
    %v666 = vunpack.c.h.b16 %v624
    %v667 = vunpack.c.l.b16 %v625
    %v668 = vunpack.c.h.b16 %v625
    %v669 = vunpack.c.l.b16 %v626
    %v670 = vunpack.c.h.b16 %v626
    %v671 = vunpack.c.l.b16 %v627
    %v672 = vunpack.c.h.b16 %v627
    %v673 = vunpack.c.l.b16 %v628
    %v674 = vunpack.c.h.b16 %v628
    %v675 = vunpack.c.l.b16 %v629
    %v676 = vunpack.c.h.b16 %v629
    %v677 = vunpack.c.l.b16 %v630
    %v678 = vunpack.c.h.b16 %v630
    %v679 = vpack.c.b16 %v651, %v647
    %v680 = vpack.c.b16 %v652, %v648
    %v681 = vpack.c.b16 %v653, %v649
    %v682 = vpack.c.b16 %v654, %v650
    %v683 = vpack.c.b16 %v659, %v655
    %v684 = vpack.c.b16 %v660, %v656
    %v685 = vpack.c.b16 %v661, %v657
    %v686 = vpack.c.b16 %v662, %v658
    %v687 = vpack.c.b16 %v667, %v663
    %v688 = vpack.c.b16 %v668, %v664
    %v689 = vpack.c.b16 %v669, %v665
    %v690 = vpack.c.b16 %v670, %v666
    %v691 = vpack.c.b16 %v675, %v671
    %v692 = vpack.c.b16 %v676, %v672
    %v693 = vpack.c.b16 %v677, %v673
    %v694 = vpack.c.b16 %v678, %v674
    %v712 = vsel %vm105, %v599, 0
    %v715 = vsel %vm105, %v600, 0
    %v718 = vsel %vm105, %v601, 0
    %v721 = vsel %vm105, %v602, 0
    %v724 = vsel %vm105, %v603, 0
    %v727 = vsel %vm105, %v604, 0
    %v730 = vsel %vm105, %v605, 0
    %v733 = vsel %vm105, %v606, 0
    %v736 = vsel %vm105, %v607, 0
    %v739 = vsel %vm105, %v608, 0
    %v742 = vsel %vm105, %v609, 0
    %v745 = vsel %vm105, %v610, 0
    %v748 = vsel %vm105, %v611, 0
    %v751 = vsel %vm105, %v612, 0
    %v754 = vsel %vm105, %v613, 0
    %v757 = vsel %vm105, %v614, 0
    %759 = vmatprep.subr.bf16.mxu0 %v680
    %760 = vmatpush1.bf16.msra.mxu0 %v679
    %761 = vmatprep.subr.bf16.mxu0 %v684
    %762 = vmatpush1.bf16.msra.mxu0 %v683
    %763 = vmatprep.subr.bf16.mxu0 %v688
    %764 = vmatpush1.bf16.msra.mxu0 %v687
    %765 = vmatprep.subr.bf16.mxu0 %v692
    %766 = vmatpush1.bf16.msra.mxu0 %v691
    %767 = vmatprep.subr.bf16.mxu0 0
    %768 = vmatpush1.bf16.msra.mxu0 0
    %769 = vmatprep.subr.bf16.mxu0 0
    %770 = vmatpush1.bf16.msra.mxu0 0
    %771 = vmatprep.subr.bf16.mxu0 0
    %772 = vmatpush1.bf16.msra.mxu0 0
    %773 = vmatprep.subr.bf16.mxu0 0
    %774 = vmatpush1.bf16.msra.mxu0 0
    %775 = vmatprep.subr.bf16.mxu0 0
    %776 = vmatpush1.bf16.msra.mxu0 0
    %777 = vmatprep.subr.bf16.mxu0 0
    %778 = vmatpush1.bf16.msra.mxu0 0
    %779 = vmatprep.subr.bf16.mxu0 0
    %780 = vmatpush1.bf16.msra.mxu0 0
    %781 = vmatprep.subr.bf16.mxu0 0
    %782 = vmatpush1.bf16.msra.mxu0 0
    %783 = vmatprep.subr.bf16.mxu0 0
    %784 = vmatpush1.bf16.msra.mxu0 0
    %785 = vmatprep.subr.bf16.mxu0 0
    %786 = vmatpush1.bf16.msra.mxu0 0
    %787 = vmatprep.subr.bf16.mxu0 0
    %788 = vmatpush1.bf16.msra.mxu0 0
    %789 = vmatprep.subr.bf16.mxu0 0
    %790 = vmatpush1.bf16.msra.mxu0 0
    %791 = vmatprep.mubr.bf16.mxu0 0
    %792 = vmatmul.mubr.bf16.gmra.mrb[0].mxu0 %v712
    %v793 = vpop.f32.mrb[0].mxu0
    %v794 = vadd.f32 0.0, %v793
    %v795 = vpop.f32.mrb[0].mxu0
    %v796 = vadd.f32 0.0, %v795
    %v797 = vpop.f32.mrb[0].mxu0
    %v798 = vadd.f32 0.0, %v797
    %v799 = vpop.f32.mrb[0].mxu0
    %v800 = vadd.f32 0.0, %v799
    %801 = vmatprep.mubr.bf16.mxu0 0
    %802 = vmatmul.mubr.bf16.gmra.mrb[0].mxu0 %v715
    %v803 = vpop.f32.mrb[0].mxu0
    %v804 = vadd.f32 0.0, %v803
    %v805 = vpop.f32.mrb[0].mxu0
    %v806 = vadd.f32 0.0, %v805
    %v807 = vpop.f32.mrb[0].mxu0
    %v808 = vadd.f32 0.0, %v807
    %v809 = vpop.f32.mrb[0].mxu0
    %v810 = vadd.f32 0.0, %v809
    %811 = vmatprep.mubr.bf16.mxu0 0
    %812 = vmatmul.mubr.bf16.gmra.mrb[0].mxu0 %v718
    %v813 = vpop.f32.mrb[0].mxu0
    %v814 = vadd.f32 0.0, %v813
    %v815 = vpop.f32.mrb[0].mxu0
    %v816 = vadd.f32 0.0, %v815
    %v817 = vpop.f32.mrb[0].mxu0
    %v818 = vadd.f32 0.0, %v817
    %v819 = vpop.f32.mrb[0].mxu0
    %v820 = vadd.f32 0.0, %v819
    %821 = vmatprep.mubr.bf16.mxu0 0
    %822 = vmatmul.mubr.bf16.gmra.mrb[0].mxu0 %v721
    %v823 = vpop.f32.mrb[0].mxu0
    %v824 = vadd.f32 0.0, %v823
    %v825 = vpop.f32.mrb[0].mxu0
    %v826 = vadd.f32 0.0, %v825
    %v827 = vpop.f32.mrb[0].mxu0
    %v828 = vadd.f32 0.0, %v827
    %v829 = vpop.f32.mrb[0].mxu0
    %v830 = vadd.f32 0.0, %v829
    %831 = vmatprep.mubr.bf16.mxu0 0
    %832 = vmatmul.mubr.bf16.gmra.mrb[0].mxu0 %v724
    %v833 = vpop.f32.mrb[0].mxu0
    %v834 = vadd.f32 0.0, %v833
    %v835 = vpop.f32.mrb[0].mxu0
    %v836 = vadd.f32 0.0, %v835
    %v837 = vpop.f32.mrb[0].mxu0
    %v838 = vadd.f32 0.0, %v837
    %v839 = vpop.f32.mrb[0].mxu0
    %v840 = vadd.f32 0.0, %v839
    %841 = vmatprep.mubr.bf16.mxu0 0
    %842 = vmatmul.mubr.bf16.gmra.mrb[0].mxu0 %v727
    %v843 = vpop.f32.mrb[0].mxu0
    %v844 = vadd.f32 0.0, %v843
    %v845 = vpop.f32.mrb[0].mxu0
    %v846 = vadd.f32 0.0, %v845
    %v847 = vpop.f32.mrb[0].mxu0
    %v848 = vadd.f32 0.0, %v847
    %v849 = vpop.f32.mrb[0].mxu0
    %v850 = vadd.f32 0.0, %v849
    %851 = vmatprep.mubr.bf16.mxu0 0
    %852 = vmatmul.mubr.bf16.gmra.mrb[0].mxu0 %v730
    %v853 = vpop.f32.mrb[0].mxu0
    %v854 = vadd.f32 0.0, %v853
    %v855 = vpop.f32.mrb[0].mxu0
    %v856 = vadd.f32 0.0, %v855
    %v857 = vpop.f32.mrb[0].mxu0
    %v858 = vadd.f32 0.0, %v857
    %v859 = vpop.f32.mrb[0].mxu0
    %v860 = vadd.f32 0.0, %v859
    %861 = vmatprep.mubr.bf16.mxu0 0
    %862 = vmatmul.mubr.bf16.gmra.mrb[0].mxu0 %v733
    %v863 = vpop.f32.mrb[0].mxu0
    %v864 = vadd.f32 0.0, %v863
    %v865 = vpop.f32.mrb[0].mxu0
    %v866 = vadd.f32 0.0, %v865
    %v867 = vpop.f32.mrb[0].mxu0
    %v868 = vadd.f32 0.0, %v867
    %v869 = vpop.f32.mrb[0].mxu0
    %v870 = vadd.f32 0.0, %v869
    %871 = vmatprep.mubr.bf16.mxu0 0
    %872 = vmatmul.mubr.bf16.gmra.mrb[0].mxu0 %v736
    %v873 = vpop.f32.mrb[0].mxu0
    %v874 = vadd.f32 0.0, %v873
    %v875 = vpop.f32.mrb[0].mxu0
    %v876 = vadd.f32 0.0, %v875
    %v877 = vpop.f32.mrb[0].mxu0
    %v878 = vadd.f32 0.0, %v877
    %v879 = vpop.f32.mrb[0].mxu0
    %v880 = vadd.f32 0.0, %v879
    %881 = vmatprep.mubr.bf16.mxu0 0
    %882 = vmatmul.mubr.bf16.gmra.mrb[0].mxu0 %v739
    %v883 = vpop.f32.mrb[0].mxu0
    %v884 = vadd.f32 0.0, %v883
    %v885 = vpop.f32.mrb[0].mxu0
    %v886 = vadd.f32 0.0, %v885
    %v887 = vpop.f32.mrb[0].mxu0
    %v888 = vadd.f32 0.0, %v887
    %v889 = vpop.f32.mrb[0].mxu0
    %v890 = vadd.f32 0.0, %v889
    %891 = vmatprep.mubr.bf16.mxu0 0
    %892 = vmatmul.mubr.bf16.gmra.mrb[0].mxu0 %v742
    %v893 = vpop.f32.mrb[0].mxu0
    %v894 = vadd.f32 0.0, %v893
    %v895 = vpop.f32.mrb[0].mxu0
    %v896 = vadd.f32 0.0, %v895
    %v897 = vpop.f32.mrb[0].mxu0
    %v898 = vadd.f32 0.0, %v897
    %v899 = vpop.f32.mrb[0].mxu0
    %v900 = vadd.f32 0.0, %v899
    %901 = vmatprep.mubr.bf16.mxu0 0
    %902 = vmatmul.mubr.bf16.gmra.mrb[0].mxu0 %v745
    %v903 = vpop.f32.mrb[0].mxu0
    %v904 = vadd.f32 0.0, %v903
    %v905 = vpop.f32.mrb[0].mxu0
    %v906 = vadd.f32 0.0, %v905
    %v907 = vpop.f32.mrb[0].mxu0
    %v908 = vadd.f32 0.0, %v907
    %v909 = vpop.f32.mrb[0].mxu0
    %v910 = vadd.f32 0.0, %v909
    %911 = vmatprep.mubr.bf16.mxu0 0
    %912 = vmatmul.mubr.bf16.gmra.mrb[0].mxu0 %v748
    %v913 = vpop.f32.mrb[0].mxu0
    %v914 = vadd.f32 0.0, %v913
    %v915 = vpop.f32.mrb[0].mxu0
    %v916 = vadd.f32 0.0, %v915
    %v917 = vpop.f32.mrb[0].mxu0
    %v918 = vadd.f32 0.0, %v917
    %v919 = vpop.f32.mrb[0].mxu0
    %v920 = vadd.f32 0.0, %v919
    %921 = vmatprep.mubr.bf16.mxu0 0
    %922 = vmatmul.mubr.bf16.gmra.mrb[0].mxu0 %v751
    %v923 = vpop.f32.mrb[0].mxu0
    %v924 = vadd.f32 0.0, %v923
    %v925 = vpop.f32.mrb[0].mxu0
    %v926 = vadd.f32 0.0, %v925
    %v927 = vpop.f32.mrb[0].mxu0
    %v928 = vadd.f32 0.0, %v927
    %v929 = vpop.f32.mrb[0].mxu0
    %v930 = vadd.f32 0.0, %v929
    %931 = vmatprep.mubr.bf16.mxu0 0
    %932 = vmatmul.mubr.bf16.gmra.mrb[0].mxu0 %v754
    %v933 = vpop.f32.mrb[0].mxu0
    %v934 = vadd.f32 0.0, %v933
    %v935 = vpop.f32.mrb[0].mxu0
    %v936 = vadd.f32 0.0, %v935
    %v937 = vpop.f32.mrb[0].mxu0
    %v938 = vadd.f32 0.0, %v937
    %v939 = vpop.f32.mrb[0].mxu0
    %v940 = vadd.f32 0.0, %v939
    %941 = vmatprep.mubr.bf16.mxu0 0
    %942 = vmatmul.mubr.bf16.gmra.mrb[0].mxu0 %v757
    %v943 = vpop.f32.mrb[0].mxu0
    %v944 = vadd.f32 0.0, %v943
    %v945 = vpop.f32.mrb[0].mxu0
    %v946 = vadd.f32 0.0, %v945
    %v947 = vpop.f32.mrb[0].mxu0
    %v948 = vadd.f32 0.0, %v947
    %v949 = vpop.f32.mrb[0].mxu0
    %v950 = vadd.f32 0.0, %v949
    %951 = vdwg.mxu0
    %952 = vmatprep.subr.bf16.mxu0 %v682
    %953 = vmatpush1.bf16.msra.mxu0 %v681
    %954 = vmatprep.subr.bf16.mxu0 %v686
    %955 = vmatpush1.bf16.msra.mxu0 %v685
    %956 = vmatprep.subr.bf16.mxu0 %v690
    %957 = vmatpush1.bf16.msra.mxu0 %v689
    %958 = vmatprep.subr.bf16.mxu0 %v694
    %959 = vmatpush1.bf16.msra.mxu0 %v693
    %960 = vmatprep.subr.bf16.mxu0 0
    %961 = vmatpush1.bf16.msra.mxu0 0
    %962 = vmatprep.subr.bf16.mxu0 0
    %963 = vmatpush1.bf16.msra.mxu0 0
    %964 = vmatprep.subr.bf16.mxu0 0
    %965 = vmatpush1.bf16.msra.mxu0 0
    %966 = vmatprep.subr.bf16.mxu0 0
    %967 = vmatpush1.bf16.msra.mxu0 0
    %968 = vmatprep.subr.bf16.mxu0 0
    %969 = vmatpush1.bf16.msra.mxu0 0
    %970 = vmatprep.subr.bf16.mxu0 0
    %971 = vmatpush1.bf16.msra.mxu0 0
    %972 = vmatprep.subr.bf16.mxu0 0
    %973 = vmatpush1.bf16.msra.mxu0 0
    %974 = vmatprep.subr.bf16.mxu0 0
    %975 = vmatpush1.bf16.msra.mxu0 0
    %976 = vmatprep.subr.bf16.mxu0 0
    %977 = vmatpush1.bf16.msra.mxu0 0
    %978 = vmatprep.subr.bf16.mxu0 0
    %979 = vmatpush1.bf16.msra.mxu0 0
    %980 = vmatprep.subr.bf16.mxu0 0
    %981 = vmatpush1.bf16.msra.mxu0 0
    %982 = vmatprep.subr.bf16.mxu0 0
    %983 = vmatpush1.bf16.msra.mxu0 0
    %984 = vmatprep.mubr.bf16.mxu0 0
    %985 = vmatmul.mubr.bf16.gmra.mrb[0].mxu0 %v712
    %v986 = vpop.f32.mrb[0].mxu0
    %v987 = vadd.f32 0.0, %v986
    %v988 = vpop.f32.mrb[0].mxu0
    %v989 = vadd.f32 0.0, %v988
    %v990 = vpop.f32.mrb[0].mxu0
    %v991 = vadd.f32 0.0, %v990
    %v992 = vpop.f32.mrb[0].mxu0
    %v993 = vadd.f32 0.0, %v992
    %994 = vmatprep.mubr.bf16.mxu0 0
    %995 = vmatmul.mubr.bf16.gmra.mrb[0].mxu0 %v715
    %v996 = vpop.f32.mrb[0].mxu0
    %v997 = vadd.f32 0.0, %v996
    %v998 = vpop.f32.mrb[0].mxu0
    %v999 = vadd.f32 0.0, %v998
    %v1000 = vpop.f32.mrb[0].mxu0
    %v1001 = vadd.f32 0.0, %v1000
    %v1002 = vpop.f32.mrb[0].mxu0
    %v1003 = vadd.f32 0.0, %v1002
    %1004 = vmatprep.mubr.bf16.mxu0 0
    %1005 = vmatmul.mubr.bf16.gmra.mrb[0].mxu0 %v718
    %v1006 = vpop.f32.mrb[0].mxu0
    %v1007 = vadd.f32 0.0, %v1006
    %v1008 = vpop.f32.mrb[0].mxu0
    %v1009 = vadd.f32 0.0, %v1008
    %v1010 = vpop.f32.mrb[0].mxu0
    %v1011 = vadd.f32 0.0, %v1010
    %v1012 = vpop.f32.mrb[0].mxu0
    %v1013 = vadd.f32 0.0, %v1012
    %1014 = vmatprep.mubr.bf16.mxu0 0
    %1015 = vmatmul.mubr.bf16.gmra.mrb[0].mxu0 %v721
    %v1016 = vpop.f32.mrb[0].mxu0
    %v1017 = vadd.f32 0.0, %v1016
    %v1018 = vpop.f32.mrb[0].mxu0
    %v1019 = vadd.f32 0.0, %v1018
    %v1020 = vpop.f32.mrb[0].mxu0
    %v1021 = vadd.f32 0.0, %v1020
    %v1022 = vpop.f32.mrb[0].mxu0
    %v1023 = vadd.f32 0.0, %v1022
    %1024 = vmatprep.mubr.bf16.mxu0 0
    %1025 = vmatmul.mubr.bf16.gmra.mrb[0].mxu0 %v724
    %v1026 = vpop.f32.mrb[0].mxu0
    %v1027 = vadd.f32 0.0, %v1026
    %v1028 = vpop.f32.mrb[0].mxu0
    %v1029 = vadd.f32 0.0, %v1028
    %v1030 = vpop.f32.mrb[0].mxu0
    %v1031 = vadd.f32 0.0, %v1030
    %v1032 = vpop.f32.mrb[0].mxu0
    %v1033 = vadd.f32 0.0, %v1032
    %1034 = vmatprep.mubr.bf16.mxu0 0
    %1035 = vmatmul.mubr.bf16.gmra.mrb[0].mxu0 %v727
    %v1036 = vpop.f32.mrb[0].mxu0
    %v1037 = vadd.f32 0.0, %v1036
    %v1038 = vpop.f32.mrb[0].mxu0
    %v1039 = vadd.f32 0.0, %v1038
    %v1040 = vpop.f32.mrb[0].mxu0
    %v1041 = vadd.f32 0.0, %v1040
    %v1042 = vpop.f32.mrb[0].mxu0
    %v1043 = vadd.f32 0.0, %v1042
    %1044 = vmatprep.mubr.bf16.mxu0 0
    %1045 = vmatmul.mubr.bf16.gmra.mrb[0].mxu0 %v730
    %v1046 = vpop.f32.mrb[0].mxu0
    %v1047 = vadd.f32 0.0, %v1046
    %v1048 = vpop.f32.mrb[0].mxu0
    %v1049 = vadd.f32 0.0, %v1048
    %v1050 = vpop.f32.mrb[0].mxu0
    %v1051 = vadd.f32 0.0, %v1050
    %v1052 = vpop.f32.mrb[0].mxu0
    %v1053 = vadd.f32 0.0, %v1052
    %1054 = vmatprep.mubr.bf16.mxu0 0
    %1055 = vmatmul.mubr.bf16.gmra.mrb[0].mxu0 %v733
    %v1056 = vpop.f32.mrb[0].mxu0
    %v1057 = vadd.f32 0.0, %v1056
    %v1058 = vpop.f32.mrb[0].mxu0
    %v1059 = vadd.f32 0.0, %v1058
    %v1060 = vpop.f32.mrb[0].mxu0
    %v1061 = vadd.f32 0.0, %v1060
    %v1062 = vpop.f32.mrb[0].mxu0
    %v1063 = vadd.f32 0.0, %v1062
    %1064 = vmatprep.mubr.bf16.mxu0 0
    %1065 = vmatmul.mubr.bf16.gmra.mrb[0].mxu0 %v736
    %v1066 = vpop.f32.mrb[0].mxu0
    %v1067 = vadd.f32 0.0, %v1066
    %v1068 = vpop.f32.mrb[0].mxu0
    %v1069 = vadd.f32 0.0, %v1068
    %v1070 = vpop.f32.mrb[0].mxu0
    %v1071 = vadd.f32 0.0, %v1070
    %v1072 = vpop.f32.mrb[0].mxu0
    %v1073 = vadd.f32 0.0, %v1072
    %1074 = vmatprep.mubr.bf16.mxu0 0
    %1075 = vmatmul.mubr.bf16.gmra.mrb[0].mxu0 %v739
    %v1076 = vpop.f32.mrb[0].mxu0
    %v1077 = vadd.f32 0.0, %v1076
    %v1078 = vpop.f32.mrb[0].mxu0
    %v1079 = vadd.f32 0.0, %v1078
    %v1080 = vpop.f32.mrb[0].mxu0
    %v1081 = vadd.f32 0.0, %v1080
    %v1082 = vpop.f32.mrb[0].mxu0
    %v1083 = vadd.f32 0.0, %v1082
    %1084 = vmatprep.mubr.bf16.mxu0 0
    %1085 = vmatmul.mubr.bf16.gmra.mrb[0].mxu0 %v742
    %v1086 = vpop.f32.mrb[0].mxu0
    %v1087 = vadd.f32 0.0, %v1086
    %v1088 = vpop.f32.mrb[0].mxu0
    %v1089 = vadd.f32 0.0, %v1088
    %v1090 = vpop.f32.mrb[0].mxu0
    %v1091 = vadd.f32 0.0, %v1090
    %v1092 = vpop.f32.mrb[0].mxu0
    %v1093 = vadd.f32 0.0, %v1092
    %1094 = vmatprep.mubr.bf16.mxu0 0
    %1095 = vmatmul.mubr.bf16.gmra.mrb[0].mxu0 %v745
    %v1096 = vpop.f32.mrb[0].mxu0
    %v1097 = vadd.f32 0.0, %v1096
    %v1098 = vpop.f32.mrb[0].mxu0
    %v1099 = vadd.f32 0.0, %v1098
    %v1100 = vpop.f32.mrb[0].mxu0
    %v1101 = vadd.f32 0.0, %v1100
    %v1102 = vpop.f32.mrb[0].mxu0
    %v1103 = vadd.f32 0.0, %v1102
    %1104 = vmatprep.mubr.bf16.mxu0 0
    %1105 = vmatmul.mubr.bf16.gmra.mrb[0].mxu0 %v748
    %v1106 = vpop.f32.mrb[0].mxu0
    %v1107 = vadd.f32 0.0, %v1106
    %v1108 = vpop.f32.mrb[0].mxu0
    %v1109 = vadd.f32 0.0, %v1108
    %v1110 = vpop.f32.mrb[0].mxu0
    %v1111 = vadd.f32 0.0, %v1110
    %v1112 = vpop.f32.mrb[0].mxu0
    %v1113 = vadd.f32 0.0, %v1112
    %1114 = vmatprep.mubr.bf16.mxu0 0
    %1115 = vmatmul.mubr.bf16.gmra.mrb[0].mxu0 %v751
    %v1116 = vpop.f32.mrb[0].mxu0
    %v1117 = vadd.f32 0.0, %v1116
    %v1118 = vpop.f32.mrb[0].mxu0
    %v1119 = vadd.f32 0.0, %v1118
    %v1120 = vpop.f32.mrb[0].mxu0
    %v1121 = vadd.f32 0.0, %v1120
    %v1122 = vpop.f32.mrb[0].mxu0
    %v1123 = vadd.f32 0.0, %v1122
    %1124 = vmatprep.mubr.bf16.mxu0 0
    %1125 = vmatmul.mubr.bf16.gmra.mrb[0].mxu0 %v754
    %v1126 = vpop.f32.mrb[0].mxu0
    %v1127 = vadd.f32 0.0, %v1126
    %v1128 = vpop.f32.mrb[0].mxu0
    %v1129 = vadd.f32 0.0, %v1128
    %v1130 = vpop.f32.mrb[0].mxu0
    %v1131 = vadd.f32 0.0, %v1130
    %v1132 = vpop.f32.mrb[0].mxu0
    %v1133 = vadd.f32 0.0, %v1132
    %1134 = vmatprep.mubr.bf16.mxu0 0
    %1135 = vmatmul.mubr.bf16.gmra.mrb[0].mxu0 %v757
    %v1136 = vpop.f32.mrb[0].mxu0
    %v1137 = vadd.f32 0.0, %v1136
    %v1138 = vpop.f32.mrb[0].mxu0
    %v1139 = vadd.f32 0.0, %v1138
    %v1140 = vpop.f32.mrb[0].mxu0
    %v1141 = vadd.f32 0.0, %v1140
    %v1142 = vpop.f32.mrb[0].mxu0
    %v1143 = vadd.f32 0.0, %v1142
    %1144 = vdwg.mxu0
    %v1145 = vpack.c.bf16 %v798, %v794
    %v1146 = vpack.c.bf16 %v800, %v796
    %v1147 = vpack.c.bf16 %v991, %v987
    %v1148 = vpack.c.bf16 %v993, %v989
    %v1149 = vpack.c.bf16 %v808, %v804
    %v1150 = vpack.c.bf16 %v810, %v806
    %v1151 = vpack.c.bf16 %v1001, %v997
    %v1152 = vpack.c.bf16 %v1003, %v999
    %v1153 = vpack.c.bf16 %v818, %v814
    %v1154 = vpack.c.bf16 %v820, %v816
    %v1155 = vpack.c.bf16 %v1011, %v1007
    %v1156 = vpack.c.bf16 %v1013, %v1009
    %v1157 = vpack.c.bf16 %v828, %v824
    %v1158 = vpack.c.bf16 %v830, %v826
    %v1159 = vpack.c.bf16 %v1021, %v1017
    %v1160 = vpack.c.bf16 %v1023, %v1019
    %v1161 = vpack.c.bf16 %v838, %v834
    %v1162 = vpack.c.bf16 %v840, %v836
    %v1163 = vpack.c.bf16 %v1031, %v1027
    %v1164 = vpack.c.bf16 %v1033, %v1029
    %v1165 = vpack.c.bf16 %v848, %v844
    %v1166 = vpack.c.bf16 %v850, %v846
    %v1167 = vpack.c.bf16 %v1041, %v1037
    %v1168 = vpack.c.bf16 %v1043, %v1039
    %v1169 = vpack.c.bf16 %v858, %v854
    %v1170 = vpack.c.bf16 %v860, %v856
    %v1171 = vpack.c.bf16 %v1051, %v1047
    %v1172 = vpack.c.bf16 %v1053, %v1049
    %v1173 = vpack.c.bf16 %v868, %v864
    %v1174 = vpack.c.bf16 %v870, %v866
    %v1175 = vpack.c.bf16 %v1061, %v1057
    %v1176 = vpack.c.bf16 %v1063, %v1059
    %v1177 = vpack.c.bf16 %v878, %v874
    %v1178 = vpack.c.bf16 %v880, %v876
    %v1179 = vpack.c.bf16 %v1071, %v1067
    %v1180 = vpack.c.bf16 %v1073, %v1069
    %v1181 = vpack.c.bf16 %v888, %v884
    %v1182 = vpack.c.bf16 %v890, %v886
    %v1183 = vpack.c.bf16 %v1081, %v1077
    %v1184 = vpack.c.bf16 %v1083, %v1079
    %v1185 = vpack.c.bf16 %v898, %v894
    %v1186 = vpack.c.bf16 %v900, %v896
    %v1187 = vpack.c.bf16 %v1091, %v1087
    %v1188 = vpack.c.bf16 %v1093, %v1089
    %v1189 = vpack.c.bf16 %v908, %v904
    %v1190 = vpack.c.bf16 %v910, %v906
    %v1191 = vpack.c.bf16 %v1101, %v1097
    %v1192 = vpack.c.bf16 %v1103, %v1099
    %v1193 = vpack.c.bf16 %v918, %v914
    %v1194 = vpack.c.bf16 %v920, %v916
    %v1195 = vpack.c.bf16 %v1111, %v1107
    %v1196 = vpack.c.bf16 %v1113, %v1109
    %v1197 = vpack.c.bf16 %v928, %v924
    %v1198 = vpack.c.bf16 %v930, %v926
    %v1199 = vpack.c.bf16 %v1121, %v1117
    %v1200 = vpack.c.bf16 %v1123, %v1119
    %v1201 = vpack.c.bf16 %v938, %v934
    %v1202 = vpack.c.bf16 %v940, %v936
    %v1203 = vpack.c.bf16 %v1131, %v1127
    %v1204 = vpack.c.bf16 %v1133, %v1129
    %v1205 = vpack.c.bf16 %v948, %v944
    %v1206 = vpack.c.bf16 %v950, %v946
    %v1207 = vpack.c.bf16 %v1141, %v1137
    %v1208 = vpack.c.bf16 %v1143, %v1139
    %1225 = vrot.lane.b32.xlu0 %v1145, 64
    %v1226 = vpop.permute.xlu0 %1225
    %1227 = vrot.lane.b32.xlu0 %v1149, 64
    %v1228 = vpop.permute.xlu0 %1227
    %1229 = vrot.lane.b32.xlu0 %v1153, 64
    %v1230 = vpop.permute.xlu0 %1229
    %1231 = vrot.lane.b32.xlu0 %v1157, 64
    %v1232 = vpop.permute.xlu0 %1231
    %1233 = vrot.lane.b32.xlu0 %v1161, 64
    %v1234 = vpop.permute.xlu0 %1233
    %1235 = vrot.lane.b32.xlu0 %v1165, 64
    %v1236 = vpop.permute.xlu0 %1235
    %1237 = vrot.lane.b32.xlu0 %v1169, 64
    %v1238 = vpop.permute.xlu0 %1237
    %1239 = vrot.lane.b32.xlu0 %v1173, 64
    %v1240 = vpop.permute.xlu0 %1239
    %1241 = vrot.lane.b32.xlu0 %v1177, 64
    %v1242 = vpop.permute.xlu0 %1241
    %1243 = vrot.lane.b32.xlu0 %v1181, 64
    %v1244 = vpop.permute.xlu0 %1243
    %1245 = vrot.lane.b32.xlu0 %v1185, 64
    %v1246 = vpop.permute.xlu0 %1245
    %1247 = vrot.lane.b32.xlu0 %v1189, 64
    %v1248 = vpop.permute.xlu0 %1247
    %1249 = vrot.lane.b32.xlu0 %v1193, 64
    %v1250 = vpop.permute.xlu0 %1249
    %1251 = vrot.lane.b32.xlu0 %v1197, 64
    %v1252 = vpop.permute.xlu0 %1251
    %1253 = vrot.lane.b32.xlu0 %v1201, 64
    %v1254 = vpop.permute.xlu0 %1253
    %1255 = vrot.lane.b32.xlu0 %v1205, 64
    %v1256 = vpop.permute.xlu0 %1255
    %1273 = vrot.lane.b32.xlu0 %v1146, 64
    %v1274 = vpop.permute.xlu0 %1273
    %1275 = vrot.lane.b32.xlu0 %v1150, 64
    %v1276 = vpop.permute.xlu0 %1275
    %1277 = vrot.lane.b32.xlu0 %v1154, 64
    %v1278 = vpop.permute.xlu0 %1277
    %1279 = vrot.lane.b32.xlu0 %v1158, 64
    %v1280 = vpop.permute.xlu0 %1279
    %1281 = vrot.lane.b32.xlu0 %v1162, 64
    %v1282 = vpop.permute.xlu0 %1281
    %1283 = vrot.lane.b32.xlu0 %v1166, 64
    %v1284 = vpop.permute.xlu0 %1283
    %1285 = vrot.lane.b32.xlu0 %v1170, 64
    %v1286 = vpop.permute.xlu0 %1285
    %1287 = vrot.lane.b32.xlu0 %v1174, 64
    %v1288 = vpop.permute.xlu0 %1287
    %1289 = vrot.lane.b32.xlu0 %v1178, 64
    %v1290 = vpop.permute.xlu0 %1289
    %1291 = vrot.lane.b32.xlu0 %v1182, 64
    %v1292 = vpop.permute.xlu0 %1291
    %1293 = vrot.lane.b32.xlu0 %v1186, 64
    %v1294 = vpop.permute.xlu0 %1293
    %1295 = vrot.lane.b32.xlu0 %v1190, 64
    %v1296 = vpop.permute.xlu0 %1295
    %1297 = vrot.lane.b32.xlu0 %v1194, 64
    %v1298 = vpop.permute.xlu0 %1297
    %1299 = vrot.lane.b32.xlu0 %v1198, 64
    %v1300 = vpop.permute.xlu0 %1299
    %1301 = vrot.lane.b32.xlu0 %v1202, 64
    %v1302 = vpop.permute.xlu0 %1301
    %1303 = vrot.lane.b32.xlu0 %v1206, 64
    %v1304 = vpop.permute.xlu0 %1303
    %1321 = vrot.lane.b32.xlu0 %v1147, 64
    %v1322 = vpop.permute.xlu0 %1321
    %1323 = vrot.lane.b32.xlu0 %v1151, 64
    %v1324 = vpop.permute.xlu0 %1323
    %1325 = vrot.lane.b32.xlu0 %v1155, 64
    %v1326 = vpop.permute.xlu0 %1325
    %1327 = vrot.lane.b32.xlu0 %v1159, 64
    %v1328 = vpop.permute.xlu0 %1327
    %1329 = vrot.lane.b32.xlu0 %v1163, 64
    %v1330 = vpop.permute.xlu0 %1329
    %1331 = vrot.lane.b32.xlu0 %v1167, 64
    %v1332 = vpop.permute.xlu0 %1331
    %1333 = vrot.lane.b32.xlu0 %v1171, 64
    %v1334 = vpop.permute.xlu0 %1333
    %1335 = vrot.lane.b32.xlu0 %v1175, 64
    %v1336 = vpop.permute.xlu0 %1335
    %1337 = vrot.lane.b32.xlu0 %v1179, 64
    %v1338 = vpop.permute.xlu0 %1337
    %1339 = vrot.lane.b32.xlu0 %v1183, 64
    %v1340 = vpop.permute.xlu0 %1339
    %1341 = vrot.lane.b32.xlu0 %v1187, 64
    %v1342 = vpop.permute.xlu0 %1341
    %1343 = vrot.lane.b32.xlu0 %v1191, 64
    %v1344 = vpop.permute.xlu0 %1343
    %1345 = vrot.lane.b32.xlu0 %v1195, 64
    %v1346 = vpop.permute.xlu0 %1345
    %1347 = vrot.lane.b32.xlu0 %v1199, 64
    %v1348 = vpop.permute.xlu0 %1347
    %1349 = vrot.lane.b32.xlu0 %v1203, 64
    %v1350 = vpop.permute.xlu0 %1349
    %1351 = vrot.lane.b32.xlu0 %v1207, 64
    %v1352 = vpop.permute.xlu0 %1351
    %1385 = vrot.lane.b32.xlu0 %v1148, 64
    %v1386 = vpop.permute.xlu0 %1385
    %1387 = vrot.lane.b32.xlu0 %v1152, 64
    %v1388 = vpop.permute.xlu0 %1387
    %1389 = vrot.lane.b32.xlu0 %v1156, 64
    %v1390 = vpop.permute.xlu0 %1389
    %1391 = vrot.lane.b32.xlu0 %v1160, 64
    %v1392 = vpop.permute.xlu0 %1391
    %1393 = vrot.lane.b32.xlu0 %v1164, 64
    %v1394 = vpop.permute.xlu0 %1393
    %1395 = vrot.lane.b32.xlu0 %v1168, 64
    %v1396 = vpop.permute.xlu0 %1395
    %1397 = vrot.lane.b32.xlu0 %v1172, 64
    %v1398 = vpop.permute.xlu0 %1397
    %1399 = vrot.lane.b32.xlu0 %v1176, 64
    %v1400 = vpop.permute.xlu0 %1399
    %1401 = vrot.lane.b32.xlu0 %v1180, 64
    %v1402 = vpop.permute.xlu0 %1401
    %1403 = vrot.lane.b32.xlu0 %v1184, 64
    %v1404 = vpop.permute.xlu0 %1403
    %1405 = vrot.lane.b32.xlu0 %v1188, 64
    %v1406 = vpop.permute.xlu0 %1405
    %1407 = vrot.lane.b32.xlu0 %v1192, 64
    %v1408 = vpop.permute.xlu0 %1407
    %1409 = vrot.lane.b32.xlu0 %v1196, 64
    %v1410 = vpop.permute.xlu0 %1409
    %1411 = vrot.lane.b32.xlu0 %v1200, 64
    %v1412 = vpop.permute.xlu0 %1411
    %1413 = vrot.lane.b32.xlu0 %v1204, 64
    %v1414 = vpop.permute.xlu0 %1413
    %1415 = vrot.lane.b32.xlu0 %v1208, 64
    %v1416 = vpop.permute.xlu0 %1415
    %v1433 = vld [vmem:[#allocation5] sm:$0xff]
    %v1434 = vld [vmem:[#allocation5 + $0x8] sm:$0xff]
    %v1435 = vld [vmem:[#allocation5 + $0x10] sm:$0xff]
    %v1436 = vld [vmem:[#allocation5 + $0x18] sm:$0xff]
    %v1438 = vsel %vm105, %v1145, 0
    %v1441 = vsel %vm105, %v1149, 0
    %1443 = vmatprep.subr.bf16.mxu0 0
    %1444 = vmatpush1.bf16.xpose.msra.mxu0 %v712
    %1445 = vmatprep.subr.bf16.mxu0 0
    %1446 = vmatpush1.bf16.xpose.msra.mxu0 %v715
    %1447 = vmatprep.subr.bf16.mxu0 0
    %1448 = vmatpush1.bf16.xpose.msra.mxu0 0
    %1449 = vmatprep.subr.bf16.mxu0 0
    %1450 = vmatpush1.bf16.xpose.msra.mxu0 0
    %1451 = vmatprep.subr.bf16.mxu0 0
    %1452 = vmatpush1.bf16.xpose.msra.mxu0 0
    %1453 = vmatprep.subr.bf16.mxu0 0
    %1454 = vmatpush1.bf16.xpose.msra.mxu0 0
    %1455 = vmatprep.subr.bf16.mxu0 0
    %1456 = vmatpush1.bf16.xpose.msra.mxu0 0
    %1457 = vmatprep.subr.bf16.mxu0 0
    %1458 = vmatpush1.bf16.xpose.msra.mxu0 0
    %1459 = vmatprep.subr.bf16.mxu0 0
    %1460 = vmatpush1.bf16.xpose.msra.mxu0 0
    %1461 = vmatprep.subr.bf16.mxu0 0
    %1462 = vmatpush1.bf16.xpose.msra.mxu0 0
    %1463 = vmatprep.subr.bf16.mxu0 0
    %1464 = vmatpush1.bf16.xpose.msra.mxu0 0
    %1465 = vmatprep.subr.bf16.mxu0 0
    %1466 = vmatpush1.bf16.xpose.msra.mxu0 0
    %1467 = vmatprep.subr.bf16.mxu0 0
    %1468 = vmatpush1.bf16.xpose.msra.mxu0 0
    %1469 = vmatprep.subr.bf16.mxu0 0
    %1470 = vmatpush1.bf16.xpose.msra.mxu0 0
    %1471 = vmatprep.subr.bf16.mxu0 0
    %1472 = vmatpush1.bf16.xpose.msra.mxu0 0
    %1473 = vmatprep.subr.bf16.mxu0 0
    %1474 = vmatpush1.bf16.xpose.msra.mxu0 0
    %1475 = vmatprep.mubr.bf16.mxu0 0
    %1476 = vmatmul.mubr.bf16.gmra.mrb[0].mxu0 %v1438
    %v1477 = vpop.f32.mrb[0].mxu0
    %v1478 = vadd.f32 %v1433, %v1477
    %v1479 = vpop.f32.mrb[0].mxu0
    %v1480 = vpop.f32.mrb[0].mxu0
    %v1481 = vadd.f32 %v1434, %v1480
    %v1482 = vpop.f32.mrb[0].mxu0
    %1483 = vmatprep.mubr.bf16.mxu0 0
    %1484 = vmatmul.mubr.bf16.gmra.mrb[0].mxu0 %v1441
    %v1485 = vpop.f32.mrb[0].mxu0
    %v1486 = vadd.f32 %v1435, %v1485
    %v1487 = vpop.f32.mrb[0].mxu0
    %v1488 = vpop.f32.mrb[0].mxu0
    %v1489 = vadd.f32 %v1436, %v1488
    %v1490 = vpop.f32.mrb[0].mxu0
    %1491 = vdwg.mxu0
    %v1493 = vsel %vm105, %v1153, 0
    %v1496 = vsel %vm105, %v1157, 0
    %1498 = vmatprep.subr.bf16.mxu0 0
    %1499 = vmatpush1.bf16.xpose.msra.mxu0 %v718
    %1500 = vmatprep.subr.bf16.mxu0 0
    %1501 = vmatpush1.bf16.xpose.msra.mxu0 %v721
    %1502 = vmatprep.subr.bf16.mxu0 0
    %1503 = vmatpush1.bf16.xpose.msra.mxu0 0
    %1504 = vmatprep.subr.bf16.mxu0 0
    %1505 = vmatpush1.bf16.xpose.msra.mxu0 0
    %1506 = vmatprep.subr.bf16.mxu0 0
    %1507 = vmatpush1.bf16.xpose.msra.mxu0 0
    %1508 = vmatprep.subr.bf16.mxu0 0
    %1509 = vmatpush1.bf16.xpose.msra.mxu0 0
    %1510 = vmatprep.subr.bf16.mxu0 0
    %1511 = vmatpush1.bf16.xpose.msra.mxu0 0
    %1512 = vmatprep.subr.bf16.mxu0 0
    %1513 = vmatpush1.bf16.xpose.msra.mxu0 0
    %1514 = vmatprep.subr.bf16.mxu0 0
    %1515 = vmatpush1.bf16.xpose.msra.mxu0 0
    %1516 = vmatprep.subr.bf16.mxu0 0
    %1517 = vmatpush1.bf16.xpose.msra.mxu0 0
    %1518 = vmatprep.subr.bf16.mxu0 0
    %1519 = vmatpush1.bf16.xpose.msra.mxu0 0
    %1520 = vmatprep.subr.bf16.mxu0 0
    %1521 = vmatpush1.bf16.xpose.msra.mxu0 0
    %1522 = vmatprep.subr.bf16.mxu0 0
    %1523 = vmatpush1.bf16.xpose.msra.mxu0 0
    %1524 = vmatprep.subr.bf16.mxu0 0
    %1525 = vmatpush1.bf16.xpose.msra.mxu0 0
    %1526 = vmatprep.subr.bf16.mxu0 0
    %1527 = vmatpush1.bf16.xpose.msra.mxu0 0
    %1528 = vmatprep.subr.bf16.mxu0 0
    %1529 = vmatpush1.bf16.xpose.msra.mxu0 0
    %1530 = vmatprep.mubr.bf16.mxu0 0
    %1531 = vmatmul.mubr.bf16.gmra.mrb[0].mxu0 %v1493
    %v1532 = vpop.f32.mrb[0].mxu0
    %v1533 = vadd.f32 %v1433, %v1532
    %v1534 = vpop.f32.mrb[0].mxu0
    %v1535 = vpop.f32.mrb[0].mxu0
    %v1536 = vadd.f32 %v1434, %v1535
    %v1537 = vpop.f32.mrb[0].mxu0
    %1538 = vmatprep.mubr.bf16.mxu0 0
    %1539 = vmatmul.mubr.bf16.gmra.mrb[0].mxu0 %v1496
    %v1540 = vpop.f32.mrb[0].mxu0
    %v1541 = vadd.f32 %v1435, %v1540
    %v1542 = vpop.f32.mrb[0].mxu0
    %v1543 = vpop.f32.mrb[0].mxu0
    %v1544 = vadd.f32 %v1436, %v1543
    %v1545 = vpop.f32.mrb[0].mxu0
    %1546 = vdwg.mxu0
    %v1548 = vsel %vm105, %v1161, 0
    %v1551 = vsel %vm105, %v1165, 0
    %1553 = vmatprep.subr.bf16.mxu0 0
    %1554 = vmatpush1.bf16.xpose.msra.mxu0 %v724
    %1555 = vmatprep.subr.bf16.mxu0 0
    %1556 = vmatpush1.bf16.xpose.msra.mxu0 %v727
    %1557 = vmatprep.subr.bf16.mxu0 0
    %1558 = vmatpush1.bf16.xpose.msra.mxu0 0
    %1559 = vmatprep.subr.bf16.mxu0 0
    %1560 = vmatpush1.bf16.xpose.msra.mxu0 0
    %1561 = vmatprep.subr.bf16.mxu0 0
    %1562 = vmatpush1.bf16.xpose.msra.mxu0 0
    %1563 = vmatprep.subr.bf16.mxu0 0
    %1564 = vmatpush1.bf16.xpose.msra.mxu0 0
    %1565 = vmatprep.subr.bf16.mxu0 0
    %1566 = vmatpush1.bf16.xpose.msra.mxu0 0
    %1567 = vmatprep.subr.bf16.mxu0 0
    %1568 = vmatpush1.bf16.xpose.msra.mxu0 0
    %1569 = vmatprep.subr.bf16.mxu0 0
    %1570 = vmatpush1.bf16.xpose.msra.mxu0 0
    %1571 = vmatprep.subr.bf16.mxu0 0
    %1572 = vmatpush1.bf16.xpose.msra.mxu0 0
    %1573 = vmatprep.subr.bf16.mxu0 0
    %1574 = vmatpush1.bf16.xpose.msra.mxu0 0
    %1575 = vmatprep.subr.bf16.mxu0 0
    %1576 = vmatpush1.bf16.xpose.msra.mxu0 0
    %1577 = vmatprep.subr.bf16.mxu0 0
    %1578 = vmatpush1.bf16.xpose.msra.mxu0 0
    %1579 = vmatprep.subr.bf16.mxu0 0
    %1580 = vmatpush1.bf16.xpose.msra.mxu0 0
    %1581 = vmatprep.subr.bf16.mxu0 0
    %1582 = vmatpush1.bf16.xpose.msra.mxu0 0
    %1583 = vmatprep.subr.bf16.mxu0 0
    %1584 = vmatpush1.bf16.xpose.msra.mxu0 0
    %1585 = vmatprep.mubr.bf16.mxu0 0
    %1586 = vmatmul.mubr.bf16.gmra.mrb[0].mxu0 %v1548
    %v1587 = vpop.f32.mrb[0].mxu0
    %v1588 = vadd.f32 %v1433, %v1587
    %v1589 = vpop.f32.mrb[0].mxu0
    %v1590 = vpop.f32.mrb[0].mxu0
    %v1591 = vadd.f32 %v1434, %v1590
    %v1592 = vpop.f32.mrb[0].mxu0
    %1593 = vmatprep.mubr.bf16.mxu0 0
    %1594 = vmatmul.mubr.bf16.gmra.mrb[0].mxu0 %v1551
    %v1595 = vpop.f32.mrb[0].mxu0
    %v1596 = vadd.f32 %v1435, %v1595
    %v1597 = vpop.f32.mrb[0].mxu0
    %v1598 = vpop.f32.mrb[0].mxu0
    %v1599 = vadd.f32 %v1436, %v1598
    %v1600 = vpop.f32.mrb[0].mxu0
    %1601 = vdwg.mxu0
    %v1603 = vsel %vm105, %v1169, 0
    %v1606 = vsel %vm105, %v1173, 0
    %1608 = vmatprep.subr.bf16.mxu0 0
    %1609 = vmatpush1.bf16.xpose.msra.mxu0 %v730
    %1610 = vmatprep.subr.bf16.mxu0 0
    %1611 = vmatpush1.bf16.xpose.msra.mxu0 %v733
    %1612 = vmatprep.subr.bf16.mxu0 0
    %1613 = vmatpush1.bf16.xpose.msra.mxu0 0
    %1614 = vmatprep.subr.bf16.mxu0 0
    %1615 = vmatpush1.bf16.xpose.msra.mxu0 0
    %1616 = vmatprep.subr.bf16.mxu0 0
    %1617 = vmatpush1.bf16.xpose.msra.mxu0 0
    %1618 = vmatprep.subr.bf16.mxu0 0
    %1619 = vmatpush1.bf16.xpose.msra.mxu0 0
    %1620 = vmatprep.subr.bf16.mxu0 0
    %1621 = vmatpush1.bf16.xpose.msra.mxu0 0
    %1622 = vmatprep.subr.bf16.mxu0 0
    %1623 = vmatpush1.bf16.xpose.msra.mxu0 0
    %1624 = vmatprep.subr.bf16.mxu0 0
    %1625 = vmatpush1.bf16.xpose.msra.mxu0 0
    %1626 = vmatprep.subr.bf16.mxu0 0
    %1627 = vmatpush1.bf16.xpose.msra.mxu0 0
    %1628 = vmatprep.subr.bf16.mxu0 0
    %1629 = vmatpush1.bf16.xpose.msra.mxu0 0
    %1630 = vmatprep.subr.bf16.mxu0 0
    %1631 = vmatpush1.bf16.xpose.msra.mxu0 0
    %1632 = vmatprep.subr.bf16.mxu0 0
    %1633 = vmatpush1.bf16.xpose.msra.mxu0 0
    %1634 = vmatprep.subr.bf16.mxu0 0
    %1635 = vmatpush1.bf16.xpose.msra.mxu0 0
    %1636 = vmatprep.subr.bf16.mxu0 0
    %1637 = vmatpush1.bf16.xpose.msra.mxu0 0
    %1638 = vmatprep.subr.bf16.mxu0 0
    %1639 = vmatpush1.bf16.xpose.msra.mxu0 0
    %1640 = vmatprep.mubr.bf16.mxu0 0
    %1641 = vmatmul.mubr.bf16.gmra.mrb[0].mxu0 %v1603
    %v1642 = vpop.f32.mrb[0].mxu0
    %v1643 = vadd.f32 %v1433, %v1642
    %v1644 = vpop.f32.mrb[0].mxu0
    %v1645 = vpop.f32.mrb[0].mxu0
    %v1646 = vadd.f32 %v1434, %v1645
    %v1647 = vpop.f32.mrb[0].mxu0
    %1648 = vmatprep.mubr.bf16.mxu0 0
    %1649 = vmatmul.mubr.bf16.gmra.mrb[0].mxu0 %v1606
    %v1650 = vpop.f32.mrb[0].mxu0
    %v1651 = vadd.f32 %v1435, %v1650
    %v1652 = vpop.f32.mrb[0].mxu0
    %v1653 = vpop.f32.mrb[0].mxu0
    %v1654 = vadd.f32 %v1436, %v1653
    %v1655 = vpop.f32.mrb[0].mxu0
    %1656 = vdwg.mxu0
    %v1658 = vsel %vm105, %v1177, 0
    %v1661 = vsel %vm105, %v1181, 0
    %1663 = vmatprep.subr.bf16.mxu0 0
    %1664 = vmatpush1.bf16.xpose.msra.mxu0 %v736
    %1665 = vmatprep.subr.bf16.mxu0 0
    %1666 = vmatpush1.bf16.xpose.msra.mxu0 %v739
    %1667 = vmatprep.subr.bf16.mxu0 0
    %1668 = vmatpush1.bf16.xpose.msra.mxu0 0
    %1669 = vmatprep.subr.bf16.mxu0 0
    %1670 = vmatpush1.bf16.xpose.msra.mxu0 0
    %1671 = vmatprep.subr.bf16.mxu0 0
    %1672 = vmatpush1.bf16.xpose.msra.mxu0 0
    %1673 = vmatprep.subr.bf16.mxu0 0
    %1674 = vmatpush1.bf16.xpose.msra.mxu0 0
    %1675 = vmatprep.subr.bf16.mxu0 0
    %1676 = vmatpush1.bf16.xpose.msra.mxu0 0
    %1677 = vmatprep.subr.bf16.mxu0 0
    %1678 = vmatpush1.bf16.xpose.msra.mxu0 0
    %1679 = vmatprep.subr.bf16.mxu0 0
    %1680 = vmatpush1.bf16.xpose.msra.mxu0 0
    %1681 = vmatprep.subr.bf16.mxu0 0
    %1682 = vmatpush1.bf16.xpose.msra.mxu0 0
    %1683 = vmatprep.subr.bf16.mxu0 0
    %1684 = vmatpush1.bf16.xpose.msra.mxu0 0
    %1685 = vmatprep.subr.bf16.mxu0 0
    %1686 = vmatpush1.bf16.xpose.msra.mxu0 0
    %1687 = vmatprep.subr.bf16.mxu0 0
    %1688 = vmatpush1.bf16.xpose.msra.mxu0 0
    %1689 = vmatprep.subr.bf16.mxu0 0
    %1690 = vmatpush1.bf16.xpose.msra.mxu0 0
    %1691 = vmatprep.subr.bf16.mxu0 0
    %1692 = vmatpush1.bf16.xpose.msra.mxu0 0
    %1693 = vmatprep.subr.bf16.mxu0 0
    %1694 = vmatpush1.bf16.xpose.msra.mxu0 0
    %1695 = vmatprep.mubr.bf16.mxu0 0
    %1696 = vmatmul.mubr.bf16.gmra.mrb[0].mxu0 %v1658
    %v1697 = vpop.f32.mrb[0].mxu0
    %v1698 = vadd.f32 %v1433, %v1697
    %v1699 = vpop.f32.mrb[0].mxu0
    %v1700 = vpop.f32.mrb[0].mxu0
    %v1701 = vadd.f32 %v1434, %v1700
    %v1702 = vpop.f32.mrb[0].mxu0
    %1703 = vmatprep.mubr.bf16.mxu0 0
    %1704 = vmatmul.mubr.bf16.gmra.mrb[0].mxu0 %v1661
    %v1705 = vpop.f32.mrb[0].mxu0
    %v1706 = vadd.f32 %v1435, %v1705
    %v1707 = vpop.f32.mrb[0].mxu0
    %v1708 = vpop.f32.mrb[0].mxu0
    %v1709 = vadd.f32 %v1436, %v1708
    %v1710 = vpop.f32.mrb[0].mxu0
    %1711 = vdwg.mxu0
    %v1713 = vsel %vm105, %v1185, 0
    %v1716 = vsel %vm105, %v1189, 0
    %1718 = vmatprep.subr.bf16.mxu0 0
    %1719 = vmatpush1.bf16.xpose.msra.mxu0 %v742
    %1720 = vmatprep.subr.bf16.mxu0 0
    %1721 = vmatpush1.bf16.xpose.msra.mxu0 %v745
    %1722 = vmatprep.subr.bf16.mxu0 0
    %1723 = vmatpush1.bf16.xpose.msra.mxu0 0
    %1724 = vmatprep.subr.bf16.mxu0 0
    %1725 = vmatpush1.bf16.xpose.msra.mxu0 0
    %1726 = vmatprep.subr.bf16.mxu0 0
    %1727 = vmatpush1.bf16.xpose.msra.mxu0 0
    %1728 = vmatprep.subr.bf16.mxu0 0
    %1729 = vmatpush1.bf16.xpose.msra.mxu0 0
    %1730 = vmatprep.subr.bf16.mxu0 0
    %1731 = vmatpush1.bf16.xpose.msra.mxu0 0
    %1732 = vmatprep.subr.bf16.mxu0 0
    %1733 = vmatpush1.bf16.xpose.msra.mxu0 0
    %1734 = vmatprep.subr.bf16.mxu0 0
    %1735 = vmatpush1.bf16.xpose.msra.mxu0 0
    %1736 = vmatprep.subr.bf16.mxu0 0
    %1737 = vmatpush1.bf16.xpose.msra.mxu0 0
    %1738 = vmatprep.subr.bf16.mxu0 0
    %1739 = vmatpush1.bf16.xpose.msra.mxu0 0
    %1740 = vmatprep.subr.bf16.mxu0 0
    %1741 = vmatpush1.bf16.xpose.msra.mxu0 0
    %1742 = vmatprep.subr.bf16.mxu0 0
    %1743 = vmatpush1.bf16.xpose.msra.mxu0 0
    %1744 = vmatprep.subr.bf16.mxu0 0
    %1745 = vmatpush1.bf16.xpose.msra.mxu0 0
    %1746 = vmatprep.subr.bf16.mxu0 0
    %1747 = vmatpush1.bf16.xpose.msra.mxu0 0
    %1748 = vmatprep.subr.bf16.mxu0 0
    %1749 = vmatpush1.bf16.xpose.msra.mxu0 0
    %1750 = vmatprep.mubr.bf16.mxu0 0
    %1751 = vmatmul.mubr.bf16.gmra.mrb[0].mxu0 %v1713
    %v1752 = vpop.f32.mrb[0].mxu0
    %v1753 = vadd.f32 %v1433, %v1752
    %v1754 = vpop.f32.mrb[0].mxu0
    %v1755 = vpop.f32.mrb[0].mxu0
    %v1756 = vadd.f32 %v1434, %v1755
    %v1757 = vpop.f32.mrb[0].mxu0
    %1758 = vmatprep.mubr.bf16.mxu0 0
    %1759 = vmatmul.mubr.bf16.gmra.mrb[0].mxu0 %v1716
    %v1760 = vpop.f32.mrb[0].mxu0
    %v1761 = vadd.f32 %v1435, %v1760
    %v1762 = vpop.f32.mrb[0].mxu0
    %v1763 = vpop.f32.mrb[0].mxu0
    %v1764 = vadd.f32 %v1436, %v1763
    %v1765 = vpop.f32.mrb[0].mxu0
    %1766 = vdwg.mxu0
    %v1768 = vsel %vm105, %v1193, 0
    %v1771 = vsel %vm105, %v1197, 0
    %1773 = vmatprep.subr.bf16.mxu0 0
    %1774 = vmatpush1.bf16.xpose.msra.mxu0 %v748
    %1775 = vmatprep.subr.bf16.mxu0 0
    %1776 = vmatpush1.bf16.xpose.msra.mxu0 %v751
    %1777 = vmatprep.subr.bf16.mxu0 0
    %1778 = vmatpush1.bf16.xpose.msra.mxu0 0
    %1779 = vmatprep.subr.bf16.mxu0 0
    %1780 = vmatpush1.bf16.xpose.msra.mxu0 0
    %1781 = vmatprep.subr.bf16.mxu0 0
    %1782 = vmatpush1.bf16.xpose.msra.mxu0 0
    %1783 = vmatprep.subr.bf16.mxu0 0
    %1784 = vmatpush1.bf16.xpose.msra.mxu0 0
    %1785 = vmatprep.subr.bf16.mxu0 0
    %1786 = vmatpush1.bf16.xpose.msra.mxu0 0
    %1787 = vmatprep.subr.bf16.mxu0 0
    %1788 = vmatpush1.bf16.xpose.msra.mxu0 0
    %1789 = vmatprep.subr.bf16.mxu0 0
    %1790 = vmatpush1.bf16.xpose.msra.mxu0 0
    %1791 = vmatprep.subr.bf16.mxu0 0
    %1792 = vmatpush1.bf16.xpose.msra.mxu0 0
    %1793 = vmatprep.subr.bf16.mxu0 0
    %1794 = vmatpush1.bf16.xpose.msra.mxu0 0
    %1795 = vmatprep.subr.bf16.mxu0 0
    %1796 = vmatpush1.bf16.xpose.msra.mxu0 0
    %1797 = vmatprep.subr.bf16.mxu0 0
    %1798 = vmatpush1.bf16.xpose.msra.mxu0 0
    %1799 = vmatprep.subr.bf16.mxu0 0
    %1800 = vmatpush1.bf16.xpose.msra.mxu0 0
    %1801 = vmatprep.subr.bf16.mxu0 0
    %1802 = vmatpush1.bf16.xpose.msra.mxu0 0
    %1803 = vmatprep.subr.bf16.mxu0 0
    %1804 = vmatpush1.bf16.xpose.msra.mxu0 0
    %1805 = vmatprep.mubr.bf16.mxu0 0
    %1806 = vmatmul.mubr.bf16.gmra.mrb[0].mxu0 %v1768
    %v1807 = vpop.f32.mrb[0].mxu0
    %v1808 = vadd.f32 %v1433, %v1807
    %v1809 = vpop.f32.mrb[0].mxu0
    %v1810 = vpop.f32.mrb[0].mxu0
    %v1811 = vadd.f32 %v1434, %v1810
    %v1812 = vpop.f32.mrb[0].mxu0
    %1813 = vmatprep.mubr.bf16.mxu0 0
    %1814 = vmatmul.mubr.bf16.gmra.mrb[0].mxu0 %v1771
    %v1815 = vpop.f32.mrb[0].mxu0
    %v1816 = vadd.f32 %v1435, %v1815
    %v1817 = vpop.f32.mrb[0].mxu0
    %v1818 = vpop.f32.mrb[0].mxu0
    %v1819 = vadd.f32 %v1436, %v1818
    %v1820 = vpop.f32.mrb[0].mxu0
    %1821 = vdwg.mxu0
    %v1823 = vsel %vm105, %v1201, 0
    %v1826 = vsel %vm105, %v1205, 0
    %1828 = vmatprep.subr.bf16.mxu0 0
    %1829 = vmatpush1.bf16.xpose.msra.mxu0 %v754
    %1830 = vmatprep.subr.bf16.mxu0 0
    %1831 = vmatpush1.bf16.xpose.msra.mxu0 %v757
    %1832 = vmatprep.subr.bf16.mxu0 0
    %1833 = vmatpush1.bf16.xpose.msra.mxu0 0
    %1834 = vmatprep.subr.bf16.mxu0 0
    %1835 = vmatpush1.bf16.xpose.msra.mxu0 0
    %1836 = vmatprep.subr.bf16.mxu0 0
    %1837 = vmatpush1.bf16.xpose.msra.mxu0 0
    %1838 = vmatprep.subr.bf16.mxu0 0
    %1839 = vmatpush1.bf16.xpose.msra.mxu0 0
    %1840 = vmatprep.subr.bf16.mxu0 0
    %1841 = vmatpush1.bf16.xpose.msra.mxu0 0
    %1842 = vmatprep.subr.bf16.mxu0 0
    %1843 = vmatpush1.bf16.xpose.msra.mxu0 0
    %1844 = vmatprep.subr.bf16.mxu0 0
    %1845 = vmatpush1.bf16.xpose.msra.mxu0 0
    %1846 = vmatprep.subr.bf16.mxu0 0
    %1847 = vmatpush1.bf16.xpose.msra.mxu0 0
    %1848 = vmatprep.subr.bf16.mxu0 0
    %1849 = vmatpush1.bf16.xpose.msra.mxu0 0
    %1850 = vmatprep.subr.bf16.mxu0 0
    %1851 = vmatpush1.bf16.xpose.msra.mxu0 0
    %1852 = vmatprep.subr.bf16.mxu0 0
    %1853 = vmatpush1.bf16.xpose.msra.mxu0 0
    %1854 = vmatprep.subr.bf16.mxu0 0
    %1855 = vmatpush1.bf16.xpose.msra.mxu0 0
    %1856 = vmatprep.subr.bf16.mxu0 0
    %1857 = vmatpush1.bf16.xpose.msra.mxu0 0
    %1858 = vmatprep.subr.bf16.mxu0 0
    %1859 = vmatpush1.bf16.xpose.msra.mxu0 0
    %1860 = vmatprep.mubr.bf16.mxu0 0
    %1861 = vmatmul.mubr.bf16.gmra.mrb[0].mxu0 %v1823
    %v1862 = vpop.f32.mrb[0].mxu0
    %v1863 = vadd.f32 %v1433, %v1862
    %v1864 = vpop.f32.mrb[0].mxu0
    %v1865 = vpop.f32.mrb[0].mxu0
    %v1866 = vadd.f32 %v1434, %v1865
    %v1867 = vpop.f32.mrb[0].mxu0
    %1868 = vmatprep.mubr.bf16.mxu0 0
    %1869 = vmatmul.mubr.bf16.gmra.mrb[0].mxu0 %v1826
    %v1870 = vpop.f32.mrb[0].mxu0
    %v1871 = vadd.f32 %v1435, %v1870
    %v1872 = vpop.f32.mrb[0].mxu0
    %v1873 = vpop.f32.mrb[0].mxu0
    %v1874 = vadd.f32 %v1436, %v1873
    %v1875 = vpop.f32.mrb[0].mxu0
    %1876 = vdwg.mxu0
    %v1878 = vsel %vm105, %v1226, 0
    %v1881 = vsel %vm105, %v1228, 0
    %1883 = vmatprep.subr.bf16.mxu0 0
    %1884 = vmatpush1.bf16.xpose.msra.mxu0 %v712
    %1885 = vmatprep.subr.bf16.mxu0 0
    %1886 = vmatpush1.bf16.xpose.msra.mxu0 %v715
    %1887 = vmatprep.subr.bf16.mxu0 0
    %1888 = vmatpush1.bf16.xpose.msra.mxu0 0
    %1889 = vmatprep.subr.bf16.mxu0 0
    %1890 = vmatpush1.bf16.xpose.msra.mxu0 0
    %1891 = vmatprep.subr.bf16.mxu0 0
    %1892 = vmatpush1.bf16.xpose.msra.mxu0 0
    %1893 = vmatprep.subr.bf16.mxu0 0
    %1894 = vmatpush1.bf16.xpose.msra.mxu0 0
    %1895 = vmatprep.subr.bf16.mxu0 0
    %1896 = vmatpush1.bf16.xpose.msra.mxu0 0
    %1897 = vmatprep.subr.bf16.mxu0 0
    %1898 = vmatpush1.bf16.xpose.msra.mxu0 0
    %1899 = vmatprep.subr.bf16.mxu0 0
    %1900 = vmatpush1.bf16.xpose.msra.mxu0 0
    %1901 = vmatprep.subr.bf16.mxu0 0
    %1902 = vmatpush1.bf16.xpose.msra.mxu0 0
    %1903 = vmatprep.subr.bf16.mxu0 0
    %1904 = vmatpush1.bf16.xpose.msra.mxu0 0
    %1905 = vmatprep.subr.bf16.mxu0 0
    %1906 = vmatpush1.bf16.xpose.msra.mxu0 0
    %1907 = vmatprep.subr.bf16.mxu0 0
    %1908 = vmatpush1.bf16.xpose.msra.mxu0 0
    %1909 = vmatprep.subr.bf16.mxu0 0
    %1910 = vmatpush1.bf16.xpose.msra.mxu0 0
    %1911 = vmatprep.subr.bf16.mxu0 0
    %1912 = vmatpush1.bf16.xpose.msra.mxu0 0
    %1913 = vmatprep.subr.bf16.mxu0 0
    %1914 = vmatpush1.bf16.xpose.msra.mxu0 0
    %1915 = vmatprep.mubr.bf16.mxu0 0
    %1916 = vmatmul.mubr.bf16.gmra.mrb[0].mxu0 %v1878
    %v1917 = vpop.f32.mrb[0].mxu0
    %v1918 = vadd.f32 %v1433, %v1917
    %v1919 = vpop.f32.mrb[0].mxu0
    %v1920 = vpop.f32.mrb[0].mxu0
    %v1921 = vadd.f32 %v1434, %v1920
    %v1922 = vpop.f32.mrb[0].mxu0
    %1923 = vmatprep.mubr.bf16.mxu0 0
    %1924 = vmatmul.mubr.bf16.gmra.mrb[0].mxu0 %v1881
    %v1925 = vpop.f32.mrb[0].mxu0
    %v1926 = vadd.f32 %v1435, %v1925
    %v1927 = vpop.f32.mrb[0].mxu0
    %v1928 = vpop.f32.mrb[0].mxu0
    %v1929 = vadd.f32 %v1436, %v1928
    %v1930 = vpop.f32.mrb[0].mxu0
    %1931 = vdwg.mxu0
    %v1933 = vsel %vm105, %v1230, 0
    %v1936 = vsel %vm105, %v1232, 0
    %1938 = vmatprep.subr.bf16.mxu0 0
    %1939 = vmatpush1.bf16.xpose.msra.mxu0 %v718
    %1940 = vmatprep.subr.bf16.mxu0 0
    %1941 = vmatpush1.bf16.xpose.msra.mxu0 %v721
    %1942 = vmatprep.subr.bf16.mxu0 0
    %1943 = vmatpush1.bf16.xpose.msra.mxu0 0
    %1944 = vmatprep.subr.bf16.mxu0 0
    %1945 = vmatpush1.bf16.xpose.msra.mxu0 0
    %1946 = vmatprep.subr.bf16.mxu0 0
    %1947 = vmatpush1.bf16.xpose.msra.mxu0 0
    %1948 = vmatprep.subr.bf16.mxu0 0
    %1949 = vmatpush1.bf16.xpose.msra.mxu0 0
    %1950 = vmatprep.subr.bf16.mxu0 0
    %1951 = vmatpush1.bf16.xpose.msra.mxu0 0
    %1952 = vmatprep.subr.bf16.mxu0 0
    %1953 = vmatpush1.bf16.xpose.msra.mxu0 0
    %1954 = vmatprep.subr.bf16.mxu0 0
    %1955 = vmatpush1.bf16.xpose.msra.mxu0 0
    %1956 = vmatprep.subr.bf16.mxu0 0
    %1957 = vmatpush1.bf16.xpose.msra.mxu0 0
    %1958 = vmatprep.subr.bf16.mxu0 0
    %1959 = vmatpush1.bf16.xpose.msra.mxu0 0
    %1960 = vmatprep.subr.bf16.mxu0 0
    %1961 = vmatpush1.bf16.xpose.msra.mxu0 0
    %1962 = vmatprep.subr.bf16.mxu0 0
    %1963 = vmatpush1.bf16.xpose.msra.mxu0 0
    %1964 = vmatprep.subr.bf16.mxu0 0
    %1965 = vmatpush1.bf16.xpose.msra.mxu0 0
    %1966 = vmatprep.subr.bf16.mxu0 0
    %1967 = vmatpush1.bf16.xpose.msra.mxu0 0
    %1968 = vmatprep.subr.bf16.mxu0 0
    %1969 = vmatpush1.bf16.xpose.msra.mxu0 0
    %1970 = vmatprep.mubr.bf16.mxu0 0
    %1971 = vmatmul.mubr.bf16.gmra.mrb[0].mxu0 %v1933
    %v1972 = vpop.f32.mrb[0].mxu0
    %v1973 = vadd.f32 %v1433, %v1972
    %v1974 = vpop.f32.mrb[0].mxu0
    %v1975 = vpop.f32.mrb[0].mxu0
    %v1976 = vadd.f32 %v1434, %v1975
    %v1977 = vpop.f32.mrb[0].mxu0
    %1978 = vmatprep.mubr.bf16.mxu0 0
    %1979 = vmatmul.mubr.bf16.gmra.mrb[0].mxu0 %v1936
    %v1980 = vpop.f32.mrb[0].mxu0
    %v1981 = vadd.f32 %v1435, %v1980
    %v1982 = vpop.f32.mrb[0].mxu0
    %v1983 = vpop.f32.mrb[0].mxu0
    %v1984 = vadd.f32 %v1436, %v1983
    %v1985 = vpop.f32.mrb[0].mxu0
    %1986 = vdwg.mxu0
    %v1988 = vsel %vm105, %v1234, 0
    %v1991 = vsel %vm105, %v1236, 0
    %1993 = vmatprep.subr.bf16.mxu0 0
    %1994 = vmatpush1.bf16.xpose.msra.mxu0 %v724
    %1995 = vmatprep.subr.bf16.mxu0 0
    %1996 = vmatpush1.bf16.xpose.msra.mxu0 %v727
    %1997 = vmatprep.subr.bf16.mxu0 0
    %1998 = vmatpush1.bf16.xpose.msra.mxu0 0
    %1999 = vmatprep.subr.bf16.mxu0 0
    %2000 = vmatpush1.bf16.xpose.msra.mxu0 0
    %2001 = vmatprep.subr.bf16.mxu0 0
    %2002 = vmatpush1.bf16.xpose.msra.mxu0 0
    %2003 = vmatprep.subr.bf16.mxu0 0
    %2004 = vmatpush1.bf16.xpose.msra.mxu0 0
    %2005 = vmatprep.subr.bf16.mxu0 0
    %2006 = vmatpush1.bf16.xpose.msra.mxu0 0
    %2007 = vmatprep.subr.bf16.mxu0 0
    %2008 = vmatpush1.bf16.xpose.msra.mxu0 0
    %2009 = vmatprep.subr.bf16.mxu0 0
    %2010 = vmatpush1.bf16.xpose.msra.mxu0 0
    %2011 = vmatprep.subr.bf16.mxu0 0
    %2012 = vmatpush1.bf16.xpose.msra.mxu0 0
    %2013 = vmatprep.subr.bf16.mxu0 0
    %2014 = vmatpush1.bf16.xpose.msra.mxu0 0
    %2015 = vmatprep.subr.bf16.mxu0 0
    %2016 = vmatpush1.bf16.xpose.msra.mxu0 0
    %2017 = vmatprep.subr.bf16.mxu0 0
    %2018 = vmatpush1.bf16.xpose.msra.mxu0 0
    %2019 = vmatprep.subr.bf16.mxu0 0
    %2020 = vmatpush1.bf16.xpose.msra.mxu0 0
    %2021 = vmatprep.subr.bf16.mxu0 0
    %2022 = vmatpush1.bf16.xpose.msra.mxu0 0
    %2023 = vmatprep.subr.bf16.mxu0 0
    %2024 = vmatpush1.bf16.xpose.msra.mxu0 0
    %2025 = vmatprep.mubr.bf16.mxu0 0
    %2026 = vmatmul.mubr.bf16.gmra.mrb[0].mxu0 %v1988
    %v2027 = vpop.f32.mrb[0].mxu0
    %v2028 = vadd.f32 %v1433, %v2027
    %v2029 = vpop.f32.mrb[0].mxu0
    %v2030 = vpop.f32.mrb[0].mxu0
    %v2031 = vadd.f32 %v1434, %v2030
    %v2032 = vpop.f32.mrb[0].mxu0
    %2033 = vmatprep.mubr.bf16.mxu0 0
    %2034 = vmatmul.mubr.bf16.gmra.mrb[0].mxu0 %v1991
    %v2035 = vpop.f32.mrb[0].mxu0
    %v2036 = vadd.f32 %v1435, %v2035
    %v2037 = vpop.f32.mrb[0].mxu0
    %v2038 = vpop.f32.mrb[0].mxu0
    %v2039 = vadd.f32 %v1436, %v2038
    %v2040 = vpop.f32.mrb[0].mxu0
    %2041 = vdwg.mxu0
    %v2043 = vsel %vm105, %v1238, 0
    %v2046 = vsel %vm105, %v1240, 0
    %2048 = vmatprep.subr.bf16.mxu0 0
    %2049 = vmatpush1.bf16.xpose.msra.mxu0 %v730
    %2050 = vmatprep.subr.bf16.mxu0 0
    %2051 = vmatpush1.bf16.xpose.msra.mxu0 %v733
    %2052 = vmatprep.subr.bf16.mxu0 0
    %2053 = vmatpush1.bf16.xpose.msra.mxu0 0
    %2054 = vmatprep.subr.bf16.mxu0 0
    %2055 = vmatpush1.bf16.xpose.msra.mxu0 0
    %2056 = vmatprep.subr.bf16.mxu0 0
    %2057 = vmatpush1.bf16.xpose.msra.mxu0 0
    %2058 = vmatprep.subr.bf16.mxu0 0
    %2059 = vmatpush1.bf16.xpose.msra.mxu0 0
    %2060 = vmatprep.subr.bf16.mxu0 0
    %2061 = vmatpush1.bf16.xpose.msra.mxu0 0
    %2062 = vmatprep.subr.bf16.mxu0 0
    %2063 = vmatpush1.bf16.xpose.msra.mxu0 0
    %2064 = vmatprep.subr.bf16.mxu0 0
    %2065 = vmatpush1.bf16.xpose.msra.mxu0 0
    %2066 = vmatprep.subr.bf16.mxu0 0
    %2067 = vmatpush1.bf16.xpose.msra.mxu0 0
    %2068 = vmatprep.subr.bf16.mxu0 0
    %2069 = vmatpush1.bf16.xpose.msra.mxu0 0
    %2070 = vmatprep.subr.bf16.mxu0 0
    %2071 = vmatpush1.bf16.xpose.msra.mxu0 0
    %2072 = vmatprep.subr.bf16.mxu0 0
    %2073 = vmatpush1.bf16.xpose.msra.mxu0 0
    %2074 = vmatprep.subr.bf16.mxu0 0
    %2075 = vmatpush1.bf16.xpose.msra.mxu0 0
    %2076 = vmatprep.subr.bf16.mxu0 0
    %2077 = vmatpush1.bf16.xpose.msra.mxu0 0
    %2078 = vmatprep.subr.bf16.mxu0 0
    %2079 = vmatpush1.bf16.xpose.msra.mxu0 0
    %2080 = vmatprep.mubr.bf16.mxu0 0
    %2081 = vmatmul.mubr.bf16.gmra.mrb[0].mxu0 %v2043
    %v2082 = vpop.f32.mrb[0].mxu0
    %v2083 = vadd.f32 %v1433, %v2082
    %v2084 = vpop.f32.mrb[0].mxu0
    %v2085 = vpop.f32.mrb[0].mxu0
    %v2086 = vadd.f32 %v1434, %v2085
    %v2087 = vpop.f32.mrb[0].mxu0
    %2088 = vmatprep.mubr.bf16.mxu0 0
    %2089 = vmatmul.mubr.bf16.gmra.mrb[0].mxu0 %v2046
    %v2090 = vpop.f32.mrb[0].mxu0
    %v2091 = vadd.f32 %v1435, %v2090
    %v2092 = vpop.f32.mrb[0].mxu0
    %v2093 = vpop.f32.mrb[0].mxu0
    %v2094 = vadd.f32 %v1436, %v2093
    %v2095 = vpop.f32.mrb[0].mxu0
    %2096 = vdwg.mxu0
    %v2098 = vsel %vm105, %v1242, 0
    %v2101 = vsel %vm105, %v1244, 0
    %2103 = vmatprep.subr.bf16.mxu0 0
    %2104 = vmatpush1.bf16.xpose.msra.mxu0 %v736
    %2105 = vmatprep.subr.bf16.mxu0 0
    %2106 = vmatpush1.bf16.xpose.msra.mxu0 %v739
    %2107 = vmatprep.subr.bf16.mxu0 0
    %2108 = vmatpush1.bf16.xpose.msra.mxu0 0
    %2109 = vmatprep.subr.bf16.mxu0 0
    %2110 = vmatpush1.bf16.xpose.msra.mxu0 0
    %2111 = vmatprep.subr.bf16.mxu0 0
    %2112 = vmatpush1.bf16.xpose.msra.mxu0 0
    %2113 = vmatprep.subr.bf16.mxu0 0
    %2114 = vmatpush1.bf16.xpose.msra.mxu0 0
    %2115 = vmatprep.subr.bf16.mxu0 0
    %2116 = vmatpush1.bf16.xpose.msra.mxu0 0
    %2117 = vmatprep.subr.bf16.mxu0 0
    %2118 = vmatpush1.bf16.xpose.msra.mxu0 0
    %2119 = vmatprep.subr.bf16.mxu0 0
    %2120 = vmatpush1.bf16.xpose.msra.mxu0 0
    %2121 = vmatprep.subr.bf16.mxu0 0
    %2122 = vmatpush1.bf16.xpose.msra.mxu0 0
    %2123 = vmatprep.subr.bf16.mxu0 0
    %2124 = vmatpush1.bf16.xpose.msra.mxu0 0
    %2125 = vmatprep.subr.bf16.mxu0 0
    %2126 = vmatpush1.bf16.xpose.msra.mxu0 0
    %2127 = vmatprep.subr.bf16.mxu0 0
    %2128 = vmatpush1.bf16.xpose.msra.mxu0 0
    %2129 = vmatprep.subr.bf16.mxu0 0
    %2130 = vmatpush1.bf16.xpose.msra.mxu0 0
    %2131 = vmatprep.subr.bf16.mxu0 0
    %2132 = vmatpush1.bf16.xpose.msra.mxu0 0
    %2133 = vmatprep.subr.bf16.mxu0 0
    %2134 = vmatpush1.bf16.xpose.msra.mxu0 0
    %2135 = vmatprep.mubr.bf16.mxu0 0
    %2136 = vmatmul.mubr.bf16.gmra.mrb[0].mxu0 %v2098
    %v2137 = vpop.f32.mrb[0].mxu0
    %v2138 = vadd.f32 %v1433, %v2137
    %v2139 = vpop.f32.mrb[0].mxu0
    %v2140 = vpop.f32.mrb[0].mxu0
    %v2141 = vadd.f32 %v1434, %v2140
    %v2142 = vpop.f32.mrb[0].mxu0
    %2143 = vmatprep.mubr.bf16.mxu0 0
    %2144 = vmatmul.mubr.bf16.gmra.mrb[0].mxu0 %v2101
    %v2145 = vpop.f32.mrb[0].mxu0
    %v2146 = vadd.f32 %v1435, %v2145
    %v2147 = vpop.f32.mrb[0].mxu0
    %v2148 = vpop.f32.mrb[0].mxu0
    %v2149 = vadd.f32 %v1436, %v2148
    %v2150 = vpop.f32.mrb[0].mxu0
    %2151 = vdwg.mxu0
    %v2153 = vsel %vm105, %v1246, 0
    %v2156 = vsel %vm105, %v1248, 0
    %2158 = vmatprep.subr.bf16.mxu0 0
    %2159 = vmatpush1.bf16.xpose.msra.mxu0 %v742
    %2160 = vmatprep.subr.bf16.mxu0 0
    %2161 = vmatpush1.bf16.xpose.msra.mxu0 %v745
    %2162 = vmatprep.subr.bf16.mxu0 0
    %2163 = vmatpush1.bf16.xpose.msra.mxu0 0
    %2164 = vmatprep.subr.bf16.mxu0 0
    %2165 = vmatpush1.bf16.xpose.msra.mxu0 0
    %2166 = vmatprep.subr.bf16.mxu0 0
    %2167 = vmatpush1.bf16.xpose.msra.mxu0 0
    %2168 = vmatprep.subr.bf16.mxu0 0
    %2169 = vmatpush1.bf16.xpose.msra.mxu0 0
    %2170 = vmatprep.subr.bf16.mxu0 0
    %2171 = vmatpush1.bf16.xpose.msra.mxu0 0
    %2172 = vmatprep.subr.bf16.mxu0 0
    %2173 = vmatpush1.bf16.xpose.msra.mxu0 0
    %2174 = vmatprep.subr.bf16.mxu0 0
    %2175 = vmatpush1.bf16.xpose.msra.mxu0 0
    %2176 = vmatprep.subr.bf16.mxu0 0
    %2177 = vmatpush1.bf16.xpose.msra.mxu0 0
    %2178 = vmatprep.subr.bf16.mxu0 0
    %2179 = vmatpush1.bf16.xpose.msra.mxu0 0
    %2180 = vmatprep.subr.bf16.mxu0 0
    %2181 = vmatpush1.bf16.xpose.msra.mxu0 0
    %2182 = vmatprep.subr.bf16.mxu0 0
    %2183 = vmatpush1.bf16.xpose.msra.mxu0 0
    %2184 = vmatprep.subr.bf16.mxu0 0
    %2185 = vmatpush1.bf16.xpose.msra.mxu0 0
    %2186 = vmatprep.subr.bf16.mxu0 0
    %2187 = vmatpush1.bf16.xpose.msra.mxu0 0
    %2188 = vmatprep.subr.bf16.mxu0 0
    %2189 = vmatpush1.bf16.xpose.msra.mxu0 0
    %2190 = vmatprep.mubr.bf16.mxu0 0
    %2191 = vmatmul.mubr.bf16.gmra.mrb[0].mxu0 %v2153
    %v2192 = vpop.f32.mrb[0].mxu0
    %v2193 = vadd.f32 %v1433, %v2192
    %v2194 = vpop.f32.mrb[0].mxu0
    %v2195 = vpop.f32.mrb[0].mxu0
    %v2196 = vadd.f32 %v1434, %v2195
    %v2197 = vpop.f32.mrb[0].mxu0
    %2198 = vmatprep.mubr.bf16.mxu0 0
    %2199 = vmatmul.mubr.bf16.gmra.mrb[0].mxu0 %v2156
    %v2200 = vpop.f32.mrb[0].mxu0
    %v2201 = vadd.f32 %v1435, %v2200
    %v2202 = vpop.f32.mrb[0].mxu0
    %v2203 = vpop.f32.mrb[0].mxu0
    %v2204 = vadd.f32 %v1436, %v2203
    %v2205 = vpop.f32.mrb[0].mxu0
    %2206 = vdwg.mxu0
    %v2208 = vsel %vm105, %v1250, 0
    %v2211 = vsel %vm105, %v1252, 0
    %2213 = vmatprep.subr.bf16.mxu0 0
    %2214 = vmatpush1.bf16.xpose.msra.mxu0 %v748
    %2215 = vmatprep.subr.bf16.mxu0 0
    %2216 = vmatpush1.bf16.xpose.msra.mxu0 %v751
    %2217 = vmatprep.subr.bf16.mxu0 0
    %2218 = vmatpush1.bf16.xpose.msra.mxu0 0
    %2219 = vmatprep.subr.bf16.mxu0 0
    %2220 = vmatpush1.bf16.xpose.msra.mxu0 0
    %2221 = vmatprep.subr.bf16.mxu0 0
    %2222 = vmatpush1.bf16.xpose.msra.mxu0 0
    %2223 = vmatprep.subr.bf16.mxu0 0
    %2224 = vmatpush1.bf16.xpose.msra.mxu0 0
    %2225 = vmatprep.subr.bf16.mxu0 0
    %2226 = vmatpush1.bf16.xpose.msra.mxu0 0
    %2227 = vmatprep.subr.bf16.mxu0 0
    %2228 = vmatpush1.bf16.xpose.msra.mxu0 0
    %2229 = vmatprep.subr.bf16.mxu0 0
    %2230 = vmatpush1.bf16.xpose.msra.mxu0 0
    %2231 = vmatprep.subr.bf16.mxu0 0
    %2232 = vmatpush1.bf16.xpose.msra.mxu0 0
    %2233 = vmatprep.subr.bf16.mxu0 0
    %2234 = vmatpush1.bf16.xpose.msra.mxu0 0
    %2235 = vmatprep.subr.bf16.mxu0 0
    %2236 = vmatpush1.bf16.xpose.msra.mxu0 0
    %2237 = vmatprep.subr.bf16.mxu0 0
    %2238 = vmatpush1.bf16.xpose.msra.mxu0 0
    %2239 = vmatprep.subr.bf16.mxu0 0
    %2240 = vmatpush1.bf16.xpose.msra.mxu0 0
    %2241 = vmatprep.subr.bf16.mxu0 0
    %2242 = vmatpush1.bf16.xpose.msra.mxu0 0
    %2243 = vmatprep.subr.bf16.mxu0 0
    %2244 = vmatpush1.bf16.xpose.msra.mxu0 0
    %2245 = vmatprep.mubr.bf16.mxu0 0
    %2246 = vmatmul.mubr.bf16.gmra.mrb[0].mxu0 %v2208
    %v2247 = vpop.f32.mrb[0].mxu0
    %v2248 = vadd.f32 %v1433, %v2247
    %v2249 = vpop.f32.mrb[0].mxu0
    %v2250 = vpop.f32.mrb[0].mxu0
    %v2251 = vadd.f32 %v1434, %v2250
    %v2252 = vpop.f32.mrb[0].mxu0
    %2253 = vmatprep.mubr.bf16.mxu0 0
    %2254 = vmatmul.mubr.bf16.gmra.mrb[0].mxu0 %v2211
    %v2255 = vpop.f32.mrb[0].mxu0
    %v2256 = vadd.f32 %v1435, %v2255
    %v2257 = vpop.f32.mrb[0].mxu0
    %v2258 = vpop.f32.mrb[0].mxu0
    %v2259 = vadd.f32 %v1436, %v2258
    %v2260 = vpop.f32.mrb[0].mxu0
    %2261 = vdwg.mxu0
    %v2263 = vsel %vm105, %v1254, 0
    %v2266 = vsel %vm105, %v1256, 0
    %2268 = vmatprep.subr.bf16.mxu0 0
    %2269 = vmatpush1.bf16.xpose.msra.mxu0 %v754
    %2270 = vmatprep.subr.bf16.mxu0 0
    %2271 = vmatpush1.bf16.xpose.msra.mxu0 %v757
    %2272 = vmatprep.subr.bf16.mxu0 0
    %2273 = vmatpush1.bf16.xpose.msra.mxu0 0
    %2274 = vmatprep.subr.bf16.mxu0 0
    %2275 = vmatpush1.bf16.xpose.msra.mxu0 0
    %2276 = vmatprep.subr.bf16.mxu0 0
    %2277 = vmatpush1.bf16.xpose.msra.mxu0 0
    %2278 = vmatprep.subr.bf16.mxu0 0
    %2279 = vmatpush1.bf16.xpose.msra.mxu0 0
    %2280 = vmatprep.subr.bf16.mxu0 0
    %2281 = vmatpush1.bf16.xpose.msra.mxu0 0
    %2282 = vmatprep.subr.bf16.mxu0 0
    %2283 = vmatpush1.bf16.xpose.msra.mxu0 0
    %2284 = vmatprep.subr.bf16.mxu0 0
    %2285 = vmatpush1.bf16.xpose.msra.mxu0 0
    %2286 = vmatprep.subr.bf16.mxu0 0
    %2287 = vmatpush1.bf16.xpose.msra.mxu0 0
    %2288 = vmatprep.subr.bf16.mxu0 0
    %2289 = vmatpush1.bf16.xpose.msra.mxu0 0
    %2290 = vmatprep.subr.bf16.mxu0 0
    %2291 = vmatpush1.bf16.xpose.msra.mxu0 0
    %2292 = vmatprep.subr.bf16.mxu0 0
    %2293 = vmatpush1.bf16.xpose.msra.mxu0 0
    %2294 = vmatprep.subr.bf16.mxu0 0
    %2295 = vmatpush1.bf16.xpose.msra.mxu0 0
    %2296 = vmatprep.subr.bf16.mxu0 0
    %2297 = vmatpush1.bf16.xpose.msra.mxu0 0
    %2298 = vmatprep.subr.bf16.mxu0 0
    %2299 = vmatpush1.bf16.xpose.msra.mxu0 0
    %2300 = vmatprep.mubr.bf16.mxu0 0
    %2301 = vmatmul.mubr.bf16.gmra.mrb[0].mxu0 %v2263
    %v2302 = vpop.f32.mrb[0].mxu0
    %v2303 = vadd.f32 %v1433, %v2302
    %v2304 = vpop.f32.mrb[0].mxu0
    %v2305 = vpop.f32.mrb[0].mxu0
    %v2306 = vadd.f32 %v1434, %v2305
    %v2307 = vpop.f32.mrb[0].mxu0
    %2308 = vmatprep.mubr.bf16.mxu0 0
    %2309 = vmatmul.mubr.bf16.gmra.mrb[0].mxu0 %v2266
    %v2310 = vpop.f32.mrb[0].mxu0
    %v2311 = vadd.f32 %v1435, %v2310
    %v2312 = vpop.f32.mrb[0].mxu0
    %v2313 = vpop.f32.mrb[0].mxu0
    %v2314 = vadd.f32 %v1436, %v2313
    %v2315 = vpop.f32.mrb[0].mxu0
    %2316 = vdwg.mxu0
    %v2318 = vsel %vm105, %v1146, 0
    %v2321 = vsel %vm105, %v1150, 0
    %2323 = vmatprep.subr.bf16.mxu0 0
    %2324 = vmatpush1.bf16.xpose.msra.mxu0 %v712
    %2325 = vmatprep.subr.bf16.mxu0 0
    %2326 = vmatpush1.bf16.xpose.msra.mxu0 %v715
    %2327 = vmatprep.subr.bf16.mxu0 0
    %2328 = vmatpush1.bf16.xpose.msra.mxu0 0
    %2329 = vmatprep.subr.bf16.mxu0 0
    %2330 = vmatpush1.bf16.xpose.msra.mxu0 0
    %2331 = vmatprep.subr.bf16.mxu0 0
    %2332 = vmatpush1.bf16.xpose.msra.mxu0 0
    %2333 = vmatprep.subr.bf16.mxu0 0
    %2334 = vmatpush1.bf16.xpose.msra.mxu0 0
    %2335 = vmatprep.subr.bf16.mxu0 0
    %2336 = vmatpush1.bf16.xpose.msra.mxu0 0
    %2337 = vmatprep.subr.bf16.mxu0 0
    %2338 = vmatpush1.bf16.xpose.msra.mxu0 0
    %2339 = vmatprep.subr.bf16.mxu0 0
    %2340 = vmatpush1.bf16.xpose.msra.mxu0 0
    %2341 = vmatprep.subr.bf16.mxu0 0
    %2342 = vmatpush1.bf16.xpose.msra.mxu0 0
    %2343 = vmatprep.subr.bf16.mxu0 0
    %2344 = vmatpush1.bf16.xpose.msra.mxu0 0
    %2345 = vmatprep.subr.bf16.mxu0 0
    %2346 = vmatpush1.bf16.xpose.msra.mxu0 0
    %2347 = vmatprep.subr.bf16.mxu0 0
    %2348 = vmatpush1.bf16.xpose.msra.mxu0 0
    %2349 = vmatprep.subr.bf16.mxu0 0
    %2350 = vmatpush1.bf16.xpose.msra.mxu0 0
    %2351 = vmatprep.subr.bf16.mxu0 0
    %2352 = vmatpush1.bf16.xpose.msra.mxu0 0
    %2353 = vmatprep.subr.bf16.mxu0 0
    %2354 = vmatpush1.bf16.xpose.msra.mxu0 0
    %2355 = vmatprep.mubr.bf16.mxu0 0
    %2356 = vmatmul.mubr.bf16.gmra.mrb[0].mxu0 %v2318
    %v2357 = vpop.f32.mrb[0].mxu0
    %v2358 = vadd.f32 %v1433, %v2357
    %v2359 = vpop.f32.mrb[0].mxu0
    %v2360 = vpop.f32.mrb[0].mxu0
    %v2361 = vadd.f32 %v1434, %v2360
    %v2362 = vpop.f32.mrb[0].mxu0
    %2363 = vmatprep.mubr.bf16.mxu0 0
    %2364 = vmatmul.mubr.bf16.gmra.mrb[0].mxu0 %v2321
    %v2365 = vpop.f32.mrb[0].mxu0
    %v2366 = vadd.f32 %v1435, %v2365
    %v2367 = vpop.f32.mrb[0].mxu0
    %v2368 = vpop.f32.mrb[0].mxu0
    %v2369 = vadd.f32 %v1436, %v2368
    %v2370 = vpop.f32.mrb[0].mxu0
    %2371 = vdwg.mxu0
    %v2373 = vsel %vm105, %v1154, 0
    %v2376 = vsel %vm105, %v1158, 0
    %2378 = vmatprep.subr.bf16.mxu0 0
    %2379 = vmatpush1.bf16.xpose.msra.mxu0 %v718
    %2380 = vmatprep.subr.bf16.mxu0 0
    %2381 = vmatpush1.bf16.xpose.msra.mxu0 %v721
    %2382 = vmatprep.subr.bf16.mxu0 0
    %2383 = vmatpush1.bf16.xpose.msra.mxu0 0
    %2384 = vmatprep.subr.bf16.mxu0 0
    %2385 = vmatpush1.bf16.xpose.msra.mxu0 0
    %2386 = vmatprep.subr.bf16.mxu0 0
    %2387 = vmatpush1.bf16.xpose.msra.mxu0 0
    %2388 = vmatprep.subr.bf16.mxu0 0
    %2389 = vmatpush1.bf16.xpose.msra.mxu0 0
    %2390 = vmatprep.subr.bf16.mxu0 0
    %2391 = vmatpush1.bf16.xpose.msra.mxu0 0
    %2392 = vmatprep.subr.bf16.mxu0 0
    %2393 = vmatpush1.bf16.xpose.msra.mxu0 0
    %2394 = vmatprep.subr.bf16.mxu0 0
    %2395 = vmatpush1.bf16.xpose.msra.mxu0 0
    %2396 = vmatprep.subr.bf16.mxu0 0
    %2397 = vmatpush1.bf16.xpose.msra.mxu0 0
    %2398 = vmatprep.subr.bf16.mxu0 0
    %2399 = vmatpush1.bf16.xpose.msra.mxu0 0
    %2400 = vmatprep.subr.bf16.mxu0 0
    %2401 = vmatpush1.bf16.xpose.msra.mxu0 0
    %2402 = vmatprep.subr.bf16.mxu0 0
    %2403 = vmatpush1.bf16.xpose.msra.mxu0 0
    %2404 = vmatprep.subr.bf16.mxu0 0
    %2405 = vmatpush1.bf16.xpose.msra.mxu0 0
    %2406 = vmatprep.subr.bf16.mxu0 0
    %2407 = vmatpush1.bf16.xpose.msra.mxu0 0
    %2408 = vmatprep.subr.bf16.mxu0 0
    %2409 = vmatpush1.bf16.xpose.msra.mxu0 0
    %2410 = vmatprep.mubr.bf16.mxu0 0
    %2411 = vmatmul.mubr.bf16.gmra.mrb[0].mxu0 %v2373
    %v2412 = vpop.f32.mrb[0].mxu0
    %v2413 = vadd.f32 %v1433, %v2412
    %v2414 = vpop.f32.mrb[0].mxu0
    %v2415 = vpop.f32.mrb[0].mxu0
    %v2416 = vadd.f32 %v1434, %v2415
    %v2417 = vpop.f32.mrb[0].mxu0
    %2418 = vmatprep.mubr.bf16.mxu0 0
    %2419 = vmatmul.mubr.bf16.gmra.mrb[0].mxu0 %v2376
    %v2420 = vpop.f32.mrb[0].mxu0
    %v2421 = vadd.f32 %v1435, %v2420
    %v2422 = vpop.f32.mrb[0].mxu0
    %v2423 = vpop.f32.mrb[0].mxu0
    %v2424 = vadd.f32 %v1436, %v2423
    %v2425 = vpop.f32.mrb[0].mxu0
    %2426 = vdwg.mxu0
    %v2428 = vsel %vm105, %v1162, 0
    %v2431 = vsel %vm105, %v1166, 0
    %2433 = vmatprep.subr.bf16.mxu0 0
    %2434 = vmatpush1.bf16.xpose.msra.mxu0 %v724
    %2435 = vmatprep.subr.bf16.mxu0 0
    %2436 = vmatpush1.bf16.xpose.msra.mxu0 %v727
    %2437 = vmatprep.subr.bf16.mxu0 0
    %2438 = vmatpush1.bf16.xpose.msra.mxu0 0
    %2439 = vmatprep.subr.bf16.mxu0 0
    %2440 = vmatpush1.bf16.xpose.msra.mxu0 0
    %2441 = vmatprep.subr.bf16.mxu0 0
    %2442 = vmatpush1.bf16.xpose.msra.mxu0 0
    %2443 = vmatprep.subr.bf16.mxu0 0
    %2444 = vmatpush1.bf16.xpose.msra.mxu0 0
    %2445 = vmatprep.subr.bf16.mxu0 0
    %2446 = vmatpush1.bf16.xpose.msra.mxu0 0
    %2447 = vmatprep.subr.bf16.mxu0 0
    %2448 = vmatpush1.bf16.xpose.msra.mxu0 0
    %2449 = vmatprep.subr.bf16.mxu0 0
    %2450 = vmatpush1.bf16.xpose.msra.mxu0 0
    %2451 = vmatprep.subr.bf16.mxu0 0
    %2452 = vmatpush1.bf16.xpose.msra.mxu0 0
    %2453 = vmatprep.subr.bf16.mxu0 0
    %2454 = vmatpush1.bf16.xpose.msra.mxu0 0
    %2455 = vmatprep.subr.bf16.mxu0 0
    %2456 = vmatpush1.bf16.xpose.msra.mxu0 0
    %2457 = vmatprep.subr.bf16.mxu0 0
    %2458 = vmatpush1.bf16.xpose.msra.mxu0 0
    %2459 = vmatprep.subr.bf16.mxu0 0
    %2460 = vmatpush1.bf16.xpose.msra.mxu0 0
    %2461 = vmatprep.subr.bf16.mxu0 0
    %2462 = vmatpush1.bf16.xpose.msra.mxu0 0
    %2463 = vmatprep.subr.bf16.mxu0 0
    %2464 = vmatpush1.bf16.xpose.msra.mxu0 0
    %2465 = vmatprep.mubr.bf16.mxu0 0
    %2466 = vmatmul.mubr.bf16.gmra.mrb[0].mxu0 %v2428
    %v2467 = vpop.f32.mrb[0].mxu0
    %v2468 = vadd.f32 %v1433, %v2467
    %v2469 = vpop.f32.mrb[0].mxu0
    %v2470 = vpop.f32.mrb[0].mxu0
    %v2471 = vadd.f32 %v1434, %v2470
    %v2472 = vpop.f32.mrb[0].mxu0
    %2473 = vmatprep.mubr.bf16.mxu0 0
    %2474 = vmatmul.mubr.bf16.gmra.mrb[0].mxu0 %v2431
    %v2475 = vpop.f32.mrb[0].mxu0
    %v2476 = vadd.f32 %v1435, %v2475
    %v2477 = vpop.f32.mrb[0].mxu0
    %v2478 = vpop.f32.mrb[0].mxu0
    %v2479 = vadd.f32 %v1436, %v2478
    %v2480 = vpop.f32.mrb[0].mxu0
    %2481 = vdwg.mxu0
    %v2483 = vsel %vm105, %v1170, 0
    %v2486 = vsel %vm105, %v1174, 0
    %2488 = vmatprep.subr.bf16.mxu0 0
    %2489 = vmatpush1.bf16.xpose.msra.mxu0 %v730
    %2490 = vmatprep.subr.bf16.mxu0 0
    %2491 = vmatpush1.bf16.xpose.msra.mxu0 %v733
    %2492 = vmatprep.subr.bf16.mxu0 0
    %2493 = vmatpush1.bf16.xpose.msra.mxu0 0
    %2494 = vmatprep.subr.bf16.mxu0 0
    %2495 = vmatpush1.bf16.xpose.msra.mxu0 0
    %2496 = vmatprep.subr.bf16.mxu0 0
    %2497 = vmatpush1.bf16.xpose.msra.mxu0 0
    %2498 = vmatprep.subr.bf16.mxu0 0
    %2499 = vmatpush1.bf16.xpose.msra.mxu0 0
    %2500 = vmatprep.subr.bf16.mxu0 0
    %2501 = vmatpush1.bf16.xpose.msra.mxu0 0
    %2502 = vmatprep.subr.bf16.mxu0 0
    %2503 = vmatpush1.bf16.xpose.msra.mxu0 0
    %2504 = vmatprep.subr.bf16.mxu0 0
    %2505 = vmatpush1.bf16.xpose.msra.mxu0 0
    %2506 = vmatprep.subr.bf16.mxu0 0
    %2507 = vmatpush1.bf16.xpose.msra.mxu0 0
    %2508 = vmatprep.subr.bf16.mxu0 0
    %2509 = vmatpush1.bf16.xpose.msra.mxu0 0
    %2510 = vmatprep.subr.bf16.mxu0 0
    %2511 = vmatpush1.bf16.xpose.msra.mxu0 0
    %2512 = vmatprep.subr.bf16.mxu0 0
    %2513 = vmatpush1.bf16.xpose.msra.mxu0 0
    %2514 = vmatprep.subr.bf16.mxu0 0
    %2515 = vmatpush1.bf16.xpose.msra.mxu0 0
    %2516 = vmatprep.subr.bf16.mxu0 0
    %2517 = vmatpush1.bf16.xpose.msra.mxu0 0
    %2518 = vmatprep.subr.bf16.mxu0 0
    %2519 = vmatpush1.bf16.xpose.msra.mxu0 0
    %2520 = vmatprep.mubr.bf16.mxu0 0
    %2521 = vmatmul.mubr.bf16.gmra.mrb[0].mxu0 %v2483
    %v2522 = vpop.f32.mrb[0].mxu0
    %v2523 = vadd.f32 %v1433, %v2522
    %v2524 = vpop.f32.mrb[0].mxu0
    %v2525 = vpop.f32.mrb[0].mxu0
    %v2526 = vadd.f32 %v1434, %v2525
    %v2527 = vpop.f32.mrb[0].mxu0
    %2528 = vmatprep.mubr.bf16.mxu0 0
    %2529 = vmatmul.mubr.bf16.gmra.mrb[0].mxu0 %v2486
    %v2530 = vpop.f32.mrb[0].mxu0
    %v2531 = vadd.f32 %v1435, %v2530
    %v2532 = vpop.f32.mrb[0].mxu0
    %v2533 = vpop.f32.mrb[0].mxu0
    %v2534 = vadd.f32 %v1436, %v2533
    %v2535 = vpop.f32.mrb[0].mxu0
    %2536 = vdwg.mxu0
    %v2538 = vsel %vm105, %v1178, 0
    %v2541 = vsel %vm105, %v1182, 0
    %2543 = vmatprep.subr.bf16.mxu0 0
    %2544 = vmatpush1.bf16.xpose.msra.mxu0 %v736
    %2545 = vmatprep.subr.bf16.mxu0 0
    %2546 = vmatpush1.bf16.xpose.msra.mxu0 %v739
    %2547 = vmatprep.subr.bf16.mxu0 0
    %2548 = vmatpush1.bf16.xpose.msra.mxu0 0
    %2549 = vmatprep.subr.bf16.mxu0 0
    %2550 = vmatpush1.bf16.xpose.msra.mxu0 0
    %2551 = vmatprep.subr.bf16.mxu0 0
    %2552 = vmatpush1.bf16.xpose.msra.mxu0 0
    %2553 = vmatprep.subr.bf16.mxu0 0
    %2554 = vmatpush1.bf16.xpose.msra.mxu0 0
    %2555 = vmatprep.subr.bf16.mxu0 0
    %2556 = vmatpush1.bf16.xpose.msra.mxu0 0
    %2557 = vmatprep.subr.bf16.mxu0 0
    %2558 = vmatpush1.bf16.xpose.msra.mxu0 0
    %2559 = vmatprep.subr.bf16.mxu0 0
    %2560 = vmatpush1.bf16.xpose.msra.mxu0 0
    %2561 = vmatprep.subr.bf16.mxu0 0
    %2562 = vmatpush1.bf16.xpose.msra.mxu0 0
    %2563 = vmatprep.subr.bf16.mxu0 0
    %2564 = vmatpush1.bf16.xpose.msra.mxu0 0
    %2565 = vmatprep.subr.bf16.mxu0 0
    %2566 = vmatpush1.bf16.xpose.msra.mxu0 0
    %2567 = vmatprep.subr.bf16.mxu0 0
    %2568 = vmatpush1.bf16.xpose.msra.mxu0 0
    %2569 = vmatprep.subr.bf16.mxu0 0
    %2570 = vmatpush1.bf16.xpose.msra.mxu0 0
    %2571 = vmatprep.subr.bf16.mxu0 0
    %2572 = vmatpush1.bf16.xpose.msra.mxu0 0
    %2573 = vmatprep.subr.bf16.mxu0 0
    %2574 = vmatpush1.bf16.xpose.msra.mxu0 0
    %2575 = vmatprep.mubr.bf16.mxu0 0
    %2576 = vmatmul.mubr.bf16.gmra.mrb[0].mxu0 %v2538
    %v2577 = vpop.f32.mrb[0].mxu0
    %v2578 = vadd.f32 %v1433, %v2577
    %v2579 = vpop.f32.mrb[0].mxu0
    %v2580 = vpop.f32.mrb[0].mxu0
    %v2581 = vadd.f32 %v1434, %v2580
    %v2582 = vpop.f32.mrb[0].mxu0
    %2583 = vmatprep.mubr.bf16.mxu0 0
    %2584 = vmatmul.mubr.bf16.gmra.mrb[0].mxu0 %v2541
    %v2585 = vpop.f32.mrb[0].mxu0
    %v2586 = vadd.f32 %v1435, %v2585
    %v2587 = vpop.f32.mrb[0].mxu0
    %v2588 = vpop.f32.mrb[0].mxu0
    %v2589 = vadd.f32 %v1436, %v2588
    %v2590 = vpop.f32.mrb[0].mxu0
    %2591 = vdwg.mxu0
    %v2593 = vsel %vm105, %v1186, 0
    %v2596 = vsel %vm105, %v1190, 0
    %2598 = vmatprep.subr.bf16.mxu0 0
    %2599 = vmatpush1.bf16.xpose.msra.mxu0 %v742
    %2600 = vmatprep.subr.bf16.mxu0 0
    %2601 = vmatpush1.bf16.xpose.msra.mxu0 %v745
    %2602 = vmatprep.subr.bf16.mxu0 0
    %2603 = vmatpush1.bf16.xpose.msra.mxu0 0
    %2604 = vmatprep.subr.bf16.mxu0 0
    %2605 = vmatpush1.bf16.xpose.msra.mxu0 0
    %2606 = vmatprep.subr.bf16.mxu0 0
    %2607 = vmatpush1.bf16.xpose.msra.mxu0 0
    %2608 = vmatprep.subr.bf16.mxu0 0
    %2609 = vmatpush1.bf16.xpose.msra.mxu0 0
    %2610 = vmatprep.subr.bf16.mxu0 0
    %2611 = vmatpush1.bf16.xpose.msra.mxu0 0
    %2612 = vmatprep.subr.bf16.mxu0 0
    %2613 = vmatpush1.bf16.xpose.msra.mxu0 0
    %2614 = vmatprep.subr.bf16.mxu0 0
    %2615 = vmatpush1.bf16.xpose.msra.mxu0 0
    %2616 = vmatprep.subr.bf16.mxu0 0
    %2617 = vmatpush1.bf16.xpose.msra.mxu0 0
    %2618 = vmatprep.subr.bf16.mxu0 0
    %2619 = vmatpush1.bf16.xpose.msra.mxu0 0
    %2620 = vmatprep.subr.bf16.mxu0 0
    %2621 = vmatpush1.bf16.xpose.msra.mxu0 0
    %2622 = vmatprep.subr.bf16.mxu0 0
    %2623 = vmatpush1.bf16.xpose.msra.mxu0 0
    %2624 = vmatprep.subr.bf16.mxu0 0
    %2625 = vmatpush1.bf16.xpose.msra.mxu0 0
    %2626 = vmatprep.subr.bf16.mxu0 0
    %2627 = vmatpush1.bf16.xpose.msra.mxu0 0
    %2628 = vmatprep.subr.bf16.mxu0 0
    %2629 = vmatpush1.bf16.xpose.msra.mxu0 0
    %2630 = vmatprep.mubr.bf16.mxu0 0
    %2631 = vmatmul.mubr.bf16.gmra.mrb[0].mxu0 %v2593
    %v2632 = vpop.f32.mrb[0].mxu0
    %v2633 = vadd.f32 %v1433, %v2632
    %v2634 = vpop.f32.mrb[0].mxu0
    %v2635 = vpop.f32.mrb[0].mxu0
    %v2636 = vadd.f32 %v1434, %v2635
    %v2637 = vpop.f32.mrb[0].mxu0
    %2638 = vmatprep.mubr.bf16.mxu0 0
    %2639 = vmatmul.mubr.bf16.gmra.mrb[0].mxu0 %v2596
    %v2640 = vpop.f32.mrb[0].mxu0
    %v2641 = vadd.f32 %v1435, %v2640
    %v2642 = vpop.f32.mrb[0].mxu0
    %v2643 = vpop.f32.mrb[0].mxu0
    %v2644 = vadd.f32 %v1436, %v2643
    %v2645 = vpop.f32.mrb[0].mxu0
    %2646 = vdwg.mxu0
    %v2648 = vsel %vm105, %v1194, 0
    %v2651 = vsel %vm105, %v1198, 0
    %2653 = vmatprep.subr.bf16.mxu0 0
    %2654 = vmatpush1.bf16.xpose.msra.mxu0 %v748
    %2655 = vmatprep.subr.bf16.mxu0 0
    %2656 = vmatpush1.bf16.xpose.msra.mxu0 %v751
    %2657 = vmatprep.subr.bf16.mxu0 0
    %2658 = vmatpush1.bf16.xpose.msra.mxu0 0
    %2659 = vmatprep.subr.bf16.mxu0 0
    %2660 = vmatpush1.bf16.xpose.msra.mxu0 0
    %2661 = vmatprep.subr.bf16.mxu0 0
    %2662 = vmatpush1.bf16.xpose.msra.mxu0 0
    %2663 = vmatprep.subr.bf16.mxu0 0
    %2664 = vmatpush1.bf16.xpose.msra.mxu0 0
    %2665 = vmatprep.subr.bf16.mxu0 0
    %2666 = vmatpush1.bf16.xpose.msra.mxu0 0
    %2667 = vmatprep.subr.bf16.mxu0 0
    %2668 = vmatpush1.bf16.xpose.msra.mxu0 0
    %2669 = vmatprep.subr.bf16.mxu0 0
    %2670 = vmatpush1.bf16.xpose.msra.mxu0 0
    %2671 = vmatprep.subr.bf16.mxu0 0
    %2672 = vmatpush1.bf16.xpose.msra.mxu0 0
    %2673 = vmatprep.subr.bf16.mxu0 0
    %2674 = vmatpush1.bf16.xpose.msra.mxu0 0
    %2675 = vmatprep.subr.bf16.mxu0 0
    %2676 = vmatpush1.bf16.xpose.msra.mxu0 0
    %2677 = vmatprep.subr.bf16.mxu0 0
    %2678 = vmatpush1.bf16.xpose.msra.mxu0 0
    %2679 = vmatprep.subr.bf16.mxu0 0
    %2680 = vmatpush1.bf16.xpose.msra.mxu0 0
    %2681 = vmatprep.subr.bf16.mxu0 0
    %2682 = vmatpush1.bf16.xpose.msra.mxu0 0
    %2683 = vmatprep.subr.bf16.mxu0 0
    %2684 = vmatpush1.bf16.xpose.msra.mxu0 0
    %2685 = vmatprep.mubr.bf16.mxu0 0
    %2686 = vmatmul.mubr.bf16.gmra.mrb[0].mxu0 %v2648
    %v2687 = vpop.f32.mrb[0].mxu0
    %v2688 = vadd.f32 %v1433, %v2687
    %v2689 = vpop.f32.mrb[0].mxu0
    %v2690 = vpop.f32.mrb[0].mxu0
    %v2691 = vadd.f32 %v1434, %v2690
    %v2692 = vpop.f32.mrb[0].mxu0
    %2693 = vmatprep.mubr.bf16.mxu0 0
    %2694 = vmatmul.mubr.bf16.gmra.mrb[0].mxu0 %v2651
    %v2695 = vpop.f32.mrb[0].mxu0
    %v2696 = vadd.f32 %v1435, %v2695
    %v2697 = vpop.f32.mrb[0].mxu0
    %v2698 = vpop.f32.mrb[0].mxu0
    %v2699 = vadd.f32 %v1436, %v2698
    %v2700 = vpop.f32.mrb[0].mxu0
    %2701 = vdwg.mxu0
    %v2703 = vsel %vm105, %v1202, 0
    %v2706 = vsel %vm105, %v1206, 0
    %2708 = vmatprep.subr.bf16.mxu0 0
    %2709 = vmatpush1.bf16.xpose.msra.mxu0 %v754
    %2710 = vmatprep.subr.bf16.mxu0 0
    %2711 = vmatpush1.bf16.xpose.msra.mxu0 %v757
    %2712 = vmatprep.subr.bf16.mxu0 0
    %2713 = vmatpush1.bf16.xpose.msra.mxu0 0
    %2714 = vmatprep.subr.bf16.mxu0 0
    %2715 = vmatpush1.bf16.xpose.msra.mxu0 0
    %2716 = vmatprep.subr.bf16.mxu0 0
    %2717 = vmatpush1.bf16.xpose.msra.mxu0 0
    %2718 = vmatprep.subr.bf16.mxu0 0
    %2719 = vmatpush1.bf16.xpose.msra.mxu0 0
    %2720 = vmatprep.subr.bf16.mxu0 0
    %2721 = vmatpush1.bf16.xpose.msra.mxu0 0
    %2722 = vmatprep.subr.bf16.mxu0 0
    %2723 = vmatpush1.bf16.xpose.msra.mxu0 0
    %2724 = vmatprep.subr.bf16.mxu0 0
    %2725 = vmatpush1.bf16.xpose.msra.mxu0 0
    %2726 = vmatprep.subr.bf16.mxu0 0
    %2727 = vmatpush1.bf16.xpose.msra.mxu0 0
    %2728 = vmatprep.subr.bf16.mxu0 0
    %2729 = vmatpush1.bf16.xpose.msra.mxu0 0
    %2730 = vmatprep.subr.bf16.mxu0 0
    %2731 = vmatpush1.bf16.xpose.msra.mxu0 0
    %2732 = vmatprep.subr.bf16.mxu0 0
    %2733 = vmatpush1.bf16.xpose.msra.mxu0 0
    %2734 = vmatprep.subr.bf16.mxu0 0
    %2735 = vmatpush1.bf16.xpose.msra.mxu0 0
    %2736 = vmatprep.subr.bf16.mxu0 0
    %2737 = vmatpush1.bf16.xpose.msra.mxu0 0
    %2738 = vmatprep.subr.bf16.mxu0 0
    %2739 = vmatpush1.bf16.xpose.msra.mxu0 0
    %2740 = vmatprep.mubr.bf16.mxu0 0
    %2741 = vmatmul.mubr.bf16.gmra.mrb[0].mxu0 %v2703
    %v2742 = vpop.f32.mrb[0].mxu0
    %v2743 = vadd.f32 %v1433, %v2742
    %v2744 = vpop.f32.mrb[0].mxu0
    %v2745 = vpop.f32.mrb[0].mxu0
    %v2746 = vadd.f32 %v1434, %v2745
    %v2747 = vpop.f32.mrb[0].mxu0
    %2748 = vmatprep.mubr.bf16.mxu0 0
    %2749 = vmatmul.mubr.bf16.gmra.mrb[0].mxu0 %v2706
    %v2750 = vpop.f32.mrb[0].mxu0
    %v2751 = vadd.f32 %v1435, %v2750
    %v2752 = vpop.f32.mrb[0].mxu0
    %v2753 = vpop.f32.mrb[0].mxu0
    %v2754 = vadd.f32 %v1436, %v2753
    %v2755 = vpop.f32.mrb[0].mxu0
    %2756 = vdwg.mxu0
    %v2758 = vsel %vm105, %v1274, 0
    %v2761 = vsel %vm105, %v1276, 0
    %2763 = vmatprep.subr.bf16.mxu0 0
    %2764 = vmatpush1.bf16.xpose.msra.mxu0 %v712
    %2765 = vmatprep.subr.bf16.mxu0 0
    %2766 = vmatpush1.bf16.xpose.msra.mxu0 %v715
    %2767 = vmatprep.subr.bf16.mxu0 0
    %2768 = vmatpush1.bf16.xpose.msra.mxu0 0
    %2769 = vmatprep.subr.bf16.mxu0 0
    %2770 = vmatpush1.bf16.xpose.msra.mxu0 0
    %2771 = vmatprep.subr.bf16.mxu0 0
    %2772 = vmatpush1.bf16.xpose.msra.mxu0 0
    %2773 = vmatprep.subr.bf16.mxu0 0
    %2774 = vmatpush1.bf16.xpose.msra.mxu0 0
    %2775 = vmatprep.subr.bf16.mxu0 0
    %2776 = vmatpush1.bf16.xpose.msra.mxu0 0
    %2777 = vmatprep.subr.bf16.mxu0 0
    %2778 = vmatpush1.bf16.xpose.msra.mxu0 0
    %2779 = vmatprep.subr.bf16.mxu0 0
    %2780 = vmatpush1.bf16.xpose.msra.mxu0 0
    %2781 = vmatprep.subr.bf16.mxu0 0
    %2782 = vmatpush1.bf16.xpose.msra.mxu0 0
    %2783 = vmatprep.subr.bf16.mxu0 0
    %2784 = vmatpush1.bf16.xpose.msra.mxu0 0
    %2785 = vmatprep.subr.bf16.mxu0 0
    %2786 = vmatpush1.bf16.xpose.msra.mxu0 0
    %2787 = vmatprep.subr.bf16.mxu0 0
    %2788 = vmatpush1.bf16.xpose.msra.mxu0 0
    %2789 = vmatprep.subr.bf16.mxu0 0
    %2790 = vmatpush1.bf16.xpose.msra.mxu0 0
    %2791 = vmatprep.subr.bf16.mxu0 0
    %2792 = vmatpush1.bf16.xpose.msra.mxu0 0
    %2793 = vmatprep.subr.bf16.mxu0 0
    %2794 = vmatpush1.bf16.xpose.msra.mxu0 0
    %2795 = vmatprep.mubr.bf16.mxu0 0
    %2796 = vmatmul.mubr.bf16.gmra.mrb[0].mxu0 %v2758
    %v2797 = vpop.f32.mrb[0].mxu0
    %v2798 = vadd.f32 %v1433, %v2797
    %v2799 = vpop.f32.mrb[0].mxu0
    %v2800 = vpop.f32.mrb[0].mxu0
    %v2801 = vadd.f32 %v1434, %v2800
    %v2802 = vpop.f32.mrb[0].mxu0
    %2803 = vmatprep.mubr.bf16.mxu0 0
    %2804 = vmatmul.mubr.bf16.gmra.mrb[0].mxu0 %v2761
    %v2805 = vpop.f32.mrb[0].mxu0
    %v2806 = vadd.f32 %v1435, %v2805
    %v2807 = vpop.f32.mrb[0].mxu0
    %v2808 = vpop.f32.mrb[0].mxu0
    %v2809 = vadd.f32 %v1436, %v2808
    %v2810 = vpop.f32.mrb[0].mxu0
    %2811 = vdwg.mxu0
    %v2813 = vsel %vm105, %v1278, 0
    %v2816 = vsel %vm105, %v1280, 0
    %2818 = vmatprep.subr.bf16.mxu0 0
    %2819 = vmatpush1.bf16.xpose.msra.mxu0 %v718
    %2820 = vmatprep.subr.bf16.mxu0 0
    %2821 = vmatpush1.bf16.xpose.msra.mxu0 %v721
    %2822 = vmatprep.subr.bf16.mxu0 0
    %2823 = vmatpush1.bf16.xpose.msra.mxu0 0
    %2824 = vmatprep.subr.bf16.mxu0 0
    %2825 = vmatpush1.bf16.xpose.msra.mxu0 0
    %2826 = vmatprep.subr.bf16.mxu0 0
    %2827 = vmatpush1.bf16.xpose.msra.mxu0 0
    %2828 = vmatprep.subr.bf16.mxu0 0
    %2829 = vmatpush1.bf16.xpose.msra.mxu0 0
    %2830 = vmatprep.subr.bf16.mxu0 0
    %2831 = vmatpush1.bf16.xpose.msra.mxu0 0
    %2832 = vmatprep.subr.bf16.mxu0 0
    %2833 = vmatpush1.bf16.xpose.msra.mxu0 0
    %2834 = vmatprep.subr.bf16.mxu0 0
    %2835 = vmatpush1.bf16.xpose.msra.mxu0 0
    %2836 = vmatprep.subr.bf16.mxu0 0
    %2837 = vmatpush1.bf16.xpose.msra.mxu0 0
    %2838 = vmatprep.subr.bf16.mxu0 0
    %2839 = vmatpush1.bf16.xpose.msra.mxu0 0
    %2840 = vmatprep.subr.bf16.mxu0 0
    %2841 = vmatpush1.bf16.xpose.msra.mxu0 0
    %2842 = vmatprep.subr.bf16.mxu0 0
    %2843 = vmatpush1.bf16.xpose.msra.mxu0 0
    %2844 = vmatprep.subr.bf16.mxu0 0
    %2845 = vmatpush1.bf16.xpose.msra.mxu0 0
    %2846 = vmatprep.subr.bf16.mxu0 0
    %2847 = vmatpush1.bf16.xpose.msra.mxu0 0
    %2848 = vmatprep.subr.bf16.mxu0 0
    %2849 = vmatpush1.bf16.xpose.msra.mxu0 0
    %2850 = vmatprep.mubr.bf16.mxu0 0
    %2851 = vmatmul.mubr.bf16.gmra.mrb[0].mxu0 %v2813
    %v2852 = vpop.f32.mrb[0].mxu0
    %v2853 = vadd.f32 %v1433, %v2852
    %v2854 = vpop.f32.mrb[0].mxu0
    %v2855 = vpop.f32.mrb[0].mxu0
    %v2856 = vadd.f32 %v1434, %v2855
    %v2857 = vpop.f32.mrb[0].mxu0
    %2858 = vmatprep.mubr.bf16.mxu0 0
    %2859 = vmatmul.mubr.bf16.gmra.mrb[0].mxu0 %v2816
    %v2860 = vpop.f32.mrb[0].mxu0
    %v2861 = vadd.f32 %v1435, %v2860
    %v2862 = vpop.f32.mrb[0].mxu0
    %v2863 = vpop.f32.mrb[0].mxu0
    %v2864 = vadd.f32 %v1436, %v2863
    %v2865 = vpop.f32.mrb[0].mxu0
    %2866 = vdwg.mxu0
    %v2868 = vsel %vm105, %v1282, 0
    %v2871 = vsel %vm105, %v1284, 0
    %2873 = vmatprep.subr.bf16.mxu0 0
    %2874 = vmatpush1.bf16.xpose.msra.mxu0 %v724
    %2875 = vmatprep.subr.bf16.mxu0 0
    %2876 = vmatpush1.bf16.xpose.msra.mxu0 %v727
    %2877 = vmatprep.subr.bf16.mxu0 0
    %2878 = vmatpush1.bf16.xpose.msra.mxu0 0
    %2879 = vmatprep.subr.bf16.mxu0 0
    %2880 = vmatpush1.bf16.xpose.msra.mxu0 0
    %2881 = vmatprep.subr.bf16.mxu0 0
    %2882 = vmatpush1.bf16.xpose.msra.mxu0 0
    %2883 = vmatprep.subr.bf16.mxu0 0
    %2884 = vmatpush1.bf16.xpose.msra.mxu0 0
    %2885 = vmatprep.subr.bf16.mxu0 0
    %2886 = vmatpush1.bf16.xpose.msra.mxu0 0
    %2887 = vmatprep.subr.bf16.mxu0 0
    %2888 = vmatpush1.bf16.xpose.msra.mxu0 0
    %2889 = vmatprep.subr.bf16.mxu0 0
    %2890 = vmatpush1.bf16.xpose.msra.mxu0 0
    %2891 = vmatprep.subr.bf16.mxu0 0
    %2892 = vmatpush1.bf16.xpose.msra.mxu0 0
    %2893 = vmatprep.subr.bf16.mxu0 0
    %2894 = vmatpush1.bf16.xpose.msra.mxu0 0
    %2895 = vmatprep.subr.bf16.mxu0 0
    %2896 = vmatpush1.bf16.xpose.msra.mxu0 0
    %2897 = vmatprep.subr.bf16.mxu0 0
    %2898 = vmatpush1.bf16.xpose.msra.mxu0 0
    %2899 = vmatprep.subr.bf16.mxu0 0
    %2900 = vmatpush1.bf16.xpose.msra.mxu0 0
    %2901 = vmatprep.subr.bf16.mxu0 0
    %2902 = vmatpush1.bf16.xpose.msra.mxu0 0
    %2903 = vmatprep.subr.bf16.mxu0 0
    %2904 = vmatpush1.bf16.xpose.msra.mxu0 0
    %2905 = vmatprep.mubr.bf16.mxu0 0
    %2906 = vmatmul.mubr.bf16.gmra.mrb[0].mxu0 %v2868
    %v2907 = vpop.f32.mrb[0].mxu0
    %v2908 = vadd.f32 %v1433, %v2907
    %v2909 = vpop.f32.mrb[0].mxu0
    %v2910 = vpop.f32.mrb[0].mxu0
    %v2911 = vadd.f32 %v1434, %v2910
    %v2912 = vpop.f32.mrb[0].mxu0
    %2913 = vmatprep.mubr.bf16.mxu0 0
    %2914 = vmatmul.mubr.bf16.gmra.mrb[0].mxu0 %v2871
    %v2915 = vpop.f32.mrb[0].mxu0
    %v2916 = vadd.f32 %v1435, %v2915
    %v2917 = vpop.f32.mrb[0].mxu0
    %v2918 = vpop.f32.mrb[0].mxu0
    %v2919 = vadd.f32 %v1436, %v2918
    %v2920 = vpop.f32.mrb[0].mxu0
    %2921 = vdwg.mxu0
    %v2923 = vsel %vm105, %v1286, 0
    %v2926 = vsel %vm105, %v1288, 0
    %2928 = vmatprep.subr.bf16.mxu0 0
    %2929 = vmatpush1.bf16.xpose.msra.mxu0 %v730
    %2930 = vmatprep.subr.bf16.mxu0 0
    %2931 = vmatpush1.bf16.xpose.msra.mxu0 %v733
    %2932 = vmatprep.subr.bf16.mxu0 0
    %2933 = vmatpush1.bf16.xpose.msra.mxu0 0
    %2934 = vmatprep.subr.bf16.mxu0 0
    %2935 = vmatpush1.bf16.xpose.msra.mxu0 0
    %2936 = vmatprep.subr.bf16.mxu0 0
    %2937 = vmatpush1.bf16.xpose.msra.mxu0 0
    %2938 = vmatprep.subr.bf16.mxu0 0
    %2939 = vmatpush1.bf16.xpose.msra.mxu0 0
    %2940 = vmatprep.subr.bf16.mxu0 0
    %2941 = vmatpush1.bf16.xpose.msra.mxu0 0
    %2942 = vmatprep.subr.bf16.mxu0 0
    %2943 = vmatpush1.bf16.xpose.msra.mxu0 0
    %2944 = vmatprep.subr.bf16.mxu0 0
    %2945 = vmatpush1.bf16.xpose.msra.mxu0 0
    %2946 = vmatprep.subr.bf16.mxu0 0
    %2947 = vmatpush1.bf16.xpose.msra.mxu0 0
    %2948 = vmatprep.subr.bf16.mxu0 0
    %2949 = vmatpush1.bf16.xpose.msra.mxu0 0
    %2950 = vmatprep.subr.bf16.mxu0 0
    %2951 = vmatpush1.bf16.xpose.msra.mxu0 0
    %2952 = vmatprep.subr.bf16.mxu0 0
    %2953 = vmatpush1.bf16.xpose.msra.mxu0 0
    %2954 = vmatprep.subr.bf16.mxu0 0
    %2955 = vmatpush1.bf16.xpose.msra.mxu0 0
    %2956 = vmatprep.subr.bf16.mxu0 0
    %2957 = vmatpush1.bf16.xpose.msra.mxu0 0
    %2958 = vmatprep.subr.bf16.mxu0 0
    %2959 = vmatpush1.bf16.xpose.msra.mxu0 0
    %2960 = vmatprep.mubr.bf16.mxu0 0
    %2961 = vmatmul.mubr.bf16.gmra.mrb[0].mxu0 %v2923
    %v2962 = vpop.f32.mrb[0].mxu0
    %v2963 = vadd.f32 %v1433, %v2962
    %v2964 = vpop.f32.mrb[0].mxu0
    %v2965 = vpop.f32.mrb[0].mxu0
    %v2966 = vadd.f32 %v1434, %v2965
    %v2967 = vpop.f32.mrb[0].mxu0
    %2968 = vmatprep.mubr.bf16.mxu0 0
    %2969 = vmatmul.mubr.bf16.gmra.mrb[0].mxu0 %v2926
    %v2970 = vpop.f32.mrb[0].mxu0
    %v2971 = vadd.f32 %v1435, %v2970
    %v2972 = vpop.f32.mrb[0].mxu0
    %v2973 = vpop.f32.mrb[0].mxu0
    %v2974 = vadd.f32 %v1436, %v2973
    %v2975 = vpop.f32.mrb[0].mxu0
    %2976 = vdwg.mxu0
    %v2978 = vsel %vm105, %v1290, 0
    %v2981 = vsel %vm105, %v1292, 0
    %2983 = vmatprep.subr.bf16.mxu0 0
    %2984 = vmatpush1.bf16.xpose.msra.mxu0 %v736
    %2985 = vmatprep.subr.bf16.mxu0 0
    %2986 = vmatpush1.bf16.xpose.msra.mxu0 %v739
    %2987 = vmatprep.subr.bf16.mxu0 0
    %2988 = vmatpush1.bf16.xpose.msra.mxu0 0
    %2989 = vmatprep.subr.bf16.mxu0 0
    %2990 = vmatpush1.bf16.xpose.msra.mxu0 0
    %2991 = vmatprep.subr.bf16.mxu0 0
    %2992 = vmatpush1.bf16.xpose.msra.mxu0 0
    %2993 = vmatprep.subr.bf16.mxu0 0
    %2994 = vmatpush1.bf16.xpose.msra.mxu0 0
    %2995 = vmatprep.subr.bf16.mxu0 0
    %2996 = vmatpush1.bf16.xpose.msra.mxu0 0
    %2997 = vmatprep.subr.bf16.mxu0 0
    %2998 = vmatpush1.bf16.xpose.msra.mxu0 0
    %2999 = vmatprep.subr.bf16.mxu0 0
    %3000 = vmatpush1.bf16.xpose.msra.mxu0 0
    %3001 = vmatprep.subr.bf16.mxu0 0
    %3002 = vmatpush1.bf16.xpose.msra.mxu0 0
    %3003 = vmatprep.subr.bf16.mxu0 0
    %3004 = vmatpush1.bf16.xpose.msra.mxu0 0
    %3005 = vmatprep.subr.bf16.mxu0 0
    %3006 = vmatpush1.bf16.xpose.msra.mxu0 0
    %3007 = vmatprep.subr.bf16.mxu0 0
    %3008 = vmatpush1.bf16.xpose.msra.mxu0 0
    %3009 = vmatprep.subr.bf16.mxu0 0
    %3010 = vmatpush1.bf16.xpose.msra.mxu0 0
    %3011 = vmatprep.subr.bf16.mxu0 0
    %3012 = vmatpush1.bf16.xpose.msra.mxu0 0
    %3013 = vmatprep.subr.bf16.mxu0 0
    %3014 = vmatpush1.bf16.xpose.msra.mxu0 0
    %3015 = vmatprep.mubr.bf16.mxu0 0
    %3016 = vmatmul.mubr.bf16.gmra.mrb[0].mxu0 %v2978
    %v3017 = vpop.f32.mrb[0].mxu0
    %v3018 = vadd.f32 %v1433, %v3017
    %v3019 = vpop.f32.mrb[0].mxu0
    %v3020 = vpop.f32.mrb[0].mxu0
    %v3021 = vadd.f32 %v1434, %v3020
    %v3022 = vpop.f32.mrb[0].mxu0
    %3023 = vmatprep.mubr.bf16.mxu0 0
    %3024 = vmatmul.mubr.bf16.gmra.mrb[0].mxu0 %v2981
    %v3025 = vpop.f32.mrb[0].mxu0
    %v3026 = vadd.f32 %v1435, %v3025
    %v3027 = vpop.f32.mrb[0].mxu0
    %v3028 = vpop.f32.mrb[0].mxu0
    %v3029 = vadd.f32 %v1436, %v3028
    %v3030 = vpop.f32.mrb[0].mxu0
    %3031 = vdwg.mxu0
    %v3033 = vsel %vm105, %v1294, 0
    %v3036 = vsel %vm105, %v1296, 0
    %3038 = vmatprep.subr.bf16.mxu0 0
    %3039 = vmatpush1.bf16.xpose.msra.mxu0 %v742
    %3040 = vmatprep.subr.bf16.mxu0 0
    %3041 = vmatpush1.bf16.xpose.msra.mxu0 %v745
    %3042 = vmatprep.subr.bf16.mxu0 0
    %3043 = vmatpush1.bf16.xpose.msra.mxu0 0
    %3044 = vmatprep.subr.bf16.mxu0 0
    %3045 = vmatpush1.bf16.xpose.msra.mxu0 0
    %3046 = vmatprep.subr.bf16.mxu0 0
    %3047 = vmatpush1.bf16.xpose.msra.mxu0 0
    %3048 = vmatprep.subr.bf16.mxu0 0
    %3049 = vmatpush1.bf16.xpose.msra.mxu0 0
    %3050 = vmatprep.subr.bf16.mxu0 0
    %3051 = vmatpush1.bf16.xpose.msra.mxu0 0
    %3052 = vmatprep.subr.bf16.mxu0 0
    %3053 = vmatpush1.bf16.xpose.msra.mxu0 0
    %3054 = vmatprep.subr.bf16.mxu0 0
    %3055 = vmatpush1.bf16.xpose.msra.mxu0 0
    %3056 = vmatprep.subr.bf16.mxu0 0
    %3057 = vmatpush1.bf16.xpose.msra.mxu0 0
    %3058 = vmatprep.subr.bf16.mxu0 0
    %3059 = vmatpush1.bf16.xpose.msra.mxu0 0
    %3060 = vmatprep.subr.bf16.mxu0 0
    %3061 = vmatpush1.bf16.xpose.msra.mxu0 0
    %3062 = vmatprep.subr.bf16.mxu0 0
    %3063 = vmatpush1.bf16.xpose.msra.mxu0 0
    %3064 = vmatprep.subr.bf16.mxu0 0
    %3065 = vmatpush1.bf16.xpose.msra.mxu0 0
    %3066 = vmatprep.subr.bf16.mxu0 0
    %3067 = vmatpush1.bf16.xpose.msra.mxu0 0
    %3068 = vmatprep.subr.bf16.mxu0 0
    %3069 = vmatpush1.bf16.xpose.msra.mxu0 0
    %3070 = vmatprep.mubr.bf16.mxu0 0
    %3071 = vmatmul.mubr.bf16.gmra.mrb[0].mxu0 %v3033
    %v3072 = vpop.f32.mrb[0].mxu0
    %v3073 = vadd.f32 %v1433, %v3072
    %v3074 = vpop.f32.mrb[0].mxu0
    %v3075 = vpop.f32.mrb[0].mxu0
    %v3076 = vadd.f32 %v1434, %v3075
    %v3077 = vpop.f32.mrb[0].mxu0
    %3078 = vmatprep.mubr.bf16.mxu0 0
    %3079 = vmatmul.mubr.bf16.gmra.mrb[0].mxu0 %v3036
    %v3080 = vpop.f32.mrb[0].mxu0
    %v3081 = vadd.f32 %v1435, %v3080
    %v3082 = vpop.f32.mrb[0].mxu0
    %v3083 = vpop.f32.mrb[0].mxu0
    %v3084 = vadd.f32 %v1436, %v3083
    %v3085 = vpop.f32.mrb[0].mxu0
    %3086 = vdwg.mxu0
    %v3088 = vsel %vm105, %v1298, 0
    %v3091 = vsel %vm105, %v1300, 0
    %3093 = vmatprep.subr.bf16.mxu0 0
    %3094 = vmatpush1.bf16.xpose.msra.mxu0 %v748
    %3095 = vmatprep.subr.bf16.mxu0 0
    %3096 = vmatpush1.bf16.xpose.msra.mxu0 %v751
    %3097 = vmatprep.subr.bf16.mxu0 0
    %3098 = vmatpush1.bf16.xpose.msra.mxu0 0
    %3099 = vmatprep.subr.bf16.mxu0 0
    %3100 = vmatpush1.bf16.xpose.msra.mxu0 0
    %3101 = vmatprep.subr.bf16.mxu0 0
    %3102 = vmatpush1.bf16.xpose.msra.mxu0 0
    %3103 = vmatprep.subr.bf16.mxu0 0
    %3104 = vmatpush1.bf16.xpose.msra.mxu0 0
    %3105 = vmatprep.subr.bf16.mxu0 0
    %3106 = vmatpush1.bf16.xpose.msra.mxu0 0
    %3107 = vmatprep.subr.bf16.mxu0 0
    %3108 = vmatpush1.bf16.xpose.msra.mxu0 0
    %3109 = vmatprep.subr.bf16.mxu0 0
    %3110 = vmatpush1.bf16.xpose.msra.mxu0 0
    %3111 = vmatprep.subr.bf16.mxu0 0
    %3112 = vmatpush1.bf16.xpose.msra.mxu0 0
    %3113 = vmatprep.subr.bf16.mxu0 0
    %3114 = vmatpush1.bf16.xpose.msra.mxu0 0
    %3115 = vmatprep.subr.bf16.mxu0 0
    %3116 = vmatpush1.bf16.xpose.msra.mxu0 0
    %3117 = vmatprep.subr.bf16.mxu0 0
    %3118 = vmatpush1.bf16.xpose.msra.mxu0 0
    %3119 = vmatprep.subr.bf16.mxu0 0
    %3120 = vmatpush1.bf16.xpose.msra.mxu0 0
    %3121 = vmatprep.subr.bf16.mxu0 0
    %3122 = vmatpush1.bf16.xpose.msra.mxu0 0
    %3123 = vmatprep.subr.bf16.mxu0 0
    %3124 = vmatpush1.bf16.xpose.msra.mxu0 0
    %3125 = vmatprep.mubr.bf16.mxu0 0
    %3126 = vmatmul.mubr.bf16.gmra.mrb[0].mxu0 %v3088
    %v3127 = vpop.f32.mrb[0].mxu0
    %v3128 = vadd.f32 %v1433, %v3127
    %v3129 = vpop.f32.mrb[0].mxu0
    %v3130 = vpop.f32.mrb[0].mxu0
    %v3131 = vadd.f32 %v1434, %v3130
    %v3132 = vpop.f32.mrb[0].mxu0
    %3133 = vmatprep.mubr.bf16.mxu0 0
    %3134 = vmatmul.mubr.bf16.gmra.mrb[0].mxu0 %v3091
    %v3135 = vpop.f32.mrb[0].mxu0
    %v3136 = vadd.f32 %v1435, %v3135
    %v3137 = vpop.f32.mrb[0].mxu0
    %v3138 = vpop.f32.mrb[0].mxu0
    %v3139 = vadd.f32 %v1436, %v3138
    %v3140 = vpop.f32.mrb[0].mxu0
    %3141 = vdwg.mxu0
    %v3143 = vsel %vm105, %v1302, 0
    %v3146 = vsel %vm105, %v1304, 0
    %3148 = vmatprep.subr.bf16.mxu0 0
    %3149 = vmatpush1.bf16.xpose.msra.mxu0 %v754
    %3150 = vmatprep.subr.bf16.mxu0 0
    %3151 = vmatpush1.bf16.xpose.msra.mxu0 %v757
    %3152 = vmatprep.subr.bf16.mxu0 0
    %3153 = vmatpush1.bf16.xpose.msra.mxu0 0
    %3154 = vmatprep.subr.bf16.mxu0 0
    %3155 = vmatpush1.bf16.xpose.msra.mxu0 0
    %3156 = vmatprep.subr.bf16.mxu0 0
    %3157 = vmatpush1.bf16.xpose.msra.mxu0 0
    %3158 = vmatprep.subr.bf16.mxu0 0
    %3159 = vmatpush1.bf16.xpose.msra.mxu0 0
    %3160 = vmatprep.subr.bf16.mxu0 0
    %3161 = vmatpush1.bf16.xpose.msra.mxu0 0
    %3162 = vmatprep.subr.bf16.mxu0 0
    %3163 = vmatpush1.bf16.xpose.msra.mxu0 0
    %3164 = vmatprep.subr.bf16.mxu0 0
    %3165 = vmatpush1.bf16.xpose.msra.mxu0 0
    %3166 = vmatprep.subr.bf16.mxu0 0
    %3167 = vmatpush1.bf16.xpose.msra.mxu0 0
    %3168 = vmatprep.subr.bf16.mxu0 0
    %3169 = vmatpush1.bf16.xpose.msra.mxu0 0
    %3170 = vmatprep.subr.bf16.mxu0 0
    %3171 = vmatpush1.bf16.xpose.msra.mxu0 0
    %3172 = vmatprep.subr.bf16.mxu0 0
    %3173 = vmatpush1.bf16.xpose.msra.mxu0 0
    %3174 = vmatprep.subr.bf16.mxu0 0
    %3175 = vmatpush1.bf16.xpose.msra.mxu0 0
    %3176 = vmatprep.subr.bf16.mxu0 0
    %3177 = vmatpush1.bf16.xpose.msra.mxu0 0
    %3178 = vmatprep.subr.bf16.mxu0 0
    %3179 = vmatpush1.bf16.xpose.msra.mxu0 0
    %3180 = vmatprep.mubr.bf16.mxu0 0
    %3181 = vmatmul.mubr.bf16.gmra.mrb[0].mxu0 %v3143
    %v3182 = vpop.f32.mrb[0].mxu0
    %v3183 = vadd.f32 %v1433, %v3182
    %v3184 = vpop.f32.mrb[0].mxu0
    %v3185 = vpop.f32.mrb[0].mxu0
    %v3186 = vadd.f32 %v1434, %v3185
    %v3187 = vpop.f32.mrb[0].mxu0
    %3188 = vmatprep.mubr.bf16.mxu0 0
    %3189 = vmatmul.mubr.bf16.gmra.mrb[0].mxu0 %v3146
    %v3190 = vpop.f32.mrb[0].mxu0
    %v3191 = vadd.f32 %v1435, %v3190
    %v3192 = vpop.f32.mrb[0].mxu0
    %v3193 = vpop.f32.mrb[0].mxu0
    %v3194 = vadd.f32 %v1436, %v3193
    %v3195 = vpop.f32.mrb[0].mxu0
    %3196 = vdwg.mxu0
    %vm3197 = vcmask 261120
    %v3198 = vsel %vm3197, %v1478, -inf
    %3199 = vmax.xlane.f32.xlu0 %v3198
    %v3200 = vpop.xlane.xlu0 %3199
    %v3201 = vsel %vm3197, %v1481, -inf
    %3202 = vmax.xlane.f32.xlu0 %v3201
    %v3203 = vpop.xlane.xlu0 %3202
    %v3204 = vsel %vm3197, %v1486, -inf
    %3205 = vmax.xlane.f32.xlu0 %v3204
    %v3206 = vpop.xlane.xlu0 %3205
    %v3207 = vsel %vm3197, %v1489, -inf
    %3208 = vmax.xlane.f32.xlu0 %v3207
    %v3209 = vpop.xlane.xlu0 %3208
    %v3210 = vsel %vm3197, %v1533, -inf
    %3211 = vmax.xlane.f32.xlu0 %v3210
    %v3212 = vpop.xlane.xlu0 %3211
    %v3213 = vsel %vm3197, %v1536, -inf
    %3214 = vmax.xlane.f32.xlu0 %v3213
    %v3215 = vpop.xlane.xlu0 %3214
    %v3216 = vsel %vm3197, %v1541, -inf
    %3217 = vmax.xlane.f32.xlu0 %v3216
    %v3218 = vpop.xlane.xlu0 %3217
    %v3219 = vsel %vm3197, %v1544, -inf
    %3220 = vmax.xlane.f32.xlu0 %v3219
    %v3221 = vpop.xlane.xlu0 %3220
    %v3222 = vsel %vm3197, %v1588, -inf
    %3223 = vmax.xlane.f32.xlu0 %v3222
    %v3224 = vpop.xlane.xlu0 %3223
    %v3225 = vsel %vm3197, %v1591, -inf
    %3226 = vmax.xlane.f32.xlu0 %v3225
    %v3227 = vpop.xlane.xlu0 %3226
    %v3228 = vsel %vm3197, %v1596, -inf
    %3229 = vmax.xlane.f32.xlu0 %v3228
    %v3230 = vpop.xlane.xlu0 %3229
    %v3231 = vsel %vm3197, %v1599, -inf
    %3232 = vmax.xlane.f32.xlu0 %v3231
    %v3233 = vpop.xlane.xlu0 %3232
    %v3234 = vsel %vm3197, %v1643, -inf
    %3235 = vmax.xlane.f32.xlu0 %v3234
    %v3236 = vpop.xlane.xlu0 %3235
    %v3237 = vsel %vm3197, %v1646, -inf
    %3238 = vmax.xlane.f32.xlu0 %v3237
    %v3239 = vpop.xlane.xlu0 %3238
    %v3240 = vsel %vm3197, %v1651, -inf
    %3241 = vmax.xlane.f32.xlu0 %v3240
    %v3242 = vpop.xlane.xlu0 %3241
    %v3243 = vsel %vm3197, %v1654, -inf
    %3244 = vmax.xlane.f32.xlu0 %v3243
    %v3245 = vpop.xlane.xlu0 %3244
    %v3246 = vsel %vm3197, %v1698, -inf
    %3247 = vmax.xlane.f32.xlu0 %v3246
    %v3248 = vpop.xlane.xlu0 %3247
    %v3249 = vsel %vm3197, %v1701, -inf
    %3250 = vmax.xlane.f32.xlu0 %v3249
    %v3251 = vpop.xlane.xlu0 %3250
    %v3252 = vsel %vm3197, %v1706, -inf
    %3253 = vmax.xlane.f32.xlu0 %v3252
    %v3254 = vpop.xlane.xlu0 %3253
    %v3255 = vsel %vm3197, %v1709, -inf
    %3256 = vmax.xlane.f32.xlu0 %v3255
    %v3257 = vpop.xlane.xlu0 %3256
    %v3258 = vsel %vm3197, %v1753, -inf
    %3259 = vmax.xlane.f32.xlu0 %v3258
    %v3260 = vpop.xlane.xlu0 %3259
    %v3261 = vsel %vm3197, %v1756, -inf
    %3262 = vmax.xlane.f32.xlu0 %v3261
    %v3263 = vpop.xlane.xlu0 %3262
    %v3264 = vsel %vm3197, %v1761, -inf
    %3265 = vmax.xlane.f32.xlu0 %v3264
    %v3266 = vpop.xlane.xlu0 %3265
    %v3267 = vsel %vm3197, %v1764, -inf
    %3268 = vmax.xlane.f32.xlu0 %v3267
    %v3269 = vpop.xlane.xlu0 %3268
    %v3270 = vsel %vm3197, %v1808, -inf
    %3271 = vmax.xlane.f32.xlu0 %v3270
    %v3272 = vpop.xlane.xlu0 %3271
    %v3273 = vsel %vm3197, %v1811, -inf
    %3274 = vmax.xlane.f32.xlu0 %v3273
    %v3275 = vpop.xlane.xlu0 %3274
    %v3276 = vsel %vm3197, %v1816, -inf
    %3277 = vmax.xlane.f32.xlu0 %v3276
    %v3278 = vpop.xlane.xlu0 %3277
    %v3279 = vsel %vm3197, %v1819, -inf
    %3280 = vmax.xlane.f32.xlu0 %v3279
    %v3281 = vpop.xlane.xlu0 %3280
    %v3282 = vsel %vm3197, %v1863, -inf
    %3283 = vmax.xlane.f32.xlu0 %v3282
    %v3284 = vpop.xlane.xlu0 %3283
    %v3285 = vsel %vm3197, %v1866, -inf
    %3286 = vmax.xlane.f32.xlu0 %v3285
    %v3287 = vpop.xlane.xlu0 %3286
    %v3288 = vsel %vm3197, %v1871, -inf
    %3289 = vmax.xlane.f32.xlu0 %v3288
    %v3290 = vpop.xlane.xlu0 %3289
    %v3291 = vsel %vm3197, %v1874, -inf
    %3292 = vmax.xlane.f32.xlu0 %v3291
    %v3293 = vpop.xlane.xlu0 %3292
    %v3294 = vsel %vm3197, %v1918, -inf
    %3295 = vmax.xlane.f32.xlu0 %v3294
    %v3296 = vpop.xlane.xlu0 %3295
    %v3297 = vsel %vm3197, %v1921, -inf
    %3298 = vmax.xlane.f32.xlu0 %v3297
    %v3299 = vpop.xlane.xlu0 %3298
    %v3300 = vsel %vm3197, %v1926, -inf
    %3301 = vmax.xlane.f32.xlu0 %v3300
    %v3302 = vpop.xlane.xlu0 %3301
    %v3303 = vsel %vm3197, %v1929, -inf
    %3304 = vmax.xlane.f32.xlu0 %v3303
    %v3305 = vpop.xlane.xlu0 %3304
    %v3306 = vsel %vm3197, %v1973, -inf
    %3307 = vmax.xlane.f32.xlu0 %v3306
    %v3308 = vpop.xlane.xlu0 %3307
    %v3309 = vsel %vm3197, %v1976, -inf
    %3310 = vmax.xlane.f32.xlu0 %v3309
    %v3311 = vpop.xlane.xlu0 %3310
    %v3312 = vsel %vm3197, %v1981, -inf
    %3313 = vmax.xlane.f32.xlu0 %v3312
    %v3314 = vpop.xlane.xlu0 %3313
    %v3315 = vsel %vm3197, %v1984, -inf
    %3316 = vmax.xlane.f32.xlu0 %v3315
    %v3317 = vpop.xlane.xlu0 %3316
    %v3318 = vsel %vm3197, %v2028, -inf
    %3319 = vmax.xlane.f32.xlu0 %v3318
    %v3320 = vpop.xlane.xlu0 %3319
    %v3321 = vsel %vm3197, %v2031, -inf
    %3322 = vmax.xlane.f32.xlu0 %v3321
    %v3323 = vpop.xlane.xlu0 %3322
    %v3324 = vsel %vm3197, %v2036, -inf
    %3325 = vmax.xlane.f32.xlu0 %v3324
    %v3326 = vpop.xlane.xlu0 %3325
    %v3327 = vsel %vm3197, %v2039, -inf
    %3328 = vmax.xlane.f32.xlu0 %v3327
    %v3329 = vpop.xlane.xlu0 %3328
    %v3330 = vsel %vm3197, %v2083, -inf
    %3331 = vmax.xlane.f32.xlu0 %v3330
    %v3332 = vpop.xlane.xlu0 %3331
    %v3333 = vsel %vm3197, %v2086, -inf
    %3334 = vmax.xlane.f32.xlu0 %v3333
    %v3335 = vpop.xlane.xlu0 %3334
    %v3336 = vsel %vm3197, %v2091, -inf
    %3337 = vmax.xlane.f32.xlu0 %v3336
    %v3338 = vpop.xlane.xlu0 %3337
    %v3339 = vsel %vm3197, %v2094, -inf
    %3340 = vmax.xlane.f32.xlu0 %v3339
    %v3341 = vpop.xlane.xlu0 %3340
    %v3342 = vsel %vm3197, %v2138, -inf
    %3343 = vmax.xlane.f32.xlu0 %v3342
    %v3344 = vpop.xlane.xlu0 %3343
    %v3345 = vsel %vm3197, %v2141, -inf
    %3346 = vmax.xlane.f32.xlu0 %v3345
    %v3347 = vpop.xlane.xlu0 %3346
    %v3348 = vsel %vm3197, %v2146, -inf
    %3349 = vmax.xlane.f32.xlu0 %v3348
    %v3350 = vpop.xlane.xlu0 %3349
    %v3351 = vsel %vm3197, %v2149, -inf
    %3352 = vmax.xlane.f32.xlu0 %v3351
    %v3353 = vpop.xlane.xlu0 %3352
    %v3354 = vsel %vm3197, %v2193, -inf
    %3355 = vmax.xlane.f32.xlu0 %v3354
    %v3356 = vpop.xlane.xlu0 %3355
    %v3357 = vsel %vm3197, %v2196, -inf
    %3358 = vmax.xlane.f32.xlu0 %v3357
    %v3359 = vpop.xlane.xlu0 %3358
    %v3360 = vsel %vm3197, %v2201, -inf
    %3361 = vmax.xlane.f32.xlu0 %v3360
    %v3362 = vpop.xlane.xlu0 %3361
    %v3363 = vsel %vm3197, %v2204, -inf
    %3364 = vmax.xlane.f32.xlu0 %v3363
    %v3365 = vpop.xlane.xlu0 %3364
    %v3366 = vsel %vm3197, %v2248, -inf
    %3367 = vmax.xlane.f32.xlu0 %v3366
    %v3368 = vpop.xlane.xlu0 %3367
    %v3369 = vsel %vm3197, %v2251, -inf
    %3370 = vmax.xlane.f32.xlu0 %v3369
    %v3371 = vpop.xlane.xlu0 %3370
    %v3372 = vsel %vm3197, %v2256, -inf
    %3373 = vmax.xlane.f32.xlu0 %v3372
    %v3374 = vpop.xlane.xlu0 %3373
    %v3375 = vsel %vm3197, %v2259, -inf
    %3376 = vmax.xlane.f32.xlu0 %v3375
    %v3377 = vpop.xlane.xlu0 %3376
    %v3378 = vsel %vm3197, %v2303, -inf
    %3379 = vmax.xlane.f32.xlu0 %v3378
    %v3380 = vpop.xlane.xlu0 %3379
    %v3381 = vsel %vm3197, %v2306, -inf
    %3382 = vmax.xlane.f32.xlu0 %v3381
    %v3383 = vpop.xlane.xlu0 %3382
    %v3384 = vsel %vm3197, %v2311, -inf
    %3385 = vmax.xlane.f32.xlu0 %v3384
    %v3386 = vpop.xlane.xlu0 %3385
    %v3387 = vsel %vm3197, %v2314, -inf
    %3388 = vmax.xlane.f32.xlu0 %v3387
    %v3389 = vpop.xlane.xlu0 %3388
    %v3390 = vsel %vm3197, %v2358, -inf
    %3391 = vmax.xlane.f32.xlu0 %v3390
    %v3392 = vpop.xlane.xlu0 %3391
    %v3393 = vsel %vm3197, %v2361, -inf
    %3394 = vmax.xlane.f32.xlu0 %v3393
    %v3395 = vpop.xlane.xlu0 %3394
    %v3396 = vsel %vm3197, %v2366, -inf
    %3397 = vmax.xlane.f32.xlu0 %v3396
    %v3398 = vpop.xlane.xlu0 %3397
    %v3399 = vsel %vm3197, %v2369, -inf
    %3400 = vmax.xlane.f32.xlu0 %v3399
    %v3401 = vpop.xlane.xlu0 %3400
    %v3402 = vsel %vm3197, %v2413, -inf
    %3403 = vmax.xlane.f32.xlu0 %v3402
    %v3404 = vpop.xlane.xlu0 %3403
    %v3405 = vsel %vm3197, %v2416, -inf
    %3406 = vmax.xlane.f32.xlu0 %v3405
    %v3407 = vpop.xlane.xlu0 %3406
    %v3408 = vsel %vm3197, %v2421, -inf
    %3409 = vmax.xlane.f32.xlu0 %v3408
    %v3410 = vpop.xlane.xlu0 %3409
    %v3411 = vsel %vm3197, %v2424, -inf
    %3412 = vmax.xlane.f32.xlu0 %v3411
    %v3413 = vpop.xlane.xlu0 %3412
    %v3414 = vsel %vm3197, %v2468, -inf
    %3415 = vmax.xlane.f32.xlu0 %v3414
    %v3416 = vpop.xlane.xlu0 %3415
    %v3417 = vsel %vm3197, %v2471, -inf
    %3418 = vmax.xlane.f32.xlu0 %v3417
    %v3419 = vpop.xlane.xlu0 %3418
    %v3420 = vsel %vm3197, %v2476, -inf
    %3421 = vmax.xlane.f32.xlu0 %v3420
    %v3422 = vpop.xlane.xlu0 %3421
    %v3423 = vsel %vm3197, %v2479, -inf
    %3424 = vmax.xlane.f32.xlu0 %v3423
    %v3425 = vpop.xlane.xlu0 %3424
    %v3426 = vsel %vm3197, %v2523, -inf
    %3427 = vmax.xlane.f32.xlu0 %v3426
    %v3428 = vpop.xlane.xlu0 %3427
    %v3429 = vsel %vm3197, %v2526, -inf
    %3430 = vmax.xlane.f32.xlu0 %v3429
    %v3431 = vpop.xlane.xlu0 %3430
    %v3432 = vsel %vm3197, %v2531, -inf
    %3433 = vmax.xlane.f32.xlu0 %v3432
    %v3434 = vpop.xlane.xlu0 %3433
    %v3435 = vsel %vm3197, %v2534, -inf
    %3436 = vmax.xlane.f32.xlu0 %v3435
    %v3437 = vpop.xlane.xlu0 %3436
    %v3438 = vsel %vm3197, %v2578, -inf
    %3439 = vmax.xlane.f32.xlu0 %v3438
    %v3440 = vpop.xlane.xlu0 %3439
    %v3441 = vsel %vm3197, %v2581, -inf
    %3442 = vmax.xlane.f32.xlu0 %v3441
    %v3443 = vpop.xlane.xlu0 %3442
    %v3444 = vsel %vm3197, %v2586, -inf
    %3445 = vmax.xlane.f32.xlu0 %v3444
    %v3446 = vpop.xlane.xlu0 %3445
    %v3447 = vsel %vm3197, %v2589, -inf
    %3448 = vmax.xlane.f32.xlu0 %v3447
    %v3449 = vpop.xlane.xlu0 %3448
    %v3450 = vsel %vm3197, %v2633, -inf
    %3451 = vmax.xlane.f32.xlu0 %v3450
    %v3452 = vpop.xlane.xlu0 %3451
    %v3453 = vsel %vm3197, %v2636, -inf
    %3454 = vmax.xlane.f32.xlu0 %v3453
    %v3455 = vpop.xlane.xlu0 %3454
    %v3456 = vsel %vm3197, %v2641, -inf
    %3457 = vmax.xlane.f32.xlu0 %v3456
    %v3458 = vpop.xlane.xlu0 %3457
    %v3459 = vsel %vm3197, %v2644, -inf
    %3460 = vmax.xlane.f32.xlu0 %v3459
    %v3461 = vpop.xlane.xlu0 %3460
    %v3462 = vsel %vm3197, %v2688, -inf
    %3463 = vmax.xlane.f32.xlu0 %v3462
    %v3464 = vpop.xlane.xlu0 %3463
    %v3465 = vsel %vm3197, %v2691, -inf
    %3466 = vmax.xlane.f32.xlu0 %v3465
    %v3467 = vpop.xlane.xlu0 %3466
    %v3468 = vsel %vm3197, %v2696, -inf
    %3469 = vmax.xlane.f32.xlu0 %v3468
    %v3470 = vpop.xlane.xlu0 %3469
    %v3471 = vsel %vm3197, %v2699, -inf
    %3472 = vmax.xlane.f32.xlu0 %v3471
    %v3473 = vpop.xlane.xlu0 %3472
    %v3474 = vsel %vm3197, %v2743, -inf
    %3475 = vmax.xlane.f32.xlu0 %v3474
    %v3476 = vpop.xlane.xlu0 %3475
    %v3477 = vsel %vm3197, %v2746, -inf
    %3478 = vmax.xlane.f32.xlu0 %v3477
    %v3479 = vpop.xlane.xlu0 %3478
    %v3480 = vsel %vm3197, %v2751, -inf
    %3481 = vmax.xlane.f32.xlu0 %v3480
    %v3482 = vpop.xlane.xlu0 %3481
    %v3483 = vsel %vm3197, %v2754, -inf
    %3484 = vmax.xlane.f32.xlu0 %v3483
    %v3485 = vpop.xlane.xlu0 %3484
    %v3486 = vsel %vm3197, %v2798, -inf
    %3487 = vmax.xlane.f32.xlu0 %v3486
    %v3488 = vpop.xlane.xlu0 %3487
    %v3489 = vsel %vm3197, %v2801, -inf
    %3490 = vmax.xlane.f32.xlu0 %v3489
    %v3491 = vpop.xlane.xlu0 %3490
    %v3492 = vsel %vm3197, %v2806, -inf
    %3493 = vmax.xlane.f32.xlu0 %v3492
    %v3494 = vpop.xlane.xlu0 %3493
    %v3495 = vsel %vm3197, %v2809, -inf
    %3496 = vmax.xlane.f32.xlu0 %v3495
    %v3497 = vpop.xlane.xlu0 %3496
    %v3498 = vsel %vm3197, %v2853, -inf
    %3499 = vmax.xlane.f32.xlu0 %v3498
    %v3500 = vpop.xlane.xlu0 %3499
    %v3501 = vsel %vm3197, %v2856, -inf
    %3502 = vmax.xlane.f32.xlu0 %v3501
    %v3503 = vpop.xlane.xlu0 %3502
    %v3504 = vsel %vm3197, %v2861, -inf
    %3505 = vmax.xlane.f32.xlu0 %v3504
    %v3506 = vpop.xlane.xlu0 %3505
    %v3507 = vsel %vm3197, %v2864, -inf
    %3508 = vmax.xlane.f32.xlu0 %v3507
    %v3509 = vpop.xlane.xlu0 %3508
    %v3510 = vsel %vm3197, %v2908, -inf
    %3511 = vmax.xlane.f32.xlu0 %v3510
    %v3512 = vpop.xlane.xlu0 %3511
    %v3513 = vsel %vm3197, %v2911, -inf
    %3514 = vmax.xlane.f32.xlu0 %v3513
    %v3515 = vpop.xlane.xlu0 %3514
    %v3516 = vsel %vm3197, %v2916, -inf
    %3517 = vmax.xlane.f32.xlu0 %v3516
    %v3518 = vpop.xlane.xlu0 %3517
    %v3519 = vsel %vm3197, %v2919, -inf
    %3520 = vmax.xlane.f32.xlu0 %v3519
    %v3521 = vpop.xlane.xlu0 %3520
    %v3522 = vsel %vm3197, %v2963, -inf
    %3523 = vmax.xlane.f32.xlu0 %v3522
    %v3524 = vpop.xlane.xlu0 %3523
    %v3525 = vsel %vm3197, %v2966, -inf
    %3526 = vmax.xlane.f32.xlu0 %v3525
    %v3527 = vpop.xlane.xlu0 %3526
    %v3528 = vsel %vm3197, %v2971, -inf
    %3529 = vmax.xlane.f32.xlu0 %v3528
    %v3530 = vpop.xlane.xlu0 %3529
    %v3531 = vsel %vm3197, %v2974, -inf
    %3532 = vmax.xlane.f32.xlu0 %v3531
    %v3533 = vpop.xlane.xlu0 %3532
    %v3534 = vsel %vm3197, %v3018, -inf
    %3535 = vmax.xlane.f32.xlu0 %v3534
    %v3536 = vpop.xlane.xlu0 %3535
    %v3537 = vsel %vm3197, %v3021, -inf
    %3538 = vmax.xlane.f32.xlu0 %v3537
    %v3539 = vpop.xlane.xlu0 %3538
    %v3540 = vsel %vm3197, %v3026, -inf
    %3541 = vmax.xlane.f32.xlu0 %v3540
    %v3542 = vpop.xlane.xlu0 %3541
    %v3543 = vsel %vm3197, %v3029, -inf
    %3544 = vmax.xlane.f32.xlu0 %v3543
    %v3545 = vpop.xlane.xlu0 %3544
    %v3546 = vsel %vm3197, %v3073, -inf
    %3547 = vmax.xlane.f32.xlu0 %v3546
    %v3548 = vpop.xlane.xlu0 %3547
    %v3549 = vsel %vm3197, %v3076, -inf
    %3550 = vmax.xlane.f32.xlu0 %v3549
    %v3551 = vpop.xlane.xlu0 %3550
    %v3552 = vsel %vm3197, %v3081, -inf
    %3553 = vmax.xlane.f32.xlu0 %v3552
    %v3554 = vpop.xlane.xlu0 %3553
    %v3555 = vsel %vm3197, %v3084, -inf
    %3556 = vmax.xlane.f32.xlu0 %v3555
    %v3557 = vpop.xlane.xlu0 %3556
    %v3558 = vsel %vm3197, %v3128, -inf
    %3559 = vmax.xlane.f32.xlu0 %v3558
    %v3560 = vpop.xlane.xlu0 %3559
    %v3561 = vsel %vm3197, %v3131, -inf
    %3562 = vmax.xlane.f32.xlu0 %v3561
    %v3563 = vpop.xlane.xlu0 %3562
    %v3564 = vsel %vm3197, %v3136, -inf
    %3565 = vmax.xlane.f32.xlu0 %v3564
    %v3566 = vpop.xlane.xlu0 %3565
    %v3567 = vsel %vm3197, %v3139, -inf
    %3568 = vmax.xlane.f32.xlu0 %v3567
    %v3569 = vpop.xlane.xlu0 %3568
    %v3570 = vsel %vm3197, %v3183, -inf
    %3571 = vmax.xlane.f32.xlu0 %v3570
    %v3572 = vpop.xlane.xlu0 %3571
    %v3573 = vsel %vm3197, %v3186, -inf
    %3574 = vmax.xlane.f32.xlu0 %v3573
    %v3575 = vpop.xlane.xlu0 %3574
    %v3576 = vsel %vm3197, %v3191, -inf
    %3577 = vmax.xlane.f32.xlu0 %v3576
    %v3578 = vpop.xlane.xlu0 %3577
    %v3579 = vsel %vm3197, %v3194, -inf
    %3580 = vmax.xlane.f32.xlu0 %v3579
    %v3581 = vpop.xlane.xlu0 %3580
    %v3582 = vsub.f32 %v1478, %v3200
    %v3583 = vsub.f32 %v1481, %v3203
    %v3584 = vsub.f32 %v1486, %v3206
    %v3585 = vsub.f32 %v1489, %v3209
    %v3586 = vsub.f32 %v1533, %v3212
    %v3587 = vsub.f32 %v1536, %v3215
    %v3588 = vsub.f32 %v1541, %v3218
    %v3589 = vsub.f32 %v1544, %v3221
    %v3590 = vsub.f32 %v1588, %v3224
    %v3591 = vsub.f32 %v1591, %v3227
    %v3592 = vsub.f32 %v1596, %v3230
    %v3593 = vsub.f32 %v1599, %v3233
    %v3594 = vsub.f32 %v1643, %v3236
    %v3595 = vsub.f32 %v1646, %v3239
    %v3596 = vsub.f32 %v1651, %v3242
    %v3597 = vsub.f32 %v1654, %v3245
    %v3598 = vsub.f32 %v1698, %v3248
    %v3599 = vsub.f32 %v1701, %v3251
    %v3600 = vsub.f32 %v1706, %v3254
    %v3601 = vsub.f32 %v1709, %v3257
    %v3602 = vsub.f32 %v1753, %v3260
    %v3603 = vsub.f32 %v1756, %v3263
    %v3604 = vsub.f32 %v1761, %v3266
    %v3605 = vsub.f32 %v1764, %v3269
    %v3606 = vsub.f32 %v1808, %v3272
    %v3607 = vsub.f32 %v1811, %v3275
    %v3608 = vsub.f32 %v1816, %v3278
    %v3609 = vsub.f32 %v1819, %v3281
    %v3610 = vsub.f32 %v1863, %v3284
    %v3611 = vsub.f32 %v1866, %v3287
    %v3612 = vsub.f32 %v1871, %v3290
    %v3613 = vsub.f32 %v1874, %v3293
    %v3614 = vsub.f32 %v1918, %v3296
    %v3615 = vsub.f32 %v1921, %v3299
    %v3616 = vsub.f32 %v1926, %v3302
    %v3617 = vsub.f32 %v1929, %v3305
    %v3618 = vsub.f32 %v1973, %v3308
    %v3619 = vsub.f32 %v1976, %v3311
    %v3620 = vsub.f32 %v1981, %v3314
    %v3621 = vsub.f32 %v1984, %v3317
    %v3622 = vsub.f32 %v2028, %v3320
    %v3623 = vsub.f32 %v2031, %v3323
    %v3624 = vsub.f32 %v2036, %v3326
    %v3625 = vsub.f32 %v2039, %v3329
    %v3626 = vsub.f32 %v2083, %v3332
    %v3627 = vsub.f32 %v2086, %v3335
    %v3628 = vsub.f32 %v2091, %v3338
    %v3629 = vsub.f32 %v2094, %v3341
    %v3630 = vsub.f32 %v2138, %v3344
    %v3631 = vsub.f32 %v2141, %v3347
    %v3632 = vsub.f32 %v2146, %v3350
    %v3633 = vsub.f32 %v2149, %v3353
    %v3634 = vsub.f32 %v2193, %v3356
    %v3635 = vsub.f32 %v2196, %v3359
    %v3636 = vsub.f32 %v2201, %v3362
    %v3637 = vsub.f32 %v2204, %v3365
    %v3638 = vsub.f32 %v2248, %v3368
    %v3639 = vsub.f32 %v2251, %v3371
    %v3640 = vsub.f32 %v2256, %v3374
    %v3641 = vsub.f32 %v2259, %v3377
    %v3642 = vsub.f32 %v2303, %v3380
    %v3643 = vsub.f32 %v2306, %v3383
    %v3644 = vsub.f32 %v2311, %v3386
    %v3645 = vsub.f32 %v2314, %v3389
    %v3646 = vsub.f32 %v2358, %v3392
    %v3647 = vsub.f32 %v2361, %v3395
    %v3648 = vsub.f32 %v2366, %v3398
    %v3649 = vsub.f32 %v2369, %v3401
    %v3650 = vsub.f32 %v2413, %v3404
    %v3651 = vsub.f32 %v2416, %v3407
    %v3652 = vsub.f32 %v2421, %v3410
    %v3653 = vsub.f32 %v2424, %v3413
    %v3654 = vsub.f32 %v2468, %v3416
    %v3655 = vsub.f32 %v2471, %v3419
    %v3656 = vsub.f32 %v2476, %v3422
    %v3657 = vsub.f32 %v2479, %v3425
    %v3658 = vsub.f32 %v2523, %v3428
    %v3659 = vsub.f32 %v2526, %v3431
    %v3660 = vsub.f32 %v2531, %v3434
    %v3661 = vsub.f32 %v2534, %v3437
    %v3662 = vsub.f32 %v2578, %v3440
    %v3663 = vsub.f32 %v2581, %v3443
    %v3664 = vsub.f32 %v2586, %v3446
    %v3665 = vsub.f32 %v2589, %v3449
    %v3666 = vsub.f32 %v2633, %v3452
    %v3667 = vsub.f32 %v2636, %v3455
    %v3668 = vsub.f32 %v2641, %v3458
    %v3669 = vsub.f32 %v2644, %v3461
    %v3670 = vsub.f32 %v2688, %v3464
    %v3671 = vsub.f32 %v2691, %v3467
    %v3672 = vsub.f32 %v2696, %v3470
    %v3673 = vsub.f32 %v2699, %v3473
    %v3674 = vsub.f32 %v2743, %v3476
    %v3675 = vsub.f32 %v2746, %v3479
    %v3676 = vsub.f32 %v2751, %v3482
    %v3677 = vsub.f32 %v2754, %v3485
    %v3678 = vsub.f32 %v2798, %v3488
    %v3679 = vsub.f32 %v2801, %v3491
    %v3680 = vsub.f32 %v2806, %v3494
    %v3681 = vsub.f32 %v2809, %v3497
    %v3682 = vsub.f32 %v2853, %v3500
    %v3683 = vsub.f32 %v2856, %v3503
    %v3684 = vsub.f32 %v2861, %v3506
    %v3685 = vsub.f32 %v2864, %v3509
    %v3686 = vsub.f32 %v2908, %v3512
    %v3687 = vsub.f32 %v2911, %v3515
    %v3688 = vsub.f32 %v2916, %v3518
    %v3689 = vsub.f32 %v2919, %v3521
    %v3690 = vsub.f32 %v2963, %v3524
    %v3691 = vsub.f32 %v2966, %v3527
    %v3692 = vsub.f32 %v2971, %v3530
    %v3693 = vsub.f32 %v2974, %v3533
    %v3694 = vsub.f32 %v3018, %v3536
    %v3695 = vsub.f32 %v3021, %v3539
    %v3696 = vsub.f32 %v3026, %v3542
    %v3697 = vsub.f32 %v3029, %v3545
    %v3698 = vsub.f32 %v3073, %v3548
    %v3699 = vsub.f32 %v3076, %v3551
    %v3700 = vsub.f32 %v3081, %v3554
    %v3701 = vsub.f32 %v3084, %v3557
    %v3702 = vsub.f32 %v3128, %v3560
    %v3703 = vsub.f32 %v3131, %v3563
    %v3704 = vsub.f32 %v3136, %v3566
    %v3705 = vsub.f32 %v3139, %v3569
    %v3706 = vsub.f32 %v3183, %v3572
    %v3707 = vsub.f32 %v3186, %v3575
    %v3708 = vsub.f32 %v3191, %v3578
    %v3709 = vsub.f32 %v3194, %v3581
    %v3710 = vmul.f32 %v3582, 1.442695
    %v3711 = vpow.pop %v3710
    %v3712 = vmul.f32 %v3583, 1.442695
    %v3713 = vpow.pop %v3712
    %v3714 = vmul.f32 %v3584, 1.442695
    %v3715 = vpow.pop %v3714
    %v3716 = vmul.f32 %v3585, 1.442695
    %v3717 = vpow.pop %v3716
    %v3718 = vmul.f32 %v3586, 1.442695
    %v3719 = vpow.pop %v3718
    %v3720 = vmul.f32 %v3587, 1.442695
    %v3721 = vpow.pop %v3720
    %v3722 = vmul.f32 %v3588, 1.442695
    %v3723 = vpow.pop %v3722
    %v3724 = vmul.f32 %v3589, 1.442695
    %v3725 = vpow.pop %v3724
    %v3726 = vmul.f32 %v3590, 1.442695
    %v3727 = vpow.pop %v3726
    %v3728 = vmul.f32 %v3591, 1.442695
    %v3729 = vpow.pop %v3728
    %v3730 = vmul.f32 %v3592, 1.442695
    %v3731 = vpow.pop %v3730
    %v3732 = vmul.f32 %v3593, 1.442695
    %v3733 = vpow.pop %v3732
    %v3734 = vmul.f32 %v3594, 1.442695
    %v3735 = vpow.pop %v3734
    %v3736 = vmul.f32 %v3595, 1.442695
    %v3737 = vpow.pop %v3736
    %v3738 = vmul.f32 %v3596, 1.442695
    %v3739 = vpow.pop %v3738
    %v3740 = vmul.f32 %v3597, 1.442695
    %v3741 = vpow.pop %v3740
    %v3742 = vmul.f32 %v3598, 1.442695
    %v3743 = vpow.pop %v3742
    %v3744 = vmul.f32 %v3599, 1.442695
    %v3745 = vpow.pop %v3744
    %v3746 = vmul.f32 %v3600, 1.442695
    %v3747 = vpow.pop %v3746
    %v3748 = vmul.f32 %v3601, 1.442695
    %v3749 = vpow.pop %v3748
    %v3750 = vmul.f32 %v3602, 1.442695
    %v3751 = vpow.pop %v3750
    %v3752 = vmul.f32 %v3603, 1.442695
    %v3753 = vpow.pop %v3752
    %v3754 = vmul.f32 %v3604, 1.442695
    %v3755 = vpow.pop %v3754
    %v3756 = vmul.f32 %v3605, 1.442695
    %v3757 = vpow.pop %v3756
    %v3758 = vmul.f32 %v3606, 1.442695
    %v3759 = vpow.pop %v3758
    %v3760 = vmul.f32 %v3607, 1.442695
    %v3761 = vpow.pop %v3760
    %v3762 = vmul.f32 %v3608, 1.442695
    %v3763 = vpow.pop %v3762
    %v3764 = vmul.f32 %v3609, 1.442695
    %v3765 = vpow.pop %v3764
    %v3766 = vmul.f32 %v3610, 1.442695
    %v3767 = vpow.pop %v3766
    %v3768 = vmul.f32 %v3611, 1.442695
    %v3769 = vpow.pop %v3768
    %v3770 = vmul.f32 %v3612, 1.442695
    %v3771 = vpow.pop %v3770
    %v3772 = vmul.f32 %v3613, 1.442695
    %v3773 = vpow.pop %v3772
    %v3774 = vmul.f32 %v3614, 1.442695
    %v3775 = vpow.pop %v3774
    %v3776 = vmul.f32 %v3615, 1.442695
    %v3777 = vpow.pop %v3776
    %v3778 = vmul.f32 %v3616, 1.442695
    %v3779 = vpow.pop %v3778
    %v3780 = vmul.f32 %v3617, 1.442695
    %v3781 = vpow.pop %v3780
    %v3782 = vmul.f32 %v3618, 1.442695
    %v3783 = vpow.pop %v3782
    %v3784 = vmul.f32 %v3619, 1.442695
    %v3785 = vpow.pop %v3784
    %v3786 = vmul.f32 %v3620, 1.442695
    %v3787 = vpow.pop %v3786
    %v3788 = vmul.f32 %v3621, 1.442695
    %v3789 = vpow.pop %v3788
    %v3790 = vmul.f32 %v3622, 1.442695
    %v3791 = vpow.pop %v3790
    %v3792 = vmul.f32 %v3623, 1.442695
    %v3793 = vpow.pop %v3792
    %v3794 = vmul.f32 %v3624, 1.442695
    %v3795 = vpow.pop %v3794
    %v3796 = vmul.f32 %v3625, 1.442695
    %v3797 = vpow.pop %v3796
    %v3798 = vmul.f32 %v3626, 1.442695
    %v3799 = vpow.pop %v3798
    %v3800 = vmul.f32 %v3627, 1.442695
    %v3801 = vpow.pop %v3800
    %v3802 = vmul.f32 %v3628, 1.442695
    %v3803 = vpow.pop %v3802
    %v3804 = vmul.f32 %v3629, 1.442695
    %v3805 = vpow.pop %v3804
    %v3806 = vmul.f32 %v3630, 1.442695
    %v3807 = vpow.pop %v3806
    %v3808 = vmul.f32 %v3631, 1.442695
    %v3809 = vpow.pop %v3808
    %v3810 = vmul.f32 %v3632, 1.442695
    %v3811 = vpow.pop %v3810
    %v3812 = vmul.f32 %v3633, 1.442695
    %v3813 = vpow.pop %v3812
    %v3814 = vmul.f32 %v3634, 1.442695
    %v3815 = vpow.pop %v3814
    %v3816 = vmul.f32 %v3635, 1.442695
    %v3817 = vpow.pop %v3816
    %v3818 = vmul.f32 %v3636, 1.442695
    %v3819 = vpow.pop %v3818
    %v3820 = vmul.f32 %v3637, 1.442695
    %v3821 = vpow.pop %v3820
    %v3822 = vmul.f32 %v3638, 1.442695
    %v3823 = vpow.pop %v3822
    %v3824 = vmul.f32 %v3639, 1.442695
    %v3825 = vpow.pop %v3824
    %v3826 = vmul.f32 %v3640, 1.442695
    %v3827 = vpow.pop %v3826
    %v3828 = vmul.f32 %v3641, 1.442695
    %v3829 = vpow.pop %v3828
    %v3830 = vmul.f32 %v3642, 1.442695
    %v3831 = vpow.pop %v3830
    %v3832 = vmul.f32 %v3643, 1.442695
    %v3833 = vpow.pop %v3832
    %v3834 = vmul.f32 %v3644, 1.442695
    %v3835 = vpow.pop %v3834
    %v3836 = vmul.f32 %v3645, 1.442695
    %v3837 = vpow.pop %v3836
    %v3838 = vmul.f32 %v3646, 1.442695
    %v3839 = vpow.pop %v3838
    %v3840 = vmul.f32 %v3647, 1.442695
    %v3841 = vpow.pop %v3840
    %v3842 = vmul.f32 %v3648, 1.442695
    %v3843 = vpow.pop %v3842
    %v3844 = vmul.f32 %v3649, 1.442695
    %v3845 = vpow.pop %v3844
    %v3846 = vmul.f32 %v3650, 1.442695
    %v3847 = vpow.pop %v3846
    %v3848 = vmul.f32 %v3651, 1.442695
    %v3849 = vpow.pop %v3848
    %v3850 = vmul.f32 %v3652, 1.442695
    %v3851 = vpow.pop %v3850
    %v3852 = vmul.f32 %v3653, 1.442695
    %v3853 = vpow.pop %v3852
    %v3854 = vmul.f32 %v3654, 1.442695
    %v3855 = vpow.pop %v3854
    %v3856 = vmul.f32 %v3655, 1.442695
    %v3857 = vpow.pop %v3856
    %v3858 = vmul.f32 %v3656, 1.442695
    %v3859 = vpow.pop %v3858
    %v3860 = vmul.f32 %v3657, 1.442695
    %v3861 = vpow.pop %v3860
    %v3862 = vmul.f32 %v3658, 1.442695
    %v3863 = vpow.pop %v3862
    %v3864 = vmul.f32 %v3659, 1.442695
    %v3865 = vpow.pop %v3864
    %v3866 = vmul.f32 %v3660, 1.442695
    %v3867 = vpow.pop %v3866
    %v3868 = vmul.f32 %v3661, 1.442695
    %v3869 = vpow.pop %v3868
    %v3870 = vmul.f32 %v3662, 1.442695
    %v3871 = vpow.pop %v3870
    %v3872 = vmul.f32 %v3663, 1.442695
    %v3873 = vpow.pop %v3872
    %v3874 = vmul.f32 %v3664, 1.442695
    %v3875 = vpow.pop %v3874
    %v3876 = vmul.f32 %v3665, 1.442695
    %v3877 = vpow.pop %v3876
    %v3878 = vmul.f32 %v3666, 1.442695
    %v3879 = vpow.pop %v3878
    %v3880 = vmul.f32 %v3667, 1.442695
    %v3881 = vpow.pop %v3880
    %v3882 = vmul.f32 %v3668, 1.442695
    %v3883 = vpow.pop %v3882
    %v3884 = vmul.f32 %v3669, 1.442695
    %v3885 = vpow.pop %v3884
    %v3886 = vmul.f32 %v3670, 1.442695
    %v3887 = vpow.pop %v3886
    %v3888 = vmul.f32 %v3671, 1.442695
    %v3889 = vpow.pop %v3888
    %v3890 = vmul.f32 %v3672, 1.442695
    %v3891 = vpow.pop %v3890
    %v3892 = vmul.f32 %v3673, 1.442695
    %v3893 = vpow.pop %v3892
    %v3894 = vmul.f32 %v3674, 1.442695
    %v3895 = vpow.pop %v3894
    %v3896 = vmul.f32 %v3675, 1.442695
    %v3897 = vpow.pop %v3896
    %v3898 = vmul.f32 %v3676, 1.442695
    %v3899 = vpow.pop %v3898
    %v3900 = vmul.f32 %v3677, 1.442695
    %v3901 = vpow.pop %v3900
    %v3902 = vmul.f32 %v3678, 1.442695
    %v3903 = vpow.pop %v3902
    %v3904 = vmul.f32 %v3679, 1.442695
    %v3905 = vpow.pop %v3904
    %v3906 = vmul.f32 %v3680, 1.442695
    %v3907 = vpow.pop %v3906
    %v3908 = vmul.f32 %v3681, 1.442695
    %v3909 = vpow.pop %v3908
    %v3910 = vmul.f32 %v3682, 1.442695
    %v3911 = vpow.pop %v3910
    %v3912 = vmul.f32 %v3683, 1.442695
    %v3913 = vpow.pop %v3912
    %v3914 = vmul.f32 %v3684, 1.442695
    %v3915 = vpow.pop %v3914
    %v3916 = vmul.f32 %v3685, 1.442695
    %v3917 = vpow.pop %v3916
    %v3918 = vmul.f32 %v3686, 1.442695
    %v3919 = vpow.pop %v3918
    %v3920 = vmul.f32 %v3687, 1.442695
    %v3921 = vpow.pop %v3920
    %v3922 = vmul.f32 %v3688, 1.442695
    %v3923 = vpow.pop %v3922
    %v3924 = vmul.f32 %v3689, 1.442695
    %v3925 = vpow.pop %v3924
    %v3926 = vmul.f32 %v3690, 1.442695
    %v3927 = vpow.pop %v3926
    %v3928 = vmul.f32 %v3691, 1.442695
    %v3929 = vpow.pop %v3928
    %v3930 = vmul.f32 %v3692, 1.442695
    %v3931 = vpow.pop %v3930
    %v3932 = vmul.f32 %v3693, 1.442695
    %v3933 = vpow.pop %v3932
    %v3934 = vmul.f32 %v3694, 1.442695
    %v3935 = vpow.pop %v3934
    %v3936 = vmul.f32 %v3695, 1.442695
    %v3937 = vpow.pop %v3936
    %v3938 = vmul.f32 %v3696, 1.442695
    %v3939 = vpow.pop %v3938
    %v3940 = vmul.f32 %v3697, 1.442695
    %v3941 = vpow.pop %v3940
    %v3942 = vmul.f32 %v3698, 1.442695
    %v3943 = vpow.pop %v3942
    %v3944 = vmul.f32 %v3699, 1.442695
    %v3945 = vpow.pop %v3944
    %v3946 = vmul.f32 %v3700, 1.442695
    %v3947 = vpow.pop %v3946
    %v3948 = vmul.f32 %v3701, 1.442695
    %v3949 = vpow.pop %v3948
    %v3950 = vmul.f32 %v3702, 1.442695
    %v3951 = vpow.pop %v3950
    %v3952 = vmul.f32 %v3703, 1.442695
    %v3953 = vpow.pop %v3952
    %v3954 = vmul.f32 %v3704, 1.442695
    %v3955 = vpow.pop %v3954
    %v3956 = vmul.f32 %v3705, 1.442695
    %v3957 = vpow.pop %v3956
    %v3958 = vmul.f32 %v3706, 1.442695
    %v3959 = vpow.pop %v3958
    %v3960 = vmul.f32 %v3707, 1.442695
    %v3961 = vpow.pop %v3960
    %v3962 = vmul.f32 %v3708, 1.442695
    %v3963 = vpow.pop %v3962
    %v3964 = vmul.f32 %v3709, 1.442695
    %v3965 = vpow.pop %v3964
    %v3966 = vsel %vm3197, %v3711, 0.0
    %3967 = vadd.xlane.f32.xlu0 %v3966
    %v3968 = vpop.xlane.xlu0 %3967
    %v3969 = vsel %vm3197, %v3713, 0.0
    %3970 = vadd.xlane.f32.xlu0 %v3969
    %v3971 = vpop.xlane.xlu0 %3970
    %v3972 = vsel %vm3197, %v3715, 0.0
    %3973 = vadd.xlane.f32.xlu0 %v3972
    %v3974 = vpop.xlane.xlu0 %3973
    %v3975 = vsel %vm3197, %v3717, 0.0
    %3976 = vadd.xlane.f32.xlu0 %v3975
    %v3977 = vpop.xlane.xlu0 %3976
    %v3978 = vsel %vm3197, %v3719, 0.0
    %3979 = vadd.xlane.f32.xlu0 %v3978
    %v3980 = vpop.xlane.xlu0 %3979
    %v3981 = vsel %vm3197, %v3721, 0.0
    %3982 = vadd.xlane.f32.xlu0 %v3981
    %v3983 = vpop.xlane.xlu0 %3982
    %v3984 = vsel %vm3197, %v3723, 0.0
    %3985 = vadd.xlane.f32.xlu0 %v3984
    %v3986 = vpop.xlane.xlu0 %3985
    %v3987 = vsel %vm3197, %v3725, 0.0
    %3988 = vadd.xlane.f32.xlu0 %v3987
    %v3989 = vpop.xlane.xlu0 %3988
    %v3990 = vsel %vm3197, %v3727, 0.0
    %3991 = vadd.xlane.f32.xlu0 %v3990
    %v3992 = vpop.xlane.xlu0 %3991
    %v3993 = vsel %vm3197, %v3729, 0.0
    %3994 = vadd.xlane.f32.xlu0 %v3993
    %v3995 = vpop.xlane.xlu0 %3994
    %v3996 = vsel %vm3197, %v3731, 0.0
    %3997 = vadd.xlane.f32.xlu0 %v3996
    %v3998 = vpop.xlane.xlu0 %3997
    %v3999 = vsel %vm3197, %v3733, 0.0
    %4000 = vadd.xlane.f32.xlu0 %v3999
    %v4001 = vpop.xlane.xlu0 %4000
    %v4002 = vsel %vm3197, %v3735, 0.0
    %4003 = vadd.xlane.f32.xlu0 %v4002
    %v4004 = vpop.xlane.xlu0 %4003
    %v4005 = vsel %vm3197, %v3737, 0.0
    %4006 = vadd.xlane.f32.xlu0 %v4005
    %v4007 = vpop.xlane.xlu0 %4006
    %v4008 = vsel %vm3197, %v3739, 0.0
    %4009 = vadd.xlane.f32.xlu0 %v4008
    %v4010 = vpop.xlane.xlu0 %4009
    %v4011 = vsel %vm3197, %v3741, 0.0
    %4012 = vadd.xlane.f32.xlu0 %v4011
    %v4013 = vpop.xlane.xlu0 %4012
    %v4014 = vsel %vm3197, %v3743, 0.0
    %4015 = vadd.xlane.f32.xlu0 %v4014
    %v4016 = vpop.xlane.xlu0 %4015
    %v4017 = vsel %vm3197, %v3745, 0.0
    %4018 = vadd.xlane.f32.xlu0 %v4017
    %v4019 = vpop.xlane.xlu0 %4018
    %v4020 = vsel %vm3197, %v3747, 0.0
    %4021 = vadd.xlane.f32.xlu0 %v4020
    %v4022 = vpop.xlane.xlu0 %4021
    %v4023 = vsel %vm3197, %v3749, 0.0
    %4024 = vadd.xlane.f32.xlu0 %v4023
    %v4025 = vpop.xlane.xlu0 %4024
    %v4026 = vsel %vm3197, %v3751, 0.0
    %4027 = vadd.xlane.f32.xlu0 %v4026
    %v4028 = vpop.xlane.xlu0 %4027
    %v4029 = vsel %vm3197, %v3753, 0.0
    %4030 = vadd.xlane.f32.xlu0 %v4029
    %v4031 = vpop.xlane.xlu0 %4030
    %v4032 = vsel %vm3197, %v3755, 0.0
    %4033 = vadd.xlane.f32.xlu0 %v4032
    %v4034 = vpop.xlane.xlu0 %4033
    %v4035 = vsel %vm3197, %v3757, 0.0
    %4036 = vadd.xlane.f32.xlu0 %v4035
    %v4037 = vpop.xlane.xlu0 %4036
    %v4038 = vsel %vm3197, %v3759, 0.0
    %4039 = vadd.xlane.f32.xlu0 %v4038
    %v4040 = vpop.xlane.xlu0 %4039
    %v4041 = vsel %vm3197, %v3761, 0.0
    %4042 = vadd.xlane.f32.xlu0 %v4041
    %v4043 = vpop.xlane.xlu0 %4042
    %v4044 = vsel %vm3197, %v3763, 0.0
    %4045 = vadd.xlane.f32.xlu0 %v4044
    %v4046 = vpop.xlane.xlu0 %4045
    %v4047 = vsel %vm3197, %v3765, 0.0
    %4048 = vadd.xlane.f32.xlu0 %v4047
    %v4049 = vpop.xlane.xlu0 %4048
    %v4050 = vsel %vm3197, %v3767, 0.0
    %4051 = vadd.xlane.f32.xlu0 %v4050
    %v4052 = vpop.xlane.xlu0 %4051
    %v4053 = vsel %vm3197, %v3769, 0.0
    %4054 = vadd.xlane.f32.xlu0 %v4053
    %v4055 = vpop.xlane.xlu0 %4054
    %v4056 = vsel %vm3197, %v3771, 0.0
    %4057 = vadd.xlane.f32.xlu0 %v4056
    %v4058 = vpop.xlane.xlu0 %4057
    %v4059 = vsel %vm3197, %v3773, 0.0
    %4060 = vadd.xlane.f32.xlu0 %v4059
    %v4061 = vpop.xlane.xlu0 %4060
    %v4062 = vsel %vm3197, %v3775, 0.0
    %4063 = vadd.xlane.f32.xlu0 %v4062
    %v4064 = vpop.xlane.xlu0 %4063
    %v4065 = vsel %vm3197, %v3777, 0.0
    %4066 = vadd.xlane.f32.xlu0 %v4065
    %v4067 = vpop.xlane.xlu0 %4066
    %v4068 = vsel %vm3197, %v3779, 0.0
    %4069 = vadd.xlane.f32.xlu0 %v4068
    %v4070 = vpop.xlane.xlu0 %4069
    %v4071 = vsel %vm3197, %v3781, 0.0
    %4072 = vadd.xlane.f32.xlu0 %v4071
    %v4073 = vpop.xlane.xlu0 %4072
    %v4074 = vsel %vm3197, %v3783, 0.0
    %4075 = vadd.xlane.f32.xlu0 %v4074
    %v4076 = vpop.xlane.xlu0 %4075
    %v4077 = vsel %vm3197, %v3785, 0.0
    %4078 = vadd.xlane.f32.xlu0 %v4077
    %v4079 = vpop.xlane.xlu0 %4078
    %v4080 = vsel %vm3197, %v3787, 0.0
    %4081 = vadd.xlane.f32.xlu0 %v4080
    %v4082 = vpop.xlane.xlu0 %4081
    %v4083 = vsel %vm3197, %v3789, 0.0
    %4084 = vadd.xlane.f32.xlu0 %v4083
    %v4085 = vpop.xlane.xlu0 %4084
    %v4086 = vsel %vm3197, %v3791, 0.0
    %4087 = vadd.xlane.f32.xlu0 %v4086
    %v4088 = vpop.xlane.xlu0 %4087
    %v4089 = vsel %vm3197, %v3793, 0.0
    %4090 = vadd.xlane.f32.xlu0 %v4089
    %v4091 = vpop.xlane.xlu0 %4090
    %v4092 = vsel %vm3197, %v3795, 0.0
    %4093 = vadd.xlane.f32.xlu0 %v4092
    %v4094 = vpop.xlane.xlu0 %4093
    %v4095 = vsel %vm3197, %v3797, 0.0
    %4096 = vadd.xlane.f32.xlu0 %v4095
    %v4097 = vpop.xlane.xlu0 %4096
    %v4098 = vsel %vm3197, %v3799, 0.0
    %4099 = vadd.xlane.f32.xlu0 %v4098
    %v4100 = vpop.xlane.xlu0 %4099
    %v4101 = vsel %vm3197, %v3801, 0.0
    %4102 = vadd.xlane.f32.xlu0 %v4101
    %v4103 = vpop.xlane.xlu0 %4102
    %v4104 = vsel %vm3197, %v3803, 0.0
    %4105 = vadd.xlane.f32.xlu0 %v4104
    %v4106 = vpop.xlane.xlu0 %4105
    %v4107 = vsel %vm3197, %v3805, 0.0
    %4108 = vadd.xlane.f32.xlu0 %v4107
    %v4109 = vpop.xlane.xlu0 %4108
    %v4110 = vsel %vm3197, %v3807, 0.0
    %4111 = vadd.xlane.f32.xlu0 %v4110
    %v4112 = vpop.xlane.xlu0 %4111
    %v4113 = vsel %vm3197, %v3809, 0.0
    %4114 = vadd.xlane.f32.xlu0 %v4113
    %v4115 = vpop.xlane.xlu0 %4114
    %v4116 = vsel %vm3197, %v3811, 0.0
    %4117 = vadd.xlane.f32.xlu0 %v4116
    %v4118 = vpop.xlane.xlu0 %4117
    %v4119 = vsel %vm3197, %v3813, 0.0
    %4120 = vadd.xlane.f32.xlu0 %v4119
    %v4121 = vpop.xlane.xlu0 %4120
    %v4122 = vsel %vm3197, %v3815, 0.0
    %4123 = vadd.xlane.f32.xlu0 %v4122
    %v4124 = vpop.xlane.xlu0 %4123
    %v4125 = vsel %vm3197, %v3817, 0.0
    %4126 = vadd.xlane.f32.xlu0 %v4125
    %v4127 = vpop.xlane.xlu0 %4126
    %v4128 = vsel %vm3197, %v3819, 0.0
    %4129 = vadd.xlane.f32.xlu0 %v4128
    %v4130 = vpop.xlane.xlu0 %4129
    %v4131 = vsel %vm3197, %v3821, 0.0
    %4132 = vadd.xlane.f32.xlu0 %v4131
    %v4133 = vpop.xlane.xlu0 %4132
    %v4134 = vsel %vm3197, %v3823, 0.0
    %4135 = vadd.xlane.f32.xlu0 %v4134
    %v4136 = vpop.xlane.xlu0 %4135
    %v4137 = vsel %vm3197, %v3825, 0.0
    %4138 = vadd.xlane.f32.xlu0 %v4137
    %v4139 = vpop.xlane.xlu0 %4138
    %v4140 = vsel %vm3197, %v3827, 0.0
    %4141 = vadd.xlane.f32.xlu0 %v4140
    %v4142 = vpop.xlane.xlu0 %4141
    %v4143 = vsel %vm3197, %v3829, 0.0
    %4144 = vadd.xlane.f32.xlu0 %v4143
    %v4145 = vpop.xlane.xlu0 %4144
    %v4146 = vsel %vm3197, %v3831, 0.0
    %4147 = vadd.xlane.f32.xlu0 %v4146
    %v4148 = vpop.xlane.xlu0 %4147
    %v4149 = vsel %vm3197, %v3833, 0.0
    %4150 = vadd.xlane.f32.xlu0 %v4149
    %v4151 = vpop.xlane.xlu0 %4150
    %v4152 = vsel %vm3197, %v3835, 0.0
    %4153 = vadd.xlane.f32.xlu0 %v4152
    %v4154 = vpop.xlane.xlu0 %4153
    %v4155 = vsel %vm3197, %v3837, 0.0
    %4156 = vadd.xlane.f32.xlu0 %v4155
    %v4157 = vpop.xlane.xlu0 %4156
    %v4158 = vsel %vm3197, %v3839, 0.0
    %4159 = vadd.xlane.f32.xlu0 %v4158
    %v4160 = vpop.xlane.xlu0 %4159
    %v4161 = vsel %vm3197, %v3841, 0.0
    %4162 = vadd.xlane.f32.xlu0 %v4161
    %v4163 = vpop.xlane.xlu0 %4162
    %v4164 = vsel %vm3197, %v3843, 0.0
    %4165 = vadd.xlane.f32.xlu0 %v4164
    %v4166 = vpop.xlane.xlu0 %4165
    %v4167 = vsel %vm3197, %v3845, 0.0
    %4168 = vadd.xlane.f32.xlu0 %v4167
    %v4169 = vpop.xlane.xlu0 %4168
    %v4170 = vsel %vm3197, %v3847, 0.0
    %4171 = vadd.xlane.f32.xlu0 %v4170
    %v4172 = vpop.xlane.xlu0 %4171
    %v4173 = vsel %vm3197, %v3849, 0.0
    %4174 = vadd.xlane.f32.xlu0 %v4173
    %v4175 = vpop.xlane.xlu0 %4174
    %v4176 = vsel %vm3197, %v3851, 0.0
    %4177 = vadd.xlane.f32.xlu0 %v4176
    %v4178 = vpop.xlane.xlu0 %4177
    %v4179 = vsel %vm3197, %v3853, 0.0
    %4180 = vadd.xlane.f32.xlu0 %v4179
    %v4181 = vpop.xlane.xlu0 %4180
    %v4182 = vsel %vm3197, %v3855, 0.0
    %4183 = vadd.xlane.f32.xlu0 %v4182
    %v4184 = vpop.xlane.xlu0 %4183
    %v4185 = vsel %vm3197, %v3857, 0.0
    %4186 = vadd.xlane.f32.xlu0 %v4185
    %v4187 = vpop.xlane.xlu0 %4186
    %v4188 = vsel %vm3197, %v3859, 0.0
    %4189 = vadd.xlane.f32.xlu0 %v4188
    %v4190 = vpop.xlane.xlu0 %4189
    %v4191 = vsel %vm3197, %v3861, 0.0
    %4192 = vadd.xlane.f32.xlu0 %v4191
    %v4193 = vpop.xlane.xlu0 %4192
    %v4194 = vsel %vm3197, %v3863, 0.0
    %4195 = vadd.xlane.f32.xlu0 %v4194
    %v4196 = vpop.xlane.xlu0 %4195
    %v4197 = vsel %vm3197, %v3865, 0.0
    %4198 = vadd.xlane.f32.xlu0 %v4197
    %v4199 = vpop.xlane.xlu0 %4198
    %v4200 = vsel %vm3197, %v3867, 0.0
    %4201 = vadd.xlane.f32.xlu0 %v4200
    %v4202 = vpop.xlane.xlu0 %4201
    %v4203 = vsel %vm3197, %v3869, 0.0
    %4204 = vadd.xlane.f32.xlu0 %v4203
    %v4205 = vpop.xlane.xlu0 %4204
    %v4206 = vsel %vm3197, %v3871, 0.0
    %4207 = vadd.xlane.f32.xlu0 %v4206
    %v4208 = vpop.xlane.xlu0 %4207
    %v4209 = vsel %vm3197, %v3873, 0.0
    %4210 = vadd.xlane.f32.xlu0 %v4209
    %v4211 = vpop.xlane.xlu0 %4210
    %v4212 = vsel %vm3197, %v3875, 0.0
    %4213 = vadd.xlane.f32.xlu0 %v4212
    %v4214 = vpop.xlane.xlu0 %4213
    %v4215 = vsel %vm3197, %v3877, 0.0
    %4216 = vadd.xlane.f32.xlu0 %v4215
    %v4217 = vpop.xlane.xlu0 %4216
    %v4218 = vsel %vm3197, %v3879, 0.0
    %4219 = vadd.xlane.f32.xlu0 %v4218
    %v4220 = vpop.xlane.xlu0 %4219
    %v4221 = vsel %vm3197, %v3881, 0.0
    %4222 = vadd.xlane.f32.xlu0 %v4221
    %v4223 = vpop.xlane.xlu0 %4222
    %v4224 = vsel %vm3197, %v3883, 0.0
    %4225 = vadd.xlane.f32.xlu0 %v4224
    %v4226 = vpop.xlane.xlu0 %4225
    %v4227 = vsel %vm3197, %v3885, 0.0
    %4228 = vadd.xlane.f32.xlu0 %v4227
    %v4229 = vpop.xlane.xlu0 %4228
    %v4230 = vsel %vm3197, %v3887, 0.0
    %4231 = vadd.xlane.f32.xlu0 %v4230
    %v4232 = vpop.xlane.xlu0 %4231
    %v4233 = vsel %vm3197, %v3889, 0.0
    %4234 = vadd.xlane.f32.xlu0 %v4233
    %v4235 = vpop.xlane.xlu0 %4234
    %v4236 = vsel %vm3197, %v3891, 0.0
    %4237 = vadd.xlane.f32.xlu0 %v4236
    %v4238 = vpop.xlane.xlu0 %4237
    %v4239 = vsel %vm3197, %v3893, 0.0
    %4240 = vadd.xlane.f32.xlu0 %v4239
    %v4241 = vpop.xlane.xlu0 %4240
    %v4242 = vsel %vm3197, %v3895, 0.0
    %4243 = vadd.xlane.f32.xlu0 %v4242
    %v4244 = vpop.xlane.xlu0 %4243
    %v4245 = vsel %vm3197, %v3897, 0.0
    %4246 = vadd.xlane.f32.xlu0 %v4245
    %v4247 = vpop.xlane.xlu0 %4246
    %v4248 = vsel %vm3197, %v3899, 0.0
    %4249 = vadd.xlane.f32.xlu0 %v4248
    %v4250 = vpop.xlane.xlu0 %4249
    %v4251 = vsel %vm3197, %v3901, 0.0
    %4252 = vadd.xlane.f32.xlu0 %v4251
    %v4253 = vpop.xlane.xlu0 %4252
    %v4254 = vsel %vm3197, %v3903, 0.0
    %4255 = vadd.xlane.f32.xlu0 %v4254
    %v4256 = vpop.xlane.xlu0 %4255
    %v4257 = vsel %vm3197, %v3905, 0.0
    %4258 = vadd.xlane.f32.xlu0 %v4257
    %v4259 = vpop.xlane.xlu0 %4258
    %v4260 = vsel %vm3197, %v3907, 0.0
    %4261 = vadd.xlane.f32.xlu0 %v4260
    %v4262 = vpop.xlane.xlu0 %4261
    %v4263 = vsel %vm3197, %v3909, 0.0
    %4264 = vadd.xlane.f32.xlu0 %v4263
    %v4265 = vpop.xlane.xlu0 %4264
    %v4266 = vsel %vm3197, %v3911, 0.0
    %4267 = vadd.xlane.f32.xlu0 %v4266
    %v4268 = vpop.xlane.xlu0 %4267
    %v4269 = vsel %vm3197, %v3913, 0.0
    %4270 = vadd.xlane.f32.xlu0 %v4269
    %v4271 = vpop.xlane.xlu0 %4270
    %v4272 = vsel %vm3197, %v3915, 0.0
    %4273 = vadd.xlane.f32.xlu0 %v4272
    %v4274 = vpop.xlane.xlu0 %4273
    %v4275 = vsel %vm3197, %v3917, 0.0
    %4276 = vadd.xlane.f32.xlu0 %v4275
    %v4277 = vpop.xlane.xlu0 %4276
    %v4278 = vsel %vm3197, %v3919, 0.0
    %4279 = vadd.xlane.f32.xlu0 %v4278
    %v4280 = vpop.xlane.xlu0 %4279
    %v4281 = vsel %vm3197, %v3921, 0.0
    %4282 = vadd.xlane.f32.xlu0 %v4281
    %v4283 = vpop.xlane.xlu0 %4282
    %v4284 = vsel %vm3197, %v3923, 0.0
    %4285 = vadd.xlane.f32.xlu0 %v4284
    %v4286 = vpop.xlane.xlu0 %4285
    %v4287 = vsel %vm3197, %v3925, 0.0
    %4288 = vadd.xlane.f32.xlu0 %v4287
    %v4289 = vpop.xlane.xlu0 %4288
    %v4290 = vsel %vm3197, %v3927, 0.0
    %4291 = vadd.xlane.f32.xlu0 %v4290
    %v4292 = vpop.xlane.xlu0 %4291
    %v4293 = vsel %vm3197, %v3929, 0.0
    %4294 = vadd.xlane.f32.xlu0 %v4293
    %v4295 = vpop.xlane.xlu0 %4294
    %v4296 = vsel %vm3197, %v3931, 0.0
    %4297 = vadd.xlane.f32.xlu0 %v4296
    %v4298 = vpop.xlane.xlu0 %4297
    %v4299 = vsel %vm3197, %v3933, 0.0
    %4300 = vadd.xlane.f32.xlu0 %v4299
    %v4301 = vpop.xlane.xlu0 %4300
    %v4302 = vsel %vm3197, %v3935, 0.0
    %4303 = vadd.xlane.f32.xlu0 %v4302
    %v4304 = vpop.xlane.xlu0 %4303
    %v4305 = vsel %vm3197, %v3937, 0.0
    %4306 = vadd.xlane.f32.xlu0 %v4305
    %v4307 = vpop.xlane.xlu0 %4306
    %v4308 = vsel %vm3197, %v3939, 0.0
    %4309 = vadd.xlane.f32.xlu0 %v4308
    %v4310 = vpop.xlane.xlu0 %4309
    %v4311 = vsel %vm3197, %v3941, 0.0
    %4312 = vadd.xlane.f32.xlu0 %v4311
    %v4313 = vpop.xlane.xlu0 %4312
    %v4314 = vsel %vm3197, %v3943, 0.0
    %4315 = vadd.xlane.f32.xlu0 %v4314
    %v4316 = vpop.xlane.xlu0 %4315
    %v4317 = vsel %vm3197, %v3945, 0.0
    %4318 = vadd.xlane.f32.xlu0 %v4317
    %v4319 = vpop.xlane.xlu0 %4318
    %v4320 = vsel %vm3197, %v3947, 0.0
    %4321 = vadd.xlane.f32.xlu0 %v4320
    %v4322 = vpop.xlane.xlu0 %4321
    %v4323 = vsel %vm3197, %v3949, 0.0
    %4324 = vadd.xlane.f32.xlu0 %v4323
    %v4325 = vpop.xlane.xlu0 %4324
    %v4326 = vsel %vm3197, %v3951, 0.0
    %4327 = vadd.xlane.f32.xlu0 %v4326
    %v4328 = vpop.xlane.xlu0 %4327
    %v4329 = vsel %vm3197, %v3953, 0.0
    %4330 = vadd.xlane.f32.xlu0 %v4329
    %v4331 = vpop.xlane.xlu0 %4330
    %v4332 = vsel %vm3197, %v3955, 0.0
    %4333 = vadd.xlane.f32.xlu0 %v4332
    %v4334 = vpop.xlane.xlu0 %4333
    %v4335 = vsel %vm3197, %v3957, 0.0
    %4336 = vadd.xlane.f32.xlu0 %v4335
    %v4337 = vpop.xlane.xlu0 %4336
    %v4338 = vsel %vm3197, %v3959, 0.0
    %4339 = vadd.xlane.f32.xlu0 %v4338
    %v4340 = vpop.xlane.xlu0 %4339
    %v4341 = vsel %vm3197, %v3961, 0.0
    %4342 = vadd.xlane.f32.xlu0 %v4341
    %v4343 = vpop.xlane.xlu0 %4342
    %v4344 = vsel %vm3197, %v3963, 0.0
    %4345 = vadd.xlane.f32.xlu0 %v4344
    %v4346 = vpop.xlane.xlu0 %4345
    %v4347 = vsel %vm3197, %v3965, 0.0
    %4348 = vadd.xlane.f32.xlu0 %v4347
    %v4349 = vpop.xlane.xlu0 %4348
    %v4350 = vrcp.pop %v3968
    %v4351 = vrcp.pop %v3971
    %v4352 = vrcp.pop %v3974
    %v4353 = vrcp.pop %v3977
    %v4354 = vrcp.pop %v3980
    %v4355 = vrcp.pop %v3983
    %v4356 = vrcp.pop %v3986
    %v4357 = vrcp.pop %v3989
    %v4358 = vrcp.pop %v3992
    %v4359 = vrcp.pop %v3995
    %v4360 = vrcp.pop %v3998
    %v4361 = vrcp.pop %v4001
    %v4362 = vrcp.pop %v4004
    %v4363 = vrcp.pop %v4007
    %v4364 = vrcp.pop %v4010
    %v4365 = vrcp.pop %v4013
    %v4366 = vrcp.pop %v4016
    %v4367 = vrcp.pop %v4019
    %v4368 = vrcp.pop %v4022
    %v4369 = vrcp.pop %v4025
    %v4370 = vrcp.pop %v4028
    %v4371 = vrcp.pop %v4031
    %v4372 = vrcp.pop %v4034
    %v4373 = vrcp.pop %v4037
    %v4374 = vrcp.pop %v4040
    %v4375 = vrcp.pop %v4043
    %v4376 = vrcp.pop %v4046
    %v4377 = vrcp.pop %v4049
    %v4378 = vrcp.pop %v4052
    %v4379 = vrcp.pop %v4055
    %v4380 = vrcp.pop %v4058
    %v4381 = vrcp.pop %v4061
    %v4382 = vrcp.pop %v4064
    %v4383 = vrcp.pop %v4067
    %v4384 = vrcp.pop %v4070
    %v4385 = vrcp.pop %v4073
    %v4386 = vrcp.pop %v4076
    %v4387 = vrcp.pop %v4079
    %v4388 = vrcp.pop %v4082
    %v4389 = vrcp.pop %v4085
    %v4390 = vrcp.pop %v4088
    %v4391 = vrcp.pop %v4091
    %v4392 = vrcp.pop %v4094
    %v4393 = vrcp.pop %v4097
    %v4394 = vrcp.pop %v4100
    %v4395 = vrcp.pop %v4103
    %v4396 = vrcp.pop %v4106
    %v4397 = vrcp.pop %v4109
    %v4398 = vrcp.pop %v4112
    %v4399 = vrcp.pop %v4115
    %v4400 = vrcp.pop %v4118
    %v4401 = vrcp.pop %v4121
    %v4402 = vrcp.pop %v4124
    %v4403 = vrcp.pop %v4127
    %v4404 = vrcp.pop %v4130
    %v4405 = vrcp.pop %v4133
    %v4406 = vrcp.pop %v4136
    %v4407 = vrcp.pop %v4139
    %v4408 = vrcp.pop %v4142
    %v4409 = vrcp.pop %v4145
    %v4410 = vrcp.pop %v4148
    %v4411 = vrcp.pop %v4151
    %v4412 = vrcp.pop %v4154
    %v4413 = vrcp.pop %v4157
    %v4414 = vrcp.pop %v4160
    %v4415 = vrcp.pop %v4163
    %v4416 = vrcp.pop %v4166
    %v4417 = vrcp.pop %v4169
    %v4418 = vrcp.pop %v4172
    %v4419 = vrcp.pop %v4175
    %v4420 = vrcp.pop %v4178
    %v4421 = vrcp.pop %v4181
    %v4422 = vrcp.pop %v4184
    %v4423 = vrcp.pop %v4187
    %v4424 = vrcp.pop %v4190
    %v4425 = vrcp.pop %v4193
    %v4426 = vrcp.pop %v4196
    %v4427 = vrcp.pop %v4199
    %v4428 = vrcp.pop %v4202
    %v4429 = vrcp.pop %v4205
    %v4430 = vrcp.pop %v4208
    %v4431 = vrcp.pop %v4211
    %v4432 = vrcp.pop %v4214
    %v4433 = vrcp.pop %v4217
    %v4434 = vrcp.pop %v4220
    %v4435 = vrcp.pop %v4223
    %v4436 = vrcp.pop %v4226
    %v4437 = vrcp.pop %v4229
    %v4438 = vrcp.pop %v4232
    %v4439 = vrcp.pop %v4235
    %v4440 = vrcp.pop %v4238
    %v4441 = vrcp.pop %v4241
    %v4442 = vrcp.pop %v4244
    %v4443 = vrcp.pop %v4247
    %v4444 = vrcp.pop %v4250
    %v4445 = vrcp.pop %v4253
    %v4446 = vrcp.pop %v4256
    %v4447 = vrcp.pop %v4259
    %v4448 = vrcp.pop %v4262
    %v4449 = vrcp.pop %v4265
    %v4450 = vrcp.pop %v4268
    %v4451 = vrcp.pop %v4271
    %v4452 = vrcp.pop %v4274
    %v4453 = vrcp.pop %v4277
    %v4454 = vrcp.pop %v4280
    %v4455 = vrcp.pop %v4283
    %v4456 = vrcp.pop %v4286
    %v4457 = vrcp.pop %v4289
    %v4458 = vrcp.pop %v4292
    %v4459 = vrcp.pop %v4295
    %v4460 = vrcp.pop %v4298
    %v4461 = vrcp.pop %v4301
    %v4462 = vrcp.pop %v4304
    %v4463 = vrcp.pop %v4307
    %v4464 = vrcp.pop %v4310
    %v4465 = vrcp.pop %v4313
    %v4466 = vrcp.pop %v4316
    %v4467 = vrcp.pop %v4319
    %v4468 = vrcp.pop %v4322
    %v4469 = vrcp.pop %v4325
    %v4470 = vrcp.pop %v4328
    %v4471 = vrcp.pop %v4331
    %v4472 = vrcp.pop %v4334
    %v4473 = vrcp.pop %v4337
    %v4474 = vrcp.pop %v4340
    %v4475 = vrcp.pop %v4343
    %v4476 = vrcp.pop %v4346
    %v4477 = vrcp.pop %v4349
    %v4478 = vmul.f32 %v3711, %v4350
    %v4479 = vmul.f32 %v3713, %v4351
    %v4480 = vmul.f32 %v3715, %v4352
    %v4481 = vmul.f32 %v3717, %v4353
    %v4482 = vmul.f32 %v3719, %v4354
    %v4483 = vmul.f32 %v3721, %v4355
    %v4484 = vmul.f32 %v3723, %v4356
    %v4485 = vmul.f32 %v3725, %v4357
    %v4486 = vmul.f32 %v3727, %v4358
    %v4487 = vmul.f32 %v3729, %v4359
    %v4488 = vmul.f32 %v3731, %v4360
    %v4489 = vmul.f32 %v3733, %v4361
    %v4490 = vmul.f32 %v3735, %v4362
    %v4491 = vmul.f32 %v3737, %v4363
    %v4492 = vmul.f32 %v3739, %v4364
    %v4493 = vmul.f32 %v3741, %v4365
    %v4494 = vmul.f32 %v3743, %v4366
    %v4495 = vmul.f32 %v3745, %v4367
    %v4496 = vmul.f32 %v3747, %v4368
    %v4497 = vmul.f32 %v3749, %v4369
    %v4498 = vmul.f32 %v3751, %v4370
    %v4499 = vmul.f32 %v3753, %v4371
    %v4500 = vmul.f32 %v3755, %v4372
    %v4501 = vmul.f32 %v3757, %v4373
    %v4502 = vmul.f32 %v3759, %v4374
    %v4503 = vmul.f32 %v3761, %v4375
    %v4504 = vmul.f32 %v3763, %v4376
    %v4505 = vmul.f32 %v3765, %v4377
    %v4506 = vmul.f32 %v3767, %v4378
    %v4507 = vmul.f32 %v3769, %v4379
    %v4508 = vmul.f32 %v3771, %v4380
    %v4509 = vmul.f32 %v3773, %v4381
    %v4510 = vmul.f32 %v3775, %v4382
    %v4511 = vmul.f32 %v3777, %v4383
    %v4512 = vmul.f32 %v3779, %v4384
    %v4513 = vmul.f32 %v3781, %v4385
    %v4514 = vmul.f32 %v3783, %v4386
    %v4515 = vmul.f32 %v3785, %v4387
    %v4516 = vmul.f32 %v3787, %v4388
    %v4517 = vmul.f32 %v3789, %v4389
    %v4518 = vmul.f32 %v3791, %v4390
    %v4519 = vmul.f32 %v3793, %v4391
    %v4520 = vmul.f32 %v3795, %v4392
    %v4521 = vmul.f32 %v3797, %v4393
    %v4522 = vmul.f32 %v3799, %v4394
    %v4523 = vmul.f32 %v3801, %v4395
    %v4524 = vmul.f32 %v3803, %v4396
    %v4525 = vmul.f32 %v3805, %v4397
    %v4526 = vmul.f32 %v3807, %v4398
    %v4527 = vmul.f32 %v3809, %v4399
    %v4528 = vmul.f32 %v3811, %v4400
    %v4529 = vmul.f32 %v3813, %v4401
    %v4530 = vmul.f32 %v3815, %v4402
    %v4531 = vmul.f32 %v3817, %v4403
    %v4532 = vmul.f32 %v3819, %v4404
    %v4533 = vmul.f32 %v3821, %v4405
    %v4534 = vmul.f32 %v3823, %v4406
    %v4535 = vmul.f32 %v3825, %v4407
    %v4536 = vmul.f32 %v3827, %v4408
    %v4537 = vmul.f32 %v3829, %v4409
    %v4538 = vmul.f32 %v3831, %v4410
    %v4539 = vmul.f32 %v3833, %v4411
    %v4540 = vmul.f32 %v3835, %v4412
    %v4541 = vmul.f32 %v3837, %v4413
    %v4542 = vmul.f32 %v3839, %v4414
    %v4543 = vmul.f32 %v3841, %v4415
    %v4544 = vmul.f32 %v3843, %v4416
    %v4545 = vmul.f32 %v3845, %v4417
    %v4546 = vmul.f32 %v3847, %v4418
    %v4547 = vmul.f32 %v3849, %v4419
    %v4548 = vmul.f32 %v3851, %v4420
    %v4549 = vmul.f32 %v3853, %v4421
    %v4550 = vmul.f32 %v3855, %v4422
    %v4551 = vmul.f32 %v3857, %v4423
    %v4552 = vmul.f32 %v3859, %v4424
    %v4553 = vmul.f32 %v3861, %v4425
    %v4554 = vmul.f32 %v3863, %v4426
    %v4555 = vmul.f32 %v3865, %v4427
    %v4556 = vmul.f32 %v3867, %v4428
    %v4557 = vmul.f32 %v3869, %v4429
    %v4558 = vmul.f32 %v3871, %v4430
    %v4559 = vmul.f32 %v3873, %v4431
    %v4560 = vmul.f32 %v3875, %v4432
    %v4561 = vmul.f32 %v3877, %v4433
    %v4562 = vmul.f32 %v3879, %v4434
    %v4563 = vmul.f32 %v3881, %v4435
    %v4564 = vmul.f32 %v3883, %v4436
    %v4565 = vmul.f32 %v3885, %v4437
    %v4566 = vmul.f32 %v3887, %v4438
    %v4567 = vmul.f32 %v3889, %v4439
    %v4568 = vmul.f32 %v3891, %v4440
    %v4569 = vmul.f32 %v3893, %v4441
    %v4570 = vmul.f32 %v3895, %v4442
    %v4571 = vmul.f32 %v3897, %v4443
    %v4572 = vmul.f32 %v3899, %v4444
    %v4573 = vmul.f32 %v3901, %v4445
    %v4574 = vmul.f32 %v3903, %v4446
    %v4575 = vmul.f32 %v3905, %v4447
    %v4576 = vmul.f32 %v3907, %v4448
    %v4577 = vmul.f32 %v3909, %v4449
    %v4578 = vmul.f32 %v3911, %v4450
    %v4579 = vmul.f32 %v3913, %v4451
    %v4580 = vmul.f32 %v3915, %v4452
    %v4581 = vmul.f32 %v3917, %v4453
    %v4582 = vmul.f32 %v3919, %v4454
    %v4583 = vmul.f32 %v3921, %v4455
    %v4584 = vmul.f32 %v3923, %v4456
    %v4585 = vmul.f32 %v3925, %v4457
    %v4586 = vmul.f32 %v3927, %v4458
    %v4587 = vmul.f32 %v3929, %v4459
    %v4588 = vmul.f32 %v3931, %v4460
    %v4589 = vmul.f32 %v3933, %v4461
    %v4590 = vmul.f32 %v3935, %v4462
    %v4591 = vmul.f32 %v3937, %v4463
    %v4592 = vmul.f32 %v3939, %v4464
    %v4593 = vmul.f32 %v3941, %v4465
    %v4594 = vmul.f32 %v3943, %v4466
    %v4595 = vmul.f32 %v3945, %v4467
    %v4596 = vmul.f32 %v3947, %v4468
    %v4597 = vmul.f32 %v3949, %v4469
    %v4598 = vmul.f32 %v3951, %v4470
    %v4599 = vmul.f32 %v3953, %v4471
    %v4600 = vmul.f32 %v3955, %v4472
    %v4601 = vmul.f32 %v3957, %v4473
    %v4602 = vmul.f32 %v3959, %v4474
    %v4603 = vmul.f32 %v3961, %v4475
    %v4604 = vmul.f32 %v3963, %v4476
    %v4605 = vmul.f32 %v3965, %v4477
    %v4606 = vpack.c.bf16 %v4479, %v4478
    %v4607 = vpack.c.bf16 %v4481, %v4480
    %v4608 = vpack.c.bf16 %v4483, %v4482
    %v4609 = vpack.c.bf16 %v4485, %v4484
    %v4610 = vpack.c.bf16 %v4487, %v4486
    %v4611 = vpack.c.bf16 %v4489, %v4488
    %v4612 = vpack.c.bf16 %v4491, %v4490
    %v4613 = vpack.c.bf16 %v4493, %v4492
    %v4614 = vpack.c.bf16 %v4495, %v4494
    %v4615 = vpack.c.bf16 %v4497, %v4496
    %v4616 = vpack.c.bf16 %v4499, %v4498
    %v4617 = vpack.c.bf16 %v4501, %v4500
    %v4618 = vpack.c.bf16 %v4503, %v4502
    %v4619 = vpack.c.bf16 %v4505, %v4504
    %v4620 = vpack.c.bf16 %v4507, %v4506
    %v4621 = vpack.c.bf16 %v4509, %v4508
    %v4622 = vpack.c.bf16 %v4511, %v4510
    %v4623 = vpack.c.bf16 %v4513, %v4512
    %v4624 = vpack.c.bf16 %v4515, %v4514
    %v4625 = vpack.c.bf16 %v4517, %v4516
    %v4626 = vpack.c.bf16 %v4519, %v4518
    %v4627 = vpack.c.bf16 %v4521, %v4520
    %v4628 = vpack.c.bf16 %v4523, %v4522
    %v4629 = vpack.c.bf16 %v4525, %v4524
    %v4630 = vpack.c.bf16 %v4527, %v4526
    %v4631 = vpack.c.bf16 %v4529, %v4528
    %v4632 = vpack.c.bf16 %v4531, %v4530
    %v4633 = vpack.c.bf16 %v4533, %v4532
    %v4634 = vpack.c.bf16 %v4535, %v4534
    %v4635 = vpack.c.bf16 %v4537, %v4536
    %v4636 = vpack.c.bf16 %v4539, %v4538
    %v4637 = vpack.c.bf16 %v4541, %v4540
    %v4638 = vpack.c.bf16 %v4543, %v4542
    %v4639 = vpack.c.bf16 %v4545, %v4544
    %v4640 = vpack.c.bf16 %v4547, %v4546
    %v4641 = vpack.c.bf16 %v4549, %v4548
    %v4642 = vpack.c.bf16 %v4551, %v4550
    %v4643 = vpack.c.bf16 %v4553, %v4552
    %v4644 = vpack.c.bf16 %v4555, %v4554
    %v4645 = vpack.c.bf16 %v4557, %v4556
    %v4646 = vpack.c.bf16 %v4559, %v4558
    %v4647 = vpack.c.bf16 %v4561, %v4560
    %v4648 = vpack.c.bf16 %v4563, %v4562
    %v4649 = vpack.c.bf16 %v4565, %v4564
    %v4650 = vpack.c.bf16 %v4567, %v4566
    %v4651 = vpack.c.bf16 %v4569, %v4568
    %v4652 = vpack.c.bf16 %v4571, %v4570
    %v4653 = vpack.c.bf16 %v4573, %v4572
    %v4654 = vpack.c.bf16 %v4575, %v4574
    %v4655 = vpack.c.bf16 %v4577, %v4576
    %v4656 = vpack.c.bf16 %v4579, %v4578
    %v4657 = vpack.c.bf16 %v4581, %v4580
    %v4658 = vpack.c.bf16 %v4583, %v4582
    %v4659 = vpack.c.bf16 %v4585, %v4584
    %v4660 = vpack.c.bf16 %v4587, %v4586
    %v4661 = vpack.c.bf16 %v4589, %v4588
    %v4662 = vpack.c.bf16 %v4591, %v4590
    %v4663 = vpack.c.bf16 %v4593, %v4592
    %v4664 = vpack.c.bf16 %v4595, %v4594
    %v4665 = vpack.c.bf16 %v4597, %v4596
    %v4666 = vpack.c.bf16 %v4599, %v4598
    %v4667 = vpack.c.bf16 %v4601, %v4600
    %v4668 = vpack.c.bf16 %v4603, %v4602
    %v4669 = vpack.c.bf16 %v4605, %v4604
    %v4671 = vsel %vm3197, %v4606, 0
    %v4674 = vsel %vm3197, %v4607, 0
    %4676 = vmatprep.subr.bf16.mxu0 0
    %4677 = vmatpush1.bf16.msra.mxu0 %v1147
    %4678 = vmatprep.subr.bf16.mxu0 0
    %4679 = vmatpush1.bf16.msra.mxu0 %v1151
    %4680 = vmatprep.subr.bf16.mxu0 0
    %4681 = vmatpush1.bf16.msra.mxu0 0
    %4682 = vmatprep.subr.bf16.mxu0 0
    %4683 = vmatpush1.bf16.msra.mxu0 0
    %4684 = vmatprep.subr.bf16.mxu0 0
    %4685 = vmatpush1.bf16.msra.mxu0 0
    %4686 = vmatprep.subr.bf16.mxu0 0
    %4687 = vmatpush1.bf16.msra.mxu0 0
    %4688 = vmatprep.subr.bf16.mxu0 0
    %4689 = vmatpush1.bf16.msra.mxu0 0
    %4690 = vmatprep.subr.bf16.mxu0 0
    %4691 = vmatpush1.bf16.msra.mxu0 0
    %4692 = vmatprep.subr.bf16.mxu0 0
    %4693 = vmatpush1.bf16.msra.mxu0 0
    %4694 = vmatprep.subr.bf16.mxu0 0
    %4695 = vmatpush1.bf16.msra.mxu0 0
    %4696 = vmatprep.subr.bf16.mxu0 0
    %4697 = vmatpush1.bf16.msra.mxu0 0
    %4698 = vmatprep.subr.bf16.mxu0 0
    %4699 = vmatpush1.bf16.msra.mxu0 0
    %4700 = vmatprep.subr.bf16.mxu0 0
    %4701 = vmatpush1.bf16.msra.mxu0 0
    %4702 = vmatprep.subr.bf16.mxu0 0
    %4703 = vmatpush1.bf16.msra.mxu0 0
    %4704 = vmatprep.subr.bf16.mxu0 0
    %4705 = vmatpush1.bf16.msra.mxu0 0
    %4706 = vmatprep.subr.bf16.mxu0 0
    %4707 = vmatpush1.bf16.msra.mxu0 0
    %4708 = vmatprep.mubr.bf16.mxu0 0
    %4709 = vmatmul.mubr.bf16.gmra.mrb[0].mxu0 %v4671
    %v4710 = vpop.f32.mrb[0].mxu0
    %v4711 = vadd.f32 0.0, %v4710
    %v4712 = vpop.f32.mrb[0].mxu0
    %v4713 = vpop.f32.mrb[0].mxu0
    %v4714 = vadd.f32 0.0, %v4713
    %v4715 = vpop.f32.mrb[0].mxu0
    %4716 = vmatprep.mubr.bf16.mxu0 0
    %4717 = vmatmul.mubr.bf16.gmra.mrb[0].mxu0 %v4674
    %v4718 = vpop.f32.mrb[0].mxu0
    %v4719 = vadd.f32 0.0, %v4718
    %v4720 = vpop.f32.mrb[0].mxu0
    %v4721 = vpop.f32.mrb[0].mxu0
    %v4722 = vadd.f32 0.0, %v4721
    %v4723 = vpop.f32.mrb[0].mxu0
    %4724 = vdwg.mxu0
    %v4726 = vsel %vm3197, %v4608, 0
    %v4729 = vsel %vm3197, %v4609, 0
    %4731 = vmatprep.subr.bf16.mxu0 0
    %4732 = vmatpush1.bf16.msra.mxu0 %v1155
    %4733 = vmatprep.subr.bf16.mxu0 0
    %4734 = vmatpush1.bf16.msra.mxu0 %v1159
    %4735 = vmatprep.subr.bf16.mxu0 0
    %4736 = vmatpush1.bf16.msra.mxu0 0
    %4737 = vmatprep.subr.bf16.mxu0 0
    %4738 = vmatpush1.bf16.msra.mxu0 0
    %4739 = vmatprep.subr.bf16.mxu0 0
    %4740 = vmatpush1.bf16.msra.mxu0 0
    %4741 = vmatprep.subr.bf16.mxu0 0
    %4742 = vmatpush1.bf16.msra.mxu0 0
    %4743 = vmatprep.subr.bf16.mxu0 0
    %4744 = vmatpush1.bf16.msra.mxu0 0
    %4745 = vmatprep.subr.bf16.mxu0 0
    %4746 = vmatpush1.bf16.msra.mxu0 0
    %4747 = vmatprep.subr.bf16.mxu0 0
    %4748 = vmatpush1.bf16.msra.mxu0 0
    %4749 = vmatprep.subr.bf16.mxu0 0
    %4750 = vmatpush1.bf16.msra.mxu0 0
    %4751 = vmatprep.subr.bf16.mxu0 0
    %4752 = vmatpush1.bf16.msra.mxu0 0
    %4753 = vmatprep.subr.bf16.mxu0 0
    %4754 = vmatpush1.bf16.msra.mxu0 0
    %4755 = vmatprep.subr.bf16.mxu0 0
    %4756 = vmatpush1.bf16.msra.mxu0 0
    %4757 = vmatprep.subr.bf16.mxu0 0
    %4758 = vmatpush1.bf16.msra.mxu0 0
    %4759 = vmatprep.subr.bf16.mxu0 0
    %4760 = vmatpush1.bf16.msra.mxu0 0
    %4761 = vmatprep.subr.bf16.mxu0 0
    %4762 = vmatpush1.bf16.msra.mxu0 0
    %4763 = vmatprep.mubr.bf16.mxu0 0
    %4764 = vmatmul.mubr.bf16.gmra.mrb[0].mxu0 %v4726
    %v4765 = vpop.f32.mrb[0].mxu0
    %v4766 = vadd.f32 0.0, %v4765
    %v4767 = vpop.f32.mrb[0].mxu0
    %v4768 = vpop.f32.mrb[0].mxu0
    %v4769 = vadd.f32 0.0, %v4768
    %v4770 = vpop.f32.mrb[0].mxu0
    %4771 = vmatprep.mubr.bf16.mxu0 0
    %4772 = vmatmul.mubr.bf16.gmra.mrb[0].mxu0 %v4729
    %v4773 = vpop.f32.mrb[0].mxu0
    %v4774 = vadd.f32 0.0, %v4773
    %v4775 = vpop.f32.mrb[0].mxu0
    %v4776 = vpop.f32.mrb[0].mxu0
    %v4777 = vadd.f32 0.0, %v4776
    %v4778 = vpop.f32.mrb[0].mxu0
    %4779 = vdwg.mxu0
    %v4781 = vsel %vm3197, %v4610, 0
    %v4784 = vsel %vm3197, %v4611, 0
    %4786 = vmatprep.subr.bf16.mxu0 0
    %4787 = vmatpush1.bf16.msra.mxu0 %v1163
    %4788 = vmatprep.subr.bf16.mxu0 0
    %4789 = vmatpush1.bf16.msra.mxu0 %v1167
    %4790 = vmatprep.subr.bf16.mxu0 0
    %4791 = vmatpush1.bf16.msra.mxu0 0
    %4792 = vmatprep.subr.bf16.mxu0 0
    %4793 = vmatpush1.bf16.msra.mxu0 0
    %4794 = vmatprep.subr.bf16.mxu0 0
    %4795 = vmatpush1.bf16.msra.mxu0 0
    %4796 = vmatprep.subr.bf16.mxu0 0
    %4797 = vmatpush1.bf16.msra.mxu0 0
    %4798 = vmatprep.subr.bf16.mxu0 0
    %4799 = vmatpush1.bf16.msra.mxu0 0
    %4800 = vmatprep.subr.bf16.mxu0 0
    %4801 = vmatpush1.bf16.msra.mxu0 0
    %4802 = vmatprep.subr.bf16.mxu0 0
    %4803 = vmatpush1.bf16.msra.mxu0 0
    %4804 = vmatprep.subr.bf16.mxu0 0
    %4805 = vmatpush1.bf16.msra.mxu0 0
    %4806 = vmatprep.subr.bf16.mxu0 0
    %4807 = vmatpush1.bf16.msra.mxu0 0
    %4808 = vmatprep.subr.bf16.mxu0 0
    %4809 = vmatpush1.bf16.msra.mxu0 0
    %4810 = vmatprep.subr.bf16.mxu0 0
    %4811 = vmatpush1.bf16.msra.mxu0 0
    %4812 = vmatprep.subr.bf16.mxu0 0
    %4813 = vmatpush1.bf16.msra.mxu0 0
    %4814 = vmatprep.subr.bf16.mxu0 0
    %4815 = vmatpush1.bf16.msra.mxu0 0
    %4816 = vmatprep.subr.bf16.mxu0 0
    %4817 = vmatpush1.bf16.msra.mxu0 0
    %4818 = vmatprep.mubr.bf16.mxu0 0
    %4819 = vmatmul.mubr.bf16.gmra.mrb[0].mxu0 %v4781
    %v4820 = vpop.f32.mrb[0].mxu0
    %v4821 = vadd.f32 0.0, %v4820
    %v4822 = vpop.f32.mrb[0].mxu0
    %v4823 = vpop.f32.mrb[0].mxu0
    %v4824 = vadd.f32 0.0, %v4823
    %v4825 = vpop.f32.mrb[0].mxu0
    %4826 = vmatprep.mubr.bf16.mxu0 0
    %4827 = vmatmul.mubr.bf16.gmra.mrb[0].mxu0 %v4784
    %v4828 = vpop.f32.mrb[0].mxu0
    %v4829 = vadd.f32 0.0, %v4828
    %v4830 = vpop.f32.mrb[0].mxu0
    %v4831 = vpop.f32.mrb[0].mxu0
    %v4832 = vadd.f32 0.0, %v4831
    %v4833 = vpop.f32.mrb[0].mxu0
    %4834 = vdwg.mxu0
    %v4836 = vsel %vm3197, %v4612, 0
    %v4839 = vsel %vm3197, %v4613, 0
    %4841 = vmatprep.subr.bf16.mxu0 0
    %4842 = vmatpush1.bf16.msra.mxu0 %v1171
    %4843 = vmatprep.subr.bf16.mxu0 0
    %4844 = vmatpush1.bf16.msra.mxu0 %v1175
    %4845 = vmatprep.subr.bf16.mxu0 0
    %4846 = vmatpush1.bf16.msra.mxu0 0
    %4847 = vmatprep.subr.bf16.mxu0 0
    %4848 = vmatpush1.bf16.msra.mxu0 0
    %4849 = vmatprep.subr.bf16.mxu0 0
    %4850 = vmatpush1.bf16.msra.mxu0 0
    %4851 = vmatprep.subr.bf16.mxu0 0
    %4852 = vmatpush1.bf16.msra.mxu0 0
    %4853 = vmatprep.subr.bf16.mxu0 0
    %4854 = vmatpush1.bf16.msra.mxu0 0
    %4855 = vmatprep.subr.bf16.mxu0 0
    %4856 = vmatpush1.bf16.msra.mxu0 0
    %4857 = vmatprep.subr.bf16.mxu0 0
    %4858 = vmatpush1.bf16.msra.mxu0 0
    %4859 = vmatprep.subr.bf16.mxu0 0
    %4860 = vmatpush1.bf16.msra.mxu0 0
    %4861 = vmatprep.subr.bf16.mxu0 0
    %4862 = vmatpush1.bf16.msra.mxu0 0
    %4863 = vmatprep.subr.bf16.mxu0 0
    %4864 = vmatpush1.bf16.msra.mxu0 0
    %4865 = vmatprep.subr.bf16.mxu0 0
    %4866 = vmatpush1.bf16.msra.mxu0 0
    %4867 = vmatprep.subr.bf16.mxu0 0
    %4868 = vmatpush1.bf16.msra.mxu0 0
    %4869 = vmatprep.subr.bf16.mxu0 0
    %4870 = vmatpush1.bf16.msra.mxu0 0
    %4871 = vmatprep.subr.bf16.mxu0 0
    %4872 = vmatpush1.bf16.msra.mxu0 0
    %4873 = vmatprep.mubr.bf16.mxu0 0
    %4874 = vmatmul.mubr.bf16.gmra.mrb[0].mxu0 %v4836
    %v4875 = vpop.f32.mrb[0].mxu0
    %v4876 = vadd.f32 0.0, %v4875
    %v4877 = vpop.f32.mrb[0].mxu0
    %v4878 = vpop.f32.mrb[0].mxu0
    %v4879 = vadd.f32 0.0, %v4878
    %v4880 = vpop.f32.mrb[0].mxu0
    %4881 = vmatprep.mubr.bf16.mxu0 0
    %4882 = vmatmul.mubr.bf16.gmra.mrb[0].mxu0 %v4839
    %v4883 = vpop.f32.mrb[0].mxu0
    %v4884 = vadd.f32 0.0, %v4883
    %v4885 = vpop.f32.mrb[0].mxu0
    %v4886 = vpop.f32.mrb[0].mxu0
    %v4887 = vadd.f32 0.0, %v4886
    %v4888 = vpop.f32.mrb[0].mxu0
    %4889 = vdwg.mxu0
    %v4891 = vsel %vm3197, %v4614, 0
    %v4894 = vsel %vm3197, %v4615, 0
    %4896 = vmatprep.subr.bf16.mxu0 0
    %4897 = vmatpush1.bf16.msra.mxu0 %v1179
    %4898 = vmatprep.subr.bf16.mxu0 0
    %4899 = vmatpush1.bf16.msra.mxu0 %v1183
    %4900 = vmatprep.subr.bf16.mxu0 0
    %4901 = vmatpush1.bf16.msra.mxu0 0
    %4902 = vmatprep.subr.bf16.mxu0 0
    %4903 = vmatpush1.bf16.msra.mxu0 0
    %4904 = vmatprep.subr.bf16.mxu0 0
    %4905 = vmatpush1.bf16.msra.mxu0 0
    %4906 = vmatprep.subr.bf16.mxu0 0
    %4907 = vmatpush1.bf16.msra.mxu0 0
    %4908 = vmatprep.subr.bf16.mxu0 0
    %4909 = vmatpush1.bf16.msra.mxu0 0
    %4910 = vmatprep.subr.bf16.mxu0 0
    %4911 = vmatpush1.bf16.msra.mxu0 0
    %4912 = vmatprep.subr.bf16.mxu0 0
    %4913 = vmatpush1.bf16.msra.mxu0 0
    %4914 = vmatprep.subr.bf16.mxu0 0
    %4915 = vmatpush1.bf16.msra.mxu0 0
    %4916 = vmatprep.subr.bf16.mxu0 0
    %4917 = vmatpush1.bf16.msra.mxu0 0
    %4918 = vmatprep.subr.bf16.mxu0 0
    %4919 = vmatpush1.bf16.msra.mxu0 0
    %4920 = vmatprep.subr.bf16.mxu0 0
    %4921 = vmatpush1.bf16.msra.mxu0 0
    %4922 = vmatprep.subr.bf16.mxu0 0
    %4923 = vmatpush1.bf16.msra.mxu0 0
    %4924 = vmatprep.subr.bf16.mxu0 0
    %4925 = vmatpush1.bf16.msra.mxu0 0
    %4926 = vmatprep.subr.bf16.mxu0 0
    %4927 = vmatpush1.bf16.msra.mxu0 0
    %4928 = vmatprep.mubr.bf16.mxu0 0
    %4929 = vmatmul.mubr.bf16.gmra.mrb[0].mxu0 %v4891
    %v4930 = vpop.f32.mrb[0].mxu0
    %v4931 = vadd.f32 0.0, %v4930
    %v4932 = vpop.f32.mrb[0].mxu0
    %v4933 = vpop.f32.mrb[0].mxu0
    %v4934 = vadd.f32 0.0, %v4933
    %v4935 = vpop.f32.mrb[0].mxu0
    %4936 = vmatprep.mubr.bf16.mxu0 0
    %4937 = vmatmul.mubr.bf16.gmra.mrb[0].mxu0 %v4894
    %v4938 = vpop.f32.mrb[0].mxu0
    %v4939 = vadd.f32 0.0, %v4938
    %v4940 = vpop.f32.mrb[0].mxu0
    %v4941 = vpop.f32.mrb[0].mxu0
    %v4942 = vadd.f32 0.0, %v4941
    %v4943 = vpop.f32.mrb[0].mxu0
    %4944 = vdwg.mxu0
    %v4946 = vsel %vm3197, %v4616, 0
    %v4949 = vsel %vm3197, %v4617, 0
    %4951 = vmatprep.subr.bf16.mxu0 0
    %4952 = vmatpush1.bf16.msra.mxu0 %v1187
    %4953 = vmatprep.subr.bf16.mxu0 0
    %4954 = vmatpush1.bf16.msra.mxu0 %v1191
    %4955 = vmatprep.subr.bf16.mxu0 0
    %4956 = vmatpush1.bf16.msra.mxu0 0
    %4957 = vmatprep.subr.bf16.mxu0 0
    %4958 = vmatpush1.bf16.msra.mxu0 0
    %4959 = vmatprep.subr.bf16.mxu0 0
    %4960 = vmatpush1.bf16.msra.mxu0 0
    %4961 = vmatprep.subr.bf16.mxu0 0
    %4962 = vmatpush1.bf16.msra.mxu0 0
    %4963 = vmatprep.subr.bf16.mxu0 0
    %4964 = vmatpush1.bf16.msra.mxu0 0
    %4965 = vmatprep.subr.bf16.mxu0 0
    %4966 = vmatpush1.bf16.msra.mxu0 0
    %4967 = vmatprep.subr.bf16.mxu0 0
    %4968 = vmatpush1.bf16.msra.mxu0 0
    %4969 = vmatprep.subr.bf16.mxu0 0
    %4970 = vmatpush1.bf16.msra.mxu0 0
    %4971 = vmatprep.subr.bf16.mxu0 0
    %4972 = vmatpush1.bf16.msra.mxu0 0
    %4973 = vmatprep.subr.bf16.mxu0 0
    %4974 = vmatpush1.bf16.msra.mxu0 0
    %4975 = vmatprep.subr.bf16.mxu0 0
    %4976 = vmatpush1.bf16.msra.mxu0 0
    %4977 = vmatprep.subr.bf16.mxu0 0
    %4978 = vmatpush1.bf16.msra.mxu0 0
    %4979 = vmatprep.subr.bf16.mxu0 0
    %4980 = vmatpush1.bf16.msra.mxu0 0
    %4981 = vmatprep.subr.bf16.mxu0 0
    %4982 = vmatpush1.bf16.msra.mxu0 0
    %4983 = vmatprep.mubr.bf16.mxu0 0
    %4984 = vmatmul.mubr.bf16.gmra.mrb[0].mxu0 %v4946
    %v4985 = vpop.f32.mrb[0].mxu0
    %v4986 = vadd.f32 0.0, %v4985
    %v4987 = vpop.f32.mrb[0].mxu0
    %v4988 = vpop.f32.mrb[0].mxu0
    %v4989 = vadd.f32 0.0, %v4988
    %v4990 = vpop.f32.mrb[0].mxu0
    %4991 = vmatprep.mubr.bf16.mxu0 0
    %4992 = vmatmul.mubr.bf16.gmra.mrb[0].mxu0 %v4949
    %v4993 = vpop.f32.mrb[0].mxu0
    %v4994 = vadd.f32 0.0, %v4993
    %v4995 = vpop.f32.mrb[0].mxu0
    %v4996 = vpop.f32.mrb[0].mxu0
    %v4997 = vadd.f32 0.0, %v4996
    %v4998 = vpop.f32.mrb[0].mxu0
    %4999 = vdwg.mxu0
    %v5001 = vsel %vm3197, %v4618, 0
    %v5004 = vsel %vm3197, %v4619, 0
    %5006 = vmatprep.subr.bf16.mxu0 0
    %5007 = vmatpush1.bf16.msra.mxu0 %v1195
    %5008 = vmatprep.subr.bf16.mxu0 0
    %5009 = vmatpush1.bf16.msra.mxu0 %v1199
    %5010 = vmatprep.subr.bf16.mxu0 0
    %5011 = vmatpush1.bf16.msra.mxu0 0
    %5012 = vmatprep.subr.bf16.mxu0 0
    %5013 = vmatpush1.bf16.msra.mxu0 0
    %5014 = vmatprep.subr.bf16.mxu0 0
    %5015 = vmatpush1.bf16.msra.mxu0 0
    %5016 = vmatprep.subr.bf16.mxu0 0
    %5017 = vmatpush1.bf16.msra.mxu0 0
    %5018 = vmatprep.subr.bf16.mxu0 0
    %5019 = vmatpush1.bf16.msra.mxu0 0
    %5020 = vmatprep.subr.bf16.mxu0 0
    %5021 = vmatpush1.bf16.msra.mxu0 0
    %5022 = vmatprep.subr.bf16.mxu0 0
    %5023 = vmatpush1.bf16.msra.mxu0 0
    %5024 = vmatprep.subr.bf16.mxu0 0
    %5025 = vmatpush1.bf16.msra.mxu0 0
    %5026 = vmatprep.subr.bf16.mxu0 0
    %5027 = vmatpush1.bf16.msra.mxu0 0
    %5028 = vmatprep.subr.bf16.mxu0 0
    %5029 = vmatpush1.bf16.msra.mxu0 0
    %5030 = vmatprep.subr.bf16.mxu0 0
    %5031 = vmatpush1.bf16.msra.mxu0 0
    %5032 = vmatprep.subr.bf16.mxu0 0
    %5033 = vmatpush1.bf16.msra.mxu0 0
    %5034 = vmatprep.subr.bf16.mxu0 0
    %5035 = vmatpush1.bf16.msra.mxu0 0
    %5036 = vmatprep.subr.bf16.mxu0 0
    %5037 = vmatpush1.bf16.msra.mxu0 0
    %5038 = vmatprep.mubr.bf16.mxu0 0
    %5039 = vmatmul.mubr.bf16.gmra.mrb[0].mxu0 %v5001
    %v5040 = vpop.f32.mrb[0].mxu0
    %v5041 = vadd.f32 0.0, %v5040
    %v5042 = vpop.f32.mrb[0].mxu0
    %v5043 = vpop.f32.mrb[0].mxu0
    %v5044 = vadd.f32 0.0, %v5043
    %v5045 = vpop.f32.mrb[0].mxu0
    %5046 = vmatprep.mubr.bf16.mxu0 0
    %5047 = vmatmul.mubr.bf16.gmra.mrb[0].mxu0 %v5004
    %v5048 = vpop.f32.mrb[0].mxu0
    %v5049 = vadd.f32 0.0, %v5048
    %v5050 = vpop.f32.mrb[0].mxu0
    %v5051 = vpop.f32.mrb[0].mxu0
    %v5052 = vadd.f32 0.0, %v5051
    %v5053 = vpop.f32.mrb[0].mxu0
    %5054 = vdwg.mxu0
    %v5056 = vsel %vm3197, %v4620, 0
    %v5059 = vsel %vm3197, %v4621, 0
    %5061 = vmatprep.subr.bf16.mxu0 0
    %5062 = vmatpush1.bf16.msra.mxu0 %v1203
    %5063 = vmatprep.subr.bf16.mxu0 0
    %5064 = vmatpush1.bf16.msra.mxu0 %v1207
    %5065 = vmatprep.subr.bf16.mxu0 0
    %5066 = vmatpush1.bf16.msra.mxu0 0
    %5067 = vmatprep.subr.bf16.mxu0 0
    %5068 = vmatpush1.bf16.msra.mxu0 0
    %5069 = vmatprep.subr.bf16.mxu0 0
    %5070 = vmatpush1.bf16.msra.mxu0 0
    %5071 = vmatprep.subr.bf16.mxu0 0
    %5072 = vmatpush1.bf16.msra.mxu0 0
    %5073 = vmatprep.subr.bf16.mxu0 0
    %5074 = vmatpush1.bf16.msra.mxu0 0
    %5075 = vmatprep.subr.bf16.mxu0 0
    %5076 = vmatpush1.bf16.msra.mxu0 0
    %5077 = vmatprep.subr.bf16.mxu0 0
    %5078 = vmatpush1.bf16.msra.mxu0 0
    %5079 = vmatprep.subr.bf16.mxu0 0
    %5080 = vmatpush1.bf16.msra.mxu0 0
    %5081 = vmatprep.subr.bf16.mxu0 0
    %5082 = vmatpush1.bf16.msra.mxu0 0
    %5083 = vmatprep.subr.bf16.mxu0 0
    %5084 = vmatpush1.bf16.msra.mxu0 0
    %5085 = vmatprep.subr.bf16.mxu0 0
    %5086 = vmatpush1.bf16.msra.mxu0 0
    %5087 = vmatprep.subr.bf16.mxu0 0
    %5088 = vmatpush1.bf16.msra.mxu0 0
    %5089 = vmatprep.subr.bf16.mxu0 0
    %5090 = vmatpush1.bf16.msra.mxu0 0
    %5091 = vmatprep.subr.bf16.mxu0 0
    %5092 = vmatpush1.bf16.msra.mxu0 0
    %5093 = vmatprep.mubr.bf16.mxu0 0
    %5094 = vmatmul.mubr.bf16.gmra.mrb[0].mxu0 %v5056
    %v5095 = vpop.f32.mrb[0].mxu0
    %v5096 = vadd.f32 0.0, %v5095
    %v5097 = vpop.f32.mrb[0].mxu0
    %v5098 = vpop.f32.mrb[0].mxu0
    %v5099 = vadd.f32 0.0, %v5098
    %v5100 = vpop.f32.mrb[0].mxu0
    %5101 = vmatprep.mubr.bf16.mxu0 0
    %5102 = vmatmul.mubr.bf16.gmra.mrb[0].mxu0 %v5059
    %v5103 = vpop.f32.mrb[0].mxu0
    %v5104 = vadd.f32 0.0, %v5103
    %v5105 = vpop.f32.mrb[0].mxu0
    %v5106 = vpop.f32.mrb[0].mxu0
    %v5107 = vadd.f32 0.0, %v5106
    %v5108 = vpop.f32.mrb[0].mxu0
    %5109 = vdwg.mxu0
    %v5111 = vsel %vm3197, %v4622, 0
    %v5114 = vsel %vm3197, %v4623, 0
    %5116 = vmatprep.subr.bf16.mxu0 0
    %5117 = vmatpush1.bf16.msra.mxu0 %v1322
    %5118 = vmatprep.subr.bf16.mxu0 0
    %5119 = vmatpush1.bf16.msra.mxu0 %v1324
    %5120 = vmatprep.subr.bf16.mxu0 0
    %5121 = vmatpush1.bf16.msra.mxu0 0
    %5122 = vmatprep.subr.bf16.mxu0 0
    %5123 = vmatpush1.bf16.msra.mxu0 0
    %5124 = vmatprep.subr.bf16.mxu0 0
    %5125 = vmatpush1.bf16.msra.mxu0 0
    %5126 = vmatprep.subr.bf16.mxu0 0
    %5127 = vmatpush1.bf16.msra.mxu0 0
    %5128 = vmatprep.subr.bf16.mxu0 0
    %5129 = vmatpush1.bf16.msra.mxu0 0
    %5130 = vmatprep.subr.bf16.mxu0 0
    %5131 = vmatpush1.bf16.msra.mxu0 0
    %5132 = vmatprep.subr.bf16.mxu0 0
    %5133 = vmatpush1.bf16.msra.mxu0 0
    %5134 = vmatprep.subr.bf16.mxu0 0
    %5135 = vmatpush1.bf16.msra.mxu0 0
    %5136 = vmatprep.subr.bf16.mxu0 0
    %5137 = vmatpush1.bf16.msra.mxu0 0
    %5138 = vmatprep.subr.bf16.mxu0 0
    %5139 = vmatpush1.bf16.msra.mxu0 0
    %5140 = vmatprep.subr.bf16.mxu0 0
    %5141 = vmatpush1.bf16.msra.mxu0 0
    %5142 = vmatprep.subr.bf16.mxu0 0
    %5143 = vmatpush1.bf16.msra.mxu0 0
    %5144 = vmatprep.subr.bf16.mxu0 0
    %5145 = vmatpush1.bf16.msra.mxu0 0
    %5146 = vmatprep.subr.bf16.mxu0 0
    %5147 = vmatpush1.bf16.msra.mxu0 0
    %5148 = vmatprep.mubr.bf16.mxu0 0
    %5149 = vmatmul.mubr.bf16.gmra.mrb[0].mxu0 %v5111
    %v5150 = vpop.f32.mrb[0].mxu0
    %v5151 = vadd.f32 0.0, %v5150
    %v5152 = vpop.f32.mrb[0].mxu0
    %v5153 = vpop.f32.mrb[0].mxu0
    %v5154 = vadd.f32 0.0, %v5153
    %v5155 = vpop.f32.mrb[0].mxu0
    %5156 = vmatprep.mubr.bf16.mxu0 0
    %5157 = vmatmul.mubr.bf16.gmra.mrb[0].mxu0 %v5114
    %v5158 = vpop.f32.mrb[0].mxu0
    %v5159 = vadd.f32 0.0, %v5158
    %v5160 = vpop.f32.mrb[0].mxu0
    %v5161 = vpop.f32.mrb[0].mxu0
    %v5162 = vadd.f32 0.0, %v5161
    %v5163 = vpop.f32.mrb[0].mxu0
    %5164 = vdwg.mxu0
    %v5166 = vsel %vm3197, %v4624, 0
    %v5169 = vsel %vm3197, %v4625, 0
    %5171 = vmatprep.subr.bf16.mxu0 0
    %5172 = vmatpush1.bf16.msra.mxu0 %v1326
    %5173 = vmatprep.subr.bf16.mxu0 0
    %5174 = vmatpush1.bf16.msra.mxu0 %v1328
    %5175 = vmatprep.subr.bf16.mxu0 0
    %5176 = vmatpush1.bf16.msra.mxu0 0
    %5177 = vmatprep.subr.bf16.mxu0 0
    %5178 = vmatpush1.bf16.msra.mxu0 0
    %5179 = vmatprep.subr.bf16.mxu0 0
    %5180 = vmatpush1.bf16.msra.mxu0 0
    %5181 = vmatprep.subr.bf16.mxu0 0
    %5182 = vmatpush1.bf16.msra.mxu0 0
    %5183 = vmatprep.subr.bf16.mxu0 0
    %5184 = vmatpush1.bf16.msra.mxu0 0
    %5185 = vmatprep.subr.bf16.mxu0 0
    %5186 = vmatpush1.bf16.msra.mxu0 0
    %5187 = vmatprep.subr.bf16.mxu0 0
    %5188 = vmatpush1.bf16.msra.mxu0 0
    %5189 = vmatprep.subr.bf16.mxu0 0
    %5190 = vmatpush1.bf16.msra.mxu0 0
    %5191 = vmatprep.subr.bf16.mxu0 0
    %5192 = vmatpush1.bf16.msra.mxu0 0
    %5193 = vmatprep.subr.bf16.mxu0 0
    %5194 = vmatpush1.bf16.msra.mxu0 0
    %5195 = vmatprep.subr.bf16.mxu0 0
    %5196 = vmatpush1.bf16.msra.mxu0 0
    %5197 = vmatprep.subr.bf16.mxu0 0
    %5198 = vmatpush1.bf16.msra.mxu0 0
    %5199 = vmatprep.subr.bf16.mxu0 0
    %5200 = vmatpush1.bf16.msra.mxu0 0
    %5201 = vmatprep.subr.bf16.mxu0 0
    %5202 = vmatpush1.bf16.msra.mxu0 0
    %5203 = vmatprep.mubr.bf16.mxu0 0
    %5204 = vmatmul.mubr.bf16.gmra.mrb[0].mxu0 %v5166
    %v5205 = vpop.f32.mrb[0].mxu0
    %v5206 = vadd.f32 0.0, %v5205
    %v5207 = vpop.f32.mrb[0].mxu0
    %v5208 = vpop.f32.mrb[0].mxu0
    %v5209 = vadd.f32 0.0, %v5208
    %v5210 = vpop.f32.mrb[0].mxu0
    %5211 = vmatprep.mubr.bf16.mxu0 0
    %5212 = vmatmul.mubr.bf16.gmra.mrb[0].mxu0 %v5169
    %v5213 = vpop.f32.mrb[0].mxu0
    %v5214 = vadd.f32 0.0, %v5213
    %v5215 = vpop.f32.mrb[0].mxu0
    %v5216 = vpop.f32.mrb[0].mxu0
    %v5217 = vadd.f32 0.0, %v5216
    %v5218 = vpop.f32.mrb[0].mxu0
    %5219 = vdwg.mxu0
    %v5221 = vsel %vm3197, %v4626, 0
    %v5224 = vsel %vm3197, %v4627, 0
    %5226 = vmatprep.subr.bf16.mxu0 0
    %5227 = vmatpush1.bf16.msra.mxu0 %v1330
    %5228 = vmatprep.subr.bf16.mxu0 0
    %5229 = vmatpush1.bf16.msra.mxu0 %v1332
    %5230 = vmatprep.subr.bf16.mxu0 0
    %5231 = vmatpush1.bf16.msra.mxu0 0
    %5232 = vmatprep.subr.bf16.mxu0 0
    %5233 = vmatpush1.bf16.msra.mxu0 0
    %5234 = vmatprep.subr.bf16.mxu0 0
    %5235 = vmatpush1.bf16.msra.mxu0 0
    %5236 = vmatprep.subr.bf16.mxu0 0
    %5237 = vmatpush1.bf16.msra.mxu0 0
    %5238 = vmatprep.subr.bf16.mxu0 0
    %5239 = vmatpush1.bf16.msra.mxu0 0
    %5240 = vmatprep.subr.bf16.mxu0 0
    %5241 = vmatpush1.bf16.msra.mxu0 0
    %5242 = vmatprep.subr.bf16.mxu0 0
    %5243 = vmatpush1.bf16.msra.mxu0 0
    %5244 = vmatprep.subr.bf16.mxu0 0
    %5245 = vmatpush1.bf16.msra.mxu0 0
    %5246 = vmatprep.subr.bf16.mxu0 0
    %5247 = vmatpush1.bf16.msra.mxu0 0
    %5248 = vmatprep.subr.bf16.mxu0 0
    %5249 = vmatpush1.bf16.msra.mxu0 0
    %5250 = vmatprep.subr.bf16.mxu0 0
    %5251 = vmatpush1.bf16.msra.mxu0 0
    %5252 = vmatprep.subr.bf16.mxu0 0
    %5253 = vmatpush1.bf16.msra.mxu0 0
    %5254 = vmatprep.subr.bf16.mxu0 0
    %5255 = vmatpush1.bf16.msra.mxu0 0
    %5256 = vmatprep.subr.bf16.mxu0 0
    %5257 = vmatpush1.bf16.msra.mxu0 0
    %5258 = vmatprep.mubr.bf16.mxu0 0
    %5259 = vmatmul.mubr.bf16.gmra.mrb[0].mxu0 %v5221
    %v5260 = vpop.f32.mrb[0].mxu0
    %v5261 = vadd.f32 0.0, %v5260
    %v5262 = vpop.f32.mrb[0].mxu0
    %v5263 = vpop.f32.mrb[0].mxu0
    %v5264 = vadd.f32 0.0, %v5263
    %v5265 = vpop.f32.mrb[0].mxu0
    %5266 = vmatprep.mubr.bf16.mxu0 0
    %5267 = vmatmul.mubr.bf16.gmra.mrb[0].mxu0 %v5224
    %v5268 = vpop.f32.mrb[0].mxu0
    %v5269 = vadd.f32 0.0, %v5268
    %v5270 = vpop.f32.mrb[0].mxu0
    %v5271 = vpop.f32.mrb[0].mxu0
    %v5272 = vadd.f32 0.0, %v5271
    %v5273 = vpop.f32.mrb[0].mxu0
    %5274 = vdwg.mxu0
    %v5276 = vsel %vm3197, %v4628, 0
    %v5279 = vsel %vm3197, %v4629, 0
    %5281 = vmatprep.subr.bf16.mxu0 0
    %5282 = vmatpush1.bf16.msra.mxu0 %v1334
    %5283 = vmatprep.subr.bf16.mxu0 0
    %5284 = vmatpush1.bf16.msra.mxu0 %v1336
    %5285 = vmatprep.subr.bf16.mxu0 0
    %5286 = vmatpush1.bf16.msra.mxu0 0
    %5287 = vmatprep.subr.bf16.mxu0 0
    %5288 = vmatpush1.bf16.msra.mxu0 0
    %5289 = vmatprep.subr.bf16.mxu0 0
    %5290 = vmatpush1.bf16.msra.mxu0 0
    %5291 = vmatprep.subr.bf16.mxu0 0
    %5292 = vmatpush1.bf16.msra.mxu0 0
    %5293 = vmatprep.subr.bf16.mxu0 0
    %5294 = vmatpush1.bf16.msra.mxu0 0
    %5295 = vmatprep.subr.bf16.mxu0 0
    %5296 = vmatpush1.bf16.msra.mxu0 0
    %5297 = vmatprep.subr.bf16.mxu0 0
    %5298 = vmatpush1.bf16.msra.mxu0 0
    %5299 = vmatprep.subr.bf16.mxu0 0
    %5300 = vmatpush1.bf16.msra.mxu0 0
    %5301 = vmatprep.subr.bf16.mxu0 0
    %5302 = vmatpush1.bf16.msra.mxu0 0
    %5303 = vmatprep.subr.bf16.mxu0 0
    %5304 = vmatpush1.bf16.msra.mxu0 0
    %5305 = vmatprep.subr.bf16.mxu0 0
    %5306 = vmatpush1.bf16.msra.mxu0 0
    %5307 = vmatprep.subr.bf16.mxu0 0
    %5308 = vmatpush1.bf16.msra.mxu0 0
    %5309 = vmatprep.subr.bf16.mxu0 0
    %5310 = vmatpush1.bf16.msra.mxu0 0
    %5311 = vmatprep.subr.bf16.mxu0 0
    %5312 = vmatpush1.bf16.msra.mxu0 0
    %5313 = vmatprep.mubr.bf16.mxu0 0
    %5314 = vmatmul.mubr.bf16.gmra.mrb[0].mxu0 %v5276
    %v5315 = vpop.f32.mrb[0].mxu0
    %v5316 = vadd.f32 0.0, %v5315
    %v5317 = vpop.f32.mrb[0].mxu0
    %v5318 = vpop.f32.mrb[0].mxu0
    %v5319 = vadd.f32 0.0, %v5318
    %v5320 = vpop.f32.mrb[0].mxu0
    %5321 = vmatprep.mubr.bf16.mxu0 0
    %5322 = vmatmul.mubr.bf16.gmra.mrb[0].mxu0 %v5279
    %v5323 = vpop.f32.mrb[0].mxu0
    %v5324 = vadd.f32 0.0, %v5323
    %v5325 = vpop.f32.mrb[0].mxu0
    %v5326 = vpop.f32.mrb[0].mxu0
    %v5327 = vadd.f32 0.0, %v5326
    %v5328 = vpop.f32.mrb[0].mxu0
    %5329 = vdwg.mxu0
    %v5331 = vsel %vm3197, %v4630, 0
    %v5334 = vsel %vm3197, %v4631, 0
    %5336 = vmatprep.subr.bf16.mxu0 0
    %5337 = vmatpush1.bf16.msra.mxu0 %v1338
    %5338 = vmatprep.subr.bf16.mxu0 0
    %5339 = vmatpush1.bf16.msra.mxu0 %v1340
    %5340 = vmatprep.subr.bf16.mxu0 0
    %5341 = vmatpush1.bf16.msra.mxu0 0
    %5342 = vmatprep.subr.bf16.mxu0 0
    %5343 = vmatpush1.bf16.msra.mxu0 0
    %5344 = vmatprep.subr.bf16.mxu0 0
    %5345 = vmatpush1.bf16.msra.mxu0 0
    %5346 = vmatprep.subr.bf16.mxu0 0
    %5347 = vmatpush1.bf16.msra.mxu0 0
    %5348 = vmatprep.subr.bf16.mxu0 0
    %5349 = vmatpush1.bf16.msra.mxu0 0
    %5350 = vmatprep.subr.bf16.mxu0 0
    %5351 = vmatpush1.bf16.msra.mxu0 0
    %5352 = vmatprep.subr.bf16.mxu0 0
    %5353 = vmatpush1.bf16.msra.mxu0 0
    %5354 = vmatprep.subr.bf16.mxu0 0
    %5355 = vmatpush1.bf16.msra.mxu0 0
    %5356 = vmatprep.subr.bf16.mxu0 0
    %5357 = vmatpush1.bf16.msra.mxu0 0
    %5358 = vmatprep.subr.bf16.mxu0 0
    %5359 = vmatpush1.bf16.msra.mxu0 0
    %5360 = vmatprep.subr.bf16.mxu0 0
    %5361 = vmatpush1.bf16.msra.mxu0 0
    %5362 = vmatprep.subr.bf16.mxu0 0
    %5363 = vmatpush1.bf16.msra.mxu0 0
    %5364 = vmatprep.subr.bf16.mxu0 0
    %5365 = vmatpush1.bf16.msra.mxu0 0
    %5366 = vmatprep.subr.bf16.mxu0 0
    %5367 = vmatpush1.bf16.msra.mxu0 0
    %5368 = vmatprep.mubr.bf16.mxu0 0
    %5369 = vmatmul.mubr.bf16.gmra.mrb[0].mxu0 %v5331
    %v5370 = vpop.f32.mrb[0].mxu0
    %v5371 = vadd.f32 0.0, %v5370
    %v5372 = vpop.f32.mrb[0].mxu0
    %v5373 = vpop.f32.mrb[0].mxu0
    %v5374 = vadd.f32 0.0, %v5373
    %v5375 = vpop.f32.mrb[0].mxu0
    %5376 = vmatprep.mubr.bf16.mxu0 0
    %5377 = vmatmul.mubr.bf16.gmra.mrb[0].mxu0 %v5334
    %v5378 = vpop.f32.mrb[0].mxu0
    %v5379 = vadd.f32 0.0, %v5378
    %v5380 = vpop.f32.mrb[0].mxu0
    %v5381 = vpop.f32.mrb[0].mxu0
    %v5382 = vadd.f32 0.0, %v5381
    %v5383 = vpop.f32.mrb[0].mxu0
    %5384 = vdwg.mxu0
    %v5386 = vsel %vm3197, %v4632, 0
    %v5389 = vsel %vm3197, %v4633, 0
    %5391 = vmatprep.subr.bf16.mxu0 0
    %5392 = vmatpush1.bf16.msra.mxu0 %v1342
    %5393 = vmatprep.subr.bf16.mxu0 0
    %5394 = vmatpush1.bf16.msra.mxu0 %v1344
    %5395 = vmatprep.subr.bf16.mxu0 0
    %5396 = vmatpush1.bf16.msra.mxu0 0
    %5397 = vmatprep.subr.bf16.mxu0 0
    %5398 = vmatpush1.bf16.msra.mxu0 0
    %5399 = vmatprep.subr.bf16.mxu0 0
    %5400 = vmatpush1.bf16.msra.mxu0 0
    %5401 = vmatprep.subr.bf16.mxu0 0
    %5402 = vmatpush1.bf16.msra.mxu0 0
    %5403 = vmatprep.subr.bf16.mxu0 0
    %5404 = vmatpush1.bf16.msra.mxu0 0
    %5405 = vmatprep.subr.bf16.mxu0 0
    %5406 = vmatpush1.bf16.msra.mxu0 0
    %5407 = vmatprep.subr.bf16.mxu0 0
    %5408 = vmatpush1.bf16.msra.mxu0 0
    %5409 = vmatprep.subr.bf16.mxu0 0
    %5410 = vmatpush1.bf16.msra.mxu0 0
    %5411 = vmatprep.subr.bf16.mxu0 0
    %5412 = vmatpush1.bf16.msra.mxu0 0
    %5413 = vmatprep.subr.bf16.mxu0 0
    %5414 = vmatpush1.bf16.msra.mxu0 0
    %5415 = vmatprep.subr.bf16.mxu0 0
    %5416 = vmatpush1.bf16.msra.mxu0 0
    %5417 = vmatprep.subr.bf16.mxu0 0
    %5418 = vmatpush1.bf16.msra.mxu0 0
    %5419 = vmatprep.subr.bf16.mxu0 0
    %5420 = vmatpush1.bf16.msra.mxu0 0
    %5421 = vmatprep.subr.bf16.mxu0 0
    %5422 = vmatpush1.bf16.msra.mxu0 0
    %5423 = vmatprep.mubr.bf16.mxu0 0
    %5424 = vmatmul.mubr.bf16.gmra.mrb[0].mxu0 %v5386
    %v5425 = vpop.f32.mrb[0].mxu0
    %v5426 = vadd.f32 0.0, %v5425
    %v5427 = vpop.f32.mrb[0].mxu0
    %v5428 = vpop.f32.mrb[0].mxu0
    %v5429 = vadd.f32 0.0, %v5428
    %v5430 = vpop.f32.mrb[0].mxu0
    %5431 = vmatprep.mubr.bf16.mxu0 0
    %5432 = vmatmul.mubr.bf16.gmra.mrb[0].mxu0 %v5389
    %v5433 = vpop.f32.mrb[0].mxu0
    %v5434 = vadd.f32 0.0, %v5433
    %v5435 = vpop.f32.mrb[0].mxu0
    %v5436 = vpop.f32.mrb[0].mxu0
    %v5437 = vadd.f32 0.0, %v5436
    %v5438 = vpop.f32.mrb[0].mxu0
    %5439 = vdwg.mxu0
    %v5441 = vsel %vm3197, %v4634, 0
    %v5444 = vsel %vm3197, %v4635, 0
    %5446 = vmatprep.subr.bf16.mxu0 0
    %5447 = vmatpush1.bf16.msra.mxu0 %v1346
    %5448 = vmatprep.subr.bf16.mxu0 0
    %5449 = vmatpush1.bf16.msra.mxu0 %v1348
    %5450 = vmatprep.subr.bf16.mxu0 0
    %5451 = vmatpush1.bf16.msra.mxu0 0
    %5452 = vmatprep.subr.bf16.mxu0 0
    %5453 = vmatpush1.bf16.msra.mxu0 0
    %5454 = vmatprep.subr.bf16.mxu0 0
    %5455 = vmatpush1.bf16.msra.mxu0 0
    %5456 = vmatprep.subr.bf16.mxu0 0
    %5457 = vmatpush1.bf16.msra.mxu0 0
    %5458 = vmatprep.subr.bf16.mxu0 0
    %5459 = vmatpush1.bf16.msra.mxu0 0
    %5460 = vmatprep.subr.bf16.mxu0 0
    %5461 = vmatpush1.bf16.msra.mxu0 0
    %5462 = vmatprep.subr.bf16.mxu0 0
    %5463 = vmatpush1.bf16.msra.mxu0 0
    %5464 = vmatprep.subr.bf16.mxu0 0
    %5465 = vmatpush1.bf16.msra.mxu0 0
    %5466 = vmatprep.subr.bf16.mxu0 0
    %5467 = vmatpush1.bf16.msra.mxu0 0
    %5468 = vmatprep.subr.bf16.mxu0 0
    %5469 = vmatpush1.bf16.msra.mxu0 0
    %5470 = vmatprep.subr.bf16.mxu0 0
    %5471 = vmatpush1.bf16.msra.mxu0 0
    %5472 = vmatprep.subr.bf16.mxu0 0
    %5473 = vmatpush1.bf16.msra.mxu0 0
    %5474 = vmatprep.subr.bf16.mxu0 0
    %5475 = vmatpush1.bf16.msra.mxu0 0
    %5476 = vmatprep.subr.bf16.mxu0 0
    %5477 = vmatpush1.bf16.msra.mxu0 0
    %5478 = vmatprep.mubr.bf16.mxu0 0
    %5479 = vmatmul.mubr.bf16.gmra.mrb[0].mxu0 %v5441
    %v5480 = vpop.f32.mrb[0].mxu0
    %v5481 = vadd.f32 0.0, %v5480
    %v5482 = vpop.f32.mrb[0].mxu0
    %v5483 = vpop.f32.mrb[0].mxu0
    %v5484 = vadd.f32 0.0, %v5483
    %v5485 = vpop.f32.mrb[0].mxu0
    %5486 = vmatprep.mubr.bf16.mxu0 0
    %5487 = vmatmul.mubr.bf16.gmra.mrb[0].mxu0 %v5444
    %v5488 = vpop.f32.mrb[0].mxu0
    %v5489 = vadd.f32 0.0, %v5488
    %v5490 = vpop.f32.mrb[0].mxu0
    %v5491 = vpop.f32.mrb[0].mxu0
    %v5492 = vadd.f32 0.0, %v5491
    %v5493 = vpop.f32.mrb[0].mxu0
    %5494 = vdwg.mxu0
    %v5496 = vsel %vm3197, %v4636, 0
    %v5499 = vsel %vm3197, %v4637, 0
    %5501 = vmatprep.subr.bf16.mxu0 0
    %5502 = vmatpush1.bf16.msra.mxu0 %v1350
    %5503 = vmatprep.subr.bf16.mxu0 0
    %5504 = vmatpush1.bf16.msra.mxu0 %v1352
    %5505 = vmatprep.subr.bf16.mxu0 0
    %5506 = vmatpush1.bf16.msra.mxu0 0
    %5507 = vmatprep.subr.bf16.mxu0 0
    %5508 = vmatpush1.bf16.msra.mxu0 0
    %5509 = vmatprep.subr.bf16.mxu0 0
    %5510 = vmatpush1.bf16.msra.mxu0 0
    %5511 = vmatprep.subr.bf16.mxu0 0
    %5512 = vmatpush1.bf16.msra.mxu0 0
    %5513 = vmatprep.subr.bf16.mxu0 0
    %5514 = vmatpush1.bf16.msra.mxu0 0
    %5515 = vmatprep.subr.bf16.mxu0 0
    %5516 = vmatpush1.bf16.msra.mxu0 0
    %5517 = vmatprep.subr.bf16.mxu0 0
    %5518 = vmatpush1.bf16.msra.mxu0 0
    %5519 = vmatprep.subr.bf16.mxu0 0
    %5520 = vmatpush1.bf16.msra.mxu0 0
    %5521 = vmatprep.subr.bf16.mxu0 0
    %5522 = vmatpush1.bf16.msra.mxu0 0
    %5523 = vmatprep.subr.bf16.mxu0 0
    %5524 = vmatpush1.bf16.msra.mxu0 0
    %5525 = vmatprep.subr.bf16.mxu0 0
    %5526 = vmatpush1.bf16.msra.mxu0 0
    %5527 = vmatprep.subr.bf16.mxu0 0
    %5528 = vmatpush1.bf16.msra.mxu0 0
    %5529 = vmatprep.subr.bf16.mxu0 0
    %5530 = vmatpush1.bf16.msra.mxu0 0
    %5531 = vmatprep.subr.bf16.mxu0 0
    %5532 = vmatpush1.bf16.msra.mxu0 0
    %5533 = vmatprep.mubr.bf16.mxu0 0
    %5534 = vmatmul.mubr.bf16.gmra.mrb[0].mxu0 %v5496
    %v5535 = vpop.f32.mrb[0].mxu0
    %v5536 = vadd.f32 0.0, %v5535
    %v5537 = vpop.f32.mrb[0].mxu0
    %v5538 = vpop.f32.mrb[0].mxu0
    %v5539 = vadd.f32 0.0, %v5538
    %v5540 = vpop.f32.mrb[0].mxu0
    %5541 = vmatprep.mubr.bf16.mxu0 0
    %5542 = vmatmul.mubr.bf16.gmra.mrb[0].mxu0 %v5499
    %v5543 = vpop.f32.mrb[0].mxu0
    %v5544 = vadd.f32 0.0, %v5543
    %v5545 = vpop.f32.mrb[0].mxu0
    %v5546 = vpop.f32.mrb[0].mxu0
    %v5547 = vadd.f32 0.0, %v5546
    %v5548 = vpop.f32.mrb[0].mxu0
    %5549 = vdwg.mxu0
    %v5551 = vsel %vm3197, %v4638, 0
    %v5554 = vsel %vm3197, %v4639, 0
    %5556 = vmatprep.subr.bf16.mxu0 0
    %5557 = vmatpush1.bf16.msra.mxu0 %v1148
    %5558 = vmatprep.subr.bf16.mxu0 0
    %5559 = vmatpush1.bf16.msra.mxu0 %v1152
    %5560 = vmatprep.subr.bf16.mxu0 0
    %5561 = vmatpush1.bf16.msra.mxu0 0
    %5562 = vmatprep.subr.bf16.mxu0 0
    %5563 = vmatpush1.bf16.msra.mxu0 0
    %5564 = vmatprep.subr.bf16.mxu0 0
    %5565 = vmatpush1.bf16.msra.mxu0 0
    %5566 = vmatprep.subr.bf16.mxu0 0
    %5567 = vmatpush1.bf16.msra.mxu0 0
    %5568 = vmatprep.subr.bf16.mxu0 0
    %5569 = vmatpush1.bf16.msra.mxu0 0
    %5570 = vmatprep.subr.bf16.mxu0 0
    %5571 = vmatpush1.bf16.msra.mxu0 0
    %5572 = vmatprep.subr.bf16.mxu0 0
    %5573 = vmatpush1.bf16.msra.mxu0 0
    %5574 = vmatprep.subr.bf16.mxu0 0
    %5575 = vmatpush1.bf16.msra.mxu0 0
    %5576 = vmatprep.subr.bf16.mxu0 0
    %5577 = vmatpush1.bf16.msra.mxu0 0
    %5578 = vmatprep.subr.bf16.mxu0 0
    %5579 = vmatpush1.bf16.msra.mxu0 0
    %5580 = vmatprep.subr.bf16.mxu0 0
    %5581 = vmatpush1.bf16.msra.mxu0 0
    %5582 = vmatprep.subr.bf16.mxu0 0
    %5583 = vmatpush1.bf16.msra.mxu0 0
    %5584 = vmatprep.subr.bf16.mxu0 0
    %5585 = vmatpush1.bf16.msra.mxu0 0
    %5586 = vmatprep.subr.bf16.mxu0 0
    %5587 = vmatpush1.bf16.msra.mxu0 0
    %5588 = vmatprep.mubr.bf16.mxu0 0
    %5589 = vmatmul.mubr.bf16.gmra.mrb[0].mxu0 %v5551
    %v5590 = vpop.f32.mrb[0].mxu0
    %v5591 = vadd.f32 0.0, %v5590
    %v5592 = vpop.f32.mrb[0].mxu0
    %v5593 = vpop.f32.mrb[0].mxu0
    %v5594 = vadd.f32 0.0, %v5593
    %v5595 = vpop.f32.mrb[0].mxu0
    %5596 = vmatprep.mubr.bf16.mxu0 0
    %5597 = vmatmul.mubr.bf16.gmra.mrb[0].mxu0 %v5554
    %v5598 = vpop.f32.mrb[0].mxu0
    %v5599 = vadd.f32 0.0, %v5598
    %v5600 = vpop.f32.mrb[0].mxu0
    %v5601 = vpop.f32.mrb[0].mxu0
    %v5602 = vadd.f32 0.0, %v5601
    %v5603 = vpop.f32.mrb[0].mxu0
    %5604 = vdwg.mxu0
    %v5606 = vsel %vm3197, %v4640, 0
    %v5609 = vsel %vm3197, %v4641, 0
    %5611 = vmatprep.subr.bf16.mxu0 0
    %5612 = vmatpush1.bf16.msra.mxu0 %v1156
    %5613 = vmatprep.subr.bf16.mxu0 0
    %5614 = vmatpush1.bf16.msra.mxu0 %v1160
    %5615 = vmatprep.subr.bf16.mxu0 0
    %5616 = vmatpush1.bf16.msra.mxu0 0
    %5617 = vmatprep.subr.bf16.mxu0 0
    %5618 = vmatpush1.bf16.msra.mxu0 0
    %5619 = vmatprep.subr.bf16.mxu0 0
    %5620 = vmatpush1.bf16.msra.mxu0 0
    %5621 = vmatprep.subr.bf16.mxu0 0
    %5622 = vmatpush1.bf16.msra.mxu0 0
    %5623 = vmatprep.subr.bf16.mxu0 0
    %5624 = vmatpush1.bf16.msra.mxu0 0
    %5625 = vmatprep.subr.bf16.mxu0 0
    %5626 = vmatpush1.bf16.msra.mxu0 0
    %5627 = vmatprep.subr.bf16.mxu0 0
    %5628 = vmatpush1.bf16.msra.mxu0 0
    %5629 = vmatprep.subr.bf16.mxu0 0
    %5630 = vmatpush1.bf16.msra.mxu0 0
    %5631 = vmatprep.subr.bf16.mxu0 0
    %5632 = vmatpush1.bf16.msra.mxu0 0
    %5633 = vmatprep.subr.bf16.mxu0 0
    %5634 = vmatpush1.bf16.msra.mxu0 0
    %5635 = vmatprep.subr.bf16.mxu0 0
    %5636 = vmatpush1.bf16.msra.mxu0 0
    %5637 = vmatprep.subr.bf16.mxu0 0
    %5638 = vmatpush1.bf16.msra.mxu0 0
    %5639 = vmatprep.subr.bf16.mxu0 0
    %5640 = vmatpush1.bf16.msra.mxu0 0
    %5641 = vmatprep.subr.bf16.mxu0 0
    %5642 = vmatpush1.bf16.msra.mxu0 0
    %5643 = vmatprep.mubr.bf16.mxu0 0
    %5644 = vmatmul.mubr.bf16.gmra.mrb[0].mxu0 %v5606
    %v5645 = vpop.f32.mrb[0].mxu0
    %v5646 = vadd.f32 0.0, %v5645
    %v5647 = vpop.f32.mrb[0].mxu0
    %v5648 = vpop.f32.mrb[0].mxu0
    %v5649 = vadd.f32 0.0, %v5648
    %v5650 = vpop.f32.mrb[0].mxu0
    %5651 = vmatprep.mubr.bf16.mxu0 0
    %5652 = vmatmul.mubr.bf16.gmra.mrb[0].mxu0 %v5609
    %v5653 = vpop.f32.mrb[0].mxu0
    %v5654 = vadd.f32 0.0, %v5653
    %v5655 = vpop.f32.mrb[0].mxu0
    %v5656 = vpop.f32.mrb[0].mxu0
    %v5657 = vadd.f32 0.0, %v5656
    %v5658 = vpop.f32.mrb[0].mxu0
    %5659 = vdwg.mxu0
    %v5661 = vsel %vm3197, %v4642, 0
    %v5664 = vsel %vm3197, %v4643, 0
    %5666 = vmatprep.subr.bf16.mxu0 0
    %5667 = vmatpush1.bf16.msra.mxu0 %v1164
    %5668 = vmatprep.subr.bf16.mxu0 0
    %5669 = vmatpush1.bf16.msra.mxu0 %v1168
    %5670 = vmatprep.subr.bf16.mxu0 0
    %5671 = vmatpush1.bf16.msra.mxu0 0
    %5672 = vmatprep.subr.bf16.mxu0 0
    %5673 = vmatpush1.bf16.msra.mxu0 0
    %5674 = vmatprep.subr.bf16.mxu0 0
    %5675 = vmatpush1.bf16.msra.mxu0 0
    %5676 = vmatprep.subr.bf16.mxu0 0
    %5677 = vmatpush1.bf16.msra.mxu0 0
    %5678 = vmatprep.subr.bf16.mxu0 0
    %5679 = vmatpush1.bf16.msra.mxu0 0
    %5680 = vmatprep.subr.bf16.mxu0 0
    %5681 = vmatpush1.bf16.msra.mxu0 0
    %5682 = vmatprep.subr.bf16.mxu0 0
    %5683 = vmatpush1.bf16.msra.mxu0 0
    %5684 = vmatprep.subr.bf16.mxu0 0
    %5685 = vmatpush1.bf16.msra.mxu0 0
    %5686 = vmatprep.subr.bf16.mxu0 0
    %5687 = vmatpush1.bf16.msra.mxu0 0
    %5688 = vmatprep.subr.bf16.mxu0 0
    %5689 = vmatpush1.bf16.msra.mxu0 0
    %5690 = vmatprep.subr.bf16.mxu0 0
    %5691 = vmatpush1.bf16.msra.mxu0 0
    %5692 = vmatprep.subr.bf16.mxu0 0
    %5693 = vmatpush1.bf16.msra.mxu0 0
    %5694 = vmatprep.subr.bf16.mxu0 0
    %5695 = vmatpush1.bf16.msra.mxu0 0
    %5696 = vmatprep.subr.bf16.mxu0 0
    %5697 = vmatpush1.bf16.msra.mxu0 0
    %5698 = vmatprep.mubr.bf16.mxu0 0
    %5699 = vmatmul.mubr.bf16.gmra.mrb[0].mxu0 %v5661
    %v5700 = vpop.f32.mrb[0].mxu0
    %v5701 = vadd.f32 0.0, %v5700
    %v5702 = vpop.f32.mrb[0].mxu0
    %v5703 = vpop.f32.mrb[0].mxu0
    %v5704 = vadd.f32 0.0, %v5703
    %v5705 = vpop.f32.mrb[0].mxu0
    %5706 = vmatprep.mubr.bf16.mxu0 0
    %5707 = vmatmul.mubr.bf16.gmra.mrb[0].mxu0 %v5664
    %v5708 = vpop.f32.mrb[0].mxu0
    %v5709 = vadd.f32 0.0, %v5708
    %v5710 = vpop.f32.mrb[0].mxu0
    %v5711 = vpop.f32.mrb[0].mxu0
    %v5712 = vadd.f32 0.0, %v5711
    %v5713 = vpop.f32.mrb[0].mxu0
    %5714 = vdwg.mxu0
    %v5716 = vsel %vm3197, %v4644, 0
    %v5719 = vsel %vm3197, %v4645, 0
    %5721 = vmatprep.subr.bf16.mxu0 0
    %5722 = vmatpush1.bf16.msra.mxu0 %v1172
    %5723 = vmatprep.subr.bf16.mxu0 0
    %5724 = vmatpush1.bf16.msra.mxu0 %v1176
    %5725 = vmatprep.subr.bf16.mxu0 0
    %5726 = vmatpush1.bf16.msra.mxu0 0
    %5727 = vmatprep.subr.bf16.mxu0 0
    %5728 = vmatpush1.bf16.msra.mxu0 0
    %5729 = vmatprep.subr.bf16.mxu0 0
    %5730 = vmatpush1.bf16.msra.mxu0 0
    %5731 = vmatprep.subr.bf16.mxu0 0
    %5732 = vmatpush1.bf16.msra.mxu0 0
    %5733 = vmatprep.subr.bf16.mxu0 0
    %5734 = vmatpush1.bf16.msra.mxu0 0
    %5735 = vmatprep.subr.bf16.mxu0 0
    %5736 = vmatpush1.bf16.msra.mxu0 0
    %5737 = vmatprep.subr.bf16.mxu0 0
    %5738 = vmatpush1.bf16.msra.mxu0 0
    %5739 = vmatprep.subr.bf16.mxu0 0
    %5740 = vmatpush1.bf16.msra.mxu0 0
    %5741 = vmatprep.subr.bf16.mxu0 0
    %5742 = vmatpush1.bf16.msra.mxu0 0
    %5743 = vmatprep.subr.bf16.mxu0 0
    %5744 = vmatpush1.bf16.msra.mxu0 0
    %5745 = vmatprep.subr.bf16.mxu0 0
    %5746 = vmatpush1.bf16.msra.mxu0 0
    %5747 = vmatprep.subr.bf16.mxu0 0
    %5748 = vmatpush1.bf16.msra.mxu0 0
    %5749 = vmatprep.subr.bf16.mxu0 0
    %5750 = vmatpush1.bf16.msra.mxu0 0
    %5751 = vmatprep.subr.bf16.mxu0 0
    %5752 = vmatpush1.bf16.msra.mxu0 0
    %5753 = vmatprep.mubr.bf16.mxu0 0
    %5754 = vmatmul.mubr.bf16.gmra.mrb[0].mxu0 %v5716
    %v5755 = vpop.f32.mrb[0].mxu0
    %v5756 = vadd.f32 0.0, %v5755
    %v5757 = vpop.f32.mrb[0].mxu0
    %v5758 = vpop.f32.mrb[0].mxu0
    %v5759 = vadd.f32 0.0, %v5758
    %v5760 = vpop.f32.mrb[0].mxu0
    %5761 = vmatprep.mubr.bf16.mxu0 0
    %5762 = vmatmul.mubr.bf16.gmra.mrb[0].mxu0 %v5719
    %v5763 = vpop.f32.mrb[0].mxu0
    %v5764 = vadd.f32 0.0, %v5763
    %v5765 = vpop.f32.mrb[0].mxu0
    %v5766 = vpop.f32.mrb[0].mxu0
    %v5767 = vadd.f32 0.0, %v5766
    %v5768 = vpop.f32.mrb[0].mxu0
    %5769 = vdwg.mxu0
    %v5771 = vsel %vm3197, %v4646, 0
    %v5774 = vsel %vm3197, %v4647, 0
    %5776 = vmatprep.subr.bf16.mxu0 0
    %5777 = vmatpush1.bf16.msra.mxu0 %v1180
    %5778 = vmatprep.subr.bf16.mxu0 0
    %5779 = vmatpush1.bf16.msra.mxu0 %v1184
    %5780 = vmatprep.subr.bf16.mxu0 0
    %5781 = vmatpush1.bf16.msra.mxu0 0
    %5782 = vmatprep.subr.bf16.mxu0 0
    %5783 = vmatpush1.bf16.msra.mxu0 0
    %5784 = vmatprep.subr.bf16.mxu0 0
    %5785 = vmatpush1.bf16.msra.mxu0 0
    %5786 = vmatprep.subr.bf16.mxu0 0
    %5787 = vmatpush1.bf16.msra.mxu0 0
    %5788 = vmatprep.subr.bf16.mxu0 0
    %5789 = vmatpush1.bf16.msra.mxu0 0
    %5790 = vmatprep.subr.bf16.mxu0 0
    %5791 = vmatpush1.bf16.msra.mxu0 0
    %5792 = vmatprep.subr.bf16.mxu0 0
    %5793 = vmatpush1.bf16.msra.mxu0 0
    %5794 = vmatprep.subr.bf16.mxu0 0
    %5795 = vmatpush1.bf16.msra.mxu0 0
    %5796 = vmatprep.subr.bf16.mxu0 0
    %5797 = vmatpush1.bf16.msra.mxu0 0
    %5798 = vmatprep.subr.bf16.mxu0 0
    %5799 = vmatpush1.bf16.msra.mxu0 0
    %5800 = vmatprep.subr.bf16.mxu0 0
    %5801 = vmatpush1.bf16.msra.mxu0 0
    %5802 = vmatprep.subr.bf16.mxu0 0
    %5803 = vmatpush1.bf16.msra.mxu0 0
    %5804 = vmatprep.subr.bf16.mxu0 0
    %5805 = vmatpush1.bf16.msra.mxu0 0
    %5806 = vmatprep.subr.bf16.mxu0 0
    %5807 = vmatpush1.bf16.msra.mxu0 0
    %5808 = vmatprep.mubr.bf16.mxu0 0
    %5809 = vmatmul.mubr.bf16.gmra.mrb[0].mxu0 %v5771
    %v5810 = vpop.f32.mrb[0].mxu0
    %v5811 = vadd.f32 0.0, %v5810
    %v5812 = vpop.f32.mrb[0].mxu0
    %v5813 = vpop.f32.mrb[0].mxu0
    %v5814 = vadd.f32 0.0, %v5813
    %v5815 = vpop.f32.mrb[0].mxu0
    %5816 = vmatprep.mubr.bf16.mxu0 0
    %5817 = vmatmul.mubr.bf16.gmra.mrb[0].mxu0 %v5774
    %v5818 = vpop.f32.mrb[0].mxu0
    %v5819 = vadd.f32 0.0, %v5818
    %v5820 = vpop.f32.mrb[0].mxu0
    %v5821 = vpop.f32.mrb[0].mxu0
    %v5822 = vadd.f32 0.0, %v5821
    %v5823 = vpop.f32.mrb[0].mxu0
    %5824 = vdwg.mxu0
    %v5826 = vsel %vm3197, %v4648, 0
    %v5829 = vsel %vm3197, %v4649, 0
    %5831 = vmatprep.subr.bf16.mxu0 0
    %5832 = vmatpush1.bf16.msra.mxu0 %v1188
    %5833 = vmatprep.subr.bf16.mxu0 0
    %5834 = vmatpush1.bf16.msra.mxu0 %v1192
    %5835 = vmatprep.subr.bf16.mxu0 0
    %5836 = vmatpush1.bf16.msra.mxu0 0
    %5837 = vmatprep.subr.bf16.mxu0 0
    %5838 = vmatpush1.bf16.msra.mxu0 0
    %5839 = vmatprep.subr.bf16.mxu0 0
    %5840 = vmatpush1.bf16.msra.mxu0 0
    %5841 = vmatprep.subr.bf16.mxu0 0
    %5842 = vmatpush1.bf16.msra.mxu0 0
    %5843 = vmatprep.subr.bf16.mxu0 0
    %5844 = vmatpush1.bf16.msra.mxu0 0
    %5845 = vmatprep.subr.bf16.mxu0 0
    %5846 = vmatpush1.bf16.msra.mxu0 0
    %5847 = vmatprep.subr.bf16.mxu0 0
    %5848 = vmatpush1.bf16.msra.mxu0 0
    %5849 = vmatprep.subr.bf16.mxu0 0
    %5850 = vmatpush1.bf16.msra.mxu0 0
    %5851 = vmatprep.subr.bf16.mxu0 0
    %5852 = vmatpush1.bf16.msra.mxu0 0
    %5853 = vmatprep.subr.bf16.mxu0 0
    %5854 = vmatpush1.bf16.msra.mxu0 0
    %5855 = vmatprep.subr.bf16.mxu0 0
    %5856 = vmatpush1.bf16.msra.mxu0 0
    %5857 = vmatprep.subr.bf16.mxu0 0
    %5858 = vmatpush1.bf16.msra.mxu0 0
    %5859 = vmatprep.subr.bf16.mxu0 0
    %5860 = vmatpush1.bf16.msra.mxu0 0
    %5861 = vmatprep.subr.bf16.mxu0 0
    %5862 = vmatpush1.bf16.msra.mxu0 0
    %5863 = vmatprep.mubr.bf16.mxu0 0
    %5864 = vmatmul.mubr.bf16.gmra.mrb[0].mxu0 %v5826
    %v5865 = vpop.f32.mrb[0].mxu0
    %v5866 = vadd.f32 0.0, %v5865
    %v5867 = vpop.f32.mrb[0].mxu0
    %v5868 = vpop.f32.mrb[0].mxu0
    %v5869 = vadd.f32 0.0, %v5868
    %v5870 = vpop.f32.mrb[0].mxu0
    %5871 = vmatprep.mubr.bf16.mxu0 0
    %5872 = vmatmul.mubr.bf16.gmra.mrb[0].mxu0 %v5829
    %v5873 = vpop.f32.mrb[0].mxu0
    %v5874 = vadd.f32 0.0, %v5873
    %v5875 = vpop.f32.mrb[0].mxu0
    %v5876 = vpop.f32.mrb[0].mxu0
    %v5877 = vadd.f32 0.0, %v5876
    %v5878 = vpop.f32.mrb[0].mxu0
    %5879 = vdwg.mxu0
    %v5881 = vsel %vm3197, %v4650, 0
    %v5884 = vsel %vm3197, %v4651, 0
    %5886 = vmatprep.subr.bf16.mxu0 0
    %5887 = vmatpush1.bf16.msra.mxu0 %v1196
    %5888 = vmatprep.subr.bf16.mxu0 0
    %5889 = vmatpush1.bf16.msra.mxu0 %v1200
    %5890 = vmatprep.subr.bf16.mxu0 0
    %5891 = vmatpush1.bf16.msra.mxu0 0
    %5892 = vmatprep.subr.bf16.mxu0 0
    %5893 = vmatpush1.bf16.msra.mxu0 0
    %5894 = vmatprep.subr.bf16.mxu0 0
    %5895 = vmatpush1.bf16.msra.mxu0 0
    %5896 = vmatprep.subr.bf16.mxu0 0
    %5897 = vmatpush1.bf16.msra.mxu0 0
    %5898 = vmatprep.subr.bf16.mxu0 0
    %5899 = vmatpush1.bf16.msra.mxu0 0
    %5900 = vmatprep.subr.bf16.mxu0 0
    %5901 = vmatpush1.bf16.msra.mxu0 0
    %5902 = vmatprep.subr.bf16.mxu0 0
    %5903 = vmatpush1.bf16.msra.mxu0 0
    %5904 = vmatprep.subr.bf16.mxu0 0
    %5905 = vmatpush1.bf16.msra.mxu0 0
    %5906 = vmatprep.subr.bf16.mxu0 0
    %5907 = vmatpush1.bf16.msra.mxu0 0
    %5908 = vmatprep.subr.bf16.mxu0 0
    %5909 = vmatpush1.bf16.msra.mxu0 0
    %5910 = vmatprep.subr.bf16.mxu0 0
    %5911 = vmatpush1.bf16.msra.mxu0 0
    %5912 = vmatprep.subr.bf16.mxu0 0
    %5913 = vmatpush1.bf16.msra.mxu0 0
    %5914 = vmatprep.subr.bf16.mxu0 0
    %5915 = vmatpush1.bf16.msra.mxu0 0
    %5916 = vmatprep.subr.bf16.mxu0 0
    %5917 = vmatpush1.bf16.msra.mxu0 0
    %5918 = vmatprep.mubr.bf16.mxu0 0
    %5919 = vmatmul.mubr.bf16.gmra.mrb[0].mxu0 %v5881
    %v5920 = vpop.f32.mrb[0].mxu0
    %v5921 = vadd.f32 0.0, %v5920
    %v5922 = vpop.f32.mrb[0].mxu0
    %v5923 = vpop.f32.mrb[0].mxu0
    %v5924 = vadd.f32 0.0, %v5923
    %v5925 = vpop.f32.mrb[0].mxu0
    %5926 = vmatprep.mubr.bf16.mxu0 0
    %5927 = vmatmul.mubr.bf16.gmra.mrb[0].mxu0 %v5884
    %v5928 = vpop.f32.mrb[0].mxu0
    %v5929 = vadd.f32 0.0, %v5928
    %v5930 = vpop.f32.mrb[0].mxu0
    %v5931 = vpop.f32.mrb[0].mxu0
    %v5932 = vadd.f32 0.0, %v5931
    %v5933 = vpop.f32.mrb[0].mxu0
    %5934 = vdwg.mxu0
    %v5936 = vsel %vm3197, %v4652, 0
    %v5939 = vsel %vm3197, %v4653, 0
    %5941 = vmatprep.subr.bf16.mxu0 0
    %5942 = vmatpush1.bf16.msra.mxu0 %v1204
    %5943 = vmatprep.subr.bf16.mxu0 0
    %5944 = vmatpush1.bf16.msra.mxu0 %v1208
    %5945 = vmatprep.subr.bf16.mxu0 0
    %5946 = vmatpush1.bf16.msra.mxu0 0
    %5947 = vmatprep.subr.bf16.mxu0 0
    %5948 = vmatpush1.bf16.msra.mxu0 0
    %5949 = vmatprep.subr.bf16.mxu0 0
    %5950 = vmatpush1.bf16.msra.mxu0 0
    %5951 = vmatprep.subr.bf16.mxu0 0
    %5952 = vmatpush1.bf16.msra.mxu0 0
    %5953 = vmatprep.subr.bf16.mxu0 0
    %5954 = vmatpush1.bf16.msra.mxu0 0
    %5955 = vmatprep.subr.bf16.mxu0 0
    %5956 = vmatpush1.bf16.msra.mxu0 0
    %5957 = vmatprep.subr.bf16.mxu0 0
    %5958 = vmatpush1.bf16.msra.mxu0 0
    %5959 = vmatprep.subr.bf16.mxu0 0
    %5960 = vmatpush1.bf16.msra.mxu0 0
    %5961 = vmatprep.subr.bf16.mxu0 0
    %5962 = vmatpush1.bf16.msra.mxu0 0
    %5963 = vmatprep.subr.bf16.mxu0 0
    %5964 = vmatpush1.bf16.msra.mxu0 0
    %5965 = vmatprep.subr.bf16.mxu0 0
    %5966 = vmatpush1.bf16.msra.mxu0 0
    %5967 = vmatprep.subr.bf16.mxu0 0
    %5968 = vmatpush1.bf16.msra.mxu0 0
    %5969 = vmatprep.subr.bf16.mxu0 0
    %5970 = vmatpush1.bf16.msra.mxu0 0
    %5971 = vmatprep.subr.bf16.mxu0 0
    %5972 = vmatpush1.bf16.msra.mxu0 0
    %5973 = vmatprep.mubr.bf16.mxu0 0
    %5974 = vmatmul.mubr.bf16.gmra.mrb[0].mxu0 %v5936
    %v5975 = vpop.f32.mrb[0].mxu0
    %v5976 = vadd.f32 0.0, %v5975
    %v5977 = vpop.f32.mrb[0].mxu0
    %v5978 = vpop.f32.mrb[0].mxu0
    %v5979 = vadd.f32 0.0, %v5978
    %v5980 = vpop.f32.mrb[0].mxu0
    %5981 = vmatprep.mubr.bf16.mxu0 0
    %5982 = vmatmul.mubr.bf16.gmra.mrb[0].mxu0 %v5939
    %v5983 = vpop.f32.mrb[0].mxu0
    %v5984 = vadd.f32 0.0, %v5983
    %v5985 = vpop.f32.mrb[0].mxu0
    %v5986 = vpop.f32.mrb[0].mxu0
    %v5987 = vadd.f32 0.0, %v5986
    %v5988 = vpop.f32.mrb[0].mxu0
    %5989 = vdwg.mxu0
    %v5991 = vsel %vm3197, %v4654, 0
    %v5994 = vsel %vm3197, %v4655, 0
    %5996 = vmatprep.subr.bf16.mxu0 0
    %5997 = vmatpush1.bf16.msra.mxu0 %v1386
    %5998 = vmatprep.subr.bf16.mxu0 0
    %5999 = vmatpush1.bf16.msra.mxu0 %v1388
    %6000 = vmatprep.subr.bf16.mxu0 0
    %6001 = vmatpush1.bf16.msra.mxu0 0
    %6002 = vmatprep.subr.bf16.mxu0 0
    %6003 = vmatpush1.bf16.msra.mxu0 0
    %6004 = vmatprep.subr.bf16.mxu0 0
    %6005 = vmatpush1.bf16.msra.mxu0 0
    %6006 = vmatprep.subr.bf16.mxu0 0
    %6007 = vmatpush1.bf16.msra.mxu0 0
    %6008 = vmatprep.subr.bf16.mxu0 0
    %6009 = vmatpush1.bf16.msra.mxu0 0
    %6010 = vmatprep.subr.bf16.mxu0 0
    %6011 = vmatpush1.bf16.msra.mxu0 0
    %6012 = vmatprep.subr.bf16.mxu0 0
    %6013 = vmatpush1.bf16.msra.mxu0 0
    %6014 = vmatprep.subr.bf16.mxu0 0
    %6015 = vmatpush1.bf16.msra.mxu0 0
    %6016 = vmatprep.subr.bf16.mxu0 0
    %6017 = vmatpush1.bf16.msra.mxu0 0
    %6018 = vmatprep.subr.bf16.mxu0 0
    %6019 = vmatpush1.bf16.msra.mxu0 0
    %6020 = vmatprep.subr.bf16.mxu0 0
    %6021 = vmatpush1.bf16.msra.mxu0 0
    %6022 = vmatprep.subr.bf16.mxu0 0
    %6023 = vmatpush1.bf16.msra.mxu0 0
    %6024 = vmatprep.subr.bf16.mxu0 0
    %6025 = vmatpush1.bf16.msra.mxu0 0
    %6026 = vmatprep.subr.bf16.mxu0 0
    %6027 = vmatpush1.bf16.msra.mxu0 0
    %6028 = vmatprep.mubr.bf16.mxu0 0
    %6029 = vmatmul.mubr.bf16.gmra.mrb[0].mxu0 %v5991
    %v6030 = vpop.f32.mrb[0].mxu0
    %v6031 = vadd.f32 0.0, %v6030
    %v6032 = vpop.f32.mrb[0].mxu0
    %v6033 = vpop.f32.mrb[0].mxu0
    %v6034 = vadd.f32 0.0, %v6033
    %v6035 = vpop.f32.mrb[0].mxu0
    %6036 = vmatprep.mubr.bf16.mxu0 0
    %6037 = vmatmul.mubr.bf16.gmra.mrb[0].mxu0 %v5994
    %v6038 = vpop.f32.mrb[0].mxu0
    %v6039 = vadd.f32 0.0, %v6038
    %v6040 = vpop.f32.mrb[0].mxu0
    %v6041 = vpop.f32.mrb[0].mxu0
    %v6042 = vadd.f32 0.0, %v6041
    %v6043 = vpop.f32.mrb[0].mxu0
    %6044 = vdwg.mxu0
    %v6046 = vsel %vm3197, %v4656, 0
    %v6049 = vsel %vm3197, %v4657, 0
    %6051 = vmatprep.subr.bf16.mxu0 0
    %6052 = vmatpush1.bf16.msra.mxu0 %v1390
    %6053 = vmatprep.subr.bf16.mxu0 0
    %6054 = vmatpush1.bf16.msra.mxu0 %v1392
    %6055 = vmatprep.subr.bf16.mxu0 0
    %6056 = vmatpush1.bf16.msra.mxu0 0
    %6057 = vmatprep.subr.bf16.mxu0 0
    %6058 = vmatpush1.bf16.msra.mxu0 0
    %6059 = vmatprep.subr.bf16.mxu0 0
    %6060 = vmatpush1.bf16.msra.mxu0 0
    %6061 = vmatprep.subr.bf16.mxu0 0
    %6062 = vmatpush1.bf16.msra.mxu0 0
    %6063 = vmatprep.subr.bf16.mxu0 0
    %6064 = vmatpush1.bf16.msra.mxu0 0
    %6065 = vmatprep.subr.bf16.mxu0 0
    %6066 = vmatpush1.bf16.msra.mxu0 0
    %6067 = vmatprep.subr.bf16.mxu0 0
    %6068 = vmatpush1.bf16.msra.mxu0 0
    %6069 = vmatprep.subr.bf16.mxu0 0
    %6070 = vmatpush1.bf16.msra.mxu0 0
    %6071 = vmatprep.subr.bf16.mxu0 0
    %6072 = vmatpush1.bf16.msra.mxu0 0
    %6073 = vmatprep.subr.bf16.mxu0 0
    %6074 = vmatpush1.bf16.msra.mxu0 0
    %6075 = vmatprep.subr.bf16.mxu0 0
    %6076 = vmatpush1.bf16.msra.mxu0 0
    %6077 = vmatprep.subr.bf16.mxu0 0
    %6078 = vmatpush1.bf16.msra.mxu0 0
    %6079 = vmatprep.subr.bf16.mxu0 0
    %6080 = vmatpush1.bf16.msra.mxu0 0
    %6081 = vmatprep.subr.bf16.mxu0 0
    %6082 = vmatpush1.bf16.msra.mxu0 0
    %6083 = vmatprep.mubr.bf16.mxu0 0
    %6084 = vmatmul.mubr.bf16.gmra.mrb[0].mxu0 %v6046
    %v6085 = vpop.f32.mrb[0].mxu0
    %v6086 = vadd.f32 0.0, %v6085
    %v6087 = vpop.f32.mrb[0].mxu0
    %v6088 = vpop.f32.mrb[0].mxu0
    %v6089 = vadd.f32 0.0, %v6088
    %v6090 = vpop.f32.mrb[0].mxu0
    %6091 = vmatprep.mubr.bf16.mxu0 0
    %6092 = vmatmul.mubr.bf16.gmra.mrb[0].mxu0 %v6049
    %v6093 = vpop.f32.mrb[0].mxu0
    %v6094 = vadd.f32 0.0, %v6093
    %v6095 = vpop.f32.mrb[0].mxu0
    %v6096 = vpop.f32.mrb[0].mxu0
    %v6097 = vadd.f32 0.0, %v6096
    %v6098 = vpop.f32.mrb[0].mxu0
    %6099 = vdwg.mxu0
    %v6101 = vsel %vm3197, %v4658, 0
    %v6104 = vsel %vm3197, %v4659, 0
    %6106 = vmatprep.subr.bf16.mxu0 0
    %6107 = vmatpush1.bf16.msra.mxu0 %v1394
    %6108 = vmatprep.subr.bf16.mxu0 0
    %6109 = vmatpush1.bf16.msra.mxu0 %v1396
    %6110 = vmatprep.subr.bf16.mxu0 0
    %6111 = vmatpush1.bf16.msra.mxu0 0
    %6112 = vmatprep.subr.bf16.mxu0 0
    %6113 = vmatpush1.bf16.msra.mxu0 0
    %6114 = vmatprep.subr.bf16.mxu0 0
    %6115 = vmatpush1.bf16.msra.mxu0 0
    %6116 = vmatprep.subr.bf16.mxu0 0
    %6117 = vmatpush1.bf16.msra.mxu0 0
    %6118 = vmatprep.subr.bf16.mxu0 0
    %6119 = vmatpush1.bf16.msra.mxu0 0
    %6120 = vmatprep.subr.bf16.mxu0 0
    %6121 = vmatpush1.bf16.msra.mxu0 0
    %6122 = vmatprep.subr.bf16.mxu0 0
    %6123 = vmatpush1.bf16.msra.mxu0 0
    %6124 = vmatprep.subr.bf16.mxu0 0
    %6125 = vmatpush1.bf16.msra.mxu0 0
    %6126 = vmatprep.subr.bf16.mxu0 0
    %6127 = vmatpush1.bf16.msra.mxu0 0
    %6128 = vmatprep.subr.bf16.mxu0 0
    %6129 = vmatpush1.bf16.msra.mxu0 0
    %6130 = vmatprep.subr.bf16.mxu0 0
    %6131 = vmatpush1.bf16.msra.mxu0 0
    %6132 = vmatprep.subr.bf16.mxu0 0
    %6133 = vmatpush1.bf16.msra.mxu0 0
    %6134 = vmatprep.subr.bf16.mxu0 0
    %6135 = vmatpush1.bf16.msra.mxu0 0
    %6136 = vmatprep.subr.bf16.mxu0 0
    %6137 = vmatpush1.bf16.msra.mxu0 0
    %6138 = vmatprep.mubr.bf16.mxu0 0
    %6139 = vmatmul.mubr.bf16.gmra.mrb[0].mxu0 %v6101
    %v6140 = vpop.f32.mrb[0].mxu0
    %v6141 = vadd.f32 0.0, %v6140
    %v6142 = vpop.f32.mrb[0].mxu0
    %v6143 = vpop.f32.mrb[0].mxu0
    %v6144 = vadd.f32 0.0, %v6143
    %v6145 = vpop.f32.mrb[0].mxu0
    %6146 = vmatprep.mubr.bf16.mxu0 0
    %6147 = vmatmul.mubr.bf16.gmra.mrb[0].mxu0 %v6104
    %v6148 = vpop.f32.mrb[0].mxu0
    %v6149 = vadd.f32 0.0, %v6148
    %v6150 = vpop.f32.mrb[0].mxu0
    %v6151 = vpop.f32.mrb[0].mxu0
    %v6152 = vadd.f32 0.0, %v6151
    %v6153 = vpop.f32.mrb[0].mxu0
    %6154 = vdwg.mxu0
    %v6156 = vsel %vm3197, %v4660, 0
    %v6159 = vsel %vm3197, %v4661, 0
    %6161 = vmatprep.subr.bf16.mxu0 0
    %6162 = vmatpush1.bf16.msra.mxu0 %v1398
    %6163 = vmatprep.subr.bf16.mxu0 0
    %6164 = vmatpush1.bf16.msra.mxu0 %v1400
    %6165 = vmatprep.subr.bf16.mxu0 0
    %6166 = vmatpush1.bf16.msra.mxu0 0
    %6167 = vmatprep.subr.bf16.mxu0 0
    %6168 = vmatpush1.bf16.msra.mxu0 0
    %6169 = vmatprep.subr.bf16.mxu0 0
    %6170 = vmatpush1.bf16.msra.mxu0 0
    %6171 = vmatprep.subr.bf16.mxu0 0
    %6172 = vmatpush1.bf16.msra.mxu0 0
    %6173 = vmatprep.subr.bf16.mxu0 0
    %6174 = vmatpush1.bf16.msra.mxu0 0
    %6175 = vmatprep.subr.bf16.mxu0 0
    %6176 = vmatpush1.bf16.msra.mxu0 0
    %6177 = vmatprep.subr.bf16.mxu0 0
    %6178 = vmatpush1.bf16.msra.mxu0 0
    %6179 = vmatprep.subr.bf16.mxu0 0
    %6180 = vmatpush1.bf16.msra.mxu0 0
    %6181 = vmatprep.subr.bf16.mxu0 0
    %6182 = vmatpush1.bf16.msra.mxu0 0
    %6183 = vmatprep.subr.bf16.mxu0 0
    %6184 = vmatpush1.bf16.msra.mxu0 0
    %6185 = vmatprep.subr.bf16.mxu0 0
    %6186 = vmatpush1.bf16.msra.mxu0 0
    %6187 = vmatprep.subr.bf16.mxu0 0
    %6188 = vmatpush1.bf16.msra.mxu0 0
    %6189 = vmatprep.subr.bf16.mxu0 0
    %6190 = vmatpush1.bf16.msra.mxu0 0
    %6191 = vmatprep.subr.bf16.mxu0 0
    %6192 = vmatpush1.bf16.msra.mxu0 0
    %6193 = vmatprep.mubr.bf16.mxu0 0
    %6194 = vmatmul.mubr.bf16.gmra.mrb[0].mxu0 %v6156
    %v6195 = vpop.f32.mrb[0].mxu0
    %v6196 = vadd.f32 0.0, %v6195
    %v6197 = vpop.f32.mrb[0].mxu0
    %v6198 = vpop.f32.mrb[0].mxu0
    %v6199 = vadd.f32 0.0, %v6198
    %v6200 = vpop.f32.mrb[0].mxu0
    %6201 = vmatprep.mubr.bf16.mxu0 0
    %6202 = vmatmul.mubr.bf16.gmra.mrb[0].mxu0 %v6159
    %v6203 = vpop.f32.mrb[0].mxu0
    %v6204 = vadd.f32 0.0, %v6203
    %v6205 = vpop.f32.mrb[0].mxu0
    %v6206 = vpop.f32.mrb[0].mxu0
    %v6207 = vadd.f32 0.0, %v6206
    %v6208 = vpop.f32.mrb[0].mxu0
    %6209 = vdwg.mxu0
    %v6211 = vsel %vm3197, %v4662, 0
    %v6214 = vsel %vm3197, %v4663, 0
    %6216 = vmatprep.subr.bf16.mxu0 0
    %6217 = vmatpush1.bf16.msra.mxu0 %v1402
    %6218 = vmatprep.subr.bf16.mxu0 0
    %6219 = vmatpush1.bf16.msra.mxu0 %v1404
    %6220 = vmatprep.subr.bf16.mxu0 0
    %6221 = vmatpush1.bf16.msra.mxu0 0
    %6222 = vmatprep.subr.bf16.mxu0 0
    %6223 = vmatpush1.bf16.msra.mxu0 0
    %6224 = vmatprep.subr.bf16.mxu0 0
    %6225 = vmatpush1.bf16.msra.mxu0 0
    %6226 = vmatprep.subr.bf16.mxu0 0
    %6227 = vmatpush1.bf16.msra.mxu0 0
    %6228 = vmatprep.subr.bf16.mxu0 0
    %6229 = vmatpush1.bf16.msra.mxu0 0
    %6230 = vmatprep.subr.bf16.mxu0 0
    %6231 = vmatpush1.bf16.msra.mxu0 0
    %6232 = vmatprep.subr.bf16.mxu0 0
    %6233 = vmatpush1.bf16.msra.mxu0 0
    %6234 = vmatprep.subr.bf16.mxu0 0
    %6235 = vmatpush1.bf16.msra.mxu0 0
    %6236 = vmatprep.subr.bf16.mxu0 0
    %6237 = vmatpush1.bf16.msra.mxu0 0
    %6238 = vmatprep.subr.bf16.mxu0 0
    %6239 = vmatpush1.bf16.msra.mxu0 0
    %6240 = vmatprep.subr.bf16.mxu0 0
    %6241 = vmatpush1.bf16.msra.mxu0 0
    %6242 = vmatprep.subr.bf16.mxu0 0
    %6243 = vmatpush1.bf16.msra.mxu0 0
    %6244 = vmatprep.subr.bf16.mxu0 0
    %6245 = vmatpush1.bf16.msra.mxu0 0
    %6246 = vmatprep.subr.bf16.mxu0 0
    %6247 = vmatpush1.bf16.msra.mxu0 0
    %6248 = vmatprep.mubr.bf16.mxu0 0
    %6249 = vmatmul.mubr.bf16.gmra.mrb[0].mxu0 %v6211
    %v6250 = vpop.f32.mrb[0].mxu0
    %v6251 = vadd.f32 0.0, %v6250
    %v6252 = vpop.f32.mrb[0].mxu0
    %v6253 = vpop.f32.mrb[0].mxu0
    %v6254 = vadd.f32 0.0, %v6253
    %v6255 = vpop.f32.mrb[0].mxu0
    %6256 = vmatprep.mubr.bf16.mxu0 0
    %6257 = vmatmul.mubr.bf16.gmra.mrb[0].mxu0 %v6214
    %v6258 = vpop.f32.mrb[0].mxu0
    %v6259 = vadd.f32 0.0, %v6258
    %v6260 = vpop.f32.mrb[0].mxu0
    %v6261 = vpop.f32.mrb[0].mxu0
    %v6262 = vadd.f32 0.0, %v6261
    %v6263 = vpop.f32.mrb[0].mxu0
    %6264 = vdwg.mxu0
    %v6266 = vsel %vm3197, %v4664, 0
    %v6269 = vsel %vm3197, %v4665, 0
    %6271 = vmatprep.subr.bf16.mxu0 0
    %6272 = vmatpush1.bf16.msra.mxu0 %v1406
    %6273 = vmatprep.subr.bf16.mxu0 0
    %6274 = vmatpush1.bf16.msra.mxu0 %v1408
    %6275 = vmatprep.subr.bf16.mxu0 0
    %6276 = vmatpush1.bf16.msra.mxu0 0
    %6277 = vmatprep.subr.bf16.mxu0 0
    %6278 = vmatpush1.bf16.msra.mxu0 0
    %6279 = vmatprep.subr.bf16.mxu0 0
    %6280 = vmatpush1.bf16.msra.mxu0 0
    %6281 = vmatprep.subr.bf16.mxu0 0
    %6282 = vmatpush1.bf16.msra.mxu0 0
    %6283 = vmatprep.subr.bf16.mxu0 0
    %6284 = vmatpush1.bf16.msra.mxu0 0
    %6285 = vmatprep.subr.bf16.mxu0 0
    %6286 = vmatpush1.bf16.msra.mxu0 0
    %6287 = vmatprep.subr.bf16.mxu0 0
    %6288 = vmatpush1.bf16.msra.mxu0 0
    %6289 = vmatprep.subr.bf16.mxu0 0
    %6290 = vmatpush1.bf16.msra.mxu0 0
    %6291 = vmatprep.subr.bf16.mxu0 0
    %6292 = vmatpush1.bf16.msra.mxu0 0
    %6293 = vmatprep.subr.bf16.mxu0 0
    %6294 = vmatpush1.bf16.msra.mxu0 0
    %6295 = vmatprep.subr.bf16.mxu0 0
    %6296 = vmatpush1.bf16.msra.mxu0 0
    %6297 = vmatprep.subr.bf16.mxu0 0
    %6298 = vmatpush1.bf16.msra.mxu0 0
    %6299 = vmatprep.subr.bf16.mxu0 0
    %6300 = vmatpush1.bf16.msra.mxu0 0
    %6301 = vmatprep.subr.bf16.mxu0 0
    %6302 = vmatpush1.bf16.msra.mxu0 0
    %6303 = vmatprep.mubr.bf16.mxu0 0
    %6304 = vmatmul.mubr.bf16.gmra.mrb[0].mxu0 %v6266
    %v6305 = vpop.f32.mrb[0].mxu0
    %v6306 = vadd.f32 0.0, %v6305
    %v6307 = vpop.f32.mrb[0].mxu0
    %v6308 = vpop.f32.mrb[0].mxu0
    %v6309 = vadd.f32 0.0, %v6308
    %v6310 = vpop.f32.mrb[0].mxu0
    %6311 = vmatprep.mubr.bf16.mxu0 0
    %6312 = vmatmul.mubr.bf16.gmra.mrb[0].mxu0 %v6269
    %v6313 = vpop.f32.mrb[0].mxu0
    %v6314 = vadd.f32 0.0, %v6313
    %v6315 = vpop.f32.mrb[0].mxu0
    %v6316 = vpop.f32.mrb[0].mxu0
    %v6317 = vadd.f32 0.0, %v6316
    %v6318 = vpop.f32.mrb[0].mxu0
    %6319 = vdwg.mxu0
    %v6321 = vsel %vm3197, %v4666, 0
    %v6324 = vsel %vm3197, %v4667, 0
    %6326 = vmatprep.subr.bf16.mxu0 0
    %6327 = vmatpush1.bf16.msra.mxu0 %v1410
    %6328 = vmatprep.subr.bf16.mxu0 0
    %6329 = vmatpush1.bf16.msra.mxu0 %v1412
    %6330 = vmatprep.subr.bf16.mxu0 0
    %6331 = vmatpush1.bf16.msra.mxu0 0
    %6332 = vmatprep.subr.bf16.mxu0 0
    %6333 = vmatpush1.bf16.msra.mxu0 0
    %6334 = vmatprep.subr.bf16.mxu0 0
    %6335 = vmatpush1.bf16.msra.mxu0 0
    %6336 = vmatprep.subr.bf16.mxu0 0
    %6337 = vmatpush1.bf16.msra.mxu0 0
    %6338 = vmatprep.subr.bf16.mxu0 0
    %6339 = vmatpush1.bf16.msra.mxu0 0
    %6340 = vmatprep.subr.bf16.mxu0 0
    %6341 = vmatpush1.bf16.msra.mxu0 0
    %6342 = vmatprep.subr.bf16.mxu0 0
    %6343 = vmatpush1.bf16.msra.mxu0 0
    %6344 = vmatprep.subr.bf16.mxu0 0
    %6345 = vmatpush1.bf16.msra.mxu0 0
    %6346 = vmatprep.subr.bf16.mxu0 0
    %6347 = vmatpush1.bf16.msra.mxu0 0
    %6348 = vmatprep.subr.bf16.mxu0 0
    %6349 = vmatpush1.bf16.msra.mxu0 0
    %6350 = vmatprep.subr.bf16.mxu0 0
    %6351 = vmatpush1.bf16.msra.mxu0 0
    %6352 = vmatprep.subr.bf16.mxu0 0
    %6353 = vmatpush1.bf16.msra.mxu0 0
    %6354 = vmatprep.subr.bf16.mxu0 0
    %6355 = vmatpush1.bf16.msra.mxu0 0
    %6356 = vmatprep.subr.bf16.mxu0 0
    %6357 = vmatpush1.bf16.msra.mxu0 0
    %6358 = vmatprep.mubr.bf16.mxu0 0
    %6359 = vmatmul.mubr.bf16.gmra.mrb[0].mxu0 %v6321
    %v6360 = vpop.f32.mrb[0].mxu0
    %v6361 = vadd.f32 0.0, %v6360
    %v6362 = vpop.f32.mrb[0].mxu0
    %v6363 = vpop.f32.mrb[0].mxu0
    %v6364 = vadd.f32 0.0, %v6363
    %v6365 = vpop.f32.mrb[0].mxu0
    %6366 = vmatprep.mubr.bf16.mxu0 0
    %6367 = vmatmul.mubr.bf16.gmra.mrb[0].mxu0 %v6324
    %v6368 = vpop.f32.mrb[0].mxu0
    %v6369 = vadd.f32 0.0, %v6368
    %v6370 = vpop.f32.mrb[0].mxu0
    %v6371 = vpop.f32.mrb[0].mxu0
    %v6372 = vadd.f32 0.0, %v6371
    %v6373 = vpop.f32.mrb[0].mxu0
    %6374 = vdwg.mxu0
    %v6376 = vsel %vm3197, %v4668, 0
    %v6379 = vsel %vm3197, %v4669, 0
    %6381 = vmatprep.subr.bf16.mxu0 0
    %6382 = vmatpush1.bf16.msra.mxu0 %v1414
    %6383 = vmatprep.subr.bf16.mxu0 0
    %6384 = vmatpush1.bf16.msra.mxu0 %v1416
    %6385 = vmatprep.subr.bf16.mxu0 0
    %6386 = vmatpush1.bf16.msra.mxu0 0
    %6387 = vmatprep.subr.bf16.mxu0 0
    %6388 = vmatpush1.bf16.msra.mxu0 0
    %6389 = vmatprep.subr.bf16.mxu0 0
    %6390 = vmatpush1.bf16.msra.mxu0 0
    %6391 = vmatprep.subr.bf16.mxu0 0
    %6392 = vmatpush1.bf16.msra.mxu0 0
    %6393 = vmatprep.subr.bf16.mxu0 0
    %6394 = vmatpush1.bf16.msra.mxu0 0
    %6395 = vmatprep.subr.bf16.mxu0 0
    %6396 = vmatpush1.bf16.msra.mxu0 0
    %6397 = vmatprep.subr.bf16.mxu0 0
    %6398 = vmatpush1.bf16.msra.mxu0 0
    %6399 = vmatprep.subr.bf16.mxu0 0
    %6400 = vmatpush1.bf16.msra.mxu0 0
    %6401 = vmatprep.subr.bf16.mxu0 0
    %6402 = vmatpush1.bf16.msra.mxu0 0
    %6403 = vmatprep.subr.bf16.mxu0 0
    %6404 = vmatpush1.bf16.msra.mxu0 0
    %6405 = vmatprep.subr.bf16.mxu0 0
    %6406 = vmatpush1.bf16.msra.mxu0 0
    %6407 = vmatprep.subr.bf16.mxu0 0
    %6408 = vmatpush1.bf16.msra.mxu0 0
    %6409 = vmatprep.subr.bf16.mxu0 0
    %6410 = vmatpush1.bf16.msra.mxu0 0
    %6411 = vmatprep.subr.bf16.mxu0 0
    %6412 = vmatpush1.bf16.msra.mxu0 0
    %6413 = vmatprep.mubr.bf16.mxu0 0
    %6414 = vmatmul.mubr.bf16.gmra.mrb[0].mxu0 %v6376
    %v6415 = vpop.f32.mrb[0].mxu0
    %v6416 = vadd.f32 0.0, %v6415
    %v6417 = vpop.f32.mrb[0].mxu0
    %v6418 = vpop.f32.mrb[0].mxu0
    %v6419 = vadd.f32 0.0, %v6418
    %v6420 = vpop.f32.mrb[0].mxu0
    %6421 = vmatprep.mubr.bf16.mxu0 0
    %6422 = vmatmul.mubr.bf16.gmra.mrb[0].mxu0 %v6379
    %v6423 = vpop.f32.mrb[0].mxu0
    %v6424 = vadd.f32 0.0, %v6423
    %v6425 = vpop.f32.mrb[0].mxu0
    %v6426 = vpop.f32.mrb[0].mxu0
    %v6427 = vadd.f32 0.0, %v6426
    %v6428 = vpop.f32.mrb[0].mxu0
    %6429 = vdwg.mxu0
    %v6430 = vadd.f32 %v4711, %v5151
    %v6431 = vadd.f32 %v4714, %v5154
    %v6432 = vadd.f32 %v4719, %v5159
    %v6433 = vadd.f32 %v4722, %v5162
    %v6434 = vadd.f32 %v4766, %v5206
    %v6435 = vadd.f32 %v4769, %v5209
    %v6436 = vadd.f32 %v4774, %v5214
    %v6437 = vadd.f32 %v4777, %v5217
    %v6438 = vadd.f32 %v4821, %v5261
    %v6439 = vadd.f32 %v4824, %v5264
    %v6440 = vadd.f32 %v4829, %v5269
    %v6441 = vadd.f32 %v4832, %v5272
    %v6442 = vadd.f32 %v4876, %v5316
    %v6443 = vadd.f32 %v4879, %v5319
    %v6444 = vadd.f32 %v4884, %v5324
    %v6445 = vadd.f32 %v4887, %v5327
    %v6446 = vadd.f32 %v4931, %v5371
    %v6447 = vadd.f32 %v4934, %v5374
    %v6448 = vadd.f32 %v4939, %v5379
    %v6449 = vadd.f32 %v4942, %v5382
    %v6450 = vadd.f32 %v4986, %v5426
    %v6451 = vadd.f32 %v4989, %v5429
    %v6452 = vadd.f32 %v4994, %v5434
    %v6453 = vadd.f32 %v4997, %v5437
    %v6454 = vadd.f32 %v5041, %v5481
    %v6455 = vadd.f32 %v5044, %v5484
    %v6456 = vadd.f32 %v5049, %v5489
    %v6457 = vadd.f32 %v5052, %v5492
    %v6458 = vadd.f32 %v5096, %v5536
    %v6459 = vadd.f32 %v5099, %v5539
    %v6460 = vadd.f32 %v5104, %v5544
    %v6461 = vadd.f32 %v5107, %v5547
    %v6462 = vadd.f32 %v6430, %v5591
    %v6463 = vadd.f32 %v6431, %v5594
    %v6464 = vadd.f32 %v6432, %v5599
    %v6465 = vadd.f32 %v6433, %v5602
    %v6466 = vadd.f32 %v6434, %v5646
    %v6467 = vadd.f32 %v6435, %v5649
    %v6468 = vadd.f32 %v6436, %v5654
    %v6469 = vadd.f32 %v6437, %v5657
    %v6470 = vadd.f32 %v6438, %v5701
    %v6471 = vadd.f32 %v6439, %v5704
    %v6472 = vadd.f32 %v6440, %v5709
    %v6473 = vadd.f32 %v6441, %v5712
    %v6474 = vadd.f32 %v6442, %v5756
    %v6475 = vadd.f32 %v6443, %v5759
    %v6476 = vadd.f32 %v6444, %v5764
    %v6477 = vadd.f32 %v6445, %v5767
    %v6478 = vadd.f32 %v6446, %v5811
    %v6479 = vadd.f32 %v6447, %v5814
    %v6480 = vadd.f32 %v6448, %v5819
    %v6481 = vadd.f32 %v6449, %v5822
    %v6482 = vadd.f32 %v6450, %v5866
    %v6483 = vadd.f32 %v6451, %v5869
    %v6484 = vadd.f32 %v6452, %v5874
    %v6485 = vadd.f32 %v6453, %v5877
    %v6486 = vadd.f32 %v6454, %v5921
    %v6487 = vadd.f32 %v6455, %v5924
    %v6488 = vadd.f32 %v6456, %v5929
    %v6489 = vadd.f32 %v6457, %v5932
    %v6490 = vadd.f32 %v6458, %v5976
    %v6491 = vadd.f32 %v6459, %v5979
    %v6492 = vadd.f32 %v6460, %v5984
    %v6493 = vadd.f32 %v6461, %v5987
    %v6494 = vadd.f32 %v6462, %v6031
    %v6495 = vadd.f32 %v6463, %v6034
    %v6496 = vadd.f32 %v6464, %v6039
    %v6497 = vadd.f32 %v6465, %v6042
    %v6498 = vadd.f32 %v6466, %v6086
    %v6499 = vadd.f32 %v6467, %v6089
    %v6500 = vadd.f32 %v6468, %v6094
    %v6501 = vadd.f32 %v6469, %v6097
    %v6502 = vadd.f32 %v6470, %v6141
    %v6503 = vadd.f32 %v6471, %v6144
    %v6504 = vadd.f32 %v6472, %v6149
    %v6505 = vadd.f32 %v6473, %v6152
    %v6506 = vadd.f32 %v6474, %v6196
    %v6507 = vadd.f32 %v6475, %v6199
    %v6508 = vadd.f32 %v6476, %v6204
    %v6509 = vadd.f32 %v6477, %v6207
    %v6510 = vadd.f32 %v6478, %v6251
    %v6511 = vadd.f32 %v6479, %v6254
    %v6512 = vadd.f32 %v6480, %v6259
    %v6513 = vadd.f32 %v6481, %v6262
    %v6514 = vadd.f32 %v6482, %v6306
    %v6515 = vadd.f32 %v6483, %v6309
    %v6516 = vadd.f32 %v6484, %v6314
    %v6517 = vadd.f32 %v6485, %v6317
    %v6518 = vadd.f32 %v6486, %v6361
    %v6519 = vadd.f32 %v6487, %v6364
    %v6520 = vadd.f32 %v6488, %v6369
    %v6521 = vadd.f32 %v6489, %v6372
    %v6522 = vadd.f32 %v6490, %v6416
    %v6523 = vadd.f32 %v6491, %v6419
    %v6524 = vadd.f32 %v6492, %v6424
    %v6525 = vadd.f32 %v6493, %v6427
    %v6526 = vld [vmem:[%s5] sm:$0x1]
    %v6528 = vlaneseq
    %v6529 = vshrl.u32 %v6528, 7
    %v6530 = vsub.s32 0, %v6529
    %v6531 = vrot.slane %v6526, %v6530
    %v6533 = vadd.f32 %v6494, %v6531
    %v6534 = vadd.f32 %v6495, %v6531
    %v6535 = vadd.f32 %v6496, %v6531
    %v6536 = vadd.f32 %v6497, %v6531
    %v6537 = vadd.f32 %v6498, %v6531
    %v6538 = vadd.f32 %v6499, %v6531
    %v6539 = vadd.f32 %v6500, %v6531
    %v6540 = vadd.f32 %v6501, %v6531
    %v6541 = vadd.f32 %v6502, %v6531
    %v6542 = vadd.f32 %v6503, %v6531
    %v6543 = vadd.f32 %v6504, %v6531
    %v6544 = vadd.f32 %v6505, %v6531
    %v6545 = vadd.f32 %v6506, %v6531
    %v6546 = vadd.f32 %v6507, %v6531
    %v6547 = vadd.f32 %v6508, %v6531
    %v6548 = vadd.f32 %v6509, %v6531
    %v6549 = vadd.f32 %v6510, %v6531
    %v6550 = vadd.f32 %v6511, %v6531
    %v6551 = vadd.f32 %v6512, %v6531
    %v6552 = vadd.f32 %v6513, %v6531
    %v6553 = vadd.f32 %v6514, %v6531
    %v6554 = vadd.f32 %v6515, %v6531
    %v6555 = vadd.f32 %v6516, %v6531
    %v6556 = vadd.f32 %v6517, %v6531
    %v6557 = vadd.f32 %v6518, %v6531
    %v6558 = vadd.f32 %v6519, %v6531
    %v6559 = vadd.f32 %v6520, %v6531
    %v6560 = vadd.f32 %v6521, %v6531
    %v6561 = vadd.f32 %v6522, %v6531
    %v6562 = vadd.f32 %v6523, %v6531
    %v6563 = vadd.f32 %v6524, %v6531
    %v6564 = vadd.f32 %v6525, %v6531
    %v6565 = vadd.f32 %v71, %v6533
    %v6566 = vadd.f32 %v72, %v6534
    %v6567 = vadd.f32 %v73, %v6535
    %v6568 = vadd.f32 %v74, %v6536
    %v6569 = vadd.f32 %v75, %v6537
    %v6570 = vadd.f32 %v76, %v6538
    %v6571 = vadd.f32 %v77, %v6539
    %v6572 = vadd.f32 %v78, %v6540
    %v6573 = vadd.f32 %v79, %v6541
    %v6574 = vadd.f32 %v80, %v6542
    %v6575 = vadd.f32 %v81, %v6543
    %v6576 = vadd.f32 %v82, %v6544
    %v6577 = vadd.f32 %v83, %v6545
    %v6578 = vadd.f32 %v84, %v6546
    %v6579 = vadd.f32 %v85, %v6547
    %v6580 = vadd.f32 %v86, %v6548
    %v6581 = vadd.f32 %v87, %v6549
    %v6582 = vadd.f32 %v88, %v6550
    %v6583 = vadd.f32 %v89, %v6551
    %v6584 = vadd.f32 %v90, %v6552
    %v6585 = vadd.f32 %v91, %v6553
    %v6586 = vadd.f32 %v92, %v6554
    %v6587 = vadd.f32 %v93, %v6555
    %v6588 = vadd.f32 %v94, %v6556
    %v6589 = vadd.f32 %v95, %v6557
    %v6590 = vadd.f32 %v96, %v6558
    %v6591 = vadd.f32 %v97, %v6559
    %v6592 = vadd.f32 %v98, %v6560
    %v6593 = vadd.f32 %v99, %v6561
    %v6594 = vadd.f32 %v100, %v6562
    %v6595 = vadd.f32 %v101, %v6563
    %v6596 = vadd.f32 %v102, %v6564
    %v6597 = vld [vmem:[%s6] sm:$0x1]
    %v6598 = vld [vmem:[%s7] sm:$0x1]
    %v6599 = vsel %vm105, %v6565, 0.0
    %6600 = vadd.xlane.f32.xlu0 %v6599
    %v6601 = vpop.xlane.xlu0 %6600
    %v6602 = vsel %vm105, %v6566, 0.0
    %6603 = vadd.xlane.f32.xlu0 %v6602
    %v6604 = vpop.xlane.xlu0 %6603
    %v6605 = vsel %vm105, %v6567, 0.0
    %6606 = vadd.xlane.f32.xlu0 %v6605
    %v6607 = vpop.xlane.xlu0 %6606
    %v6608 = vsel %vm105, %v6568, 0.0
    %6609 = vadd.xlane.f32.xlu0 %v6608
    %v6610 = vpop.xlane.xlu0 %6609
    %v6611 = vsel %vm105, %v6569, 0.0
    %6612 = vadd.xlane.f32.xlu0 %v6611
    %v6613 = vpop.xlane.xlu0 %6612
    %v6614 = vsel %vm105, %v6570, 0.0
    %6615 = vadd.xlane.f32.xlu0 %v6614
    %v6616 = vpop.xlane.xlu0 %6615
    %v6617 = vsel %vm105, %v6571, 0.0
    %6618 = vadd.xlane.f32.xlu0 %v6617
    %v6619 = vpop.xlane.xlu0 %6618
    %v6620 = vsel %vm105, %v6572, 0.0
    %6621 = vadd.xlane.f32.xlu0 %v6620
    %v6622 = vpop.xlane.xlu0 %6621
    %v6623 = vsel %vm105, %v6573, 0.0
    %6624 = vadd.xlane.f32.xlu0 %v6623
    %v6625 = vpop.xlane.xlu0 %6624
    %v6626 = vsel %vm105, %v6574, 0.0
    %6627 = vadd.xlane.f32.xlu0 %v6626
    %v6628 = vpop.xlane.xlu0 %6627
    %v6629 = vsel %vm105, %v6575, 0.0
    %6630 = vadd.xlane.f32.xlu0 %v6629
    %v6631 = vpop.xlane.xlu0 %6630
    %v6632 = vsel %vm105, %v6576, 0.0
    %6633 = vadd.xlane.f32.xlu0 %v6632
    %v6634 = vpop.xlane.xlu0 %6633
    %v6635 = vsel %vm105, %v6577, 0.0
    %6636 = vadd.xlane.f32.xlu0 %v6635
    %v6637 = vpop.xlane.xlu0 %6636
    %v6638 = vsel %vm105, %v6578, 0.0
    %6639 = vadd.xlane.f32.xlu0 %v6638
    %v6640 = vpop.xlane.xlu0 %6639
    %v6641 = vsel %vm105, %v6579, 0.0
    %6642 = vadd.xlane.f32.xlu0 %v6641
    %v6643 = vpop.xlane.xlu0 %6642
    %v6644 = vsel %vm105, %v6580, 0.0
    %6645 = vadd.xlane.f32.xlu0 %v6644
    %v6646 = vpop.xlane.xlu0 %6645
    %v6647 = vsel %vm105, %v6581, 0.0
    %6648 = vadd.xlane.f32.xlu0 %v6647
    %v6649 = vpop.xlane.xlu0 %6648
    %v6650 = vsel %vm105, %v6582, 0.0
    %6651 = vadd.xlane.f32.xlu0 %v6650
    %v6652 = vpop.xlane.xlu0 %6651
    %v6653 = vsel %vm105, %v6583, 0.0
    %6654 = vadd.xlane.f32.xlu0 %v6653
    %v6655 = vpop.xlane.xlu0 %6654
    %v6656 = vsel %vm105, %v6584, 0.0
    %6657 = vadd.xlane.f32.xlu0 %v6656
    %v6658 = vpop.xlane.xlu0 %6657
    %v6659 = vsel %vm105, %v6585, 0.0
    %6660 = vadd.xlane.f32.xlu0 %v6659
    %v6661 = vpop.xlane.xlu0 %6660
    %v6662 = vsel %vm105, %v6586, 0.0
    %6663 = vadd.xlane.f32.xlu0 %v6662
    %v6664 = vpop.xlane.xlu0 %6663
    %v6665 = vsel %vm105, %v6587, 0.0
    %6666 = vadd.xlane.f32.xlu0 %v6665
    %v6667 = vpop.xlane.xlu0 %6666
    %v6668 = vsel %vm105, %v6588, 0.0
    %6669 = vadd.xlane.f32.xlu0 %v6668
    %v6670 = vpop.xlane.xlu0 %6669
    %v6671 = vsel %vm105, %v6589, 0.0
    %6672 = vadd.xlane.f32.xlu0 %v6671
    %v6673 = vpop.xlane.xlu0 %6672
    %v6674 = vsel %vm105, %v6590, 0.0
    %6675 = vadd.xlane.f32.xlu0 %v6674
    %v6676 = vpop.xlane.xlu0 %6675
    %v6677 = vsel %vm105, %v6591, 0.0
    %6678 = vadd.xlane.f32.xlu0 %v6677
    %v6679 = vpop.xlane.xlu0 %6678
    %v6680 = vsel %vm105, %v6592, 0.0
    %6681 = vadd.xlane.f32.xlu0 %v6680
    %v6682 = vpop.xlane.xlu0 %6681
    %v6683 = vsel %vm105, %v6593, 0.0
    %6684 = vadd.xlane.f32.xlu0 %v6683
    %v6685 = vpop.xlane.xlu0 %6684
    %v6686 = vsel %vm105, %v6594, 0.0
    %6687 = vadd.xlane.f32.xlu0 %v6686
    %v6688 = vpop.xlane.xlu0 %6687
    %v6689 = vsel %vm105, %v6595, 0.0
    %6690 = vadd.xlane.f32.xlu0 %v6689
    %v6691 = vpop.xlane.xlu0 %6690
    %v6692 = vsel %vm105, %v6596, 0.0
    %6693 = vadd.xlane.f32.xlu0 %v6692
    %v6694 = vpop.xlane.xlu0 %6693
    %v6695 = vmul.f32 %v6601, %v202
    %v6696 = vmul.f32 %v6604, %v202
    %v6697 = vmul.f32 %v6607, %v202
    %v6698 = vmul.f32 %v6610, %v202
    %v6699 = vmul.f32 %v6613, %v202
    %v6700 = vmul.f32 %v6616, %v202
    %v6701 = vmul.f32 %v6619, %v202
    %v6702 = vmul.f32 %v6622, %v202
    %v6703 = vmul.f32 %v6625, %v202
    %v6704 = vmul.f32 %v6628, %v202
    %v6705 = vmul.f32 %v6631, %v202
    %v6706 = vmul.f32 %v6634, %v202
    %v6707 = vmul.f32 %v6637, %v202
    %v6708 = vmul.f32 %v6640, %v202
    %v6709 = vmul.f32 %v6643, %v202
    %v6710 = vmul.f32 %v6646, %v202
    %v6711 = vmul.f32 %v6649, %v202
    %v6712 = vmul.f32 %v6652, %v202
    %v6713 = vmul.f32 %v6655, %v202
    %v6714 = vmul.f32 %v6658, %v202
    %v6715 = vmul.f32 %v6661, %v202
    %v6716 = vmul.f32 %v6664, %v202
    %v6717 = vmul.f32 %v6667, %v202
    %v6718 = vmul.f32 %v6670, %v202
    %v6719 = vmul.f32 %v6673, %v202
    %v6720 = vmul.f32 %v6676, %v202
    %v6721 = vmul.f32 %v6679, %v202
    %v6722 = vmul.f32 %v6682, %v202
    %v6723 = vmul.f32 %v6685, %v202
    %v6724 = vmul.f32 %v6688, %v202
    %v6725 = vmul.f32 %v6691, %v202
    %v6726 = vmul.f32 %v6694, %v202
    %v6727 = vsub.f32 %v6565, %v6695
    %v6728 = vsub.f32 %v6566, %v6696
    %v6729 = vsub.f32 %v6567, %v6697
    %v6730 = vsub.f32 %v6568, %v6698
    %v6731 = vsub.f32 %v6569, %v6699
    %v6732 = vsub.f32 %v6570, %v6700
    %v6733 = vsub.f32 %v6571, %v6701
    %v6734 = vsub.f32 %v6572, %v6702
    %v6735 = vsub.f32 %v6573, %v6703
    %v6736 = vsub.f32 %v6574, %v6704
    %v6737 = vsub.f32 %v6575, %v6705
    %v6738 = vsub.f32 %v6576, %v6706
    %v6739 = vsub.f32 %v6577, %v6707
    %v6740 = vsub.f32 %v6578, %v6708
    %v6741 = vsub.f32 %v6579, %v6709
    %v6742 = vsub.f32 %v6580, %v6710
    %v6743 = vsub.f32 %v6581, %v6711
    %v6744 = vsub.f32 %v6582, %v6712
    %v6745 = vsub.f32 %v6583, %v6713
    %v6746 = vsub.f32 %v6584, %v6714
    %v6747 = vsub.f32 %v6585, %v6715
    %v6748 = vsub.f32 %v6586, %v6716
    %v6749 = vsub.f32 %v6587, %v6717
    %v6750 = vsub.f32 %v6588, %v6718
    %v6751 = vsub.f32 %v6589, %v6719
    %v6752 = vsub.f32 %v6590, %v6720
    %v6753 = vsub.f32 %v6591, %v6721
    %v6754 = vsub.f32 %v6592, %v6722
    %v6755 = vsub.f32 %v6593, %v6723
    %v6756 = vsub.f32 %v6594, %v6724
    %v6757 = vsub.f32 %v6595, %v6725
    %v6758 = vsub.f32 %v6596, %v6726
    %v6759 = vmul.f32 %v6727, %v6727
    %v6760 = vmul.f32 %v6728, %v6728
    %v6761 = vmul.f32 %v6729, %v6729
    %v6762 = vmul.f32 %v6730, %v6730
    %v6763 = vmul.f32 %v6731, %v6731
    %v6764 = vmul.f32 %v6732, %v6732
    %v6765 = vmul.f32 %v6733, %v6733
    %v6766 = vmul.f32 %v6734, %v6734
    %v6767 = vmul.f32 %v6735, %v6735
    %v6768 = vmul.f32 %v6736, %v6736
    %v6769 = vmul.f32 %v6737, %v6737
    %v6770 = vmul.f32 %v6738, %v6738
    %v6771 = vmul.f32 %v6739, %v6739
    %v6772 = vmul.f32 %v6740, %v6740
    %v6773 = vmul.f32 %v6741, %v6741
    %v6774 = vmul.f32 %v6742, %v6742
    %v6775 = vmul.f32 %v6743, %v6743
    %v6776 = vmul.f32 %v6744, %v6744
    %v6777 = vmul.f32 %v6745, %v6745
    %v6778 = vmul.f32 %v6746, %v6746
    %v6779 = vmul.f32 %v6747, %v6747
    %v6780 = vmul.f32 %v6748, %v6748
    %v6781 = vmul.f32 %v6749, %v6749
    %v6782 = vmul.f32 %v6750, %v6750
    %v6783 = vmul.f32 %v6751, %v6751
    %v6784 = vmul.f32 %v6752, %v6752
    %v6785 = vmul.f32 %v6753, %v6753
    %v6786 = vmul.f32 %v6754, %v6754
    %v6787 = vmul.f32 %v6755, %v6755
    %v6788 = vmul.f32 %v6756, %v6756
    %v6789 = vmul.f32 %v6757, %v6757
    %v6790 = vmul.f32 %v6758, %v6758
    %v6791 = vsel %vm105, %v6759, 0.0
    %6792 = vadd.xlane.f32.xlu0 %v6791
    %v6793 = vpop.xlane.xlu0 %6792
    %v6794 = vsel %vm105, %v6760, 0.0
    %6795 = vadd.xlane.f32.xlu0 %v6794
    %v6796 = vpop.xlane.xlu0 %6795
    %v6797 = vsel %vm105, %v6761, 0.0
    %6798 = vadd.xlane.f32.xlu0 %v6797
    %v6799 = vpop.xlane.xlu0 %6798
    %v6800 = vsel %vm105, %v6762, 0.0
    %6801 = vadd.xlane.f32.xlu0 %v6800
    %v6802 = vpop.xlane.xlu0 %6801
    %v6803 = vsel %vm105, %v6763, 0.0
    %6804 = vadd.xlane.f32.xlu0 %v6803
    %v6805 = vpop.xlane.xlu0 %6804
    %v6806 = vsel %vm105, %v6764, 0.0
    %6807 = vadd.xlane.f32.xlu0 %v6806
    %v6808 = vpop.xlane.xlu0 %6807
    %v6809 = vsel %vm105, %v6765, 0.0
    %6810 = vadd.xlane.f32.xlu0 %v6809
    %v6811 = vpop.xlane.xlu0 %6810
    %v6812 = vsel %vm105, %v6766, 0.0
    %6813 = vadd.xlane.f32.xlu0 %v6812
    %v6814 = vpop.xlane.xlu0 %6813
    %v6815 = vsel %vm105, %v6767, 0.0
    %6816 = vadd.xlane.f32.xlu0 %v6815
    %v6817 = vpop.xlane.xlu0 %6816
    %v6818 = vsel %vm105, %v6768, 0.0
    %6819 = vadd.xlane.f32.xlu0 %v6818
    %v6820 = vpop.xlane.xlu0 %6819
    %v6821 = vsel %vm105, %v6769, 0.0
    %6822 = vadd.xlane.f32.xlu0 %v6821
    %v6823 = vpop.xlane.xlu0 %6822
    %v6824 = vsel %vm105, %v6770, 0.0
    %6825 = vadd.xlane.f32.xlu0 %v6824
    %v6826 = vpop.xlane.xlu0 %6825
    %v6827 = vsel %vm105, %v6771, 0.0
    %6828 = vadd.xlane.f32.xlu0 %v6827
    %v6829 = vpop.xlane.xlu0 %6828
    %v6830 = vsel %vm105, %v6772, 0.0
    %6831 = vadd.xlane.f32.xlu0 %v6830
    %v6832 = vpop.xlane.xlu0 %6831
    %v6833 = vsel %vm105, %v6773, 0.0
    %6834 = vadd.xlane.f32.xlu0 %v6833
    %v6835 = vpop.xlane.xlu0 %6834
    %v6836 = vsel %vm105, %v6774, 0.0
    %6837 = vadd.xlane.f32.xlu0 %v6836
    %v6838 = vpop.xlane.xlu0 %6837
    %v6839 = vsel %vm105, %v6775, 0.0
    %6840 = vadd.xlane.f32.xlu0 %v6839
    %v6841 = vpop.xlane.xlu0 %6840
    %v6842 = vsel %vm105, %v6776, 0.0
    %6843 = vadd.xlane.f32.xlu0 %v6842
    %v6844 = vpop.xlane.xlu0 %6843
    %v6845 = vsel %vm105, %v6777, 0.0
    %6846 = vadd.xlane.f32.xlu0 %v6845
    %v6847 = vpop.xlane.xlu0 %6846
    %v6848 = vsel %vm105, %v6778, 0.0
    %6849 = vadd.xlane.f32.xlu0 %v6848
    %v6850 = vpop.xlane.xlu0 %6849
    %v6851 = vsel %vm105, %v6779, 0.0
    %6852 = vadd.xlane.f32.xlu0 %v6851
    %v6853 = vpop.xlane.xlu0 %6852
    %v6854 = vsel %vm105, %v6780, 0.0
    %6855 = vadd.xlane.f32.xlu0 %v6854
    %v6856 = vpop.xlane.xlu0 %6855
    %v6857 = vsel %vm105, %v6781, 0.0
    %6858 = vadd.xlane.f32.xlu0 %v6857
    %v6859 = vpop.xlane.xlu0 %6858
    %v6860 = vsel %vm105, %v6782, 0.0
    %6861 = vadd.xlane.f32.xlu0 %v6860
    %v6862 = vpop.xlane.xlu0 %6861
    %v6863 = vsel %vm105, %v6783, 0.0
    %6864 = vadd.xlane.f32.xlu0 %v6863
    %v6865 = vpop.xlane.xlu0 %6864
    %v6866 = vsel %vm105, %v6784, 0.0
    %6867 = vadd.xlane.f32.xlu0 %v6866
    %v6868 = vpop.xlane.xlu0 %6867
    %v6869 = vsel %vm105, %v6785, 0.0
    %6870 = vadd.xlane.f32.xlu0 %v6869
    %v6871 = vpop.xlane.xlu0 %6870
    %v6872 = vsel %vm105, %v6786, 0.0
    %6873 = vadd.xlane.f32.xlu0 %v6872
    %v6874 = vpop.xlane.xlu0 %6873
    %v6875 = vsel %vm105, %v6787, 0.0
    %6876 = vadd.xlane.f32.xlu0 %v6875
    %v6877 = vpop.xlane.xlu0 %6876
    %v6878 = vsel %vm105, %v6788, 0.0
    %6879 = vadd.xlane.f32.xlu0 %v6878
    %v6880 = vpop.xlane.xlu0 %6879
    %v6881 = vsel %vm105, %v6789, 0.0
    %6882 = vadd.xlane.f32.xlu0 %v6881
    %v6883 = vpop.xlane.xlu0 %6882
    %v6884 = vsel %vm105, %v6790, 0.0
    %6885 = vadd.xlane.f32.xlu0 %v6884
    %v6886 = vpop.xlane.xlu0 %6885
    %v6887 = vmul.f32 %v6793, %v202
    %v6888 = vmul.f32 %v6796, %v202
    %v6889 = vmul.f32 %v6799, %v202
    %v6890 = vmul.f32 %v6802, %v202
    %v6891 = vmul.f32 %v6805, %v202
    %v6892 = vmul.f32 %v6808, %v202
    %v6893 = vmul.f32 %v6811, %v202
    %v6894 = vmul.f32 %v6814, %v202
    %v6895 = vmul.f32 %v6817, %v202
    %v6896 = vmul.f32 %v6820, %v202
    %v6897 = vmul.f32 %v6823, %v202
    %v6898 = vmul.f32 %v6826, %v202
    %v6899 = vmul.f32 %v6829, %v202
    %v6900 = vmul.f32 %v6832, %v202
    %v6901 = vmul.f32 %v6835, %v202
    %v6902 = vmul.f32 %v6838, %v202
    %v6903 = vmul.f32 %v6841, %v202
    %v6904 = vmul.f32 %v6844, %v202
    %v6905 = vmul.f32 %v6847, %v202
    %v6906 = vmul.f32 %v6850, %v202
    %v6907 = vmul.f32 %v6853, %v202
    %v6908 = vmul.f32 %v6856, %v202
    %v6909 = vmul.f32 %v6859, %v202
    %v6910 = vmul.f32 %v6862, %v202
    %v6911 = vmul.f32 %v6865, %v202
    %v6912 = vmul.f32 %v6868, %v202
    %v6913 = vmul.f32 %v6871, %v202
    %v6914 = vmul.f32 %v6874, %v202
    %v6915 = vmul.f32 %v6877, %v202
    %v6916 = vmul.f32 %v6880, %v202
    %v6917 = vmul.f32 %v6883, %v202
    %v6918 = vmul.f32 %v6886, %v202
    %v6919 = vadd.f32 %v6887, 1e-05
    %v6920 = vadd.f32 %v6888, 1e-05
    %v6921 = vadd.f32 %v6889, 1e-05
    %v6922 = vadd.f32 %v6890, 1e-05
    %v6923 = vadd.f32 %v6891, 1e-05
    %v6924 = vadd.f32 %v6892, 1e-05
    %v6925 = vadd.f32 %v6893, 1e-05
    %v6926 = vadd.f32 %v6894, 1e-05
    %v6927 = vadd.f32 %v6895, 1e-05
    %v6928 = vadd.f32 %v6896, 1e-05
    %v6929 = vadd.f32 %v6897, 1e-05
    %v6930 = vadd.f32 %v6898, 1e-05
    %v6931 = vadd.f32 %v6899, 1e-05
    %v6932 = vadd.f32 %v6900, 1e-05
    %v6933 = vadd.f32 %v6901, 1e-05
    %v6934 = vadd.f32 %v6902, 1e-05
    %v6935 = vadd.f32 %v6903, 1e-05
    %v6936 = vadd.f32 %v6904, 1e-05
    %v6937 = vadd.f32 %v6905, 1e-05
    %v6938 = vadd.f32 %v6906, 1e-05
    %v6939 = vadd.f32 %v6907, 1e-05
    %v6940 = vadd.f32 %v6908, 1e-05
    %v6941 = vadd.f32 %v6909, 1e-05
    %v6942 = vadd.f32 %v6910, 1e-05
    %v6943 = vadd.f32 %v6911, 1e-05
    %v6944 = vadd.f32 %v6912, 1e-05
    %v6945 = vadd.f32 %v6913, 1e-05
    %v6946 = vadd.f32 %v6914, 1e-05
    %v6947 = vadd.f32 %v6915, 1e-05
    %v6948 = vadd.f32 %v6916, 1e-05
    %v6949 = vadd.f32 %v6917, 1e-05
    %v6950 = vadd.f32 %v6918, 1e-05
    %v6951 = vrsqrt.pop %v6919
    %v6952 = vrsqrt.pop %v6920
    %v6953 = vrsqrt.pop %v6921
    %v6954 = vrsqrt.pop %v6922
    %v6955 = vrsqrt.pop %v6923
    %v6956 = vrsqrt.pop %v6924
    %v6957 = vrsqrt.pop %v6925
    %v6958 = vrsqrt.pop %v6926
    %v6959 = vrsqrt.pop %v6927
    %v6960 = vrsqrt.pop %v6928
    %v6961 = vrsqrt.pop %v6929
    %v6962 = vrsqrt.pop %v6930
    %v6963 = vrsqrt.pop %v6931
    %v6964 = vrsqrt.pop %v6932
    %v6965 = vrsqrt.pop %v6933
    %v6966 = vrsqrt.pop %v6934
    %v6967 = vrsqrt.pop %v6935
    %v6968 = vrsqrt.pop %v6936
    %v6969 = vrsqrt.pop %v6937
    %v6970 = vrsqrt.pop %v6938
    %v6971 = vrsqrt.pop %v6939
    %v6972 = vrsqrt.pop %v6940
    %v6973 = vrsqrt.pop %v6941
    %v6974 = vrsqrt.pop %v6942
    %v6975 = vrsqrt.pop %v6943
    %v6976 = vrsqrt.pop %v6944
    %v6977 = vrsqrt.pop %v6945
    %v6978 = vrsqrt.pop %v6946
    %v6979 = vrsqrt.pop %v6947
    %v6980 = vrsqrt.pop %v6948
    %v6981 = vrsqrt.pop %v6949
    %v6982 = vrsqrt.pop %v6950
    %v6983 = vmul.f32 %v6727, %v6951
    %v6984 = vmul.f32 %v6728, %v6952
    %v6985 = vmul.f32 %v6729, %v6953
    %v6986 = vmul.f32 %v6730, %v6954
    %v6987 = vmul.f32 %v6731, %v6955
    %v6988 = vmul.f32 %v6732, %v6956
    %v6989 = vmul.f32 %v6733, %v6957
    %v6990 = vmul.f32 %v6734, %v6958
    %v6991 = vmul.f32 %v6735, %v6959
    %v6992 = vmul.f32 %v6736, %v6960
    %v6993 = vmul.f32 %v6737, %v6961
    %v6994 = vmul.f32 %v6738, %v6962
    %v6995 = vmul.f32 %v6739, %v6963
    %v6996 = vmul.f32 %v6740, %v6964
    %v6997 = vmul.f32 %v6741, %v6965
    %v6998 = vmul.f32 %v6742, %v6966
    %v6999 = vmul.f32 %v6743, %v6967
    %v7000 = vmul.f32 %v6744, %v6968
    %v7001 = vmul.f32 %v6745, %v6969
    %v7002 = vmul.f32 %v6746, %v6970
    %v7003 = vmul.f32 %v6747, %v6971
    %v7004 = vmul.f32 %v6748, %v6972
    %v7005 = vmul.f32 %v6749, %v6973
    %v7006 = vmul.f32 %v6750, %v6974
    %v7007 = vmul.f32 %v6751, %v6975
    %v7008 = vmul.f32 %v6752, %v6976
    %v7009 = vmul.f32 %v6753, %v6977
    %v7010 = vmul.f32 %v6754, %v6978
    %v7011 = vmul.f32 %v6755, %v6979
    %v7012 = vmul.f32 %v6756, %v6980
    %v7013 = vmul.f32 %v6757, %v6981
    %v7014 = vmul.f32 %v6758, %v6982
    %v7016 = vlaneseq
    %v7017 = vshrl.u32 %v7016, 7
    %v7018 = vsub.s32 0, %v7017
    %v7019 = vrot.slane %v6597, %v7018
    %v7021 = vmul.f32 %v6983, %v7019
    %v7022 = vmul.f32 %v6984, %v7019
    %v7023 = vmul.f32 %v6985, %v7019
    %v7024 = vmul.f32 %v6986, %v7019
    %v7025 = vmul.f32 %v6987, %v7019
    %v7026 = vmul.f32 %v6988, %v7019
    %v7027 = vmul.f32 %v6989, %v7019
    %v7028 = vmul.f32 %v6990, %v7019
    %v7029 = vmul.f32 %v6991, %v7019
    %v7030 = vmul.f32 %v6992, %v7019
    %v7031 = vmul.f32 %v6993, %v7019
    %v7032 = vmul.f32 %v6994, %v7019
    %v7033 = vmul.f32 %v6995, %v7019
    %v7034 = vmul.f32 %v6996, %v7019
    %v7035 = vmul.f32 %v6997, %v7019
    %v7036 = vmul.f32 %v6998, %v7019
    %v7037 = vmul.f32 %v6999, %v7019
    %v7038 = vmul.f32 %v7000, %v7019
    %v7039 = vmul.f32 %v7001, %v7019
    %v7040 = vmul.f32 %v7002, %v7019
    %v7041 = vmul.f32 %v7003, %v7019
    %v7042 = vmul.f32 %v7004, %v7019
    %v7043 = vmul.f32 %v7005, %v7019
    %v7044 = vmul.f32 %v7006, %v7019
    %v7045 = vmul.f32 %v7007, %v7019
    %v7046 = vmul.f32 %v7008, %v7019
    %v7047 = vmul.f32 %v7009, %v7019
    %v7048 = vmul.f32 %v7010, %v7019
    %v7049 = vmul.f32 %v7011, %v7019
    %v7050 = vmul.f32 %v7012, %v7019
    %v7051 = vmul.f32 %v7013, %v7019
    %v7052 = vmul.f32 %v7014, %v7019
    %v7054 = vlaneseq
    %v7055 = vshrl.u32 %v7054, 7
    %v7056 = vsub.s32 0, %v7055
    %v7057 = vrot.slane %v6598, %v7056
    %v7059 = vadd.f32 %v7021, %v7057
    %v7060 = vadd.f32 %v7022, %v7057
    %v7061 = vadd.f32 %v7023, %v7057
    %v7062 = vadd.f32 %v7024, %v7057
    %v7063 = vadd.f32 %v7025, %v7057
    %v7064 = vadd.f32 %v7026, %v7057
    %v7065 = vadd.f32 %v7027, %v7057
    %v7066 = vadd.f32 %v7028, %v7057
    %v7067 = vadd.f32 %v7029, %v7057
    %v7068 = vadd.f32 %v7030, %v7057
    %v7069 = vadd.f32 %v7031, %v7057
    %v7070 = vadd.f32 %v7032, %v7057
    %v7071 = vadd.f32 %v7033, %v7057
    %v7072 = vadd.f32 %v7034, %v7057
    %v7073 = vadd.f32 %v7035, %v7057
    %v7074 = vadd.f32 %v7036, %v7057
    %v7075 = vadd.f32 %v7037, %v7057
    %v7076 = vadd.f32 %v7038, %v7057
    %v7077 = vadd.f32 %v7039, %v7057
    %v7078 = vadd.f32 %v7040, %v7057
    %v7079 = vadd.f32 %v7041, %v7057
    %v7080 = vadd.f32 %v7042, %v7057
    %v7081 = vadd.f32 %v7043, %v7057
    %v7082 = vadd.f32 %v7044, %v7057
    %v7083 = vadd.f32 %v7045, %v7057
    %v7084 = vadd.f32 %v7046, %v7057
    %v7085 = vadd.f32 %v7047, %v7057
    %v7086 = vadd.f32 %v7048, %v7057
    %v7087 = vadd.f32 %v7049, %v7057
    %v7088 = vadd.f32 %v7050, %v7057
    %v7089 = vadd.f32 %v7051, %v7057
    %v7090 = vadd.f32 %v7052, %v7057
    %v7091 = vpack.c.bf16 %v7060, %v7059
    %v7092 = vpack.c.bf16 %v7062, %v7061
    %v7093 = vpack.c.bf16 %v7064, %v7063
    %v7094 = vpack.c.bf16 %v7066, %v7065
    %v7095 = vpack.c.bf16 %v7068, %v7067
    %v7096 = vpack.c.bf16 %v7070, %v7069
    %v7097 = vpack.c.bf16 %v7072, %v7071
    %v7098 = vpack.c.bf16 %v7074, %v7073
    %v7099 = vpack.c.bf16 %v7076, %v7075
    %v7100 = vpack.c.bf16 %v7078, %v7077
    %v7101 = vpack.c.bf16 %v7080, %v7079
    %v7102 = vpack.c.bf16 %v7082, %v7081
    %v7103 = vpack.c.bf16 %v7084, %v7083
    %v7104 = vpack.c.bf16 %v7086, %v7085
    %v7105 = vpack.c.bf16 %v7088, %v7087
    %v7106 = vpack.c.bf16 %v7090, %v7089
    %v7107 = vld [vmem:[%s8] sm:$0xff]
    %v7108 = vld [vmem:[%s8 + $0x8] sm:$0xff]
    %v7109 = vld [vmem:[%s8 + $0x10] sm:$0xff]
    %v7110 = vld [vmem:[%s8 + $0x18] sm:$0xff]
    %v7111 = vld [vmem:[%s8 + $0x20] sm:$0xff]
    %v7112 = vld [vmem:[%s8 + $0x28] sm:$0xff]
    %v7113 = vld [vmem:[%s8 + $0x30] sm:$0xff]
    %v7114 = vld [vmem:[%s8 + $0x38] sm:$0xff]
    %v7115 = vld [vmem:[%s9] sm:$0x3]
    %v7117 = vlaneseq
    %v7118 = vshrl.u32 %v7117, 7
    %v7119 = vsub.s32 0, %v7118
    %v7120 = vrot.slane %v7115, %v7119
    %v7121 = vlaneseq
    %v7122 = vshrl.u32 %v7121, 7
    %v7123 = vsub.s32 1, %v7122
    %v7124 = vrot.slane %v7115, %v7123
    %v7135 = vunpack.c.l.b16 %v7107
    %v7136 = vunpack.c.h.b16 %v7107
    %v7137 = vunpack.c.l.b16 %v7108
    %v7138 = vunpack.c.h.b16 %v7108
    %v7139 = vunpack.c.l.b16 %v7109
    %v7140 = vunpack.c.h.b16 %v7109
    %v7141 = vunpack.c.l.b16 %v7110
    %v7142 = vunpack.c.h.b16 %v7110
    %v7143 = vunpack.c.l.b16 %v7111
    %v7144 = vunpack.c.h.b16 %v7111
    %v7145 = vunpack.c.l.b16 %v7112
    %v7146 = vunpack.c.h.b16 %v7112
    %v7147 = vunpack.c.l.b16 %v7113
    %v7148 = vunpack.c.h.b16 %v7113
    %v7149 = vunpack.c.l.b16 %v7114
    %v7150 = vunpack.c.h.b16 %v7114
    %v7151 = vpack.c.b16 %v7137, %v7135
    %v7152 = vpack.c.b16 %v7138, %v7136
    %v7153 = vpack.c.b16 %v7141, %v7139
    %v7154 = vpack.c.b16 %v7142, %v7140
    %v7155 = vpack.c.b16 %v7145, %v7143
    %v7156 = vpack.c.b16 %v7146, %v7144
    %v7157 = vpack.c.b16 %v7149, %v7147
    %v7158 = vpack.c.b16 %v7150, %v7148
    %v7168 = vsel %vm105, %v7091, 0
    %v7171 = vsel %vm105, %v7092, 0
    %v7174 = vsel %vm105, %v7093, 0
    %v7177 = vsel %vm105, %v7094, 0
    %v7180 = vsel %vm105, %v7095, 0
    %v7183 = vsel %vm105, %v7096, 0
    %v7186 = vsel %vm105, %v7097, 0
    %v7189 = vsel %vm105, %v7098, 0
    %v7192 = vsel %vm105, %v7099, 0
    %v7195 = vsel %vm105, %v7100, 0
    %v7198 = vsel %vm105, %v7101, 0
    %v7201 = vsel %vm105, %v7102, 0
    %v7204 = vsel %vm105, %v7103, 0
    %v7207 = vsel %vm105, %v7104, 0
    %v7210 = vsel %vm105, %v7105, 0
    %v7213 = vsel %vm105, %v7106, 0
    %7215 = vmatprep.subr.bf16.mxu0 %v7152
    %7216 = vmatpush1.bf16.msra.mxu0 %v7151
    %7217 = vmatprep.subr.bf16.mxu0 %v7154
    %7218 = vmatpush1.bf16.msra.mxu0 %v7153
    %7219 = vmatprep.subr.bf16.mxu0 %v7156
    %7220 = vmatpush1.bf16.msra.mxu0 %v7155
    %7221 = vmatprep.subr.bf16.mxu0 %v7158
    %7222 = vmatpush1.bf16.msra.mxu0 %v7157
    %7223 = vmatprep.subr.bf16.mxu0 0
    %7224 = vmatpush1.bf16.msra.mxu0 0
    %7225 = vmatprep.subr.bf16.mxu0 0
    %7226 = vmatpush1.bf16.msra.mxu0 0
    %7227 = vmatprep.subr.bf16.mxu0 0
    %7228 = vmatpush1.bf16.msra.mxu0 0
    %7229 = vmatprep.subr.bf16.mxu0 0
    %7230 = vmatpush1.bf16.msra.mxu0 0
    %7231 = vmatprep.subr.bf16.mxu0 0
    %7232 = vmatpush1.bf16.msra.mxu0 0
    %7233 = vmatprep.subr.bf16.mxu0 0
    %7234 = vmatpush1.bf16.msra.mxu0 0
    %7235 = vmatprep.subr.bf16.mxu0 0
    %7236 = vmatpush1.bf16.msra.mxu0 0
    %7237 = vmatprep.subr.bf16.mxu0 0
    %7238 = vmatpush1.bf16.msra.mxu0 0
    %7239 = vmatprep.subr.bf16.mxu0 0
    %7240 = vmatpush1.bf16.msra.mxu0 0
    %7241 = vmatprep.subr.bf16.mxu0 0
    %7242 = vmatpush1.bf16.msra.mxu0 0
    %7243 = vmatprep.subr.bf16.mxu0 0
    %7244 = vmatpush1.bf16.msra.mxu0 0
    %7245 = vmatprep.subr.bf16.mxu0 0
    %7246 = vmatpush1.bf16.msra.mxu0 0
    %7247 = vmatprep.mubr.bf16.mxu0 0
    %7248 = vmatmul.mubr.bf16.gmra.mrb[0].mxu0 %v7168
    %v7249 = vpop.f32.mrb[0].mxu0
    %v7250 = vadd.f32 %v7120, %v7249
    %v7251 = vpop.f32.mrb[0].mxu0
    %v7252 = vadd.f32 %v7124, %v7251
    %v7253 = vpop.f32.mrb[0].mxu0
    %v7254 = vadd.f32 %v7120, %v7253
    %v7255 = vpop.f32.mrb[0].mxu0
    %v7256 = vadd.f32 %v7124, %v7255
    %7257 = vmatprep.mubr.bf16.mxu0 0
    %7258 = vmatmul.mubr.bf16.gmra.mrb[0].mxu0 %v7171
    %v7259 = vpop.f32.mrb[0].mxu0
    %v7260 = vadd.f32 %v7120, %v7259
    %v7261 = vpop.f32.mrb[0].mxu0
    %v7262 = vadd.f32 %v7124, %v7261
    %v7263 = vpop.f32.mrb[0].mxu0
    %v7264 = vadd.f32 %v7120, %v7263
    %v7265 = vpop.f32.mrb[0].mxu0
    %v7266 = vadd.f32 %v7124, %v7265
    %7267 = vmatprep.mubr.bf16.mxu0 0
    %7268 = vmatmul.mubr.bf16.gmra.mrb[0].mxu0 %v7174
    %v7269 = vpop.f32.mrb[0].mxu0
    %v7270 = vadd.f32 %v7120, %v7269
    %v7271 = vpop.f32.mrb[0].mxu0
    %v7272 = vadd.f32 %v7124, %v7271
    %v7273 = vpop.f32.mrb[0].mxu0
    %v7274 = vadd.f32 %v7120, %v7273
    %v7275 = vpop.f32.mrb[0].mxu0
    %v7276 = vadd.f32 %v7124, %v7275
    %7277 = vmatprep.mubr.bf16.mxu0 0
    %7278 = vmatmul.mubr.bf16.gmra.mrb[0].mxu0 %v7177
    %v7279 = vpop.f32.mrb[0].mxu0
    %v7280 = vadd.f32 %v7120, %v7279
    %v7281 = vpop.f32.mrb[0].mxu0
    %v7282 = vadd.f32 %v7124, %v7281
    %v7283 = vpop.f32.mrb[0].mxu0
    %v7284 = vadd.f32 %v7120, %v7283
    %v7285 = vpop.f32.mrb[0].mxu0
    %v7286 = vadd.f32 %v7124, %v7285
    %7287 = vmatprep.mubr.bf16.mxu0 0
    %7288 = vmatmul.mubr.bf16.gmra.mrb[0].mxu0 %v7180
    %v7289 = vpop.f32.mrb[0].mxu0
    %v7290 = vadd.f32 %v7120, %v7289
    %v7291 = vpop.f32.mrb[0].mxu0
    %v7292 = vadd.f32 %v7124, %v7291
    %v7293 = vpop.f32.mrb[0].mxu0
    %v7294 = vadd.f32 %v7120, %v7293
    %v7295 = vpop.f32.mrb[0].mxu0
    %v7296 = vadd.f32 %v7124, %v7295
    %7297 = vmatprep.mubr.bf16.mxu0 0
    %7298 = vmatmul.mubr.bf16.gmra.mrb[0].mxu0 %v7183
    %v7299 = vpop.f32.mrb[0].mxu0
    %v7300 = vadd.f32 %v7120, %v7299
    %v7301 = vpop.f32.mrb[0].mxu0
    %v7302 = vadd.f32 %v7124, %v7301
    %v7303 = vpop.f32.mrb[0].mxu0
    %v7304 = vadd.f32 %v7120, %v7303
    %v7305 = vpop.f32.mrb[0].mxu0
    %v7306 = vadd.f32 %v7124, %v7305
    %7307 = vmatprep.mubr.bf16.mxu0 0
    %7308 = vmatmul.mubr.bf16.gmra.mrb[0].mxu0 %v7186
    %v7309 = vpop.f32.mrb[0].mxu0
    %v7310 = vadd.f32 %v7120, %v7309
    %v7311 = vpop.f32.mrb[0].mxu0
    %v7312 = vadd.f32 %v7124, %v7311
    %v7313 = vpop.f32.mrb[0].mxu0
    %v7314 = vadd.f32 %v7120, %v7313
    %v7315 = vpop.f32.mrb[0].mxu0
    %v7316 = vadd.f32 %v7124, %v7315
    %7317 = vmatprep.mubr.bf16.mxu0 0
    %7318 = vmatmul.mubr.bf16.gmra.mrb[0].mxu0 %v7189
    %v7319 = vpop.f32.mrb[0].mxu0
    %v7320 = vadd.f32 %v7120, %v7319
    %v7321 = vpop.f32.mrb[0].mxu0
    %v7322 = vadd.f32 %v7124, %v7321
    %v7323 = vpop.f32.mrb[0].mxu0
    %v7324 = vadd.f32 %v7120, %v7323
    %v7325 = vpop.f32.mrb[0].mxu0
    %v7326 = vadd.f32 %v7124, %v7325
    %7327 = vmatprep.mubr.bf16.mxu0 0
    %7328 = vmatmul.mubr.bf16.gmra.mrb[0].mxu0 %v7192
    %v7329 = vpop.f32.mrb[0].mxu0
    %v7330 = vadd.f32 %v7120, %v7329
    %v7331 = vpop.f32.mrb[0].mxu0
    %v7332 = vadd.f32 %v7124, %v7331
    %v7333 = vpop.f32.mrb[0].mxu0
    %v7334 = vadd.f32 %v7120, %v7333
    %v7335 = vpop.f32.mrb[0].mxu0
    %v7336 = vadd.f32 %v7124, %v7335
    %7337 = vmatprep.mubr.bf16.mxu0 0
    %7338 = vmatmul.mubr.bf16.gmra.mrb[0].mxu0 %v7195
    %v7339 = vpop.f32.mrb[0].mxu0
    %v7340 = vadd.f32 %v7120, %v7339
    %v7341 = vpop.f32.mrb[0].mxu0
    %v7342 = vadd.f32 %v7124, %v7341
    %v7343 = vpop.f32.mrb[0].mxu0
    %v7344 = vadd.f32 %v7120, %v7343
    %v7345 = vpop.f32.mrb[0].mxu0
    %v7346 = vadd.f32 %v7124, %v7345
    %7347 = vmatprep.mubr.bf16.mxu0 0
    %7348 = vmatmul.mubr.bf16.gmra.mrb[0].mxu0 %v7198
    %v7349 = vpop.f32.mrb[0].mxu0
    %v7350 = vadd.f32 %v7120, %v7349
    %v7351 = vpop.f32.mrb[0].mxu0
    %v7352 = vadd.f32 %v7124, %v7351
    %v7353 = vpop.f32.mrb[0].mxu0
    %v7354 = vadd.f32 %v7120, %v7353
    %v7355 = vpop.f32.mrb[0].mxu0
    %v7356 = vadd.f32 %v7124, %v7355
    %7357 = vmatprep.mubr.bf16.mxu0 0
    %7358 = vmatmul.mubr.bf16.gmra.mrb[0].mxu0 %v7201
    %v7359 = vpop.f32.mrb[0].mxu0
    %v7360 = vadd.f32 %v7120, %v7359
    %v7361 = vpop.f32.mrb[0].mxu0
    %v7362 = vadd.f32 %v7124, %v7361
    %v7363 = vpop.f32.mrb[0].mxu0
    %v7364 = vadd.f32 %v7120, %v7363
    %v7365 = vpop.f32.mrb[0].mxu0
    %v7366 = vadd.f32 %v7124, %v7365
    %7367 = vmatprep.mubr.bf16.mxu0 0
    %7368 = vmatmul.mubr.bf16.gmra.mrb[0].mxu0 %v7204
    %v7369 = vpop.f32.mrb[0].mxu0
    %v7370 = vadd.f32 %v7120, %v7369
    %v7371 = vpop.f32.mrb[0].mxu0
    %v7372 = vadd.f32 %v7124, %v7371
    %v7373 = vpop.f32.mrb[0].mxu0
    %v7374 = vadd.f32 %v7120, %v7373
    %v7375 = vpop.f32.mrb[0].mxu0
    %v7376 = vadd.f32 %v7124, %v7375
    %7377 = vmatprep.mubr.bf16.mxu0 0
    %7378 = vmatmul.mubr.bf16.gmra.mrb[0].mxu0 %v7207
    %v7379 = vpop.f32.mrb[0].mxu0
    %v7380 = vadd.f32 %v7120, %v7379
    %v7381 = vpop.f32.mrb[0].mxu0
    %v7382 = vadd.f32 %v7124, %v7381
    %v7383 = vpop.f32.mrb[0].mxu0
    %v7384 = vadd.f32 %v7120, %v7383
    %v7385 = vpop.f32.mrb[0].mxu0
    %v7386 = vadd.f32 %v7124, %v7385
    %7387 = vmatprep.mubr.bf16.mxu0 0
    %7388 = vmatmul.mubr.bf16.gmra.mrb[0].mxu0 %v7210
    %v7389 = vpop.f32.mrb[0].mxu0
    %v7390 = vadd.f32 %v7120, %v7389
    %v7391 = vpop.f32.mrb[0].mxu0
    %v7392 = vadd.f32 %v7124, %v7391
    %v7393 = vpop.f32.mrb[0].mxu0
    %v7394 = vadd.f32 %v7120, %v7393
    %v7395 = vpop.f32.mrb[0].mxu0
    %v7396 = vadd.f32 %v7124, %v7395
    %7397 = vmatprep.mubr.bf16.mxu0 0
    %7398 = vmatmul.mubr.bf16.gmra.mrb[0].mxu0 %v7213
    %v7399 = vpop.f32.mrb[0].mxu0
    %v7400 = vadd.f32 %v7120, %v7399
    %v7401 = vpop.f32.mrb[0].mxu0
    %v7402 = vadd.f32 %v7124, %v7401
    %v7403 = vpop.f32.mrb[0].mxu0
    %v7404 = vadd.f32 %v7120, %v7403
    %v7405 = vpop.f32.mrb[0].mxu0
    %v7406 = vadd.f32 %v7124, %v7405
    %7407 = vdwg.mxu0
    %v7408 = vmax.f32 %v7250, 0.0
    %v7409 = vmax.f32 %v7252, 0.0
    %v7410 = vmax.f32 %v7254, 0.0
    %v7411 = vmax.f32 %v7256, 0.0
    %v7412 = vmax.f32 %v7260, 0.0
    %v7413 = vmax.f32 %v7262, 0.0
    %v7414 = vmax.f32 %v7264, 0.0
    %v7415 = vmax.f32 %v7266, 0.0
    %v7416 = vmax.f32 %v7270, 0.0
    %v7417 = vmax.f32 %v7272, 0.0
    %v7418 = vmax.f32 %v7274, 0.0
    %v7419 = vmax.f32 %v7276, 0.0
    %v7420 = vmax.f32 %v7280, 0.0
    %v7421 = vmax.f32 %v7282, 0.0
    %v7422 = vmax.f32 %v7284, 0.0
    %v7423 = vmax.f32 %v7286, 0.0
    %v7424 = vmax.f32 %v7290, 0.0
    %v7425 = vmax.f32 %v7292, 0.0
    %v7426 = vmax.f32 %v7294, 0.0
    %v7427 = vmax.f32 %v7296, 0.0
    %v7428 = vmax.f32 %v7300, 0.0
    %v7429 = vmax.f32 %v7302, 0.0
    %v7430 = vmax.f32 %v7304, 0.0
    %v7431 = vmax.f32 %v7306, 0.0
    %v7432 = vmax.f32 %v7310, 0.0
    %v7433 = vmax.f32 %v7312, 0.0
    %v7434 = vmax.f32 %v7314, 0.0
    %v7435 = vmax.f32 %v7316, 0.0
    %v7436 = vmax.f32 %v7320, 0.0
    %v7437 = vmax.f32 %v7322, 0.0
    %v7438 = vmax.f32 %v7324, 0.0
    %v7439 = vmax.f32 %v7326, 0.0
    %v7440 = vmax.f32 %v7330, 0.0
    %v7441 = vmax.f32 %v7332, 0.0
    %v7442 = vmax.f32 %v7334, 0.0
    %v7443 = vmax.f32 %v7336, 0.0
    %v7444 = vmax.f32 %v7340, 0.0
    %v7445 = vmax.f32 %v7342, 0.0
    %v7446 = vmax.f32 %v7344, 0.0
    %v7447 = vmax.f32 %v7346, 0.0
    %v7448 = vmax.f32 %v7350, 0.0
    %v7449 = vmax.f32 %v7352, 0.0
    %v7450 = vmax.f32 %v7354, 0.0
    %v7451 = vmax.f32 %v7356, 0.0
    %v7452 = vmax.f32 %v7360, 0.0
    %v7453 = vmax.f32 %v7362, 0.0
    %v7454 = vmax.f32 %v7364, 0.0
    %v7455 = vmax.f32 %v7366, 0.0
    %v7456 = vmax.f32 %v7370, 0.0
    %v7457 = vmax.f32 %v7372, 0.0
    %v7458 = vmax.f32 %v7374, 0.0
    %v7459 = vmax.f32 %v7376, 0.0
    %v7460 = vmax.f32 %v7380, 0.0
    %v7461 = vmax.f32 %v7382, 0.0
    %v7462 = vmax.f32 %v7384, 0.0
    %v7463 = vmax.f32 %v7386, 0.0
    %v7464 = vmax.f32 %v7390, 0.0
    %v7465 = vmax.f32 %v7392, 0.0
    %v7466 = vmax.f32 %v7394, 0.0
    %v7467 = vmax.f32 %v7396, 0.0
    %v7468 = vmax.f32 %v7400, 0.0
    %v7469 = vmax.f32 %v7402, 0.0
    %v7470 = vmax.f32 %v7404, 0.0
    %v7471 = vmax.f32 %v7406, 0.0
    %v7472 = vpack.c.bf16 %v7410, %v7408
    %v7473 = vpack.c.bf16 %v7411, %v7409
    %v7474 = vpack.c.bf16 %v7414, %v7412
    %v7475 = vpack.c.bf16 %v7415, %v7413
    %v7476 = vpack.c.bf16 %v7418, %v7416
    %v7477 = vpack.c.bf16 %v7419, %v7417
    %v7478 = vpack.c.bf16 %v7422, %v7420
    %v7479 = vpack.c.bf16 %v7423, %v7421
    %v7480 = vpack.c.bf16 %v7426, %v7424
    %v7481 = vpack.c.bf16 %v7427, %v7425
    %v7482 = vpack.c.bf16 %v7430, %v7428
    %v7483 = vpack.c.bf16 %v7431, %v7429
    %v7484 = vpack.c.bf16 %v7434, %v7432
    %v7485 = vpack.c.bf16 %v7435, %v7433
    %v7486 = vpack.c.bf16 %v7438, %v7436
    %v7487 = vpack.c.bf16 %v7439, %v7437
    %v7488 = vpack.c.bf16 %v7442, %v7440
    %v7489 = vpack.c.bf16 %v7443, %v7441
    %v7490 = vpack.c.bf16 %v7446, %v7444
    %v7491 = vpack.c.bf16 %v7447, %v7445
    %v7492 = vpack.c.bf16 %v7450, %v7448
    %v7493 = vpack.c.bf16 %v7451, %v7449
    %v7494 = vpack.c.bf16 %v7454, %v7452
    %v7495 = vpack.c.bf16 %v7455, %v7453
    %v7496 = vpack.c.bf16 %v7458, %v7456
    %v7497 = vpack.c.bf16 %v7459, %v7457
    %v7498 = vpack.c.bf16 %v7462, %v7460
    %v7499 = vpack.c.bf16 %v7463, %v7461
    %v7500 = vpack.c.bf16 %v7466, %v7464
    %v7501 = vpack.c.bf16 %v7467, %v7465
    %v7502 = vpack.c.bf16 %v7470, %v7468
    %v7503 = vpack.c.bf16 %v7471, %v7469
    %v7504 = vld [vmem:[%s10] sm:$0xf]
    %v7505 = vld [vmem:[%s10 + $0x4] sm:$0xf]
    %v7506 = vld [vmem:[%s10 + $0x8] sm:$0xf]
    %v7507 = vld [vmem:[%s10 + $0xc] sm:$0xf]
    %v7508 = vld [vmem:[%s10 + $0x10] sm:$0xf]
    %v7509 = vld [vmem:[%s10 + $0x14] sm:$0xf]
    %v7510 = vld [vmem:[%s10 + $0x18] sm:$0xf]
    %v7511 = vld [vmem:[%s10 + $0x1c] sm:$0xf]
    %v7512 = vld [vmem:[%s10 + $0x20] sm:$0xf]
    %v7513 = vld [vmem:[%s10 + $0x24] sm:$0xf]
    %v7514 = vld [vmem:[%s10 + $0x28] sm:$0xf]
    %v7515 = vld [vmem:[%s10 + $0x2c] sm:$0xf]
    %v7516 = vld [vmem:[%s10 + $0x30] sm:$0xf]
    %v7517 = vld [vmem:[%s10 + $0x34] sm:$0xf]
    %v7518 = vld [vmem:[%s10 + $0x38] sm:$0xf]
    %v7519 = vld [vmem:[%s10 + $0x3c] sm:$0xf]
    %v7520 = vld [vmem:[%s10 + $0x40] sm:$0xf]
    %v7521 = vld [vmem:[%s10 + $0x44] sm:$0xf]
    %v7522 = vld [vmem:[%s10 + $0x48] sm:$0xf]
    %v7523 = vld [vmem:[%s10 + $0x4c] sm:$0xf]
    %v7524 = vld [vmem:[%s10 + $0x50] sm:$0xf]
    %v7525 = vld [vmem:[%s10 + $0x54] sm:$0xf]
    %v7526 = vld [vmem:[%s10 + $0x58] sm:$0xf]
    %v7527 = vld [vmem:[%s10 + $0x5c] sm:$0xf]
    %v7528 = vld [vmem:[%s10 + $0x60] sm:$0xf]
    %v7529 = vld [vmem:[%s10 + $0x64] sm:$0xf]
    %v7530 = vld [vmem:[%s10 + $0x68] sm:$0xf]
    %v7531 = vld [vmem:[%s10 + $0x6c] sm:$0xf]
    %v7532 = vld [vmem:[%s10 + $0x70] sm:$0xf]
    %v7533 = vld [vmem:[%s10 + $0x74] sm:$0xf]
    %v7534 = vld [vmem:[%s10 + $0x78] sm:$0xf]
    %v7535 = vld [vmem:[%s10 + $0x7c] sm:$0xf]
    %v7536 = vld [vmem:[%s11] sm:$0x1]
    %v7538 = vlaneseq
    %v7539 = vshrl.u32 %v7538, 7
    %v7540 = vsub.s32 0, %v7539
    %v7541 = vrot.slane %v7536, %v7540
    %v7575 = vunpack.c.l.b16 %v7504
    %v7576 = vunpack.c.l.b16 %v7505
    %v7577 = vunpack.c.l.b16 %v7506
    %v7578 = vunpack.c.l.b16 %v7507
    %v7579 = vunpack.c.l.b16 %v7508
    %v7580 = vunpack.c.l.b16 %v7509
    %v7581 = vunpack.c.l.b16 %v7510
    %v7582 = vunpack.c.l.b16 %v7511
    %v7583 = vunpack.c.l.b16 %v7512
    %v7584 = vunpack.c.l.b16 %v7513
    %v7585 = vunpack.c.l.b16 %v7514
    %v7586 = vunpack.c.l.b16 %v7515
    %v7587 = vunpack.c.l.b16 %v7516
    %v7588 = vunpack.c.l.b16 %v7517
    %v7589 = vunpack.c.l.b16 %v7518
    %v7590 = vunpack.c.l.b16 %v7519
    %v7591 = vunpack.c.l.b16 %v7520
    %v7592 = vunpack.c.l.b16 %v7521
    %v7593 = vunpack.c.l.b16 %v7522
    %v7594 = vunpack.c.l.b16 %v7523
    %v7595 = vunpack.c.l.b16 %v7524
    %v7596 = vunpack.c.l.b16 %v7525
    %v7597 = vunpack.c.l.b16 %v7526
    %v7598 = vunpack.c.l.b16 %v7527
    %v7599 = vunpack.c.l.b16 %v7528
    %v7600 = vunpack.c.l.b16 %v7529
    %v7601 = vunpack.c.l.b16 %v7530
    %v7602 = vunpack.c.l.b16 %v7531
    %v7603 = vunpack.c.l.b16 %v7532
    %v7604 = vunpack.c.l.b16 %v7533
    %v7605 = vunpack.c.l.b16 %v7534
    %v7606 = vunpack.c.l.b16 %v7535
    %v7607 = vpack.c.b16 %v7576, %v7575
    %v7608 = vpack.c.b16 %v7578, %v7577
    %v7609 = vpack.c.b16 %v7580, %v7579
    %v7610 = vpack.c.b16 %v7582, %v7581
    %v7611 = vpack.c.b16 %v7584, %v7583
    %v7612 = vpack.c.b16 %v7586, %v7585
    %v7613 = vpack.c.b16 %v7588, %v7587
    %v7614 = vpack.c.b16 %v7590, %v7589
    %v7615 = vpack.c.b16 %v7592, %v7591
    %v7616 = vpack.c.b16 %v7594, %v7593
    %v7617 = vpack.c.b16 %v7596, %v7595
    %v7618 = vpack.c.b16 %v7598, %v7597
    %v7619 = vpack.c.b16 %v7600, %v7599
    %v7620 = vpack.c.b16 %v7602, %v7601
    %v7621 = vpack.c.b16 %v7604, %v7603
    %v7622 = vpack.c.b16 %v7606, %v7605
    %7639 = vmatprep.subr.bf16.mxu0 0
    %7640 = vmatpush1.bf16.msra.mxu0 %v7607
    %7641 = vmatprep.subr.bf16.mxu0 0
    %7642 = vmatpush1.bf16.msra.mxu0 %v7608
    %7643 = vmatprep.subr.bf16.mxu0 0
    %7644 = vmatpush1.bf16.msra.mxu0 %v7609
    %7645 = vmatprep.subr.bf16.mxu0 0
    %7646 = vmatpush1.bf16.msra.mxu0 %v7610
    %7647 = vmatprep.subr.bf16.mxu0 0
    %7648 = vmatpush1.bf16.msra.mxu0 %v7611
    %7649 = vmatprep.subr.bf16.mxu0 0
    %7650 = vmatpush1.bf16.msra.mxu0 %v7612
    %7651 = vmatprep.subr.bf16.mxu0 0
    %7652 = vmatpush1.bf16.msra.mxu0 %v7613
    %7653 = vmatprep.subr.bf16.mxu0 0
    %7654 = vmatpush1.bf16.msra.mxu0 %v7614
    %7655 = vmatprep.subr.bf16.mxu0 0
    %7656 = vmatpush1.bf16.msra.mxu0 %v7615
    %7657 = vmatprep.subr.bf16.mxu0 0
    %7658 = vmatpush1.bf16.msra.mxu0 %v7616
    %7659 = vmatprep.subr.bf16.mxu0 0
    %7660 = vmatpush1.bf16.msra.mxu0 %v7617
    %7661 = vmatprep.subr.bf16.mxu0 0
    %7662 = vmatpush1.bf16.msra.mxu0 %v7618
    %7663 = vmatprep.subr.bf16.mxu0 0
    %7664 = vmatpush1.bf16.msra.mxu0 %v7619
    %7665 = vmatprep.subr.bf16.mxu0 0
    %7666 = vmatpush1.bf16.msra.mxu0 %v7620
    %7667 = vmatprep.subr.bf16.mxu0 0
    %7668 = vmatpush1.bf16.msra.mxu0 %v7621
    %7669 = vmatprep.subr.bf16.mxu0 0
    %7670 = vmatpush1.bf16.msra.mxu0 %v7622
    %7671 = vmatprep.mubr.bf16.mxu0 %v7473
    %7672 = vmatmul.mubr.bf16.gmra.mrb[0].mxu0 %v7472
    %v7673 = vpop.f32.mrb[0].mxu0
    %v7674 = vadd.f32 %v7541, %v7673
    %v7675 = vpop.f32.mrb[0].mxu0
    %v7676 = vpop.f32.mrb[0].mxu0
    %v7677 = vadd.f32 %v7541, %v7676
    %v7678 = vpop.f32.mrb[0].mxu0
    %7679 = vmatprep.mubr.bf16.mxu0 %v7475
    %7680 = vmatmul.mubr.bf16.gmra.mrb[0].mxu0 %v7474
    %v7681 = vpop.f32.mrb[0].mxu0
    %v7682 = vadd.f32 %v7541, %v7681
    %v7683 = vpop.f32.mrb[0].mxu0
    %v7684 = vpop.f32.mrb[0].mxu0
    %v7685 = vadd.f32 %v7541, %v7684
    %v7686 = vpop.f32.mrb[0].mxu0
    %7687 = vmatprep.mubr.bf16.mxu0 %v7477
    %7688 = vmatmul.mubr.bf16.gmra.mrb[0].mxu0 %v7476
    %v7689 = vpop.f32.mrb[0].mxu0
    %v7690 = vadd.f32 %v7541, %v7689
    %v7691 = vpop.f32.mrb[0].mxu0
    %v7692 = vpop.f32.mrb[0].mxu0
    %v7693 = vadd.f32 %v7541, %v7692
    %v7694 = vpop.f32.mrb[0].mxu0
    %7695 = vmatprep.mubr.bf16.mxu0 %v7479
    %7696 = vmatmul.mubr.bf16.gmra.mrb[0].mxu0 %v7478
    %v7697 = vpop.f32.mrb[0].mxu0
    %v7698 = vadd.f32 %v7541, %v7697
    %v7699 = vpop.f32.mrb[0].mxu0
    %v7700 = vpop.f32.mrb[0].mxu0
    %v7701 = vadd.f32 %v7541, %v7700
    %v7702 = vpop.f32.mrb[0].mxu0
    %7703 = vmatprep.mubr.bf16.mxu0 %v7481
    %7704 = vmatmul.mubr.bf16.gmra.mrb[0].mxu0 %v7480
    %v7705 = vpop.f32.mrb[0].mxu0
    %v7706 = vadd.f32 %v7541, %v7705
    %v7707 = vpop.f32.mrb[0].mxu0
    %v7708 = vpop.f32.mrb[0].mxu0
    %v7709 = vadd.f32 %v7541, %v7708
    %v7710 = vpop.f32.mrb[0].mxu0
    %7711 = vmatprep.mubr.bf16.mxu0 %v7483
    %7712 = vmatmul.mubr.bf16.gmra.mrb[0].mxu0 %v7482
    %v7713 = vpop.f32.mrb[0].mxu0
    %v7714 = vadd.f32 %v7541, %v7713
    %v7715 = vpop.f32.mrb[0].mxu0
    %v7716 = vpop.f32.mrb[0].mxu0
    %v7717 = vadd.f32 %v7541, %v7716
    %v7718 = vpop.f32.mrb[0].mxu0
    %7719 = vmatprep.mubr.bf16.mxu0 %v7485
    %7720 = vmatmul.mubr.bf16.gmra.mrb[0].mxu0 %v7484
    %v7721 = vpop.f32.mrb[0].mxu0
    %v7722 = vadd.f32 %v7541, %v7721
    %v7723 = vpop.f32.mrb[0].mxu0
    %v7724 = vpop.f32.mrb[0].mxu0
    %v7725 = vadd.f32 %v7541, %v7724
    %v7726 = vpop.f32.mrb[0].mxu0
    %7727 = vmatprep.mubr.bf16.mxu0 %v7487
    %7728 = vmatmul.mubr.bf16.gmra.mrb[0].mxu0 %v7486
    %v7729 = vpop.f32.mrb[0].mxu0
    %v7730 = vadd.f32 %v7541, %v7729
    %v7731 = vpop.f32.mrb[0].mxu0
    %v7732 = vpop.f32.mrb[0].mxu0
    %v7733 = vadd.f32 %v7541, %v7732
    %v7734 = vpop.f32.mrb[0].mxu0
    %7735 = vmatprep.mubr.bf16.mxu0 %v7489
    %7736 = vmatmul.mubr.bf16.gmra.mrb[0].mxu0 %v7488
    %v7737 = vpop.f32.mrb[0].mxu0
    %v7738 = vadd.f32 %v7541, %v7737
    %v7739 = vpop.f32.mrb[0].mxu0
    %v7740 = vpop.f32.mrb[0].mxu0
    %v7741 = vadd.f32 %v7541, %v7740
    %v7742 = vpop.f32.mrb[0].mxu0
    %7743 = vmatprep.mubr.bf16.mxu0 %v7491
    %7744 = vmatmul.mubr.bf16.gmra.mrb[0].mxu0 %v7490
    %v7745 = vpop.f32.mrb[0].mxu0
    %v7746 = vadd.f32 %v7541, %v7745
    %v7747 = vpop.f32.mrb[0].mxu0
    %v7748 = vpop.f32.mrb[0].mxu0
    %v7749 = vadd.f32 %v7541, %v7748
    %v7750 = vpop.f32.mrb[0].mxu0
    %7751 = vmatprep.mubr.bf16.mxu0 %v7493
    %7752 = vmatmul.mubr.bf16.gmra.mrb[0].mxu0 %v7492
    %v7753 = vpop.f32.mrb[0].mxu0
    %v7754 = vadd.f32 %v7541, %v7753
    %v7755 = vpop.f32.mrb[0].mxu0
    %v7756 = vpop.f32.mrb[0].mxu0
    %v7757 = vadd.f32 %v7541, %v7756
    %v7758 = vpop.f32.mrb[0].mxu0
    %7759 = vmatprep.mubr.bf16.mxu0 %v7495
    %7760 = vmatmul.mubr.bf16.gmra.mrb[0].mxu0 %v7494
    %v7761 = vpop.f32.mrb[0].mxu0
    %v7762 = vadd.f32 %v7541, %v7761
    %v7763 = vpop.f32.mrb[0].mxu0
    %v7764 = vpop.f32.mrb[0].mxu0
    %v7765 = vadd.f32 %v7541, %v7764
    %v7766 = vpop.f32.mrb[0].mxu0
    %7767 = vmatprep.mubr.bf16.mxu0 %v7497
    %7768 = vmatmul.mubr.bf16.gmra.mrb[0].mxu0 %v7496
    %v7769 = vpop.f32.mrb[0].mxu0
    %v7770 = vadd.f32 %v7541, %v7769
    %v7771 = vpop.f32.mrb[0].mxu0
    %v7772 = vpop.f32.mrb[0].mxu0
    %v7773 = vadd.f32 %v7541, %v7772
    %v7774 = vpop.f32.mrb[0].mxu0
    %7775 = vmatprep.mubr.bf16.mxu0 %v7499
    %7776 = vmatmul.mubr.bf16.gmra.mrb[0].mxu0 %v7498
    %v7777 = vpop.f32.mrb[0].mxu0
    %v7778 = vadd.f32 %v7541, %v7777
    %v7779 = vpop.f32.mrb[0].mxu0
    %v7780 = vpop.f32.mrb[0].mxu0
    %v7781 = vadd.f32 %v7541, %v7780
    %v7782 = vpop.f32.mrb[0].mxu0
    %7783 = vmatprep.mubr.bf16.mxu0 %v7501
    %7784 = vmatmul.mubr.bf16.gmra.mrb[0].mxu0 %v7500
    %v7785 = vpop.f32.mrb[0].mxu0
    %v7786 = vadd.f32 %v7541, %v7785
    %v7787 = vpop.f32.mrb[0].mxu0
    %v7788 = vpop.f32.mrb[0].mxu0
    %v7789 = vadd.f32 %v7541, %v7788
    %v7790 = vpop.f32.mrb[0].mxu0
    %7791 = vmatprep.mubr.bf16.mxu0 %v7503
    %7792 = vmatmul.mubr.bf16.gmra.mrb[0].mxu0 %v7502
    %v7793 = vpop.f32.mrb[0].mxu0
    %v7794 = vadd.f32 %v7541, %v7793
    %v7795 = vpop.f32.mrb[0].mxu0
    %v7796 = vpop.f32.mrb[0].mxu0
    %v7797 = vadd.f32 %v7541, %v7796
    %v7798 = vpop.f32.mrb[0].mxu0
    %7799 = vdwg.mxu0
    %v7800 = vadd.f32 %v6565, %v7674
    %v7801 = vadd.f32 %v6566, %v7677
    %v7802 = vadd.f32 %v6567, %v7682
    %v7803 = vadd.f32 %v6568, %v7685
    %v7804 = vadd.f32 %v6569, %v7690
    %v7805 = vadd.f32 %v6570, %v7693
    %v7806 = vadd.f32 %v6571, %v7698
    %v7807 = vadd.f32 %v6572, %v7701
    %v7808 = vadd.f32 %v6573, %v7706
    %v7809 = vadd.f32 %v6574, %v7709
    %v7810 = vadd.f32 %v6575, %v7714
    %v7811 = vadd.f32 %v6576, %v7717
    %v7812 = vadd.f32 %v6577, %v7722
    %v7813 = vadd.f32 %v6578, %v7725
    %v7814 = vadd.f32 %v6579, %v7730
    %v7815 = vadd.f32 %v6580, %v7733
    %v7816 = vadd.f32 %v6581, %v7738
    %v7817 = vadd.f32 %v6582, %v7741
    %v7818 = vadd.f32 %v6583, %v7746
    %v7819 = vadd.f32 %v6584, %v7749
    %v7820 = vadd.f32 %v6585, %v7754
    %v7821 = vadd.f32 %v6586, %v7757
    %v7822 = vadd.f32 %v6587, %v7762
    %v7823 = vadd.f32 %v6588, %v7765
    %v7824 = vadd.f32 %v6589, %v7770
    %v7825 = vadd.f32 %v6590, %v7773
    %v7826 = vadd.f32 %v6591, %v7778
    %v7827 = vadd.f32 %v6592, %v7781
    %v7828 = vadd.f32 %v6593, %v7786
    %v7829 = vadd.f32 %v6594, %v7789
    %v7830 = vadd.f32 %v6595, %v7794
    %v7831 = vadd.f32 %v6596, %v7797
    %7832 = vst.msk [vmem:[#allocation7] sm:$0xff] %vm105, %v7800
    %7833 = vst.msk [vmem:[#allocation7 + $0x8] sm:$0xff] %vm105, %v7801
    %7834 = vst.msk [vmem:[#allocation7 + $0x10] sm:$0xff] %vm105, %v7802
    %7835 = vst.msk [vmem:[#allocation7 + $0x18] sm:$0xff] %vm105, %v7803
    %7836 = vst.msk [vmem:[#allocation7 + $0x20] sm:$0xff] %vm105, %v7804
    %7837 = vst.msk [vmem:[#allocation7 + $0x28] sm:$0xff] %vm105, %v7805
    %7838 = vst.msk [vmem:[#allocation7 + $0x30] sm:$0xff] %vm105, %v7806
    %7839 = vst.msk [vmem:[#allocation7 + $0x38] sm:$0xff] %vm105, %v7807
    %7840 = vst.msk [vmem:[#allocation7 + $0x40] sm:$0xff] %vm105, %v7808
    %7841 = vst.msk [vmem:[#allocation7 + $0x48] sm:$0xff] %vm105, %v7809
    %7842 = vst.msk [vmem:[#allocation7 + $0x50] sm:$0xff] %vm105, %v7810
    %7843 = vst.msk [vmem:[#allocation7 + $0x58] sm:$0xff] %vm105, %v7811
    %7844 = vst.msk [vmem:[#allocation7 + $0x60] sm:$0xff] %vm105, %v7812
    %7845 = vst.msk [vmem:[#allocation7 + $0x68] sm:$0xff] %vm105, %v7813
    %7846 = vst.msk [vmem:[#allocation7 + $0x70] sm:$0xff] %vm105, %v7814
    %7847 = vst.msk [vmem:[#allocation7 + $0x78] sm:$0xff] %vm105, %v7815
    %7848 = vst.msk [vmem:[#allocation7 + $0x80] sm:$0xff] %vm105, %v7816
    %7849 = vst.msk [vmem:[#allocation7 + $0x88] sm:$0xff] %vm105, %v7817
    %7850 = vst.msk [vmem:[#allocation7 + $0x90] sm:$0xff] %vm105, %v7818
    %7851 = vst.msk [vmem:[#allocation7 + $0x98] sm:$0xff] %vm105, %v7819
    %7852 = vst.msk [vmem:[#allocation7 + $0xa0] sm:$0xff] %vm105, %v7820
    %7853 = vst.msk [vmem:[#allocation7 + $0xa8] sm:$0xff] %vm105, %v7821
    %7854 = vst.msk [vmem:[#allocation7 + $0xb0] sm:$0xff] %vm105, %v7822
    %7855 = vst.msk [vmem:[#allocation7 + $0xb8] sm:$0xff] %vm105, %v7823
    %7856 = vst.msk [vmem:[#allocation7 + $0xc0] sm:$0xff] %vm105, %v7824
    %7857 = vst.msk [vmem:[#allocation7 + $0xc8] sm:$0xff] %vm105, %v7825
    %7858 = vst.msk [vmem:[#allocation7 + $0xd0] sm:$0xff] %vm105, %v7826
    %7859 = vst.msk [vmem:[#allocation7 + $0xd8] sm:$0xff] %vm105, %v7827
    %7860 = vst.msk [vmem:[#allocation7 + $0xe0] sm:$0xff] %vm105, %v7828
    %7861 = vst.msk [vmem:[#allocation7 + $0xe8] sm:$0xff] %vm105, %v7829
    %7862 = vst.msk [vmem:[#allocation7 + $0xf0] sm:$0xff] %vm105, %v7830
    %7863 = vst.msk [vmem:[#allocation7 + $0xf8] sm:$0xff] %vm105, %v7831
    // Predicated region
    $region58: #{tpu_custom_call.1} parent=1 // pred_check
      _
    $region59: #{tpu_custom_call.1} parent=1 // pred_check_branch
      %7865 = sbr.rel (0) target = $region61
    $region60: #{tpu_custom_call.1} parent=1 // pred_region
      %s7867 = ssub.s32 4096, 4096
      %7868 = vsyncadd [#allocation4], %s7867
      %s7869 = sshll.u32 [#allocation7], 4
      %s7870 = int_to_ptr.vmem [resolvable:$true] %s7869
      %7875 = dma.vmem_to_hbm [thread:$0]  %s7870, 4096, %s12, [#allocation4], 128, 128, 8
    $region61: #{tpu_custom_call.1} parent=1 // pred_fallthru
      _
    // Predicated region
    $region62: #{tpu_custom_call.1} parent=1 // pred_check
      _
    $region63: #{tpu_custom_call.1} parent=1 // pred_check_branch
      %7877 = sbr.rel (0) target = $region65
    $region64: #{tpu_custom_call.1} parent=1 // pred_region
      %7878 = dma.done [#allocation4], 4096
    $region65: #{tpu_custom_call.1} parent=1 // pred_fallthru
      _
    %7879 = vsyncpa [#allocation3], 1
    %7880 = vsyncpa [#allocation6], 1
    %7881 = vsyncpa [#allocation4], 1

</llo_original>
